<compile_context>
chip_gen: v6e
topology: v6e:2x2x1
jax: 0.10.0
libtpu: 0.0.40
codegen_flags: <defaults>
</compile_context>

<pallas_src>
import functools

import jax
import jax.numpy as jnp
from jax.experimental import pallas as pl
from jax.experimental.pallas import tpu as pltpu


_VMEM_LIMIT = 48 * 1024 * 1024        # requested scoped VMEM (fits v7x's 64 MiB)
_GEMM_VMEM_BUDGET = 40 * 1024 * 1024  # headroom under the limit for tile picking
_LN_VMEM_BUDGET = 16 * 1024 * 1024


def _pick_tile(dim, target, align):
    """Largest multiple of `align` dividing `dim` that is <= `target`, else `dim`."""
    if dim <= target:
        return dim
    t = (target // align) * align
    while t >= align:
        if dim % t == 0:
            return t
        t -= align
    return dim


def _shrink_tile(dim, cur, align):
    """Next smaller aligned divisor of `dim` below `cur` (or `cur` if none)."""
    if cur <= align:
        return cur
    t = _pick_tile(dim, max(align, cur // 2), align)
    return t if t < cur else cur


# ------------------------------ layernorm ---------------------------------

def _layernorm_kernel(x_ref, g_ref, b_ref, o_ref, *, eps):
    x = x_ref[...].astype(jnp.float32)
    mean = jnp.mean(x, axis=-1, keepdims=True)
    var = jnp.mean(jnp.square(x - mean), axis=-1, keepdims=True)
    y = (x - mean) * jax.lax.rsqrt(var + eps)
    o_ref[...] = (y * g_ref[...] + b_ref[...]).astype(o_ref.dtype)


def layernorm(x, gamma, beta, eps, out_dtype=None):
    B, S, H = x.shape
    M = B * S
    out_dtype = out_dtype or x.dtype
    # Row tile sized so the double-buffered in+out tiles stay in budget even
    # at real Bloom hidden sizes (review: 256-512 rows already ~85% roofline).
    bpe = x.dtype.itemsize + jnp.dtype(out_dtype).itemsize
    max_rows = max(8, (_LN_VMEM_BUDGET // (2 * H * bpe)) // 8 * 8)
    tr = _pick_tile(M, min(512, max_rows), 8)
    out = pl.pallas_call(
        functools.partial(_layernorm_kernel, eps=eps),
        out_shape=jax.ShapeDtypeStruct((M, H), out_dtype),
        grid=(M // tr,),
        in_specs=[
            pl.BlockSpec((tr, H), lambda i: (i, 0)),
            pl.BlockSpec((1, H), lambda i: (0, 0)),
            pl.BlockSpec((1, H), lambda i: (0, 0)),
        ],
        out_specs=pl.BlockSpec((tr, H), lambda i: (i, 0)),
        compiler_params=pltpu.CompilerParams(
            dimension_semantics=("parallel",),
            vmem_limit_bytes=_VMEM_LIMIT,
        ),
    )(x.reshape(M, H), gamma.reshape(1, H), beta.reshape(1, H))
    return out.reshape(B, S, H)


# ------------------- tiled K-accumulating GEMM (+epilogue) -----------------

def _bloom_gelu(y):
    return y * 0.5 * (1.0 + jnp.tanh(0.79788456 * y * (1.0 + 0.044715 * y * y)))


def _make_matmul_kernel(nk, has_bias, gelu, has_res):
    def kernel(*refs):
        x_ref, w_ref = refs[0], refs[1]
        i = 2
        b_ref = r_ref = None
        if has_bias:
            b_ref = refs[i]
            i += 1
        if has_res:
            r_ref = refs[i]
            i += 1
        o_ref, acc_ref = refs[i], refs[i + 1]

        @pl.when(pl.program_id(2) == 0)
        def _init():
            acc_ref[...] = jnp.zeros_like(acc_ref)

        acc_ref[...] += jnp.dot(
            x_ref[...].astype(jnp.bfloat16),
            w_ref[...].astype(jnp.bfloat16),
            preferred_element_type=jnp.float32,
        )

        @pl.when(pl.program_id(2) == nk - 1)
        def _store():
            y = acc_ref[...]
            if has_bias:
                y = y + b_ref[...].astype(jnp.float32)
            if gelu:
                y = _bloom_gelu(y)
            if has_res:
                y = y + r_ref[...].astype(jnp.float32)
            o_ref[...] = y.astype(o_ref.dtype)

    return kernel


def linear(x, w, b=None, residual=None, gelu=False, out_dtype=None,
           tm_target=512, tn_target=1024, tk_target=512):
    """out = [gelu](x @ w + b) + residual, tiled (M,N,K) with f32 accumulation."""
    M, K = x.shape
    N = w.shape[1]
    out_dtype = out_dtype or x.dtype

    tm = _pick_tile(M, tm_target, 8)
    tn = _pick_tile(N, tn_target, 128)
    tk = _pick_tile(K, tk_target, 128)

    def vmem_bytes(tm_, tn_, tk_):
        tot = 2 * (tm_ * tk_ * x.dtype.itemsize            # X tile (double-buffered)
                   + tk_ * tn_ * w.dtype.itemsize           # W tile
                   + tm_ * tn_ * jnp.dtype(out_dtype).itemsize)  # out tile
        if b is not None:
            tot += 2 * tn_ * b.dtype.itemsize
        if residual is not None:
            tot += 2 * tm_ * tn_ * residual.dtype.itemsize
        tot += tm_ * tn_ * 4                                 # f32 accumulator
        return tot

    # Keep tiles large for MXU intensity but inside the (v7x-safe) VMEM budget.
    for _ in range(16):
        if vmem_bytes(tm, tn, tk) <= _GEMM_VMEM_BUDGET:
            break
        new_tn = _shrink_tile(N, tn, 128)
        if new_tn < tn:
            tn = new_tn
            continue
        new_tm = _shrink_tile(M, tm, 8)
        if new_tm < tm:
            tm = new_tm
            continue
        new_tk = _shrink_tile(K, tk, 128)
        if new_tk < tk:
            tk = new_tk
            continue
        break

    nk = K // tk

    in_specs = [
        pl.BlockSpec((tm, tk), lambda i, j, k: (i, k)),
        pl.BlockSpec((tk, tn), lambda i, j, k: (k, j)),
    ]
    args = [x, w]
    if b is not None:
        in_specs.append(pl.BlockSpec((1, tn), lambda i, j, k: (0, j)))
        args.append(b.reshape(1, N))
    if residual is not None:
        in_specs.append(pl.BlockSpec((tm, tn), lambda i, j, k: (i, j)))
        args.append(residual)

    kern = _make_matmul_kernel(nk, b is not None, gelu, residual is not None)
    return pl.pallas_call(
        kern,
        out_shape=jax.ShapeDtypeStruct((M, N), out_dtype),
        grid=(M // tm, N // tn, nk),
        in_specs=in_specs,
        out_specs=pl.BlockSpec((tm, tn), lambda i, j, k: (i, j)),
        scratch_shapes=[pltpu.VMEM((tm, tn), jnp.float32)],
        compiler_params=pltpu.CompilerParams(
            dimension_semantics=("parallel", "parallel", "arbitrary"),
            vmem_limit_bytes=_VMEM_LIMIT,
        ),
    )(*args)


# ------------------- flash attention with in-kernel bias -------------------

def _flash_attn_kernel(slopes_ref, q_ref, k_ref, v_ref, pos_ref, pad_ref,
                       o_ref, m_sc, l_sc, acc_sc, *,
                       inv_norm, n_kv, tq, tkv, causal):
    h = pl.program_id(1)
    qi = pl.program_id(2)
    kvi = pl.program_id(3)

    @pl.when(kvi == 0)
    def _init():
        m_sc[...] = jnp.full((tq, 1), -jnp.inf, jnp.float32)
        l_sc[...] = jnp.zeros_like(l_sc)
        acc_sc[...] = jnp.zeros_like(acc_sc)

    def _step():
        q = q_ref[0]          # (tq,  hd) bf16
        k = k_ref[0]          # (tkv, hd) bf16
        v = v_ref[0]          # (tkv, hd) bf16

        # scores = (q @ k^T) / sqrt(head_dim)  (layer_number factors cancel)
        s = jax.lax.dot_general(q, k, (((1,), (1,)), ((), ())),
                                preferred_element_type=jnp.float32) * inv_norm

        # alibi + padding bias built from small per-batch vectors (no HBM mask)
        slope = slopes_ref[h]                       # scalar f32 from SMEM
        s = s + (slope * pos_ref[0] + pad_ref[0])   # (1, tkv) broadcast over rows

        if causal:
            q_idx = qi * tq + jax.lax.broadcasted_iota(jnp.int32, (tq, tkv), 0)
            kv_idx = kvi * tkv + jax.lax.broadcasted_iota(jnp.int32, (tq, tkv), 1)
            s = jnp.where(kv_idx > q_idx, s - 10000.0, s)  # additive, like torch triu

        # online softmax (f32 statistics)
        m_prev = m_sc[...]
        m_new = jnp.maximum(m_prev, jnp.max(s, axis=-1, keepdims=True))
        alpha = jnp.exp(m_prev - m_new)
        p = jnp.exp(s - m_new)
        l_sc[...] = alpha * l_sc[...] + jnp.sum(p, axis=-1, keepdims=True)
        acc_sc[...] = alpha * acc_sc[...] + jnp.dot(
            p.astype(v.dtype), v, preferred_element_type=jnp.float32)
        m_sc[...] = m_new

    if causal:
        # Skip kv tiles that lie entirely above the diagonal (fully masked);
        # init/finalize stay unconditional so scratch state remains correct.
        @pl.when(kvi * tkv <= qi * tq + (tq - 1))
        def _compute():
            _step()
    else:
        _step()

    @pl.when(kvi == n_kv - 1)
    def _finalize():
        o_ref[0] = (acc_sc[...] * pl.reciprocal(l_sc[...], approx=True)
                    ).astype(o_ref.dtype)


def attention_core(qkv, positions, pad_bias, slopes, head_dim, causal):
    """qkv: (B, S, 3H) with per-head [q|k|v] columns -> context (B, S, H)."""
    B, S, threeH = qkv.shape
    H = threeH // 3
    NH = H // head_dim
    hd = head_dim

    tq = _pick_tile(S, 512, 8)
    tkv = _pick_tile(S, 512, 128)
    n_q, n_kv = S // tq, S // tkv

    kern = functools.partial(
        _flash_attn_kernel,
        inv_norm=1.0 / (hd ** 0.5), n_kv=n_kv, tq=tq, tkv=tkv, causal=causal)

    return pl.pallas_call(
        kern,
        out_shape=jax.ShapeDtypeStruct((B, S, H), qkv.dtype),
        grid=(B, NH, n_q, n_kv),
        in_specs=[
            pl.BlockSpec(memory_space=pltpu.MemorySpace.SMEM),                    # slopes (NH,)
            pl.BlockSpec((1, tq, hd), lambda b, h, qi, kvi: (b, qi, 3 * h)),       # q
            pl.BlockSpec((1, tkv, hd), lambda b, h, qi, kvi: (b, kvi, 3 * h + 1)),  # k
            pl.BlockSpec((1, tkv, hd), lambda b, h, qi, kvi: (b, kvi, 3 * h + 2)),  # v
            pl.BlockSpec((1, 1, tkv), lambda b, h, qi, kvi: (b, 0, kvi)),          # positions
            pl.BlockSpec((1, 1, tkv), lambda b, h, qi, kvi: (b, 0, kvi)),          # pad bias
        ],
        # context written directly in (B, S, H) layout, head h -> cols [h*hd,(h+1)*hd)
        out_specs=pl.BlockSpec((1, tq, hd), lambda b, h, qi, kvi: (b, qi, h)),
        scratch_shapes=[
            pltpu.VMEM((tq, 1), jnp.float32),    # m
            pltpu.VMEM((tq, 1), jnp.float32),    # l
            pltpu.VMEM((tq, hd), jnp.float32),   # acc
        ],
        compiler_params=pltpu.CompilerParams(
            dimension_semantics=("parallel", "parallel", "parallel", "arbitrary"),
            vmem_limit_bytes=_VMEM_LIMIT,
        ),
    )(slopes, qkv, qkv, qkv, positions, pad_bias)


# ------------------------------- Model glue --------------------------------

def init_params(key, config):
    H, V, L = config["hidden_size"], config["vocab_size"], config["n_layer"]
    keys = iter(jax.random.split(key, 6 + L * 12))

    def nrm(shape, scale=0.02, dtype=jnp.float32):
        return (scale * jax.random.normal(next(keys), shape, jnp.float32)).astype(dtype)

    params = {
        "wte": nrm((V, H)),
        "emb_ln_g": 1.0 + nrm((H,)), "emb_ln_b": nrm((H,)),
        "lnf_g": 1.0 + nrm((H,)), "lnf_b": nrm((H,)),
        "lm_head": nrm((H, V), dtype=jnp.bfloat16),
        "layers": [],
    }
    for _ in range(L):
        params["layers"].append({
            "ln1_g": 1.0 + nrm((H,)), "ln1_b": nrm((H,)),
            "w_qkv": nrm((H, 3 * H), dtype=jnp.bfloat16), "b_qkv": nrm((3 * H,)),
            "w_dense": nrm((H, H), dtype=jnp.bfloat16), "b_dense": nrm((H,)),
            "ln2_g": 1.0 + nrm((H,)), "ln2_b": nrm((H,)),
            "w_fc": nrm((H, 4 * H), dtype=jnp.bfloat16), "b_fc": nrm((4 * H,)),
            "w_proj": nrm((4 * H, H), dtype=jnp.bfloat16), "b_proj": nrm((H,)),
        })
    return params


def bloom_forward(params, input_ids, attention_mask, config):
    H, NH, eps = config["hidden_size"], config["n_head"], config["eps"]
    residual_ln = config["apply_residual_connection_post_layernorm"]
    B, S = input_ids.shape
    hd = H // NH
    # TODO(synk): when head_dim < 128, pack multiple heads per attention grid
    # step instead of requiring lane-aligned head_dim.
    assert hd % 128 == 0, "attention kernel expects head_dim to be a multiple of 128"

    # word embeddings (XLA gather glue) + embedding layernorm.  The residual
    # stream is kept in bf16; all statistics / MXU accumulation stay f32 in-kernel.
    h = params["wte"][input_ids]                                  # (B, S, H) f32
    h = layernorm(h, params["emb_ln_g"], params["emb_ln_b"], eps,
                  out_dtype=jnp.bfloat16)

    # alibi / mask ingredients (small (B,1,S) vectors; full bias built in-kernel)
    am = attention_mask.astype(jnp.float32)                        # (B, S)
    positions = (am * (jnp.cumsum(am, axis=1) - 1.0))[:, None, :]  # (B, 1, S)
    pad_bias = (-10000.0 * (1.0 - am))[:, None, :]                 # (B, 1, S)
    freqs = 1.0 + jnp.arange(NH, dtype=jnp.float32)
    slopes = 2.0 ** (-8.0 * freqs / NH)                            # (NH,)
    causal = S > 1

    presents = []
    for lp in params["layers"]:
        ln = layernorm(h, lp["ln1_g"], lp["ln1_b"], eps)           # bf16 -> bf16

        # fused QKV projection -> (B*S, 3H) bf16, per-head [q|k|v] interleave
        qkv = linear(ln.reshape(B * S, H), lp["w_qkv"], lp["b_qkv"],
                     out_dtype=jnp.bfloat16)
        qkv3 = qkv.reshape(B, S, 3 * H)
        # TODO(synk): past_key/past_value concatenation (incremental decode KV
        # cache) is not exercised here; this path matches past_* = None.

        ctx = attention_core(qkv3, positions, pad_bias, slopes, hd, causal)

        # attention output projection with the residual add fused in the epilogue
        res = (ln if residual_ln else h).reshape(B * S, H)
        attn = linear(ctx.reshape(B * S, H), lp["w_dense"], lp["b_dense"],
                      residual=res, out_dtype=jnp.bfloat16).reshape(B, S, H)

        ln2 = layernorm(attn, lp["ln2_g"], lp["ln2_b"], eps)
        m = linear(ln2.reshape(B * S, H), lp["w_fc"], lp["b_fc"], gelu=True,
                   out_dtype=jnp.bfloat16)
        res2 = (ln2 if residual_ln else attn).reshape(B * S, H)
        h = linear(m, lp["w_proj"], lp["b_proj"], residual=res2,
                   out_dtype=jnp.bfloat16).reshape(B, S, H)

        # presents as zero-transpose (B, S, NH, hd) slices of the QKV output;
        # callers needing torch's (B, NH, S, hd) layout can transpose lazily.
        qkv5 = qkv.reshape(B, S, NH, 3, hd)
        presents.append((qkv5[:, :, :, 1, :], qkv5[:, :, :, 2, :]))

    h = layernorm(h, params["lnf_g"], params["lnf_b"], eps)
    logits = linear(h.reshape(B * S, H), params["lm_head"],
                    out_dtype=jnp.float32, tn_target=2048)
    return logits.reshape(B, S, config["vocab_size"]), presents


# ---------------------------------- main -----------------------------------

if __name__ == "__main__":
    config = {
        "hidden_size": 256,
        "n_head": 2,          # head_dim = 128, lane-aligned (same as real Bloom)
        "n_layer": 2,
        "vocab_size": 512,
        "eps": 1e-5,
        "apply_residual_connection_post_layernorm": False,
    }
    B, S = 2, 16

    key = jax.random.PRNGKey(0)
    k_params, k_ids = jax.random.split(key)
    params = init_params(k_params, config)

    input_ids = jax.random.randint(k_ids, (B, S), 0, config["vocab_size"],
                                   dtype=jnp.int32)
    attention_mask = jnp.ones((B, S), dtype=jnp.float32)

    fwd = jax.jit(functools.partial(bloom_forward, config=config))
    logits, presents = fwd(params, input_ids, attention_mask)
    logits = jax.block_until_ready(logits)
    jax.tree_util.tree_map(jax.block_until_ready, presents)

    assert logits.shape == (B, S, config["vocab_size"])
    assert logits.dtype == jnp.float32
    assert bool(jnp.all(jnp.isfinite(logits)))
    print("KERNEL_OK")
</pallas_src>

<mosaic_0001>
module attributes {stable_mosaic.version = 11 : i64} {
  func.func @_layernorm_kernel(%arg0: i32, %arg1: memref<32x256xbf16, #tpu.memory_space<vmem>>, %arg2: memref<1x256xf32, #tpu.memory_space<vmem>>, %arg3: memref<1x256xf32, #tpu.memory_space<vmem>>, %arg4: memref<32x256xbf16, #tpu.memory_space<vmem>>) attributes {dimension_semantics = [#tpu.dimension_semantics<parallel>], iteration_bounds = array<i64: 1>, scalar_prefetch = 0 : i64, scratch_operands = 0 : i64, tpu.core_type = #tpu.core_type<tc>, window_params = [{transform_indices = @transform_0, window_bounds = array<i64: 32, 256>}, {pipeline_mode = #tpu.pipeline_mode<synchronous>, transform_indices = @transform_1, window_bounds = array<i64: 1, 256>}, {pipeline_mode = #tpu.pipeline_mode<synchronous>, transform_indices = @transform_2, window_bounds = array<i64: 1, 256>}, {transform_indices = @transform_3, window_bounds = array<i64: 32, 256>}]} {
    %c0 = arith.constant 0 : index
    %c0_0 = arith.constant 0 : index
    %0 = vector.load %arg1[%c0, %c0_0] : memref<32x256xbf16, #tpu.memory_space<vmem>>, vector<32x256xbf16>
    %1 = arith.extf %0 : vector<32x256xbf16> to vector<32x256xf32>
    %cst = arith.constant dense<0.000000e+00> : vector<32xf32>
    %2 = vector.multi_reduction <add>, %1, %cst [1] : vector<32x256xf32> to vector<32xf32>
    %3 = vector.shape_cast %2 : vector<32xf32> to vector<32x1xf32>
    %cst_1 = arith.constant 2.560000e+02 : f32
    %4 = vector.broadcast %cst_1 : f32 to vector<32x1xf32>
    %5 = arith.divf %3, %4 : vector<32x1xf32>
    %6 = vector.broadcast %5 : vector<32x1xf32> to vector<32x256xf32>
    %7 = arith.subf %1, %6 : vector<32x256xf32>
    %8 = arith.mulf %7, %7 : vector<32x256xf32>
    %cst_2 = arith.constant dense<0.000000e+00> : vector<32xf32>
    %9 = vector.multi_reduction <add>, %8, %cst_2 [1] : vector<32x256xf32> to vector<32xf32>
    %10 = vector.shape_cast %9 : vector<32xf32> to vector<32x1xf32>
    %cst_3 = arith.constant 2.560000e+02 : f32
    %11 = vector.broadcast %cst_3 : f32 to vector<32x1xf32>
    %12 = arith.divf %10, %11 : vector<32x1xf32>
    %13 = vector.broadcast %5 : vector<32x1xf32> to vector<32x256xf32>
    %14 = arith.subf %1, %13 : vector<32x256xf32>
    %cst_4 = arith.constant 9.99999974E-6 : f32
    %15 = vector.broadcast %cst_4 : f32 to vector<32x1xf32>
    %16 = arith.addf %12, %15 : vector<32x1xf32>
    %17 = math.rsqrt %16 : vector<32x1xf32>
    %18 = vector.broadcast %17 : vector<32x1xf32> to vector<32x256xf32>
    %19 = arith.mulf %14, %18 : vector<32x256xf32>
    %c0_5 = arith.constant 0 : index
    %c0_6 = arith.constant 0 : index
    %20 = vector.load %arg2[%c0_5, %c0_6] : memref<1x256xf32, #tpu.memory_space<vmem>>, vector<1x256xf32>
    %21 = vector.broadcast %20 : vector<1x256xf32> to vector<32x256xf32>
    %22 = arith.mulf %19, %21 : vector<32x256xf32>
    %c0_7 = arith.constant 0 : index
    %c0_8 = arith.constant 0 : index
    %23 = vector.load %arg3[%c0_7, %c0_8] : memref<1x256xf32, #tpu.memory_space<vmem>>, vector<1x256xf32>
    %24 = vector.broadcast %23 : vector<1x256xf32> to vector<32x256xf32>
    %25 = arith.addf %22, %24 : vector<32x256xf32>
    %26 = arith.truncf %25 : vector<32x256xf32> to vector<32x256xbf16>
    %c0_9 = arith.constant 0 : index
    %c0_10 = arith.constant 0 : index
    %27 = vector.load %arg4[%c0_9, %c0_10] : memref<32x256xbf16, #tpu.memory_space<vmem>>, vector<32x256xbf16>
    tpu.vector_store %arg4[%c0_9, %c0_10], %26 {strides = array<i32>} : memref<32x256xbf16, #tpu.memory_space<vmem>>, vector<32x256xbf16>,
    return
  }
  func.func @transform_0(%arg0: i32) -> (i32, i32) {
    %c0_i32 = arith.constant 0 : i32
    %c0_i32_0 = arith.constant 0 : i32
    return %arg0, %c0_i32 : i32, i32
  }
  func.func @transform_1(%arg0: i32) -> (i32, i32) {
    %c0_i32 = arith.constant 0 : i32
    %c0_i32_0 = arith.constant 0 : i32
    %c0_i32_1 = arith.constant 0 : i32
    return %c0_i32, %c0_i32_0 : i32, i32
  }
  func.func @transform_2(%arg0: i32) -> (i32, i32) {
    %c0_i32 = arith.constant 0 : i32
    %c0_i32_0 = arith.constant 0 : i32
    %c0_i32_1 = arith.constant 0 : i32
    return %c0_i32, %c0_i32_0 : i32, i32
  }
  func.func @transform_3(%arg0: i32) -> (i32, i32) {
    %c0_i32 = arith.constant 0 : i32
    %c0_i32_0 = arith.constant 0 : i32
    return %arg0, %c0_i32 : i32, i32
  }
}

module attributes {stable_mosaic.version = 11 : i64} {
  func.func @_flash_attn_kernel(%arg0: i32, %arg1: i32, %arg2: i32, %arg3: i32, %arg4: memref<2xf32, #tpu.memory_space<smem>>, %arg5: memref<1x16x128xbf16, #tpu.memory_space<vmem>>, %arg6: memref<1x16x128xbf16, #tpu.memory_space<vmem>>, %arg7: memref<1x16x128xbf16, #tpu.memory_space<vmem>>, %arg8: memref<1x1x16xf32, #tpu.memory_space<vmem>>, %arg9: memref<1x1x16xf32, #tpu.memory_space<vmem>>, %arg10: memref<1x16x128xbf16, #tpu.memory_space<vmem>>, %arg11: memref<16x1xf32, #tpu.memory_space<vmem>>, %arg12: memref<16x1xf32, #tpu.memory_space<vmem>>, %arg13: memref<16x128xf32, #tpu.memory_space<vmem>>) attributes {dimension_semantics = [#tpu.dimension_semantics<parallel>, #tpu.dimension_semantics<parallel>, #tpu.dimension_semantics<parallel>, #tpu.dimension_semantics<arbitrary>], iteration_bounds = array<i64: 2, 2, 1, 1>, scalar_prefetch = 0 : i64, scratch_operands = 3 : i64, tpu.core_type = #tpu.core_type<tc>, window_params = [{transform_indices = @transform_0, window_bounds = array<i64: 2>}, {transform_indices = @transform_1, window_bounds = array<i64: 1, 16, 128>}, {transform_indices = @transform_2, window_bounds = array<i64: 1, 16, 128>}, {transform_indices = @transform_3, window_bounds = array<i64: 1, 16, 128>}, {transform_indices = @transform_4, window_bounds = array<i64: 1, 1, 16>}, {transform_indices = @transform_5, window_bounds = array<i64: 1, 1, 16>}, {transform_indices = @transform_6, window_bounds = array<i64: 1, 16, 128>}]} {
    %c0_i32 = arith.constant 0 : i32
    %0 = arith.cmpi eq, %arg3, %c0_i32 : i32
    %1 = arith.extui %0 : i1 to i32
    %c0_i32_0 = arith.constant 0 : i32
    %2 = arith.cmpi ne, %1, %c0_i32_0 : i32
    scf.if %2 {
      %cst = arith.constant 0xFF800000 : f32
      %12 = vector.broadcast %cst : f32 to vector<16x1xf32>
      %c0 = arith.constant 0 : index
      %c0_5 = arith.constant 0 : index
      %13 = vector.load %arg11[%c0, %c0_5] : memref<16x1xf32, #tpu.memory_space<vmem>>, vector<16x1xf32>
      tpu.vector_store %arg11[%c0, %c0_5], %12 {strides = array<i32>} : memref<16x1xf32, #tpu.memory_space<vmem>>, vector<16x1xf32>,
      %cst_6 = arith.constant 0.000000e+00 : f32
      %14 = vector.broadcast %cst_6 : f32 to vector<16x1xf32>
      %c0_7 = arith.constant 0 : index
      %c0_8 = arith.constant 0 : index
      %15 = vector.load %arg12[%c0_7, %c0_8] : memref<16x1xf32, #tpu.memory_space<vmem>>, vector<16x1xf32>
      tpu.vector_store %arg12[%c0_7, %c0_8], %14 {strides = array<i32>} : memref<16x1xf32, #tpu.memory_space<vmem>>, vector<16x1xf32>,
      %cst_9 = arith.constant 0.000000e+00 : f32
      %16 = vector.broadcast %cst_9 : f32 to vector<16x128xf32>
      %c0_10 = arith.constant 0 : index
      %c0_11 = arith.constant 0 : index
      %17 = vector.load %arg13[%c0_10, %c0_11] : memref<16x128xf32, #tpu.memory_space<vmem>>, vector<16x128xf32>
      tpu.vector_store %arg13[%c0_10, %c0_11], %16 {strides = array<i32>} : memref<16x128xf32, #tpu.memory_space<vmem>>, vector<16x128xf32>,
    } else {
    }
    %c16_i32 = arith.constant 16 : i32
    %3 = arith.muli %arg3, %c16_i32 : i32
    %c16_i32_1 = arith.constant 16 : i32
    %4 = arith.muli %arg2, %c16_i32_1 : i32
    %c15_i32 = arith.constant 15 : i32
    %5 = arith.addi %4, %c15_i32 : i32
    %6 = arith.cmpi sle, %3, %5 : i32
    %7 = arith.extui %6 : i1 to i32
    %c0_i32_2 = arith.constant 0 : i32
    %8 = arith.cmpi ne, %7, %c0_i32_2 : i32
    scf.if %8 {
      %c0 = arith.constant 0 : index
      %c0_5 = arith.constant 0 : index
      %c0_6 = arith.constant 0 : index
      %12 = vector.load %arg5[%c0, %c0_5, %c0_6] : memref<1x16x128xbf16, #tpu.memory_space<vmem>>, vector<1x16x128xbf16>
      %13 = vector.shape_cast %12 : vector<1x16x128xbf16> to vector<16x128xbf16>
      %c0_7 = arith.constant 0 : index
      %c0_8 = arith.constant 0 : index
      %c0_9 = arith.constant 0 : index
      %14 = vector.load %arg6[%c0_7, %c0_8, %c0_9] : memref<1x16x128xbf16, #tpu.memory_space<vmem>>, vector<1x16x128xbf16>
      %15 = vector.shape_cast %14 : vector<1x16x128xbf16> to vector<16x128xbf16>
      %c0_10 = arith.constant 0 : index
      %c0_11 = arith.constant 0 : index
      %c0_12 = arith.constant 0 : index
      %16 = vector.load %arg7[%c0_10, %c0_11, %c0_12] : memref<1x16x128xbf16, #tpu.memory_space<vmem>>, vector<1x16x128xbf16>
      %17 = vector.shape_cast %16 : vector<1x16x128xbf16> to vector<16x128xbf16>
      %cst = arith.constant dense<0.000000e+00> : vector<16x16xf32>
      %18 = tpu.matmul %13, %15, %cst {dimension_numbers = #tpu.dot_dimension_numbers<[1], [1], [0], [0], [0, 0, 1, 0], [], []>} : vector<16x128xbf16>, vector<16x128xbf16>, vector<16x16xf32> -> vector<16x16xf32>
      %cst_13 = arith.constant 0.0883883461 : f32
      %19 = vector.broadcast %cst_13 : f32 to vector<16x16xf32>
      %20 = arith.mulf %18, %19 : vector<16x16xf32>
      %21 = arith.index_cast %arg1 : i32 to index
      %22 = memref.load %arg4[%21] : memref<2xf32, #tpu.memory_space<smem>>
      %c0_14 = arith.constant 0 : index
      %c0_15 = arith.constant 0 : index
      %c0_16 = arith.constant 0 : index
      %23 = vector.load %arg8[%c0_14, %c0_15, %c0_16] : memref<1x1x16xf32, #tpu.memory_space<vmem>>, vector<1x1x16xf32>
      %24 = vector.shape_cast %23 : vector<1x1x16xf32> to vector<1x16xf32>
      %25 = vector.broadcast %22 : f32 to vector<1x16xf32>
      %26 = arith.mulf %25, %24 : vector<1x16xf32>
      %c0_17 = arith.constant 0 : index
      %c0_18 = arith.constant 0 : index
      %c0_19 = arith.constant 0 : index
      %27 = vector.load %arg9[%c0_17, %c0_18, %c0_19] : memref<1x1x16xf32, #tpu.memory_space<vmem>>, vector<1x1x16xf32>
      %28 = vector.shape_cast %27 : vector<1x1x16xf32> to vector<1x16xf32>
      %29 = arith.addf %26, %28 : vector<1x16xf32>
      %30 = vector.broadcast %29 : vector<1x16xf32> to vector<16x16xf32>
      %31 = arith.addf %20, %30 : vector<16x16xf32>
      %c16_i32_20 = arith.constant 16 : i32
      %32 = arith.muli %arg2, %c16_i32_20 : i32
      %33 = tpu.iota {dimensions = array<i32: 0>} : vector<16x16xi32>
      %34 = vector.broadcast %32 : i32 to vector<16x16xi32>
      %35 = arith.addi %34, %33 : vector<16x16xi32>
      %c16_i32_21 = arith.constant 16 : i32
      %36 = arith.muli %arg3, %c16_i32_21 : i32
      %37 = tpu.iota {dimensions = array<i32: 1>} : vector<16x16xi32>
      %38 = vector.broadcast %36 : i32 to vector<16x16xi32>
      %39 = arith.addi %38, %37 : vector<16x16xi32>
      %40 = arith.cmpi sgt, %39, %35 : vector<16x16xi32>
      %cst_22 = arith.constant 1.000000e+04 : f32
      %41 = vector.broadcast %cst_22 : f32 to vector<16x16xf32>
      %42 = arith.subf %31, %41 : vector<16x16xf32>
      %43 = arith.select %40, %42, %31 : vector<16x16xi1>, vector<16x16xf32>
      %c0_23 = arith.constant 0 : index
      %c0_24 = arith.constant 0 : index
      %44 = vector.load %arg11[%c0_23, %c0_24] : memref<16x1xf32, #tpu.memory_space<vmem>>, vector<16x1xf32>
      %cst_25 = arith.constant dense<0xFF800000> : vector<16xf32>
      %45 = vector.multi_reduction <maximumf>, %43, %cst_25 [1] : vector<16x16xf32> to vector<16xf32>
      %46 = vector.shape_cast %45 : vector<16xf32> to vector<16x1xf32>
      %47 = arith.maximumf %44, %46 : vector<16x1xf32>
      %48 = arith.subf %44, %47 : vector<16x1xf32>
      %49 = math.exp %48 : vector<16x1xf32>
      %50 = vector.broadcast %47 : vector<16x1xf32> to vector<16x16xf32>
      %51 = arith.subf %43, %50 : vector<16x16xf32>
      %52 = math.exp %51 : vector<16x16xf32>
      %c0_26 = arith.constant 0 : index
      %c0_27 = arith.constant 0 : index
      %53 = vector.load %arg12[%c0_26, %c0_27] : memref<16x1xf32, #tpu.memory_space<vmem>>, vector<16x1xf32>
      %54 = arith.mulf %49, %53 : vector<16x1xf32>
      %cst_28 = arith.constant dense<0.000000e+00> : vector<16xf32>
      %55 = vector.multi_reduction <add>, %52, %cst_28 [1] : vector<16x16xf32> to vector<16xf32>
      %56 = vector.shape_cast %55 : vector<16xf32> to vector<16x1xf32>
      %57 = arith.addf %54, %56 : vector<16x1xf32>
      %c0_29 = arith.constant 0 : index
      %c0_30 = arith.constant 0 : index
      %58 = vector.load %arg12[%c0_29, %c0_30] : memref<16x1xf32, #tpu.memory_space<vmem>>, vector<16x1xf32>
      tpu.vector_store %arg12[%c0_29, %c0_30], %57 {strides = array<i32>} : memref<16x1xf32, #tpu.memory_space<vmem>>, vector<16x1xf32>,
      %c0_31 = arith.constant 0 : index
      %c0_32 = arith.constant 0 : index
      %59 = vector.load %arg13[%c0_31, %c0_32] : memref<16x128xf32, #tpu.memory_space<vmem>>, vector<16x128xf32>
      %60 = vector.broadcast %49 : vector<16x1xf32> to vector<16x128xf32>
      %61 = arith.mulf %60, %59 : vector<16x128xf32>
      %62 = arith.truncf %52 : vector<16x16xf32> to vector<16x16xbf16>
      %cst_33 = arith.constant dense<0.000000e+00> : vector<16x128xf32>
      %63 = tpu.matmul %62, %17, %cst_33 {dimension_numbers = #tpu.dot_dimension_numbers<[1], [0], [0], [1], [0, 0, 1, 1], [], []>} : vector<16x16xbf16>, vector<16x128xbf16>, vector<16x128xf32> -> vector<16x128xf32>
      %64 = arith.addf %61, %63 : vector<16x128xf32>
      %c0_34 = arith.constant 0 : index
      %c0_35 = arith.constant 0 : index
      %65 = vector.load %arg13[%c0_34, %c0_35] : memref<16x128xf32, #tpu.memory_space<vmem>>, vector<16x128xf32>
      tpu.vector_store %arg13[%c0_34, %c0_35], %64 {strides = array<i32>} : memref<16x128xf32, #tpu.memory_space<vmem>>, vector<16x128xf32>,
      %c0_36 = arith.constant 0 : index
      %c0_37 = arith.constant 0 : index
      %66 = vector.load %arg11[%c0_36, %c0_37] : memref<16x1xf32, #tpu.memory_space<vmem>>, vector<16x1xf32>
      tpu.vector_store %arg11[%c0_36, %c0_37], %47 {strides = array<i32>} : memref<16x1xf32, #tpu.memory_space<vmem>>, vector<16x1xf32>,
    } else {
    }
    %c0_i32_3 = arith.constant 0 : i32
    %9 = arith.cmpi eq, %arg3, %c0_i32_3 : i32
    %10 = arith.extui %9 : i1 to i32
    %c0_i32_4 = arith.constant 0 : i32
    %11 = arith.cmpi ne, %10, %c0_i32_4 : i32
    scf.if %11 {
      %c0 = arith.constant 0 : index
      %c0_5 = arith.constant 0 : index
      %12 = vector.load %arg13[%c0, %c0_5] : memref<16x128xf32, #tpu.memory_space<vmem>>, vector<16x128xf32>
      %c0_6 = arith.constant 0 : index
      %c0_7 = arith.constant 0 : index
      %13 = vector.load %arg12[%c0_6, %c0_7] : memref<16x1xf32, #tpu.memory_space<vmem>>, vector<16x1xf32>
      %14 = tpu.reciprocal %13 {approx = true} : vector<16x1xf32> -> vector<16x1xf32>
      %15 = vector.broadcast %14 : vector<16x1xf32> to vector<16x128xf32>
      %16 = arith.mulf %12, %15 : vector<16x128xf32>
      %17 = arith.truncf %16 : vector<16x128xf32> to vector<16x128xbf16>
      %c0_8 = arith.constant 0 : index
      %c0_9 = arith.constant 0 : index
      %c0_10 = arith.constant 0 : index
      %18 = vector.load %arg10[%c0_8, %c0_9, %c0_10] : memref<1x16x128xbf16, #tpu.memory_space<vmem>>, vector<1x16x128xbf16>
      %19 = vector.shape_cast %18 : vector<1x16x128xbf16> to vector<16x128xbf16>
      %20 = vector.shape_cast %17 : vector<16x128xbf16> to vector<1x16x128xbf16>
      tpu.vector_store %arg10[%c0_8, %c0_9, %c0_10], %20 {strides = array<i32>} : memref<1x16x128xbf16, #tpu.memory_space<vmem>>, vector<1x16x128xbf16>,
    } else {
    }
    return
  }
  func.func @transform_0(%arg0: i32, %arg1: i32, %arg2: i32, %arg3: i32) -> i32 {
    %c0_i32 = arith.constant 0 : i32
    %c0_i32_0 = arith.constant 0 : i32
    return %c0_i32 : i32
  }
  func.func @transform_1(%arg0: i32, %arg1: i32, %arg2: i32, %arg3: i32) -> (i32, i32, i32) {
    %c3_i32 = arith.constant 3 : i32
    %0 = arith.muli %c3_i32, %arg1 : i32
    %c0_i32 = arith.constant 0 : i32
    return %arg0, %arg2, %0 : i32, i32, i32
  }
  func.func @transform_2(%arg0: i32, %arg1: i32, %arg2: i32, %arg3: i32) -> (i32, i32, i32) {
    %c3_i32 = arith.constant 3 : i32
    %0 = arith.muli %c3_i32, %arg1 : i32
    %c1_i32 = arith.constant 1 : i32
    %1 = arith.addi %0, %c1_i32 : i32
    %c0_i32 = arith.constant 0 : i32
    return %arg0, %arg3, %1 : i32, i32, i32
  }
  func.func @transform_3(%arg0: i32, %arg1: i32, %arg2: i32, %arg3: i32) -> (i32, i32, i32) {
    %c3_i32 = arith.constant 3 : i32
    %0 = arith.muli %c3_i32, %arg1 : i32
    %c2_i32 = arith.constant 2 : i32
    %1 = arith.addi %0, %c2_i32 : i32
    %c0_i32 = arith.constant 0 : i32
    return %arg0, %arg3, %1 : i32, i32, i32
  }
  func.func @transform_4(%arg0: i32, %arg1: i32, %arg2: i32, %arg3: i32) -> (i32, i32, i32) {
    %c0_i32 = arith.constant 0 : i32
    %c0_i32_0 = arith.constant 0 : i32
    return %arg0, %c0_i32, %arg3 : i32, i32, i32
  }
  func.func @transform_5(%arg0: i32, %arg1: i32, %arg2: i32, %arg3: i32) -> (i32, i32, i32) {
    %c0_i32 = arith.constant 0 : i32
    %c0_i32_0 = arith.constant 0 : i32
    return %arg0, %c0_i32, %arg3 : i32, i32, i32
  }
  func.func @transform_6(%arg0: i32, %arg1: i32, %arg2: i32, %arg3: i32) -> (i32, i32, i32) {
    %c0_i32 = arith.constant 0 : i32
    return %arg0, %arg2, %arg1 : i32, i32, i32
  }
}

module attributes {stable_mosaic.version = 11 : i64} {
  func.func @_layernorm_kernel(%arg0: i32, %arg1: memref<32x256xf32, #tpu.memory_space<vmem>>, %arg2: memref<1x256xf32, #tpu.memory_space<vmem>>, %arg3: memref<1x256xf32, #tpu.memory_space<vmem>>, %arg4: memref<32x256xbf16, #tpu.memory_space<vmem>>) attributes {dimension_semantics = [#tpu.dimension_semantics<parallel>], iteration_bounds = array<i64: 1>, scalar_prefetch = 0 : i64, scratch_operands = 0 : i64, tpu.core_type = #tpu.core_type<tc>, window_params = [{transform_indices = @transform_0, window_bounds = array<i64: 32, 256>}, {pipeline_mode = #tpu.pipeline_mode<synchronous>, transform_indices = @transform_1, window_bounds = array<i64: 1, 256>}, {pipeline_mode = #tpu.pipeline_mode<synchronous>, transform_indices = @transform_2, window_bounds = array<i64: 1, 256>}, {transform_indices = @transform_3, window_bounds = array<i64: 32, 256>}]} {
    %c0 = arith.constant 0 : index
    %c0_0 = arith.constant 0 : index
    %0 = vector.load %arg1[%c0, %c0_0] : memref<32x256xf32, #tpu.memory_space<vmem>>, vector<32x256xf32>
    %cst = arith.constant dense<0.000000e+00> : vector<32xf32>
    %1 = vector.multi_reduction <add>, %0, %cst [1] : vector<32x256xf32> to vector<32xf32>
    %2 = vector.shape_cast %1 : vector<32xf32> to vector<32x1xf32>
    %cst_1 = arith.constant 2.560000e+02 : f32
    %3 = vector.broadcast %cst_1 : f32 to vector<32x1xf32>
    %4 = arith.divf %2, %3 : vector<32x1xf32>
    %5 = vector.broadcast %4 : vector<32x1xf32> to vector<32x256xf32>
    %6 = arith.subf %0, %5 : vector<32x256xf32>
    %7 = arith.mulf %6, %6 : vector<32x256xf32>
    %cst_2 = arith.constant dense<0.000000e+00> : vector<32xf32>
    %8 = vector.multi_reduction <add>, %7, %cst_2 [1] : vector<32x256xf32> to vector<32xf32>
    %9 = vector.shape_cast %8 : vector<32xf32> to vector<32x1xf32>
    %cst_3 = arith.constant 2.560000e+02 : f32
    %10 = vector.broadcast %cst_3 : f32 to vector<32x1xf32>
    %11 = arith.divf %9, %10 : vector<32x1xf32>
    %12 = vector.broadcast %4 : vector<32x1xf32> to vector<32x256xf32>
    %13 = arith.subf %0, %12 : vector<32x256xf32>
    %cst_4 = arith.constant 9.99999974E-6 : f32
    %14 = vector.broadcast %cst_4 : f32 to vector<32x1xf32>
    %15 = arith.addf %11, %14 : vector<32x1xf32>
    %16 = math.rsqrt %15 : vector<32x1xf32>
    %17 = vector.broadcast %16 : vector<32x1xf32> to vector<32x256xf32>
    %18 = arith.mulf %13, %17 : vector<32x256xf32>
    %c0_5 = arith.constant 0 : index
    %c0_6 = arith.constant 0 : index
    %19 = vector.load %arg2[%c0_5, %c0_6] : memref<1x256xf32, #tpu.memory_space<vmem>>, vector<1x256xf32>
    %20 = vector.broadcast %19 : vector<1x256xf32> to vector<32x256xf32>
    %21 = arith.mulf %18, %20 : vector<32x256xf32>
    %c0_7 = arith.constant 0 : index
    %c0_8 = arith.constant 0 : index
    %22 = vector.load %arg3[%c0_7, %c0_8] : memref<1x256xf32, #tpu.memory_space<vmem>>, vector<1x256xf32>
    %23 = vector.broadcast %22 : vector<1x256xf32> to vector<32x256xf32>
    %24 = arith.addf %21, %23 : vector<32x256xf32>
    %25 = arith.truncf %24 : vector<32x256xf32> to vector<32x256xbf16>
    %c0_9 = arith.constant 0 : index
    %c0_10 = arith.constant 0 : index
    %26 = vector.load %arg4[%c0_9, %c0_10] : memref<32x256xbf16, #tpu.memory_space<vmem>>, vector<32x256xbf16>
    tpu.vector_store %arg4[%c0_9, %c0_10], %25 {strides = array<i32>} : memref<32x256xbf16, #tpu.memory_space<vmem>>, vector<32x256xbf16>,
    return
  }
  func.func @transform_0(%arg0: i32) -> (i32, i32) {
    %c0_i32 = arith.constant 0 : i32
    %c0_i32_0 = arith.constant 0 : i32
    return %arg0, %c0_i32 : i32, i32
  }
  func.func @transform_1(%arg0: i32) -> (i32, i32) {
    %c0_i32 = arith.constant 0 : i32
    %c0_i32_0 = arith.constant 0 : i32
    %c0_i32_1 = arith.constant 0 : i32
    return %c0_i32, %c0_i32_0 : i32, i32
  }
  func.func @transform_2(%arg0: i32) -> (i32, i32) {
    %c0_i32 = arith.constant 0 : i32
    %c0_i32_0 = arith.constant 0 : i32
    %c0_i32_1 = arith.constant 0 : i32
    return %c0_i32, %c0_i32_0 : i32, i32
  }
  func.func @transform_3(%arg0: i32) -> (i32, i32) {
    %c0_i32 = arith.constant 0 : i32
    %c0_i32_0 = arith.constant 0 : i32
    return %arg0, %c0_i32 : i32, i32
  }
}

module attributes {stable_mosaic.version = 11 : i64} {
  func.func @kernel(%arg0: i32, %arg1: i32, %arg2: i32, %arg3: memref<32x256xbf16, #tpu.memory_space<vmem>>, %arg4: memref<256x768xbf16, #tpu.memory_space<vmem>>, %arg5: memref<1x768xf32, #tpu.memory_space<vmem>>, %arg6: memref<32x768xbf16, #tpu.memory_space<vmem>>, %arg7: memref<32x768xf32, #tpu.memory_space<vmem>>) attributes {dimension_semantics = [#tpu.dimension_semantics<parallel>, #tpu.dimension_semantics<parallel>, #tpu.dimension_semantics<arbitrary>], iteration_bounds = array<i64: 1, 1, 1>, scalar_prefetch = 0 : i64, scratch_operands = 1 : i64, tpu.core_type = #tpu.core_type<tc>, window_params = [{transform_indices = @transform_0, window_bounds = array<i64: 32, 256>}, {transform_indices = @transform_1, window_bounds = array<i64: 256, 768>}, {transform_indices = @transform_2, window_bounds = array<i64: 1, 768>}, {transform_indices = @transform_3, window_bounds = array<i64: 32, 768>}]} {
    %c0_i32 = arith.constant 0 : i32
    %0 = arith.cmpi eq, %arg2, %c0_i32 : i32
    %1 = arith.extui %0 : i1 to i32
    %c0_i32_0 = arith.constant 0 : i32
    %2 = arith.cmpi ne, %1, %c0_i32_0 : i32
    scf.if %2 {
      %cst_10 = arith.constant 0.000000e+00 : f32
      %12 = vector.broadcast %cst_10 : f32 to vector<32x768xf32>
      %c0_11 = arith.constant 0 : index
      %c0_12 = arith.constant 0 : index
      %13 = vector.load %arg7[%c0_11, %c0_12] : memref<32x768xf32, #tpu.memory_space<vmem>>, vector<32x768xf32>
      tpu.vector_store %arg7[%c0_11, %c0_12], %12 {strides = array<i32>} : memref<32x768xf32, #tpu.memory_space<vmem>>, vector<32x768xf32>,
    } else {
    }
    %c0 = arith.constant 0 : index
    %c0_1 = arith.constant 0 : index
    %3 = vector.load %arg7[%c0, %c0_1] : memref<32x768xf32, #tpu.memory_space<vmem>>, vector<32x768xf32>
    %c0_2 = arith.constant 0 : index
    %c0_3 = arith.constant 0 : index
    %4 = vector.load %arg3[%c0_2, %c0_3] : memref<32x256xbf16, #tpu.memory_space<vmem>>, vector<32x256xbf16>
    %c0_4 = arith.constant 0 : index
    %c0_5 = arith.constant 0 : index
    %5 = vector.load %arg4[%c0_4, %c0_5] : memref<256x768xbf16, #tpu.memory_space<vmem>>, vector<256x768xbf16>
    %cst = arith.constant dense<0.000000e+00> : vector<32x768xf32>
    %6 = tpu.matmul %4, %5, %cst {dimension_numbers = #tpu.dot_dimension_numbers<[1], [0], [0], [1], [0, 0, 1, 1], [], []>} : vector<32x256xbf16>, vector<256x768xbf16>, vector<32x768xf32> -> vector<32x768xf32>
    %7 = arith.addf %3, %6 : vector<32x768xf32>
    %c0_6 = arith.constant 0 : index
    %c0_7 = arith.constant 0 : index
    %8 = vector.load %arg7[%c0_6, %c0_7] : memref<32x768xf32, #tpu.memory_space<vmem>>, vector<32x768xf32>
    tpu.vector_store %arg7[%c0_6, %c0_7], %7 {strides = array<i32>} : memref<32x768xf32, #tpu.memory_space<vmem>>, vector<32x768xf32>,
    %c0_i32_8 = arith.constant 0 : i32
    %9 = arith.cmpi eq, %arg2, %c0_i32_8 : i32
    %10 = arith.extui %9 : i1 to i32
    %c0_i32_9 = arith.constant 0 : i32
    %11 = arith.cmpi ne, %10, %c0_i32_9 : i32
    scf.if %11 {
      %c0_10 = arith.constant 0 : index
      %c0_11 = arith.constant 0 : index
      %12 = vector.load %arg7[%c0_10, %c0_11] : memref<32x768xf32, #tpu.memory_space<vmem>>, vector<32x768xf32>
      %c0_12 = arith.constant 0 : index
      %c0_13 = arith.constant 0 : index
      %13 = vector.load %arg5[%c0_12, %c0_13] : memref<1x768xf32, #tpu.memory_space<vmem>>, vector<1x768xf32>
      %14 = vector.broadcast %13 : vector<1x768xf32> to vector<32x768xf32>
      %15 = arith.addf %12, %14 : vector<32x768xf32>
      %16 = arith.truncf %15 : vector<32x768xf32> to vector<32x768xbf16>
      %c0_14 = arith.constant 0 : index
      %c0_15 = arith.constant 0 : index
      %17 = vector.load %arg6[%c0_14, %c0_15] : memref<32x768xbf16, #tpu.memory_space<vmem>>, vector<32x768xbf16>
      tpu.vector_store %arg6[%c0_14, %c0_15], %16 {strides = array<i32>} : memref<32x768xbf16, #tpu.memory_space<vmem>>, vector<32x768xbf16>,
    } else {
    }
    return
  }
  func.func @transform_0(%arg0: i32, %arg1: i32, %arg2: i32) -> (i32, i32) {
    %c0_i32 = arith.constant 0 : i32
    return %arg0, %arg2 : i32, i32
  }
  func.func @transform_1(%arg0: i32, %arg1: i32, %arg2: i32) -> (i32, i32) {
    %c0_i32 = arith.constant 0 : i32
    return %arg2, %arg1 : i32, i32
  }
  func.func @transform_2(%arg0: i32, %arg1: i32, %arg2: i32) -> (i32, i32) {
    %c0_i32 = arith.constant 0 : i32
    %c0_i32_0 = arith.constant 0 : i32
    return %c0_i32, %arg1 : i32, i32
  }
  func.func @transform_3(%arg0: i32, %arg1: i32, %arg2: i32) -> (i32, i32) {
    %c0_i32 = arith.constant 0 : i32
    return %arg0, %arg1 : i32, i32
  }
}

module attributes {stable_mosaic.version = 11 : i64} {
  func.func @kernel(%arg0: i32, %arg1: i32, %arg2: i32, %arg3: memref<32x256xbf16, #tpu.memory_space<vmem>>, %arg4: memref<256x256xbf16, #tpu.memory_space<vmem>>, %arg5: memref<1x256xf32, #tpu.memory_space<vmem>>, %arg6: memref<32x256xbf16, #tpu.memory_space<vmem>>, %arg7: memref<32x256xbf16, #tpu.memory_space<vmem>>, %arg8: memref<32x256xf32, #tpu.memory_space<vmem>>) attributes {dimension_semantics = [#tpu.dimension_semantics<parallel>, #tpu.dimension_semantics<parallel>, #tpu.dimension_semantics<arbitrary>], iteration_bounds = array<i64: 1, 1, 1>, scalar_prefetch = 0 : i64, scratch_operands = 1 : i64, tpu.core_type = #tpu.core_type<tc>, window_params = [{transform_indices = @transform_0, window_bounds = array<i64: 32, 256>}, {transform_indices = @transform_1, window_bounds = array<i64: 256, 256>}, {transform_indices = @transform_2, window_bounds = array<i64: 1, 256>}, {transform_indices = @transform_3, window_bounds = array<i64: 32, 256>}, {transform_indices = @transform_4, window_bounds = array<i64: 32, 256>}]} {
    %c0_i32 = arith.constant 0 : i32
    %0 = arith.cmpi eq, %arg2, %c0_i32 : i32
    %1 = arith.extui %0 : i1 to i32
    %c0_i32_0 = arith.constant 0 : i32
    %2 = arith.cmpi ne, %1, %c0_i32_0 : i32
    scf.if %2 {
      %cst_10 = arith.constant 0.000000e+00 : f32
      %12 = vector.broadcast %cst_10 : f32 to vector<32x256xf32>
      %c0_11 = arith.constant 0 : index
      %c0_12 = arith.constant 0 : index
      %13 = vector.load %arg8[%c0_11, %c0_12] : memref<32x256xf32, #tpu.memory_space<vmem>>, vector<32x256xf32>
      tpu.vector_store %arg8[%c0_11, %c0_12], %12 {strides = array<i32>} : memref<32x256xf32, #tpu.memory_space<vmem>>, vector<32x256xf32>,
    } else {
    }
    %c0 = arith.constant 0 : index
    %c0_1 = arith.constant 0 : index
    %3 = vector.load %arg8[%c0, %c0_1] : memref<32x256xf32, #tpu.memory_space<vmem>>, vector<32x256xf32>
    %c0_2 = arith.constant 0 : index
    %c0_3 = arith.constant 0 : index
    %4 = vector.load %arg3[%c0_2, %c0_3] : memref<32x256xbf16, #tpu.memory_space<vmem>>, vector<32x256xbf16>
    %c0_4 = arith.constant 0 : index
    %c0_5 = arith.constant 0 : index
    %5 = vector.load %arg4[%c0_4, %c0_5] : memref<256x256xbf16, #tpu.memory_space<vmem>>, vector<256x256xbf16>
    %cst = arith.constant dense<0.000000e+00> : vector<32x256xf32>
    %6 = tpu.matmul %4, %5, %cst {dimension_numbers = #tpu.dot_dimension_numbers<[1], [0], [0], [1], [0, 0, 1, 1], [], []>} : vector<32x256xbf16>, vector<256x256xbf16>, vector<32x256xf32> -> vector<32x256xf32>
    %7 = arith.addf %3, %6 : vector<32x256xf32>
    %c0_6 = arith.constant 0 : index
    %c0_7 = arith.constant 0 : index
    %8 = vector.load %arg8[%c0_6, %c0_7] : memref<32x256xf32, #tpu.memory_space<vmem>>, vector<32x256xf32>
    tpu.vector_store %arg8[%c0_6, %c0_7], %7 {strides = array<i32>} : memref<32x256xf32, #tpu.memory_space<vmem>>, vector<32x256xf32>,
    %c0_i32_8 = arith.constant 0 : i32
    %9 = arith.cmpi eq, %arg2, %c0_i32_8 : i32
    %10 = arith.extui %9 : i1 to i32
    %c0_i32_9 = arith.constant 0 : i32
    %11 = arith.cmpi ne, %10, %c0_i32_9 : i32
    scf.if %11 {
      %c0_10 = arith.constant 0 : index
      %c0_11 = arith.constant 0 : index
      %12 = vector.load %arg8[%c0_10, %c0_11] : memref<32x256xf32, #tpu.memory_space<vmem>>, vector<32x256xf32>
      %c0_12 = arith.constant 0 : index
      %c0_13 = arith.constant 0 : index
      %13 = vector.load %arg5[%c0_12, %c0_13] : memref<1x256xf32, #tpu.memory_space<vmem>>, vector<1x256xf32>
      %14 = vector.broadcast %13 : vector<1x256xf32> to vector<32x256xf32>
      %15 = arith.addf %12, %14 : vector<32x256xf32>
      %c0_14 = arith.constant 0 : index
      %c0_15 = arith.constant 0 : index
      %16 = vector.load %arg6[%c0_14, %c0_15] : memref<32x256xbf16, #tpu.memory_space<vmem>>, vector<32x256xbf16>
      %17 = arith.extf %16 : vector<32x256xbf16> to vector<32x256xf32>
      %18 = arith.addf %15, %17 : vector<32x256xf32>
      %19 = arith.truncf %18 : vector<32x256xf32> to vector<32x256xbf16>
      %c0_16 = arith.constant 0 : index
      %c0_17 = arith.constant 0 : index
      %20 = vector.load %arg7[%c0_16, %c0_17] : memref<32x256xbf16, #tpu.memory_space<vmem>>, vector<32x256xbf16>
      tpu.vector_store %arg7[%c0_16, %c0_17], %19 {strides = array<i32>} : memref<32x256xbf16, #tpu.memory_space<vmem>>, vector<32x256xbf16>,
    } else {
    }
    return
  }
  func.func @transform_0(%arg0: i32, %arg1: i32, %arg2: i32) -> (i32, i32) {
    %c0_i32 = arith.constant 0 : i32
    return %arg0, %arg2 : i32, i32
  }
  func.func @transform_1(%arg0: i32, %arg1: i32, %arg2: i32) -> (i32, i32) {
    %c0_i32 = arith.constant 0 : i32
    return %arg2, %arg1 : i32, i32
  }
  func.func @transform_2(%arg0: i32, %arg1: i32, %arg2: i32) -> (i32, i32) {
    %c0_i32 = arith.constant 0 : i32
    %c0_i32_0 = arith.constant 0 : i32
    return %c0_i32, %arg1 : i32, i32
  }
  func.func @transform_3(%arg0: i32, %arg1: i32, %arg2: i32) -> (i32, i32) {
    %c0_i32 = arith.constant 0 : i32
    return %arg0, %arg1 : i32, i32
  }
  func.func @transform_4(%arg0: i32, %arg1: i32, %arg2: i32) -> (i32, i32) {
    %c0_i32 = arith.constant 0 : i32
    return %arg0, %arg1 : i32, i32
  }
}

module attributes {stable_mosaic.version = 11 : i64} {
  func.func @kernel(%arg0: i32, %arg1: i32, %arg2: i32, %arg3: memref<32x256xbf16, #tpu.memory_space<vmem>>, %arg4: memref<256x1024xbf16, #tpu.memory_space<vmem>>, %arg5: memref<1x1024xf32, #tpu.memory_space<vmem>>, %arg6: memref<32x1024xbf16, #tpu.memory_space<vmem>>, %arg7: memref<32x1024xf32, #tpu.memory_space<vmem>>) attributes {dimension_semantics = [#tpu.dimension_semantics<parallel>, #tpu.dimension_semantics<parallel>, #tpu.dimension_semantics<arbitrary>], iteration_bounds = array<i64: 1, 1, 1>, scalar_prefetch = 0 : i64, scratch_operands = 1 : i64, tpu.core_type = #tpu.core_type<tc>, window_params = [{transform_indices = @transform_0, window_bounds = array<i64: 32, 256>}, {transform_indices = @transform_1, window_bounds = array<i64: 256, 1024>}, {transform_indices = @transform_2, window_bounds = array<i64: 1, 1024>}, {transform_indices = @transform_3, window_bounds = array<i64: 32, 1024>}]} {
    %c0_i32 = arith.constant 0 : i32
    %0 = arith.cmpi eq, %arg2, %c0_i32 : i32
    %1 = arith.extui %0 : i1 to i32
    %c0_i32_0 = arith.constant 0 : i32
    %2 = arith.cmpi ne, %1, %c0_i32_0 : i32
    scf.if %2 {
      %cst_10 = arith.constant 0.000000e+00 : f32
      %12 = vector.broadcast %cst_10 : f32 to vector<32x1024xf32>
      %c0_11 = arith.constant 0 : index
      %c0_12 = arith.constant 0 : index
      %13 = vector.load %arg7[%c0_11, %c0_12] : memref<32x1024xf32, #tpu.memory_space<vmem>>, vector<32x1024xf32>
      tpu.vector_store %arg7[%c0_11, %c0_12], %12 {strides = array<i32>} : memref<32x1024xf32, #tpu.memory_space<vmem>>, vector<32x1024xf32>,
    } else {
    }
    %c0 = arith.constant 0 : index
    %c0_1 = arith.constant 0 : index
    %3 = vector.load %arg7[%c0, %c0_1] : memref<32x1024xf32, #tpu.memory_space<vmem>>, vector<32x1024xf32>
    %c0_2 = arith.constant 0 : index
    %c0_3 = arith.constant 0 : index
    %4 = vector.load %arg3[%c0_2, %c0_3] : memref<32x256xbf16, #tpu.memory_space<vmem>>, vector<32x256xbf16>
    %c0_4 = arith.constant 0 : index
    %c0_5 = arith.constant 0 : index
    %5 = vector.load %arg4[%c0_4, %c0_5] : memref<256x1024xbf16, #tpu.memory_space<vmem>>, vector<256x1024xbf16>
    %cst = arith.constant dense<0.000000e+00> : vector<32x1024xf32>
    %6 = tpu.matmul %4, %5, %cst {dimension_numbers = #tpu.dot_dimension_numbers<[1], [0], [0], [1], [0, 0, 1, 1], [], []>} : vector<32x256xbf16>, vector<256x1024xbf16>, vector<32x1024xf32> -> vector<32x1024xf32>
    %7 = arith.addf %3, %6 : vector<32x1024xf32>
    %c0_6 = arith.constant 0 : index
    %c0_7 = arith.constant 0 : index
    %8 = vector.load %arg7[%c0_6, %c0_7] : memref<32x1024xf32, #tpu.memory_space<vmem>>, vector<32x1024xf32>
    tpu.vector_store %arg7[%c0_6, %c0_7], %7 {strides = array<i32>} : memref<32x1024xf32, #tpu.memory_space<vmem>>, vector<32x1024xf32>,
    %c0_i32_8 = arith.constant 0 : i32
    %9 = arith.cmpi eq, %arg2, %c0_i32_8 : i32
    %10 = arith.extui %9 : i1 to i32
    %c0_i32_9 = arith.constant 0 : i32
    %11 = arith.cmpi ne, %10, %c0_i32_9 : i32
    scf.if %11 {
      %c0_10 = arith.constant 0 : index
      %c0_11 = arith.constant 0 : index
      %12 = vector.load %arg7[%c0_10, %c0_11] : memref<32x1024xf32, #tpu.memory_space<vmem>>, vector<32x1024xf32>
      %c0_12 = arith.constant 0 : index
      %c0_13 = arith.constant 0 : index
      %13 = vector.load %arg5[%c0_12, %c0_13] : memref<1x1024xf32, #tpu.memory_space<vmem>>, vector<1x1024xf32>
      %14 = vector.broadcast %13 : vector<1x1024xf32> to vector<32x1024xf32>
      %15 = arith.addf %12, %14 : vector<32x1024xf32>
      %cst_14 = arith.constant 5.000000e-01 : f32
      %16 = vector.broadcast %cst_14 : f32 to vector<32x1024xf32>
      %17 = arith.mulf %15, %16 : vector<32x1024xf32>
      %cst_15 = arith.constant 0.797884583 : f32
      %18 = vector.broadcast %cst_15 : f32 to vector<32x1024xf32>
      %19 = arith.mulf %18, %15 : vector<32x1024xf32>
      %cst_16 = arith.constant 4.471500e-02 : f32
      %20 = vector.broadcast %cst_16 : f32 to vector<32x1024xf32>
      %21 = arith.mulf %20, %15 : vector<32x1024xf32>
      %22 = arith.mulf %21, %15 : vector<32x1024xf32>
      %cst_17 = arith.constant 1.000000e+00 : f32
      %23 = vector.broadcast %cst_17 : f32 to vector<32x1024xf32>
      %24 = arith.addf %23, %22 : vector<32x1024xf32>
      %25 = arith.mulf %19, %24 : vector<32x1024xf32>
      %26 = math.tanh %25 : vector<32x1024xf32>
      %cst_18 = arith.constant 1.000000e+00 : f32
      %27 = vector.broadcast %cst_18 : f32 to vector<32x1024xf32>
      %28 = arith.addf %27, %26 : vector<32x1024xf32>
      %29 = arith.mulf %17, %28 : vector<32x1024xf32>
      %30 = arith.truncf %29 : vector<32x1024xf32> to vector<32x1024xbf16>
      %c0_19 = arith.constant 0 : index
      %c0_20 = arith.constant 0 : index
      %31 = vector.load %arg6[%c0_19, %c0_20] : memref<32x1024xbf16, #tpu.memory_space<vmem>>, vector<32x1024xbf16>
      tpu.vector_store %arg6[%c0_19, %c0_20], %30 {strides = array<i32>} : memref<32x1024xbf16, #tpu.memory_space<vmem>>, vector<32x1024xbf16>,
    } else {
    }
    return
  }
  func.func @transform_0(%arg0: i32, %arg1: i32, %arg2: i32) -> (i32, i32) {
    %c0_i32 = arith.constant 0 : i32
    return %arg0, %arg2 : i32, i32
  }
  func.func @transform_1(%arg0: i32, %arg1: i32, %arg2: i32) -> (i32, i32) {
    %c0_i32 = arith.constant 0 : i32
    return %arg2, %arg1 : i32, i32
  }
  func.func @transform_2(%arg0: i32, %arg1: i32, %arg2: i32) -> (i32, i32) {
    %c0_i32 = arith.constant 0 : i32
    %c0_i32_0 = arith.constant 0 : i32
    return %c0_i32, %arg1 : i32, i32
  }
  func.func @transform_3(%arg0: i32, %arg1: i32, %arg2: i32) -> (i32, i32) {
    %c0_i32 = arith.constant 0 : i32
    return %arg0, %arg1 : i32, i32
  }
}

module attributes {stable_mosaic.version = 11 : i64} {
  func.func @kernel(%arg0: i32, %arg1: i32, %arg2: i32, %arg3: memref<32x512xbf16, #tpu.memory_space<vmem>>, %arg4: memref<512x256xbf16, #tpu.memory_space<vmem>>, %arg5: memref<1x256xf32, #tpu.memory_space<vmem>>, %arg6: memref<32x256xbf16, #tpu.memory_space<vmem>>, %arg7: memref<32x256xbf16, #tpu.memory_space<vmem>>, %arg8: memref<32x256xf32, #tpu.memory_space<vmem>>) attributes {dimension_semantics = [#tpu.dimension_semantics<parallel>, #tpu.dimension_semantics<parallel>, #tpu.dimension_semantics<arbitrary>], iteration_bounds = array<i64: 1, 1, 2>, scalar_prefetch = 0 : i64, scratch_operands = 1 : i64, tpu.core_type = #tpu.core_type<tc>, window_params = [{transform_indices = @transform_0, window_bounds = array<i64: 32, 512>}, {transform_indices = @transform_1, window_bounds = array<i64: 512, 256>}, {transform_indices = @transform_2, window_bounds = array<i64: 1, 256>}, {transform_indices = @transform_3, window_bounds = array<i64: 32, 256>}, {transform_indices = @transform_4, window_bounds = array<i64: 32, 256>}]} {
    %c0_i32 = arith.constant 0 : i32
    %0 = arith.cmpi eq, %arg2, %c0_i32 : i32
    %1 = arith.extui %0 : i1 to i32
    %c0_i32_0 = arith.constant 0 : i32
    %2 = arith.cmpi ne, %1, %c0_i32_0 : i32
    scf.if %2 {
      %cst_9 = arith.constant 0.000000e+00 : f32
      %12 = vector.broadcast %cst_9 : f32 to vector<32x256xf32>
      %c0_10 = arith.constant 0 : index
      %c0_11 = arith.constant 0 : index
      %13 = vector.load %arg8[%c0_10, %c0_11] : memref<32x256xf32, #tpu.memory_space<vmem>>, vector<32x256xf32>
      tpu.vector_store %arg8[%c0_10, %c0_11], %12 {strides = array<i32>} : memref<32x256xf32, #tpu.memory_space<vmem>>, vector<32x256xf32>,
    } else {
    }
    %c0 = arith.constant 0 : index
    %c0_1 = arith.constant 0 : index
    %3 = vector.load %arg8[%c0, %c0_1] : memref<32x256xf32, #tpu.memory_space<vmem>>, vector<32x256xf32>
    %c0_2 = arith.constant 0 : index
    %c0_3 = arith.constant 0 : index
    %4 = vector.load %arg3[%c0_2, %c0_3] : memref<32x512xbf16, #tpu.memory_space<vmem>>, vector<32x512xbf16>
    %c0_4 = arith.constant 0 : index
    %c0_5 = arith.constant 0 : index
    %5 = vector.load %arg4[%c0_4, %c0_5] : memref<512x256xbf16, #tpu.memory_space<vmem>>, vector<512x256xbf16>
    %cst = arith.constant dense<0.000000e+00> : vector<32x256xf32>
    %6 = tpu.matmul %4, %5, %cst {dimension_numbers = #tpu.dot_dimension_numbers<[1], [0], [0], [1], [0, 0, 1, 1], [], []>} : vector<32x512xbf16>, vector<512x256xbf16>, vector<32x256xf32> -> vector<32x256xf32>
    %7 = arith.addf %3, %6 : vector<32x256xf32>
    %c0_6 = arith.constant 0 : index
    %c0_7 = arith.constant 0 : index
    %8 = vector.load %arg8[%c0_6, %c0_7] : memref<32x256xf32, #tpu.memory_space<vmem>>, vector<32x256xf32>
    tpu.vector_store %arg8[%c0_6, %c0_7], %7 {strides = array<i32>} : memref<32x256xf32, #tpu.memory_space<vmem>>, vector<32x256xf32>,
    %c1_i32 = arith.constant 1 : i32
    %9 = arith.cmpi eq, %arg2, %c1_i32 : i32
    %10 = arith.extui %9 : i1 to i32
    %c0_i32_8 = arith.constant 0 : i32
    %11 = arith.cmpi ne, %10, %c0_i32_8 : i32
    scf.if %11 {
      %c0_9 = arith.constant 0 : index
      %c0_10 = arith.constant 0 : index
      %12 = vector.load %arg8[%c0_9, %c0_10] : memref<32x256xf32, #tpu.memory_space<vmem>>, vector<32x256xf32>
      %c0_11 = arith.constant 0 : index
      %c0_12 = arith.constant 0 : index
      %13 = vector.load %arg5[%c0_11, %c0_12] : memref<1x256xf32, #tpu.memory_space<vmem>>, vector<1x256xf32>
      %14 = vector.broadcast %13 : vector<1x256xf32> to vector<32x256xf32>
      %15 = arith.addf %12, %14 : vector<32x256xf32>
      %c0_13 = arith.constant 0 : index
      %c0_14 = arith.constant 0 : index
      %16 = vector.load %arg6[%c0_13, %c0_14] : memref<32x256xbf16, #tpu.memory_space<vmem>>, vector<32x256xbf16>
      %17 = arith.extf %16 : vector<32x256xbf16> to vector<32x256xf32>
      %18 = arith.addf %15, %17 : vector<32x256xf32>
      %19 = arith.truncf %18 : vector<32x256xf32> to vector<32x256xbf16>
      %c0_15 = arith.constant 0 : index
      %c0_16 = arith.constant 0 : index
      %20 = vector.load %arg7[%c0_15, %c0_16] : memref<32x256xbf16, #tpu.memory_space<vmem>>, vector<32x256xbf16>
      tpu.vector_store %arg7[%c0_15, %c0_16], %19 {strides = array<i32>} : memref<32x256xbf16, #tpu.memory_space<vmem>>, vector<32x256xbf16>,
    } else {
    }
    return
  }
  func.func @transform_0(%arg0: i32, %arg1: i32, %arg2: i32) -> (i32, i32) {
    %c0_i32 = arith.constant 0 : i32
    return %arg0, %arg2 : i32, i32
  }
  func.func @transform_1(%arg0: i32, %arg1: i32, %arg2: i32) -> (i32, i32) {
    %c0_i32 = arith.constant 0 : i32
    return %arg2, %arg1 : i32, i32
  }
  func.func @transform_2(%arg0: i32, %arg1: i32, %arg2: i32) -> (i32, i32) {
    %c0_i32 = arith.constant 0 : i32
    %c0_i32_0 = arith.constant 0 : i32
    return %c0_i32, %arg1 : i32, i32
  }
  func.func @transform_3(%arg0: i32, %arg1: i32, %arg2: i32) -> (i32, i32) {
    %c0_i32 = arith.constant 0 : i32
    return %arg0, %arg1 : i32, i32
  }
  func.func @transform_4(%arg0: i32, %arg1: i32, %arg2: i32) -> (i32, i32) {
    %c0_i32 = arith.constant 0 : i32
    return %arg0, %arg1 : i32, i32
  }
}

module attributes {stable_mosaic.version = 11 : i64} {
  func.func @kernel(%arg0: i32, %arg1: i32, %arg2: i32, %arg3: memref<32x256xbf16, #tpu.memory_space<vmem>>, %arg4: memref<256x512xbf16, #tpu.memory_space<vmem>>, %arg5: memref<32x512xf32, #tpu.memory_space<vmem>>, %arg6: memref<32x512xf32, #tpu.memory_space<vmem>>) attributes {dimension_semantics = [#tpu.dimension_semantics<parallel>, #tpu.dimension_semantics<parallel>, #tpu.dimension_semantics<arbitrary>], iteration_bounds = array<i64: 1, 1, 1>, scalar_prefetch = 0 : i64, scratch_operands = 1 : i64, tpu.core_type = #tpu.core_type<tc>, window_params = [{transform_indices = @transform_0, window_bounds = array<i64: 32, 256>}, {transform_indices = @transform_1, window_bounds = array<i64: 256, 512>}, {transform_indices = @transform_2, window_bounds = array<i64: 32, 512>}]} {
    %c0_i32 = arith.constant 0 : i32
    %0 = arith.cmpi eq, %arg2, %c0_i32 : i32
    %1 = arith.extui %0 : i1 to i32
    %c0_i32_0 = arith.constant 0 : i32
    %2 = arith.cmpi ne, %1, %c0_i32_0 : i32
    scf.if %2 {
      %cst_10 = arith.constant 0.000000e+00 : f32
      %12 = vector.broadcast %cst_10 : f32 to vector<32x512xf32>
      %c0_11 = arith.constant 0 : index
      %c0_12 = arith.constant 0 : index
      %13 = vector.load %arg6[%c0_11, %c0_12] : memref<32x512xf32, #tpu.memory_space<vmem>>, vector<32x512xf32>
      tpu.vector_store %arg6[%c0_11, %c0_12], %12 {strides = array<i32>} : memref<32x512xf32, #tpu.memory_space<vmem>>, vector<32x512xf32>,
    } else {
    }
    %c0 = arith.constant 0 : index
    %c0_1 = arith.constant 0 : index
    %3 = vector.load %arg6[%c0, %c0_1] : memref<32x512xf32, #tpu.memory_space<vmem>>, vector<32x512xf32>
    %c0_2 = arith.constant 0 : index
    %c0_3 = arith.constant 0 : index
    %4 = vector.load %arg3[%c0_2, %c0_3] : memref<32x256xbf16, #tpu.memory_space<vmem>>, vector<32x256xbf16>
    %c0_4 = arith.constant 0 : index
    %c0_5 = arith.constant 0 : index
    %5 = vector.load %arg4[%c0_4, %c0_5] : memref<256x512xbf16, #tpu.memory_space<vmem>>, vector<256x512xbf16>
    %cst = arith.constant dense<0.000000e+00> : vector<32x512xf32>
    %6 = tpu.matmul %4, %5, %cst {dimension_numbers = #tpu.dot_dimension_numbers<[1], [0], [0], [1], [0, 0, 1, 1], [], []>} : vector<32x256xbf16>, vector<256x512xbf16>, vector<32x512xf32> -> vector<32x512xf32>
    %7 = arith.addf %3, %6 : vector<32x512xf32>
    %c0_6 = arith.constant 0 : index
    %c0_7 = arith.constant 0 : index
    %8 = vector.load %arg6[%c0_6, %c0_7] : memref<32x512xf32, #tpu.memory_space<vmem>>, vector<32x512xf32>
    tpu.vector_store %arg6[%c0_6, %c0_7], %7 {strides = array<i32>} : memref<32x512xf32, #tpu.memory_space<vmem>>, vector<32x512xf32>,
    %c0_i32_8 = arith.constant 0 : i32
    %9 = arith.cmpi eq, %arg2, %c0_i32_8 : i32
    %10 = arith.extui %9 : i1 to i32
    %c0_i32_9 = arith.constant 0 : i32
    %11 = arith.cmpi ne, %10, %c0_i32_9 : i32
    scf.if %11 {
      %c0_10 = arith.constant 0 : index
      %c0_11 = arith.constant 0 : index
      %12 = vector.load %arg6[%c0_10, %c0_11] : memref<32x512xf32, #tpu.memory_space<vmem>>, vector<32x512xf32>
      %c0_12 = arith.constant 0 : index
      %c0_13 = arith.constant 0 : index
      %13 = vector.load %arg5[%c0_12, %c0_13] : memref<32x512xf32, #tpu.memory_space<vmem>>, vector<32x512xf32>
      tpu.vector_store %arg5[%c0_12, %c0_13], %12 {strides = array<i32>} : memref<32x512xf32, #tpu.memory_space<vmem>>, vector<32x512xf32>,
    } else {
    }
    return
  }
  func.func @transform_0(%arg0: i32, %arg1: i32, %arg2: i32) -> (i32, i32) {
    %c0_i32 = arith.constant 0 : i32
    return %arg0, %arg2 : i32, i32
  }
  func.func @transform_1(%arg0: i32, %arg1: i32, %arg2: i32) -> (i32, i32) {
    %c0_i32 = arith.constant 0 : i32
    return %arg2, %arg1 : i32, i32
  }
  func.func @transform_2(%arg0: i32, %arg1: i32, %arg2: i32) -> (i32, i32) {
    %c0_i32 = arith.constant 0 : i32
    return %arg0, %arg1 : i32, i32
  }
}

</mosaic_0001>

<llo_original>
// kernel: bloom_forward.18
$region0: #{bloom_forward.18}
  #allocation0 [shape = 'u32[]', space=smem, size = 0x4, offset = 0x4, fixed_abs, tag = 'smem constant byte address 0x4 - core index']
  #allocation1 [shape = 'u32[144,128]{1,0:T(1,128)}', space=vmem, size = 0x12000, scoped, tag = 'internal scratch']
  %s0 = inlined_call_operand.vmem [shape: bf16[32,256], index: 0, kind: input, shape index: {}]
  %s1 = inlined_call_operand.vmem [shape: f32[1,256], index: 1, kind: input, shape index: {}]
  %s2 = inlined_call_operand.vmem [shape: f32[1,256], index: 2, kind: input, shape index: {}]
  %s3 = inlined_call_operand.vmem [shape: bf16[32,256], index: 3, kind: output, shape index: {}]
  %s4 = sld [smem:[#allocation0]]
  $region22: #{bloom_forward.18} parent=0
    _
  %s6 = ssub.s32 1, %s4
  %s7 = scalar_select 0, %s6, %s4
  // Predicated region
  $region2: #{bloom_forward.18} parent=0 // pred_check
    _
  $region3: #{bloom_forward.18} parent=0 // pred_check_branch
    %9 = sbr.rel (0) target = $region5
  $region4: #{bloom_forward.18} parent=0 // pred_region
    _
  $region5: #{bloom_forward.18} parent=0 // pred_fallthru
    _
  // Predicated region
  $region6: #{bloom_forward.18} parent=0 // pred_check
    _
  $region7: #{bloom_forward.18} parent=0 // pred_check_branch
    %11 = sbr.rel (0) target = $region9
  $region8: #{bloom_forward.18} parent=0 // pred_region
    _
  $region9: #{bloom_forward.18} parent=0 // pred_fallthru
    _
  // Predicated region
  $region10: #{bloom_forward.18} parent=0 // pred_check
    _
  $region11: #{bloom_forward.18} parent=0 // pred_check_branch
    %13 = sbr.rel (0) target = $region13
  $region12: #{bloom_forward.18} parent=0 // pred_region
    _
  $region13: #{bloom_forward.18} parent=0 // pred_fallthru
    _
  %v14 = vld [vmem:[%s0] sm:$0xff]
  %v15 = vld [vmem:[%s0 + $0x8] sm:$0xff]
  %v16 = vld [vmem:[%s0 + $0x10] sm:$0xff]
  %v17 = vld [vmem:[%s0 + $0x18] sm:$0xff]
  %v18 = vunpack.c.l.bf16 %v14
  %v19 = vunpack.c.h.bf16 %v14
  %v20 = vunpack.c.l.bf16 %v15
  %v21 = vunpack.c.h.bf16 %v15
  %v22 = vunpack.c.l.bf16 %v16
  %v23 = vunpack.c.h.bf16 %v16
  %v24 = vunpack.c.l.bf16 %v17
  %v25 = vunpack.c.h.bf16 %v17
  %v26 = vadd.f32 %v18, %v19
  %27 = vadd.xlane.f32.xlu0 %v26
  %v28 = vpop.xlane.xlu0 %27
  %v29 = vadd.f32 %v20, %v21
  %30 = vadd.xlane.f32.xlu0 %v29
  %v31 = vpop.xlane.xlu0 %30
  %v32 = vadd.f32 %v22, %v23
  %33 = vadd.xlane.f32.xlu0 %v32
  %v34 = vpop.xlane.xlu0 %33
  %v35 = vadd.f32 %v24, %v25
  %36 = vadd.xlane.f32.xlu0 %v35
  %v37 = vpop.xlane.xlu0 %36
  %v38 = vrcp.pop 256.0
  %v39 = vmul.f32 %v28, %v38
  %v40 = vmul.f32 %v31, %v38
  %v41 = vmul.f32 %v34, %v38
  %v42 = vmul.f32 %v37, %v38
  %v43 = vsub.f32 %v18, %v39
  %v44 = vsub.f32 %v19, %v39
  %v45 = vsub.f32 %v20, %v40
  %v46 = vsub.f32 %v21, %v40
  %v47 = vsub.f32 %v22, %v41
  %v48 = vsub.f32 %v23, %v41
  %v49 = vsub.f32 %v24, %v42
  %v50 = vsub.f32 %v25, %v42
  %v51 = vmul.f32 %v43, %v43
  %v52 = vmul.f32 %v44, %v44
  %v53 = vmul.f32 %v45, %v45
  %v54 = vmul.f32 %v46, %v46
  %v55 = vmul.f32 %v47, %v47
  %v56 = vmul.f32 %v48, %v48
  %v57 = vmul.f32 %v49, %v49
  %v58 = vmul.f32 %v50, %v50
  %v59 = vadd.f32 %v51, %v52
  %60 = vadd.xlane.f32.xlu0 %v59
  %v61 = vpop.xlane.xlu0 %60
  %v62 = vadd.f32 %v53, %v54
  %63 = vadd.xlane.f32.xlu0 %v62
  %v64 = vpop.xlane.xlu0 %63
  %v65 = vadd.f32 %v55, %v56
  %66 = vadd.xlane.f32.xlu0 %v65
  %v67 = vpop.xlane.xlu0 %66
  %v68 = vadd.f32 %v57, %v58
  %69 = vadd.xlane.f32.xlu0 %v68
  %v70 = vpop.xlane.xlu0 %69
  %v71 = vmul.f32 %v61, %v38
  %v72 = vmul.f32 %v64, %v38
  %v73 = vmul.f32 %v67, %v38
  %v74 = vmul.f32 %v70, %v38
  %v75 = vadd.f32 %v71, 1e-05
  %v76 = vadd.f32 %v72, 1e-05
  %v77 = vadd.f32 %v73, 1e-05
  %v78 = vadd.f32 %v74, 1e-05
  %v79 = vrsqrt.pop %v75
  %v80 = vrsqrt.pop %v76
  %v81 = vrsqrt.pop %v77
  %v82 = vrsqrt.pop %v78
  %v83 = vmul.f32 %v43, %v79
  %v84 = vmul.f32 %v44, %v79
  %v85 = vmul.f32 %v45, %v80
  %v86 = vmul.f32 %v46, %v80
  %v87 = vmul.f32 %v47, %v81
  %v88 = vmul.f32 %v48, %v81
  %v89 = vmul.f32 %v49, %v82
  %v90 = vmul.f32 %v50, %v82
  %v91 = vld [vmem:[%s1] sm:$0x3]
  %v93 = vlaneseq
  %v94 = vshrl.u32 %v93, 7
  %v95 = vsub.s32 0, %v94
  %v96 = vrot.slane %v91, %v95
  %v97 = vlaneseq
  %v98 = vshrl.u32 %v97, 7
  %v99 = vsub.s32 1, %v98
  %v100 = vrot.slane %v91, %v99
  %v103 = vmul.f32 %v83, %v96
  %v104 = vmul.f32 %v84, %v100
  %v105 = vmul.f32 %v85, %v96
  %v106 = vmul.f32 %v86, %v100
  %v107 = vmul.f32 %v87, %v96
  %v108 = vmul.f32 %v88, %v100
  %v109 = vmul.f32 %v89, %v96
  %v110 = vmul.f32 %v90, %v100
  %v111 = vld [vmem:[%s2] sm:$0x3]
  %v113 = vlaneseq
  %v114 = vshrl.u32 %v113, 7
  %v115 = vsub.s32 0, %v114
  %v116 = vrot.slane %v111, %v115
  %v117 = vlaneseq
  %v118 = vshrl.u32 %v117, 7
  %v119 = vsub.s32 1, %v118
  %v120 = vrot.slane %v111, %v119
  %v123 = vadd.f32 %v103, %v116
  %v124 = vadd.f32 %v104, %v120
  %v125 = vadd.f32 %v105, %v116
  %v126 = vadd.f32 %v106, %v120
  %v127 = vadd.f32 %v107, %v116
  %v128 = vadd.f32 %v108, %v120
  %v129 = vadd.f32 %v109, %v116
  %v130 = vadd.f32 %v110, %v120
  %v131 = vpack.c.bf16 %v125, %v123
  %v132 = vpack.c.bf16 %v126, %v124
  %v133 = vpack.c.bf16 %v129, %v127
  %v134 = vpack.c.bf16 %v130, %v128
  %v139 = vunpack.c.l.b16 %v131
  %v140 = vunpack.c.l.b16 %v132
  %v141 = vunpack.c.h.b16 %v131
  %v142 = vunpack.c.h.b16 %v132
  %v143 = vunpack.c.l.b16 %v133
  %v144 = vunpack.c.l.b16 %v134
  %v145 = vunpack.c.h.b16 %v133
  %v146 = vunpack.c.h.b16 %v134
  %v147 = vpack.c.b16 %v140, %v139
  %v148 = vpack.c.b16 %v142, %v141
  %v149 = vpack.c.b16 %v144, %v143
  %v150 = vpack.c.b16 %v146, %v145
  %155 = vst [vmem:[%s3] sm:$0xff] %v147
  %156 = vst [vmem:[%s3 + $0x8] sm:$0xff] %v148
  %157 = vst [vmem:[%s3 + $0x10] sm:$0xff] %v149
  %158 = vst [vmem:[%s3 + $0x18] sm:$0xff] %v150
  // Predicated region
  $region14: #{bloom_forward.18} parent=0 // pred_check
    _
  $region15: #{bloom_forward.18} parent=0 // pred_check_branch
    %160 = sbr.rel (0) target = $region17
  $region16: #{bloom_forward.18} parent=0 // pred_region
    _
  $region17: #{bloom_forward.18} parent=0 // pred_fallthru
    _
  // Predicated region
  $region18: #{bloom_forward.18} parent=0 // pred_check
    _
  $region19: #{bloom_forward.18} parent=0 // pred_check_branch
    %162 = sbr.rel (0) target = $region21
  $region20: #{bloom_forward.18} parent=0 // pred_region
    _
  $region21: #{bloom_forward.18} parent=0 // pred_fallthru
    _

// kernel: bloom_forward.17
$region0: #{bloom_forward.17}
  #allocation0 [shape = 'u32[]', space=smem, size = 0x4, offset = 0x4, fixed_abs, tag = 'smem constant byte address 0x4 - core index']
  #allocation1 [shape = 'u32[144,128]{1,0:T(1,128)}', space=vmem, size = 0x12000, scoped, tag = 'internal scratch']
  %s0 = inlined_call_operand.vmem [shape: f32[32,256], index: 0, kind: input, shape index: {}]
  %s1 = inlined_call_operand.hbm [shape: f32[1,256], index: 1, kind: input, shape index: {}]
  %s2 = inlined_call_operand.hbm [shape: f32[1,256], index: 2, kind: input, shape index: {}]
  %s3 = inlined_call_operand.vmem [shape: bf16[32,256], index: 3, kind: output, shape index: {}]
  %s4 = sld [smem:[#allocation0]]
  $region30: #{bloom_forward.17} parent=0
    _
  %s6 = ssub.s32 1, %s4
  %s7 = scalar_select 0, %s6, %s4
  $region1: #{bloom_forward.17} parent=0
    #allocation2 [shape = 'u8[1024]{0}', space=vmem, size = 0x400, scoped, tag = 'input window, operand 1, single buffered']
    #allocation3 [shape = 's32[1]{0}', space=sflag, size = 0x4, scoped, tag = 'scoped memory for bloom_forward.17']
    #allocation4 [shape = 'u8[1024]{0}', space=vmem, size = 0x400, scoped, tag = 'input window, operand 2, single buffered']
    #allocation5 [shape = 's32[1]{0}', space=sflag, size = 0x4, scoped, tag = 'scoped memory for bloom_forward.17']
    %8 = vsyncpa [#allocation3], 0
    %9 = vsyncpa [#allocation5], 0
    // Predicated region
    $region2: #{bloom_forward.17} parent=1 // pred_check
      _
    $region3: #{bloom_forward.17} parent=1 // pred_check_branch
      %11 = sbr.rel (0) target = $region5
    $region4: #{bloom_forward.17} parent=1 // pred_region
      _
    $region5: #{bloom_forward.17} parent=1 // pred_fallthru
      _
    // Predicated region
    $region6: #{bloom_forward.17} parent=1 // pred_check
      _
    $region7: #{bloom_forward.17} parent=1 // pred_check_branch
      %13 = sbr.rel (0) target = $region9
    $region8: #{bloom_forward.17} parent=1 // pred_region
      %s15 = ssub.s32 32, 32
      %16 = vsyncadd [#allocation3], %s15
      %s18 = sshll.u32 [#allocation2], 4
      %s19 = int_to_ptr.vmem [resolvable:$true] %s18
      %21 = dma.hbm_to_vmem [thread:$0]  %s1, 32, %s19, [#allocation3]
    $region9: #{bloom_forward.17} parent=1 // pred_fallthru
      _
    // Predicated region
    $region10: #{bloom_forward.17} parent=1 // pred_check
      _
    $region11: #{bloom_forward.17} parent=1 // pred_check_branch
      %23 = sbr.rel (0) target = $region13
    $region12: #{bloom_forward.17} parent=1 // pred_region
      %s25 = ssub.s32 32, 32
      %26 = vsyncadd [#allocation5], %s25
      %s28 = sshll.u32 [#allocation4], 4
      %s29 = int_to_ptr.vmem [resolvable:$true] %s28
      %31 = dma.hbm_to_vmem [thread:$0]  %s2, 32, %s29, [#allocation5]
    $region13: #{bloom_forward.17} parent=1 // pred_fallthru
      _
    // Predicated region
    $region14: #{bloom_forward.17} parent=1 // pred_check
      _
    $region15: #{bloom_forward.17} parent=1 // pred_check_branch
      %33 = sbr.rel (0) target = $region17
    $region16: #{bloom_forward.17} parent=1 // pred_region
      %34 = dma.done [#allocation3], 32
    $region17: #{bloom_forward.17} parent=1 // pred_fallthru
      _
    // Predicated region
    $region18: #{bloom_forward.17} parent=1 // pred_check
      _
    $region19: #{bloom_forward.17} parent=1 // pred_check_branch
      %36 = sbr.rel (0) target = $region21
    $region20: #{bloom_forward.17} parent=1 // pred_region
      %37 = dma.done [#allocation5], 32
    $region21: #{bloom_forward.17} parent=1 // pred_fallthru
      _
    %v38 = vld [vmem:[%s0] sm:$0xff]
    %v39 = vld [vmem:[%s0 + $0x8] sm:$0xff]
    %v40 = vld [vmem:[%s0 + $0x10] sm:$0xff]
    %v41 = vld [vmem:[%s0 + $0x18] sm:$0xff]
    %v42 = vld [vmem:[%s0 + $0x20] sm:$0xff]
    %v43 = vld [vmem:[%s0 + $0x28] sm:$0xff]
    %v44 = vld [vmem:[%s0 + $0x30] sm:$0xff]
    %v45 = vld [vmem:[%s0 + $0x38] sm:$0xff]
    %v46 = vadd.f32 %v38, %v39
    %47 = vadd.xlane.f32.xlu0 %v46
    %v48 = vpop.xlane.xlu0 %47
    %v49 = vadd.f32 %v40, %v41
    %50 = vadd.xlane.f32.xlu0 %v49
    %v51 = vpop.xlane.xlu0 %50
    %v52 = vadd.f32 %v42, %v43
    %53 = vadd.xlane.f32.xlu0 %v52
    %v54 = vpop.xlane.xlu0 %53
    %v55 = vadd.f32 %v44, %v45
    %56 = vadd.xlane.f32.xlu0 %v55
    %v57 = vpop.xlane.xlu0 %56
    %v58 = vrcp.pop 256.0
    %v59 = vmul.f32 %v48, %v58
    %v60 = vmul.f32 %v51, %v58
    %v61 = vmul.f32 %v54, %v58
    %v62 = vmul.f32 %v57, %v58
    %v63 = vsub.f32 %v38, %v59
    %v64 = vsub.f32 %v39, %v59
    %v65 = vsub.f32 %v40, %v60
    %v66 = vsub.f32 %v41, %v60
    %v67 = vsub.f32 %v42, %v61
    %v68 = vsub.f32 %v43, %v61
    %v69 = vsub.f32 %v44, %v62
    %v70 = vsub.f32 %v45, %v62
    %v71 = vmul.f32 %v63, %v63
    %v72 = vmul.f32 %v64, %v64
    %v73 = vmul.f32 %v65, %v65
    %v74 = vmul.f32 %v66, %v66
    %v75 = vmul.f32 %v67, %v67
    %v76 = vmul.f32 %v68, %v68
    %v77 = vmul.f32 %v69, %v69
    %v78 = vmul.f32 %v70, %v70
    %v79 = vadd.f32 %v71, %v72
    %80 = vadd.xlane.f32.xlu0 %v79
    %v81 = vpop.xlane.xlu0 %80
    %v82 = vadd.f32 %v73, %v74
    %83 = vadd.xlane.f32.xlu0 %v82
    %v84 = vpop.xlane.xlu0 %83
    %v85 = vadd.f32 %v75, %v76
    %86 = vadd.xlane.f32.xlu0 %v85
    %v87 = vpop.xlane.xlu0 %86
    %v88 = vadd.f32 %v77, %v78
    %89 = vadd.xlane.f32.xlu0 %v88
    %v90 = vpop.xlane.xlu0 %89
    %v91 = vmul.f32 %v81, %v58
    %v92 = vmul.f32 %v84, %v58
    %v93 = vmul.f32 %v87, %v58
    %v94 = vmul.f32 %v90, %v58
    %v95 = vadd.f32 %v91, 1e-05
    %v96 = vadd.f32 %v92, 1e-05
    %v97 = vadd.f32 %v93, 1e-05
    %v98 = vadd.f32 %v94, 1e-05
    %v99 = vrsqrt.pop %v95
    %v100 = vrsqrt.pop %v96
    %v101 = vrsqrt.pop %v97
    %v102 = vrsqrt.pop %v98
    %v103 = vmul.f32 %v63, %v99
    %v104 = vmul.f32 %v64, %v99
    %v105 = vmul.f32 %v65, %v100
    %v106 = vmul.f32 %v66, %v100
    %v107 = vmul.f32 %v67, %v101
    %v108 = vmul.f32 %v68, %v101
    %v109 = vmul.f32 %v69, %v102
    %v110 = vmul.f32 %v70, %v102
    %v111 = vld [vmem:[#allocation2] sm:$0x3]
    %v113 = vlaneseq
    %v114 = vshrl.u32 %v113, 7
    %v115 = vsub.s32 0, %v114
    %v116 = vrot.slane %v111, %v115
    %v117 = vlaneseq
    %v118 = vshrl.u32 %v117, 7
    %v119 = vsub.s32 1, %v118
    %v120 = vrot.slane %v111, %v119
    %v123 = vmul.f32 %v103, %v116
    %v124 = vmul.f32 %v104, %v120
    %v125 = vmul.f32 %v105, %v116
    %v126 = vmul.f32 %v106, %v120
    %v127 = vmul.f32 %v107, %v116
    %v128 = vmul.f32 %v108, %v120
    %v129 = vmul.f32 %v109, %v116
    %v130 = vmul.f32 %v110, %v120
    %v131 = vld [vmem:[#allocation4] sm:$0x3]
    %v133 = vlaneseq
    %v134 = vshrl.u32 %v133, 7
    %v135 = vsub.s32 0, %v134
    %v136 = vrot.slane %v131, %v135
    %v137 = vlaneseq
    %v138 = vshrl.u32 %v137, 7
    %v139 = vsub.s32 1, %v138
    %v140 = vrot.slane %v131, %v139
    %v143 = vadd.f32 %v123, %v136
    %v144 = vadd.f32 %v124, %v140
    %v145 = vadd.f32 %v125, %v136
    %v146 = vadd.f32 %v126, %v140
    %v147 = vadd.f32 %v127, %v136
    %v148 = vadd.f32 %v128, %v140
    %v149 = vadd.f32 %v129, %v136
    %v150 = vadd.f32 %v130, %v140
    %v151 = vpack.c.bf16 %v145, %v143
    %v152 = vpack.c.bf16 %v146, %v144
    %v153 = vpack.c.bf16 %v149, %v147
    %v154 = vpack.c.bf16 %v150, %v148
    %v159 = vunpack.c.l.b16 %v151
    %v160 = vunpack.c.l.b16 %v152
    %v161 = vunpack.c.h.b16 %v151
    %v162 = vunpack.c.h.b16 %v152
    %v163 = vunpack.c.l.b16 %v153
    %v164 = vunpack.c.l.b16 %v154
    %v165 = vunpack.c.h.b16 %v153
    %v166 = vunpack.c.h.b16 %v154
    %v167 = vpack.c.b16 %v160, %v159
    %v168 = vpack.c.b16 %v162, %v161
    %v169 = vpack.c.b16 %v164, %v163
    %v170 = vpack.c.b16 %v166, %v165
    %175 = vst [vmem:[%s3] sm:$0xff] %v167
    %176 = vst [vmem:[%s3 + $0x8] sm:$0xff] %v168
    %177 = vst [vmem:[%s3 + $0x10] sm:$0xff] %v169
    %178 = vst [vmem:[%s3 + $0x18] sm:$0xff] %v170
    // Predicated region
    $region22: #{bloom_forward.17} parent=1 // pred_check
      _
    $region23: #{bloom_forward.17} parent=1 // pred_check_branch
      %180 = sbr.rel (0) target = $region25
    $region24: #{bloom_forward.17} parent=1 // pred_region
      _
    $region25: #{bloom_forward.17} parent=1 // pred_fallthru
      _
    // Predicated region
    $region26: #{bloom_forward.17} parent=1 // pred_check
      _
    $region27: #{bloom_forward.17} parent=1 // pred_check_branch
      %182 = sbr.rel (0) target = $region29
    $region28: #{bloom_forward.17} parent=1 // pred_region
      _
    $region29: #{bloom_forward.17} parent=1 // pred_fallthru
      _
    %183 = vsyncpa [#allocation3], 1
    %184 = vsyncpa [#allocation5], 1

// kernel: bloom_forward.20
$region0: #{bloom_forward.20}
  #allocation0 [shape = 'u32[]', space=smem, size = 0x4, offset = 0x4, fixed_abs, tag = 'smem constant byte address 0x4 - core index']
  #allocation1 [shape = 'u32[144,128]{1,0:T(1,128)}', space=vmem, size = 0x12000, scoped, tag = 'internal scratch']
  #allocation2 [shape = 'f32[16,1]{1,0:T(8,128)}', space=vmem, size = 0x2000, scoped, tag = 'scratch operand']
  #allocation3 [shape = 'f32[16,1]{1,0:T(8,128)}', space=vmem, size = 0x2000, scoped, tag = 'scratch operand']
  #allocation4 [shape = 'f32[16,128]{1,0:T(8,128)}', space=vmem, size = 0x2000, scoped, tag = 'scratch operand']
  %s0 = inlined_call_operand.vmem [shape: f32[2], index: 0, kind: input, shape index: {}]
  %s1 = inlined_call_operand.vmem [shape: bf16[2,16,768], index: 1, kind: input, shape index: {}, may-alias: {1,2,3}]
  %s2 = inlined_call_operand.vmem [shape: bf16[2,16,768], index: 2, kind: input, shape index: {}, may-alias: {1,2,3}]
  %s3 = inlined_call_operand.vmem [shape: bf16[2,16,768], index: 3, kind: input, shape index: {}, may-alias: {1,2,3}]
  %s4 = inlined_call_operand.vmem [shape: f32[2,1,16], index: 4, kind: input, shape index: {}]
  %s5 = inlined_call_operand.vmem [shape: f32[2,1,16], index: 5, kind: input, shape index: {}]
  %s6 = inlined_call_operand.vmem [shape: bf16[2,16,256], index: 6, kind: output, shape index: {}]
  %s7 = sld [smem:[#allocation0]]
  $region233: #{bloom_forward.20} parent=0
    _
  %s9 = ssub.s32 1, %s7
  %s10 = scalar_select 0, %s9, %s7
  $region1: #{bloom_forward.20} parent=0
    #allocation5 [shape = 'u8[512]{0}', space=smem, size = 0x200, scoped, tag = 'input window, operand 0, single buffered']
    #allocation6 [shape = 's32[2]{0}', space=sflag, size = 0x8, scoped, tag = 'scoped memory for bloom_forward.20']
    #allocation7 [shape = 'u8[8192]{0}', space=vmem, size = 0x2000, scoped, tag = 'input window, operand 1']
    #allocation8 [shape = 'u8[8192]{0}', space=vmem, size = 0x2000, scoped, tag = 'input window, operand 2']
    #allocation9 [shape = 'u8[8192]{0}', space=vmem, size = 0x2000, scoped, tag = 'input window, operand 3']
    #allocation10 [shape = 'u8[8192]{0}', space=vmem, size = 0x2000, scoped, tag = 'output window, operand 0']
    %11 = vsyncpa [#allocation6], 0
    loop: start=0, step=1, limit=6
    $region2: #{bloom_forward.20} parent=1 // loop_pre_header
      _
    $region3: #{bloom_forward.20} parent=1 // loop_header
      %s13 = sphi 0, %s17
      %p14 = scmp.ge.s32.totalorder %s13, 6
      %s20 = sphi 0, %s46
      %s21 = sphi 0, %s42
      %s22 = sphi 0, %s38
      %s23 = sphi 0, %s34
      %s24 = sphi 0, %s20
      %s25 = sphi 0, %s21
      %s26 = sphi 0, %s22
      %s27 = sphi 0, %s23
      %s28 = sphi 0, %s24
      %s29 = sphi 0, %s25
      %s30 = sphi 0, %s26
      %s31 = sphi 0, %s27
      %s47 = sphi 0, %s47
      %s49 = sphi 0, %s47
      %s50 = sphi 0, %s49
      %s64 = sphi 0, %s50
      %s76 = sphi 0, %s78
      %s79 = sphi 0, %s76
      %s80 = sphi 0, %s79
      %s96 = sphi 0, %s80
      %s110 = sphi 0, %s112
      %s113 = sphi 0, %s110
      %s114 = sphi 0, %s113
      %s130 = sphi 0, %s114
      %s144 = sphi 0, %s146
      %s147 = sphi 0, %s144
      %s148 = sphi 0, %s147
      %s164 = sphi 0, %s148
      %s172 = sphi 0, %s174
      %s175 = sphi 0, %s172
      %s176 = sphi 0, %s175
      %s192 = sphi 0, %s176
      %s200 = sphi 0, %s202
      %s203 = sphi 0, %s200
      %s204 = sphi 0, %s203
      %s220 = sphi 0, %s204
      %s230 = sphi 0, %s232
      %s233 = sphi 0, %s230
      %s234 = sphi 0, %s233
      %s250 = sphi 0, %s234
    $region4: #{bloom_forward.20} parent=1 // loop_header_branch
      %16 = sbr.rel (%p14) target = $region8
    $region5: #{bloom_forward.20} parent=1 // loop_body
      %s18 = ssub.s32 %s13, 1
      %s19 = ssub.s32 %s13, 2
      %s32 = sadd.s32 1, %s23
      %p33 = scmp.ge.s32.totalorder %s32, 1
      %s34 = scalar_select %p33, 0, %s32
      %s35 = sadd.s32 1, %s22
      %s36 = scalar_select %p33, %s35, %s22
      %p37 = scmp.ge.s32.totalorder %s36, 1
      %s38 = scalar_select %p37, 0, %s36
      %s39 = sadd.s32 1, %s21
      %s40 = scalar_select %p37, %s39, %s21
      %p41 = scmp.ge.s32.totalorder %s40, 2
      %s42 = scalar_select %p41, 0, %s40
      %s43 = sadd.s32 1, %s20
      %s44 = scalar_select %p41, %s43, %s20
      %p45 = scmp.ge.s32.totalorder %s44, 2
      %s46 = scalar_select %p45, 0, %s44
      %s48 = sadd.s32 %s47, 1
      %p51 = scmp.eq.s32.totalorder %s13, 3
      %p52 = scmp.ne.s32.totalorder %s47, %s49
      %p53 = scmp.eq.s32.totalorder %s13, 0
      %p54 = por %p52, %p53
      %p55 = scmp.ne.s32.totalorder %s47, %s49
      %p56 = scmp.eq.s32.totalorder %s18, 3
      %p57 = por %p55, %p56
      %p58 = scmp.ne.s32.totalorder %s49, %s50
      %p59 = scmp.eq.s32.totalorder %s18, 0
      %p60 = por %p58, %p59
      %p61 = scmp.ne.s32.totalorder %s49, %s50
      %p62 = scmp.eq.s32.totalorder %s19, 3
      %p63 = por %p61, %p62
      %p65 = scmp.ne.s32.totalorder %s50, %s64
      %p66 = scmp.eq.s32.totalorder %s19, 0
      %p67 = por %p65, %p66
      %s68 = smul.u32 %s21, 3
      %s69 = smul.u32 %s42, 3
      %s70 = ssub.s32 %s20, %s46
      %s71 = ssub.s32 %s22, %s38
      %s72 = sor.u32 %s70, %s71
      %s73 = ssub.s32 %s68, %s69
      %s74 = sor.u32 %s72, %s73
      %p75 = scmp.eq.s32.totalorder %s74, 0
      %s77 = sadd.s32 %s76, 1
      %s78 = scalar_select %p75, %s76, %s77
      %p81 = pneg %p75
      %p82 = scmp.eq.s32.totalorder %s13, 3
      %p83 = por %p81, %p82
      %p84 = scmp.ne.s32.totalorder %s76, %s79
      %p85 = scmp.eq.s32.totalorder %s13, 0
      %p86 = por %p84, %p85
      %p87 = scmp.ne.s32.totalorder %s76, %s79
      %p88 = scmp.eq.s32.totalorder %s18, 3
      %p89 = por %p87, %p88
      %p90 = scmp.ne.s32.totalorder %s79, %s80
      %p91 = scmp.eq.s32.totalorder %s18, 0
      %p92 = por %p90, %p91
      %p93 = scmp.ne.s32.totalorder %s79, %s80
      %p94 = scmp.eq.s32.totalorder %s19, 3
      %p95 = por %p93, %p94
      %p97 = scmp.ne.s32.totalorder %s80, %s96
      %p98 = scmp.eq.s32.totalorder %s19, 0
      %p99 = por %p97, %p98
      %s100 = smul.u32 %s21, 3
      %s101 = sadd.s32 %s100, 1
      %s102 = smul.u32 %s42, 3
      %s103 = sadd.s32 %s102, 1
      %s104 = ssub.s32 %s20, %s46
      %s105 = ssub.s32 %s23, %s34
      %s106 = sor.u32 %s104, %s105
      %s107 = ssub.s32 %s101, %s103
      %s108 = sor.u32 %s106, %s107
      %p109 = scmp.eq.s32.totalorder %s108, 0
      %s111 = sadd.s32 %s110, 1
      %s112 = scalar_select %p109, %s110, %s111
      %p115 = pneg %p109
      %p116 = scmp.eq.s32.totalorder %s13, 3
      %p117 = por %p115, %p116
      %p118 = scmp.ne.s32.totalorder %s110, %s113
      %p119 = scmp.eq.s32.totalorder %s13, 0
      %p120 = por %p118, %p119
      %p121 = scmp.ne.s32.totalorder %s110, %s113
      %p122 = scmp.eq.s32.totalorder %s18, 3
      %p123 = por %p121, %p122
      %p124 = scmp.ne.s32.totalorder %s113, %s114
      %p125 = scmp.eq.s32.totalorder %s18, 0
      %p126 = por %p124, %p125
      %p127 = scmp.ne.s32.totalorder %s113, %s114
      %p128 = scmp.eq.s32.totalorder %s19, 3
      %p129 = por %p127, %p128
      %p131 = scmp.ne.s32.totalorder %s114, %s130
      %p132 = scmp.eq.s32.totalorder %s19, 0
      %p133 = por %p131, %p132
      %s134 = smul.u32 %s21, 3
      %s135 = sadd.s32 %s134, 2
      %s136 = smul.u32 %s42, 3
      %s137 = sadd.s32 %s136, 2
      %s138 = ssub.s32 %s20, %s46
      %s139 = ssub.s32 %s23, %s34
      %s140 = sor.u32 %s138, %s139
      %s141 = ssub.s32 %s135, %s137
      %s142 = sor.u32 %s140, %s141
      %p143 = scmp.eq.s32.totalorder %s142, 0
      %s145 = sadd.s32 %s144, 1
      %s146 = scalar_select %p143, %s144, %s145
      %p149 = pneg %p143
      %p150 = scmp.eq.s32.totalorder %s13, 3
      %p151 = por %p149, %p150
      %p152 = scmp.ne.s32.totalorder %s144, %s147
      %p153 = scmp.eq.s32.totalorder %s13, 0
      %p154 = por %p152, %p153
      %p155 = scmp.ne.s32.totalorder %s144, %s147
      %p156 = scmp.eq.s32.totalorder %s18, 3
      %p157 = por %p155, %p156
      %p158 = scmp.ne.s32.totalorder %s147, %s148
      %p159 = scmp.eq.s32.totalorder %s18, 0
      %p160 = por %p158, %p159
      %p161 = scmp.ne.s32.totalorder %s147, %s148
      %p162 = scmp.eq.s32.totalorder %s19, 3
      %p163 = por %p161, %p162
      %p165 = scmp.ne.s32.totalorder %s148, %s164
      %p166 = scmp.eq.s32.totalorder %s19, 0
      %p167 = por %p165, %p166
      %s168 = ssub.s32 %s20, %s46
      %s169 = ssub.s32 %s23, %s34
      %s170 = sor.u32 %s168, %s169
      %p171 = scmp.eq.s32.totalorder %s170, 0
      %s173 = sadd.s32 %s172, 1
      %s174 = scalar_select %p171, %s172, %s173
      %p177 = pneg %p171
      %p178 = scmp.eq.s32.totalorder %s13, 3
      %p179 = por %p177, %p178
      %p180 = scmp.ne.s32.totalorder %s172, %s175
      %p181 = scmp.eq.s32.totalorder %s13, 0
      %p182 = por %p180, %p181
      %p183 = scmp.ne.s32.totalorder %s172, %s175
      %p184 = scmp.eq.s32.totalorder %s18, 3
      %p185 = por %p183, %p184
      %p186 = scmp.ne.s32.totalorder %s175, %s176
      %p187 = scmp.eq.s32.totalorder %s18, 0
      %p188 = por %p186, %p187
      %p189 = scmp.ne.s32.totalorder %s175, %s176
      %p190 = scmp.eq.s32.totalorder %s19, 3
      %p191 = por %p189, %p190
      %p193 = scmp.ne.s32.totalorder %s176, %s192
      %p194 = scmp.eq.s32.totalorder %s19, 0
      %p195 = por %p193, %p194
      %s196 = ssub.s32 %s20, %s46
      %s197 = ssub.s32 %s23, %s34
      %s198 = sor.u32 %s196, %s197
      %p199 = scmp.eq.s32.totalorder %s198, 0
      %s201 = sadd.s32 %s200, 1
      %s202 = scalar_select %p199, %s200, %s201
      %p205 = pneg %p199
      %p206 = scmp.eq.s32.totalorder %s13, 3
      %p207 = por %p205, %p206
      %p208 = scmp.ne.s32.totalorder %s200, %s203
      %p209 = scmp.eq.s32.totalorder %s13, 0
      %p210 = por %p208, %p209
      %p211 = scmp.ne.s32.totalorder %s200, %s203
      %p212 = scmp.eq.s32.totalorder %s18, 3
      %p213 = por %p211, %p212
      %p214 = scmp.ne.s32.totalorder %s203, %s204
      %p215 = scmp.eq.s32.totalorder %s18, 0
      %p216 = por %p214, %p215
      %p217 = scmp.ne.s32.totalorder %s203, %s204
      %p218 = scmp.eq.s32.totalorder %s19, 3
      %p219 = por %p217, %p218
      %p221 = scmp.ne.s32.totalorder %s204, %s220
      %p222 = scmp.eq.s32.totalorder %s19, 0
      %p223 = por %p221, %p222
      %s224 = ssub.s32 %s20, %s46
      %s225 = ssub.s32 %s22, %s38
      %s226 = sor.u32 %s224, %s225
      %s227 = ssub.s32 %s21, %s42
      %s228 = sor.u32 %s226, %s227
      %p229 = scmp.eq.s32.totalorder %s228, 0
      %s231 = sadd.s32 %s230, 1
      %s232 = scalar_select %p229, %s230, %s231
      %p235 = pneg %p229
      %p236 = scmp.eq.s32.totalorder %s13, 3
      %p237 = por %p235, %p236
      %p238 = scmp.ne.s32.totalorder %s230, %s233
      %p239 = scmp.eq.s32.totalorder %s13, 0
      %p240 = por %p238, %p239
      %p241 = scmp.ne.s32.totalorder %s230, %s233
      %p242 = scmp.eq.s32.totalorder %s18, 3
      %p243 = por %p241, %p242
      %p244 = scmp.ne.s32.totalorder %s233, %s234
      %p245 = scmp.eq.s32.totalorder %s18, 0
      %p246 = por %p244, %p245
      %p247 = scmp.ne.s32.totalorder %s233, %s234
      %p248 = scmp.eq.s32.totalorder %s19, 3
      %p249 = por %p247, %p248
      %p251 = scmp.ne.s32.totalorder %s234, %s250
      %p252 = scmp.eq.s32.totalorder %s19, 0
      %p253 = por %p251, %p252
      %p254 = scmp.le.s32.totalorder 1, %s13
      %p255 = scmp.lt.s32.totalorder %s13, 5
      %p256 = pnand %p254, %p255
      %p257 = pneg %p256
      // Predicated region
      $region9: #{bloom_forward.20} parent=5 // pred_check
        _
      $region10: #{bloom_forward.20} parent=5 // pred_check_branch
        %259 = sbr.rel (%p256) target = $region12
      $region11: #{bloom_forward.20} parent=5 // pred_region
        %s260 = ssub.s32 %s13, 1
        // Predicated region
        $region13: #{bloom_forward.20} parent=11 // pred_check
          %p261 = pneg %p60
        $region14: #{bloom_forward.20} parent=11 // pred_check_branch
          %263 = sbr.rel (%p261) target = $region16
        $region15: #{bloom_forward.20} parent=11 // pred_region
          %s265 = ssub.s32 16, 16
          %266 = vsyncadd [#allocation6], %s265
          %s268 = sshll.u32 %s0, 4
          %s269 = int_to_ptr.vmem [resolvable:$true] %s268
          %271 = dma.vmem_to_smem %s269, 16, [#allocation5], [#allocation6]
        $region16: #{bloom_forward.20} parent=11 // pred_fallthru
          _
      $region12: #{bloom_forward.20} parent=5 // pred_fallthru
        _
      %p272 = scmp.lt.s32.totalorder %s13, 4
      // Predicated region
      $region17: #{bloom_forward.20} parent=5 // pred_check
        %p273 = pneg %p272
      $region18: #{bloom_forward.20} parent=5 // pred_check_branch
        %275 = sbr.rel (%p273) target = $region20
      $region19: #{bloom_forward.20} parent=5 // pred_region
        // Predicated region
        $region21: #{bloom_forward.20} parent=19 // pred_check
          %p276 = pneg %p86
        $region22: #{bloom_forward.20} parent=19 // pred_check_branch
          %278 = sbr.rel (%p276) target = $region24
        $region23: #{bloom_forward.20} parent=19 // pred_region
          %s279 = sand.u32 %s76, 1
          %s280 = sand.u32 %s76, 1
          %s281 = smul.addr %s280, 8
          %s282 = scalar_lea.vmem [#allocation7], %s281
          %s283 = smul.u32 %s21, 3
          %s284 = smul.u32 2, %s22
          %s285 = smul.addr %s284, 6
          %s286 = sadd.s32 %s283, %s285
          %s287 = smul.addr %s20, 12
          %s288 = sadd.s32 %s286, %s287
          %s289 = smul.addr %s288, 4
          %s290 = scalar_lea.vmem %s1, %s289
          // Predicated region
          $region25: #{bloom_forward.20} parent=23 // pred_check
            _
          $region26: #{bloom_forward.20} parent=23 // pred_check_branch
            %292 = sbr.rel (0) target = $region28
          $region27: #{bloom_forward.20} parent=23 // pred_region
            // Predicated region
            $region29: #{bloom_forward.20} parent=27 // pred_check
              _
            $region30: #{bloom_forward.20} parent=27 // pred_check_branch
              %294 = sbr.rel target = $region32
            $region31: #{bloom_forward.20} parent=27 // pred_region
              // Predicated region
              $region44: #{bloom_forward.20} parent=31 // pred_check
                _
              $region45: #{bloom_forward.20} parent=31 // pred_check_branch
                %312 = sbr.rel (0) target = $region47
              $region46: #{bloom_forward.20} parent=31 // pred_region
                loop: start=0, step=1, limit=1
                $region48: #{bloom_forward.20} parent=46 // loop_pre_header
                  _
                $region49: #{bloom_forward.20} parent=46 // loop_header
                  %s314 = sphi 0, %s318
                  %p315 = scmp.ge.s32.totalorder %s314, 1
                  %s319 = sphi %s290, %s290
                  %s320 = sphi %s282, %s282
                $region50: #{bloom_forward.20} parent=46 // loop_header_branch
                  %317 = sbr.rel (%p315) target = $region54
                $region51: #{bloom_forward.20} parent=46 // loop_body
                  _
                $region52: #{bloom_forward.20} parent=46 // loop_footer
                  %s318 = sadd.s32 1, %s314
                $region53: #{bloom_forward.20} parent=46 // loop_footer_branch
                  %313 = sbr.rel target = $region49
                $region54: #{bloom_forward.20} parent=46 // loop_exit
                  _
                %s322 = ssub.s32 16, 1
                loop: start=0, step=1, limit=1
                $region55: #{bloom_forward.20} parent=46 // loop_pre_header
                  _
                $region56: #{bloom_forward.20} parent=46 // loop_header
                  %s324 = sphi 0, %s328
                  %p325 = scmp.ge.s32.totalorder %s324, 1
                  %s329 = sphi %s290, %s290
                  %s330 = sphi %s282, %s282
                $region57: #{bloom_forward.20} parent=46 // loop_header_branch
                  %327 = sbr.rel (%p325) target = $region61
                $region58: #{bloom_forward.20} parent=46 // loop_body
                  %v331 = vld [vmem:[%s329] sm:%s322]
                  %332 = vst [vmem:[%s330] sm:%s322] %v331
                  %v333 = vld [vmem:[%s329 + $0x18] sm:%s322]
                  %334 = vst [vmem:[%s330 + $0x4] sm:%s322] %v333
                $region59: #{bloom_forward.20} parent=46 // loop_footer
                  %s328 = sadd.s32 1, %s324
                $region60: #{bloom_forward.20} parent=46 // loop_footer_branch
                  %323 = sbr.rel target = $region56
                $region61: #{bloom_forward.20} parent=46 // loop_exit
                  _
              $region47: #{bloom_forward.20} parent=31 // pred_fallthru
                _
            $region32: #{bloom_forward.20} parent=27 // pred_fallthru
              _
            // Predicated region
            $region33: #{bloom_forward.20} parent=27 // pred_check
              _
            $region34: #{bloom_forward.20} parent=27 // pred_check_branch
              %296 = sbr.rel (0) target = $region36
            $region35: #{bloom_forward.20} parent=27 // pred_region
              %s298 = ssub.s32 16, 1
              loop: start=0, step=1, limit=1
              $region37: #{bloom_forward.20} parent=35 // loop_pre_header
                _
              $region38: #{bloom_forward.20} parent=35 // loop_header
                %s300 = sphi 0, %s304
                %p301 = scmp.ge.s32.totalorder %s300, 1
                %s305 = sphi %s290, %s290
                %s306 = sphi %s282, %s282
              $region39: #{bloom_forward.20} parent=35 // loop_header_branch
                %303 = sbr.rel (%p301) target = $region43
              $region40: #{bloom_forward.20} parent=35 // loop_body
                %v307 = vld [vmem:[%s305] sm:%s298]
                %308 = vst [vmem:[%s306] sm:%s298] %v307
                %v309 = vld [vmem:[%s305 + $0x18] sm:%s298]
                %310 = vst [vmem:[%s306 + $0x4] sm:%s298] %v309
              $region41: #{bloom_forward.20} parent=35 // loop_footer
                %s304 = sadd.s32 1, %s300
              $region42: #{bloom_forward.20} parent=35 // loop_footer_branch
                %299 = sbr.rel target = $region38
              $region43: #{bloom_forward.20} parent=35 // loop_exit
                _
            $region36: #{bloom_forward.20} parent=27 // pred_fallthru
              _
          $region28: #{bloom_forward.20} parent=23 // pred_fallthru
            _
          %335 = vnop
        $region24: #{bloom_forward.20} parent=19 // pred_fallthru
          _
        // Predicated region
        $region62: #{bloom_forward.20} parent=19 // pred_check
          %p336 = pneg %p120
        $region63: #{bloom_forward.20} parent=19 // pred_check_branch
          %338 = sbr.rel (%p336) target = $region65
        $region64: #{bloom_forward.20} parent=19 // pred_region
          %s339 = sand.u32 %s110, 1
          %s340 = sand.u32 %s110, 1
          %s341 = smul.addr %s340, 8
          %s342 = scalar_lea.vmem [#allocation8], %s341
          %s343 = smul.u32 %s21, 3
          %s344 = sadd.s32 %s343, 1
          %s345 = smul.u32 2, %s23
          %s346 = smul.addr %s345, 6
          %s347 = sadd.s32 %s344, %s346
          %s348 = smul.addr %s20, 12
          %s349 = sadd.s32 %s347, %s348
          %s350 = smul.addr %s349, 4
          %s351 = scalar_lea.vmem %s2, %s350
          // Predicated region
          $region66: #{bloom_forward.20} parent=64 // pred_check
            _
          $region67: #{bloom_forward.20} parent=64 // pred_check_branch
            %353 = sbr.rel (0) target = $region69
          $region68: #{bloom_forward.20} parent=64 // pred_region
            // Predicated region
            $region70: #{bloom_forward.20} parent=68 // pred_check
              _
            $region71: #{bloom_forward.20} parent=68 // pred_check_branch
              %355 = sbr.rel target = $region73
            $region72: #{bloom_forward.20} parent=68 // pred_region
              // Predicated region
              $region85: #{bloom_forward.20} parent=72 // pred_check
                _
              $region86: #{bloom_forward.20} parent=72 // pred_check_branch
                %373 = sbr.rel (0) target = $region88
              $region87: #{bloom_forward.20} parent=72 // pred_region
                loop: start=0, step=1, limit=1
                $region89: #{bloom_forward.20} parent=87 // loop_pre_header
                  _
                $region90: #{bloom_forward.20} parent=87 // loop_header
                  %s375 = sphi 0, %s379
                  %p376 = scmp.ge.s32.totalorder %s375, 1
                  %s380 = sphi %s351, %s351
                  %s381 = sphi %s342, %s342
                $region91: #{bloom_forward.20} parent=87 // loop_header_branch
                  %378 = sbr.rel (%p376) target = $region95
                $region92: #{bloom_forward.20} parent=87 // loop_body
                  _
                $region93: #{bloom_forward.20} parent=87 // loop_footer
                  %s379 = sadd.s32 1, %s375
                $region94: #{bloom_forward.20} parent=87 // loop_footer_branch
                  %374 = sbr.rel target = $region90
                $region95: #{bloom_forward.20} parent=87 // loop_exit
                  _
                %s383 = ssub.s32 16, 1
                loop: start=0, step=1, limit=1
                $region96: #{bloom_forward.20} parent=87 // loop_pre_header
                  _
                $region97: #{bloom_forward.20} parent=87 // loop_header
                  %s385 = sphi 0, %s389
                  %p386 = scmp.ge.s32.totalorder %s385, 1
                  %s390 = sphi %s351, %s351
                  %s391 = sphi %s342, %s342
                $region98: #{bloom_forward.20} parent=87 // loop_header_branch
                  %388 = sbr.rel (%p386) target = $region102
                $region99: #{bloom_forward.20} parent=87 // loop_body
                  %v392 = vld [vmem:[%s390] sm:%s383]
                  %393 = vst [vmem:[%s391] sm:%s383] %v392
                  %v394 = vld [vmem:[%s390 + $0x18] sm:%s383]
                  %395 = vst [vmem:[%s391 + $0x4] sm:%s383] %v394
                $region100: #{bloom_forward.20} parent=87 // loop_footer
                  %s389 = sadd.s32 1, %s385
                $region101: #{bloom_forward.20} parent=87 // loop_footer_branch
                  %384 = sbr.rel target = $region97
                $region102: #{bloom_forward.20} parent=87 // loop_exit
                  _
              $region88: #{bloom_forward.20} parent=72 // pred_fallthru
                _
            $region73: #{bloom_forward.20} parent=68 // pred_fallthru
              _
            // Predicated region
            $region74: #{bloom_forward.20} parent=68 // pred_check
              _
            $region75: #{bloom_forward.20} parent=68 // pred_check_branch
              %357 = sbr.rel (0) target = $region77
            $region76: #{bloom_forward.20} parent=68 // pred_region
              %s359 = ssub.s32 16, 1
              loop: start=0, step=1, limit=1
              $region78: #{bloom_forward.20} parent=76 // loop_pre_header
                _
              $region79: #{bloom_forward.20} parent=76 // loop_header
                %s361 = sphi 0, %s365
                %p362 = scmp.ge.s32.totalorder %s361, 1
                %s366 = sphi %s351, %s351
                %s367 = sphi %s342, %s342
              $region80: #{bloom_forward.20} parent=76 // loop_header_branch
                %364 = sbr.rel (%p362) target = $region84
              $region81: #{bloom_forward.20} parent=76 // loop_body
                %v368 = vld [vmem:[%s366] sm:%s359]
                %369 = vst [vmem:[%s367] sm:%s359] %v368
                %v370 = vld [vmem:[%s366 + $0x18] sm:%s359]
                %371 = vst [vmem:[%s367 + $0x4] sm:%s359] %v370
              $region82: #{bloom_forward.20} parent=76 // loop_footer
                %s365 = sadd.s32 1, %s361
              $region83: #{bloom_forward.20} parent=76 // loop_footer_branch
                %360 = sbr.rel target = $region79
              $region84: #{bloom_forward.20} parent=76 // loop_exit
                _
            $region77: #{bloom_forward.20} parent=68 // pred_fallthru
              _
          $region69: #{bloom_forward.20} parent=64 // pred_fallthru
            _
          %396 = vnop
        $region65: #{bloom_forward.20} parent=19 // pred_fallthru
          _
        // Predicated region
        $region103: #{bloom_forward.20} parent=19 // pred_check
          %p397 = pneg %p154
        $region104: #{bloom_forward.20} parent=19 // pred_check_branch
          %399 = sbr.rel (%p397) target = $region106
        $region105: #{bloom_forward.20} parent=19 // pred_region
          %s400 = sand.u32 %s144, 1
          %s401 = sand.u32 %s144, 1
          %s402 = smul.addr %s401, 8
          %s403 = scalar_lea.vmem [#allocation9], %s402
          %s404 = smul.u32 %s21, 3
          %s405 = sadd.s32 %s404, 2
          %s406 = smul.u32 2, %s23
          %s407 = smul.addr %s406, 6
          %s408 = sadd.s32 %s405, %s407
          %s409 = smul.addr %s20, 12
          %s410 = sadd.s32 %s408, %s409
          %s411 = smul.addr %s410, 4
          %s412 = scalar_lea.vmem %s3, %s411
          // Predicated region
          $region107: #{bloom_forward.20} parent=105 // pred_check
            _
          $region108: #{bloom_forward.20} parent=105 // pred_check_branch
            %414 = sbr.rel (0) target = $region110
          $region109: #{bloom_forward.20} parent=105 // pred_region
            // Predicated region
            $region111: #{bloom_forward.20} parent=109 // pred_check
              _
            $region112: #{bloom_forward.20} parent=109 // pred_check_branch
              %416 = sbr.rel target = $region114
            $region113: #{bloom_forward.20} parent=109 // pred_region
              // Predicated region
              $region126: #{bloom_forward.20} parent=113 // pred_check
                _
              $region127: #{bloom_forward.20} parent=113 // pred_check_branch
                %434 = sbr.rel (0) target = $region129
              $region128: #{bloom_forward.20} parent=113 // pred_region
                loop: start=0, step=1, limit=1
                $region130: #{bloom_forward.20} parent=128 // loop_pre_header
                  _
                $region131: #{bloom_forward.20} parent=128 // loop_header
                  %s436 = sphi 0, %s440
                  %p437 = scmp.ge.s32.totalorder %s436, 1
                  %s441 = sphi %s412, %s412
                  %s442 = sphi %s403, %s403
                $region132: #{bloom_forward.20} parent=128 // loop_header_branch
                  %439 = sbr.rel (%p437) target = $region136
                $region133: #{bloom_forward.20} parent=128 // loop_body
                  _
                $region134: #{bloom_forward.20} parent=128 // loop_footer
                  %s440 = sadd.s32 1, %s436
                $region135: #{bloom_forward.20} parent=128 // loop_footer_branch
                  %435 = sbr.rel target = $region131
                $region136: #{bloom_forward.20} parent=128 // loop_exit
                  _
                %s444 = ssub.s32 16, 1
                loop: start=0, step=1, limit=1
                $region137: #{bloom_forward.20} parent=128 // loop_pre_header
                  _
                $region138: #{bloom_forward.20} parent=128 // loop_header
                  %s446 = sphi 0, %s450
                  %p447 = scmp.ge.s32.totalorder %s446, 1
                  %s451 = sphi %s412, %s412
                  %s452 = sphi %s403, %s403
                $region139: #{bloom_forward.20} parent=128 // loop_header_branch
                  %449 = sbr.rel (%p447) target = $region143
                $region140: #{bloom_forward.20} parent=128 // loop_body
                  %v453 = vld [vmem:[%s451] sm:%s444]
                  %454 = vst [vmem:[%s452] sm:%s444] %v453
                  %v455 = vld [vmem:[%s451 + $0x18] sm:%s444]
                  %456 = vst [vmem:[%s452 + $0x4] sm:%s444] %v455
                $region141: #{bloom_forward.20} parent=128 // loop_footer
                  %s450 = sadd.s32 1, %s446
                $region142: #{bloom_forward.20} parent=128 // loop_footer_branch
                  %445 = sbr.rel target = $region138
                $region143: #{bloom_forward.20} parent=128 // loop_exit
                  _
              $region129: #{bloom_forward.20} parent=113 // pred_fallthru
                _
            $region114: #{bloom_forward.20} parent=109 // pred_fallthru
              _
            // Predicated region
            $region115: #{bloom_forward.20} parent=109 // pred_check
              _
            $region116: #{bloom_forward.20} parent=109 // pred_check_branch
              %418 = sbr.rel (0) target = $region118
            $region117: #{bloom_forward.20} parent=109 // pred_region
              %s420 = ssub.s32 16, 1
              loop: start=0, step=1, limit=1
              $region119: #{bloom_forward.20} parent=117 // loop_pre_header
                _
              $region120: #{bloom_forward.20} parent=117 // loop_header
                %s422 = sphi 0, %s426
                %p423 = scmp.ge.s32.totalorder %s422, 1
                %s427 = sphi %s412, %s412
                %s428 = sphi %s403, %s403
              $region121: #{bloom_forward.20} parent=117 // loop_header_branch
                %425 = sbr.rel (%p423) target = $region125
              $region122: #{bloom_forward.20} parent=117 // loop_body
                %v429 = vld [vmem:[%s427] sm:%s420]
                %430 = vst [vmem:[%s428] sm:%s420] %v429
                %v431 = vld [vmem:[%s427 + $0x18] sm:%s420]
                %432 = vst [vmem:[%s428 + $0x4] sm:%s420] %v431
              $region123: #{bloom_forward.20} parent=117 // loop_footer
                %s426 = sadd.s32 1, %s422
              $region124: #{bloom_forward.20} parent=117 // loop_footer_branch
                %421 = sbr.rel target = $region120
              $region125: #{bloom_forward.20} parent=117 // loop_exit
                _
            $region118: #{bloom_forward.20} parent=109 // pred_fallthru
              _
          $region110: #{bloom_forward.20} parent=105 // pred_fallthru
            _
          %457 = vnop
        $region106: #{bloom_forward.20} parent=19 // pred_fallthru
          _
        // Predicated region
        $region144: #{bloom_forward.20} parent=19 // pred_check
          %p458 = pneg %p182
        $region145: #{bloom_forward.20} parent=19 // pred_check_branch
          %460 = sbr.rel (%p458) target = $region147
        $region146: #{bloom_forward.20} parent=19 // pred_region
          %p461 = scmp.lt.s32.totalorder %s20, 1
          %s462 = scalar_select %p461, %s20, 1
          %p463 = scmp.lt.s32.totalorder %s23, 0
          %s464 = scalar_select %p463, %s23, 0
          %s465 = sadd.s32 %s464, %s462
          %s466 = scalar_lea.vmem %s4, %s465
        $region147: #{bloom_forward.20} parent=19 // pred_fallthru
          _
        // Predicated region
        $region148: #{bloom_forward.20} parent=19 // pred_check
          %p467 = pneg %p210
        $region149: #{bloom_forward.20} parent=19 // pred_check_branch
          %469 = sbr.rel (%p467) target = $region151
        $region150: #{bloom_forward.20} parent=19 // pred_region
          %p470 = scmp.lt.s32.totalorder %s20, 1
          %s471 = scalar_select %p470, %s20, 1
          %p472 = scmp.lt.s32.totalorder %s23, 0
          %s473 = scalar_select %p472, %s23, 0
          %s474 = sadd.s32 %s473, %s471
          %s475 = scalar_lea.vmem %s5, %s474
        $region151: #{bloom_forward.20} parent=19 // pred_fallthru
          _
      $region20: #{bloom_forward.20} parent=5 // pred_fallthru
        _
      %p476 = scmp.le.s32.totalorder 1, %s13
      %p477 = scmp.lt.s32.totalorder %s13, 5
      %p478 = pnand %p476, %p477
      %p479 = pneg %p478
      // Predicated region
      $region152: #{bloom_forward.20} parent=5 // pred_check
        _
      $region153: #{bloom_forward.20} parent=5 // pred_check_branch
        %481 = sbr.rel (%p478) target = $region155
      $region154: #{bloom_forward.20} parent=5 // pred_region
        %s482 = ssub.s32 %s13, 1
        // Predicated region
        $region156: #{bloom_forward.20} parent=154 // pred_check
          %p483 = pneg %p60
        $region157: #{bloom_forward.20} parent=154 // pred_check_branch
          %485 = sbr.rel (%p483) target = $region159
        $region158: #{bloom_forward.20} parent=154 // pred_region
          %486 = dma.done [#allocation6], 16
        $region159: #{bloom_forward.20} parent=154 // pred_fallthru
          _
        %s487 = sand.u32 %s79, 1
        %s488 = sand.u32 %s79, 1
        %s489 = smul.addr %s488, 8
        %s490 = scalar_lea.vmem [#allocation7], %s489
        // Predicated region
        $region160: #{bloom_forward.20} parent=154 // pred_check
          %p491 = pneg %p92
        $region161: #{bloom_forward.20} parent=154 // pred_check_branch
          %493 = sbr.rel (%p491) target = $region163
        $region162: #{bloom_forward.20} parent=154 // pred_region
          _
        $region163: #{bloom_forward.20} parent=154 // pred_fallthru
          _
        %s494 = sand.u32 %s113, 1
        %s495 = sand.u32 %s113, 1
        %s496 = smul.addr %s495, 8
        %s497 = scalar_lea.vmem [#allocation8], %s496
        // Predicated region
        $region164: #{bloom_forward.20} parent=154 // pred_check
          %p498 = pneg %p126
        $region165: #{bloom_forward.20} parent=154 // pred_check_branch
          %500 = sbr.rel (%p498) target = $region167
        $region166: #{bloom_forward.20} parent=154 // pred_region
          _
        $region167: #{bloom_forward.20} parent=154 // pred_fallthru
          _
        %s501 = sand.u32 %s147, 1
        %s502 = sand.u32 %s147, 1
        %s503 = smul.addr %s502, 8
        %s504 = scalar_lea.vmem [#allocation9], %s503
        // Predicated region
        $region168: #{bloom_forward.20} parent=154 // pred_check
          %p505 = pneg %p160
        $region169: #{bloom_forward.20} parent=154 // pred_check_branch
          %507 = sbr.rel (%p505) target = $region171
        $region170: #{bloom_forward.20} parent=154 // pred_region
          _
        $region171: #{bloom_forward.20} parent=154 // pred_fallthru
          _
        %508 = sfence
        %p509 = pneg %p60
        %p510 = pneg %p57
        %s511 = sand.u32 %s79, 1
        %s512 = sand.u32 %s79, 1
        %s513 = smul.addr %s512, 8
        %s514 = scalar_lea.vmem [#allocation7], %s513
        %p515 = pneg %p92
        %p516 = pneg %p89
        %s517 = sand.u32 %s113, 1
        %s518 = sand.u32 %s113, 1
        %s519 = smul.addr %s518, 8
        %s520 = scalar_lea.vmem [#allocation8], %s519
        %p521 = pneg %p126
        %p522 = pneg %p123
        %s523 = sand.u32 %s147, 1
        %s524 = sand.u32 %s147, 1
        %s525 = smul.addr %s524, 8
        %s526 = scalar_lea.vmem [#allocation9], %s525
        %p527 = pneg %p160
        %p528 = pneg %p157
        %p529 = scmp.lt.s32.totalorder %s24, 1
        %s530 = scalar_select %p529, %s24, 1
        %p531 = scmp.lt.s32.totalorder %s27, 0
        %s532 = scalar_select %p531, %s27, 0
        %s533 = sadd.s32 %s532, %s530
        %s534 = scalar_lea.vmem %s4, %s533
        %p535 = pneg %p188
        %p536 = pneg %p185
        %p537 = scmp.lt.s32.totalorder %s24, 1
        %s538 = scalar_select %p537, %s24, 1
        %p539 = scmp.lt.s32.totalorder %s27, 0
        %s540 = scalar_select %p539, %s27, 0
        %s541 = sadd.s32 %s540, %s538
        %s542 = scalar_lea.vmem %s5, %s541
        %p543 = pneg %p216
        %p544 = pneg %p213
        %p545 = pneg %p246
        %p546 = pneg %p243
        %s547 = sand.u32 %s233, 1
        %s548 = sand.u32 %s233, 1
        %s549 = smul.addr %s548, 8
        %s550 = scalar_lea.vmem [#allocation10], %s549
        %s551 = smul.u32 %s25, 3
        %s552 = smul.u32 2, %s26
        %s553 = smul.u32 %s25, 3
        %s554 = sadd.s32 %s553, 1
        %s555 = smul.u32 2, %s27
        %s556 = smul.u32 %s25, 3
        %s557 = sadd.s32 %s556, 2
        %s558 = smul.u32 2, %s27
        %p559 = scmp.lt.s32.totalorder %s24, 1
        %s560 = scalar_select %p559, %s24, 1
        %p561 = scmp.lt.s32.totalorder %s27, 0
        %s562 = scalar_select %p561, %s27, 0
        %s563 = sadd.s32 %s562, %s560
        %s564 = scalar_lea.vmem %s4, %s563
        %p565 = scmp.lt.s32.totalorder %s24, 1
        %s566 = scalar_select %p565, %s24, 1
        %p567 = scmp.lt.s32.totalorder %s27, 0
        %s568 = scalar_select %p567, %s27, 0
        %s569 = sadd.s32 %s568, %s566
        %s570 = scalar_lea.vmem %s5, %s569
        %s571 = smul.u32 2, %s26
        %p573 = scmp.eq.s32.totalorder %s27, 0
        // Predicated region
        $region172: #{bloom_forward.20} parent=154 // pred_check
          %p574 = pneg %p573
        $region173: #{bloom_forward.20} parent=154 // pred_check_branch
          %576 = sbr.rel (%p574) target = $region175
        $region174: #{bloom_forward.20} parent=154 // pred_region
          %vm577 = vcmask 7168
          %578 = vst.msk [vmem:[#allocation2] sm:$0xff] %vm577, -inf
          %579 = vst.msk [vmem:[#allocation2 + $0x8] sm:$0xff] %vm577, -inf
          %580 = vst.msk [vmem:[#allocation3] sm:$0xff] %vm577, 0.0
          %581 = vst.msk [vmem:[#allocation3 + $0x8] sm:$0xff] %vm577, 0.0
          %582 = vst [vmem:[#allocation4] sm:$0xff] 0.0
          %583 = vst [vmem:[#allocation4 + $0x8] sm:$0xff] 0.0
        $region175: #{bloom_forward.20} parent=154 // pred_fallthru
          _
        %s584 = smul.u32 %s27, 16
        %s585 = smul.u32 %s26, 16
        %s586 = sadd.s32 %s585, 15
        %p587 = scmp.le.s32.totalorder %s584, %s586
        // Predicated region
        $region176: #{bloom_forward.20} parent=154 // pred_check
          %p588 = pneg %p587
        $region177: #{bloom_forward.20} parent=154 // pred_check_branch
          %590 = sbr.rel (%p588) target = $region179
        $region178: #{bloom_forward.20} parent=154 // pred_region
          %v591 = vld [vmem:[%s490] sm:$0xf]
          %v592 = vld [vmem:[%s490 + $0x4] sm:$0xf]
          %v593 = vld [vmem:[%s497] sm:$0xf]
          %v594 = vld [vmem:[%s497 + $0x4] sm:$0xf]
          %v595 = vld [vmem:[%s504] sm:$0xf]
          %v596 = vld [vmem:[%s504 + $0x4] sm:$0xf]
          %v599 = vunpack.c.l.b16 %v591
          %v600 = vunpack.c.l.b16 %v592
          %v601 = vpack.c.b16 %v600, %v599
          %v605 = vunpack.c.l.b16 %v593
          %v606 = vunpack.c.l.b16 %v594
          %v607 = vpack.c.b16 %v606, %v605
          %609 = vmatprep.subr.bf16.mxu0 0
          %610 = vmatpush1.bf16.xpose.msra.mxu0 0
          %611 = vmatprep.subr.bf16.mxu0 0
          %612 = vmatpush1.bf16.xpose.msra.mxu0 0
          %613 = vmatprep.subr.bf16.mxu0 0
          %614 = vmatpush1.bf16.xpose.msra.mxu0 0
          %615 = vmatprep.subr.bf16.mxu0 0
          %616 = vmatpush1.bf16.xpose.msra.mxu0 0
          %617 = vmatprep.subr.bf16.mxu0 0
          %618 = vmatpush1.bf16.xpose.msra.mxu0 0
          %619 = vmatprep.subr.bf16.mxu0 0
          %620 = vmatpush1.bf16.xpose.msra.mxu0 0
          %621 = vmatprep.subr.bf16.mxu0 0
          %622 = vmatpush1.bf16.xpose.msra.mxu0 0
          %623 = vmatprep.subr.bf16.mxu0 0
          %624 = vmatpush1.bf16.xpose.msra.mxu0 %v607
          %625 = vmatprep.subr.bf16.mxu0 0
          %626 = vmatpush2.bf16.xpose.msra.mxu0 0
          %627 = vmatprep.subr.bf16.mxu0 0
          %628 = vmatpush2.bf16.xpose.msra.mxu0 0
          %629 = vmatprep.subr.bf16.mxu0 0
          %630 = vmatpush2.bf16.xpose.msra.mxu0 0
          %631 = vmatprep.subr.bf16.mxu0 0
          %632 = vmatpush2.bf16.xpose.msra.mxu0 0
          %633 = vmatprep.subr.bf16.mxu0 0
          %634 = vmatpush2.bf16.xpose.msra.mxu0 0
          %635 = vmatprep.subr.bf16.mxu0 0
          %636 = vmatpush2.bf16.xpose.msra.mxu0 0
          %637 = vmatprep.subr.bf16.mxu0 0
          %638 = vmatpush2.bf16.xpose.msra.mxu0 0
          %639 = vmatprep.subr.bf16.mxu0 0
          %640 = vmatpush2.bf16.xpose.msra.mxu0 0
          %641 = vmatprep.mubr.bf16.mxu0 0
          %642 = vmatmul.mubr.bf16.gmra.mxu0 %v601
          %v643 = vpop.f32.mrf.mxu0
          %v644 = vadd.f32 0.0, %v643
          %v645 = vpop.f32.mrf.mxu0
          %v646 = vpop.f32.mrf.mxu0
          %v647 = vadd.f32 0.0, %v646
          %v648 = vpop.f32.mrf.mxu0
          %649 = vdwg.mxu0
          %v650 = vmul.f32 %v644, 0.088388346
          %v651 = vmul.f32 %v647, 0.088388346
          %s652 = sld [smem:[#allocation5 + %s25]]
          %v653 = vld [vmem:[%s564] sm:$0x1]
          %v654 = vstv %s652
          %v655 = vmul.f32 %v654, %v653
          %v656 = vld [vmem:[%s570] sm:$0x1]
          %v657 = vadd.f32 %v655, %v656
          %v659 = vlaneseq
          %v660 = vshrl.u32 %v659, 7
          %v661 = vsub.s32 0, %v660
          %v662 = vrot.slane %v657, %v661
          %v664 = vadd.f32 %v650, %v662
          %v665 = vadd.f32 %v651, %v662
          %v666 = vlaneseq
          %v667 = vshrl.u32 %v666, 7
          %v668 = vadd.s32 %v667, 8
          %v669 = vstv %s585
          %v670 = vadd.s32 %v669, %v667
          %v671 = vadd.s32 %v669, %v668
          %v672 = vlaneseq
          %v673 = vand.u32 %v672, 127
          %v674 = vstv %s584
          %v675 = vadd.s32 %v674, %v673
          %vm676 = vcmp.gt.s32.totalorder %v675, %v670
          %vm677 = vcmp.gt.s32.totalorder %v675, %v671
          %v678 = vsub.f32 %v664, 10000.0
          %v679 = vsub.f32 %v665, 10000.0
          %v680 = vsel %vm676, %v678, %v664
          %v681 = vsel %vm677, %v679, %v665
          %v682 = vld [vmem:[#allocation2] sm:$0xff]
          %v683 = vld [vmem:[#allocation2 + $0x8] sm:$0xff]
          %vm684 = vcmask 130048
          %v685 = vsel %vm684, %v680, -inf
          %686 = vmax.xlane.f32.xlu0 %v685
          %v687 = vpop.xlane.xlu0 %686
          %v688 = vsel %vm684, %v681, -inf
          %689 = vmax.xlane.f32.xlu0 %v688
          %v690 = vpop.xlane.xlu0 %689
          %v691 = vmax.f32 %v682, %v687
          %v692 = vmax.f32 %v683, %v690
          %v693 = vsub.f32 %v682, %v691
          %v694 = vsub.f32 %v683, %v692
          %v695 = vmul.f32 %v693, 1.442695
          %v696 = vpow.pop %v695
          %v697 = vmul.f32 %v694, 1.442695
          %v698 = vpow.pop %v697
          %700 = vset.pattern.permute.xlu0 0
          %701 = vperm.xlu0 %700, %v691
          %v702 = vpop.permute.xlu0 %701
          %705 = vset.pattern.permute.xlu0 0
          %706 = vperm.xlu0 %705, %v692
          %v707 = vpop.permute.xlu0 %706
          %v709 = vsub.f32 %v680, %v702
          %v710 = vsub.f32 %v681, %v707
          %v711 = vmul.f32 %v709, 1.442695
          %v712 = vpow.pop %v711
          %v713 = vmul.f32 %v710, 1.442695
          %v714 = vpow.pop %v713
          %v715 = vld [vmem:[#allocation3] sm:$0xff]
          %v716 = vld [vmem:[#allocation3 + $0x8] sm:$0xff]
          %v717 = vmul.f32 %v696, %v715
          %v718 = vmul.f32 %v698, %v716
          %v719 = vsel %vm684, %v712, 0.0
          %720 = vadd.xlane.f32.xlu0 %v719
          %v721 = vpop.xlane.xlu0 %720
          %v722 = vsel %vm684, %v714, 0.0
          %723 = vadd.xlane.f32.xlu0 %v722
          %v724 = vpop.xlane.xlu0 %723
          %v725 = vadd.f32 %v717, %v721
          %v726 = vadd.f32 %v718, %v724
          %vm727 = vcmask 7168
          %728 = vst.msk [vmem:[#allocation3] sm:$0xff] %vm727, %v725
          %729 = vst.msk [vmem:[#allocation3 + $0x8] sm:$0xff] %vm727, %v726
          %v730 = vld [vmem:[#allocation4] sm:$0xff]
          %v731 = vld [vmem:[#allocation4 + $0x8] sm:$0xff]
          %733 = vset.pattern.permute.xlu0 0
          %734 = vperm.xlu0 %733, %v696
          %v735 = vpop.permute.xlu0 %734
          %738 = vset.pattern.permute.xlu0 0
          %739 = vperm.xlu0 %738, %v698
          %v740 = vpop.permute.xlu0 %739
          %v742 = vmul.f32 %v735, %v730
          %v743 = vmul.f32 %v740, %v731
          %v744 = vpack.c.bf16 %v714, %v712
          %v747 = vunpack.c.l.b16 %v595
          %v748 = vunpack.c.l.b16 %v596
          %v749 = vpack.c.b16 %v748, %v747
          %v752 = vsel %vm684, %v744, 0
          %754 = vmatprep.subr.bf16.mxu0 0
          %755 = vmatpush1.bf16.msra.mxu0 0
          %756 = vmatprep.subr.bf16.mxu0 0
          %757 = vmatpush1.bf16.msra.mxu0 0
          %758 = vmatprep.subr.bf16.mxu0 0
          %759 = vmatpush1.bf16.msra.mxu0 0
          %760 = vmatprep.subr.bf16.mxu0 0
          %761 = vmatpush1.bf16.msra.mxu0 0
          %762 = vmatprep.subr.bf16.mxu0 0
          %763 = vmatpush1.bf16.msra.mxu0 0
          %764 = vmatprep.subr.bf16.mxu0 0
          %765 = vmatpush1.bf16.msra.mxu0 0
          %766 = vmatprep.subr.bf16.mxu0 0
          %767 = vmatpush1.bf16.msra.mxu0 0
          %768 = vmatprep.subr.bf16.mxu0 0
          %769 = vmatpush1.bf16.msra.mxu0 %v749
          %770 = vmatprep.subr.bf16.mxu0 0
          %771 = vmatpush2.bf16.msra.mxu0 0
          %772 = vmatprep.subr.bf16.mxu0 0
          %773 = vmatpush2.bf16.msra.mxu0 0
          %774 = vmatprep.subr.bf16.mxu0 0
          %775 = vmatpush2.bf16.msra.mxu0 0
          %776 = vmatprep.subr.bf16.mxu0 0
          %777 = vmatpush2.bf16.msra.mxu0 0
          %778 = vmatprep.subr.bf16.mxu0 0
          %779 = vmatpush2.bf16.msra.mxu0 0
          %780 = vmatprep.subr.bf16.mxu0 0
          %781 = vmatpush2.bf16.msra.mxu0 0
          %782 = vmatprep.subr.bf16.mxu0 0
          %783 = vmatpush2.bf16.msra.mxu0 0
          %784 = vmatprep.subr.bf16.mxu0 0
          %785 = vmatpush2.bf16.msra.mxu0 0
          %786 = vmatprep.mubr.bf16.mxu0 0
          %787 = vmatmul.mubr.bf16.gmra.mxu0 %v752
          %v788 = vpop.f32.mrf.mxu0
          %v789 = vadd.f32 0.0, %v788
          %v790 = vpop.f32.mrf.mxu0
          %v791 = vpop.f32.mrf.mxu0
          %v792 = vadd.f32 0.0, %v791
          %v793 = vpop.f32.mrf.mxu0
          %794 = vdwg.mxu0
          %v795 = vadd.f32 %v742, %v789
          %v796 = vadd.f32 %v743, %v792
          %797 = vst [vmem:[#allocation4] sm:$0xff] %v795
          %798 = vst [vmem:[#allocation4 + $0x8] sm:$0xff] %v796
          %799 = vst.msk [vmem:[#allocation2] sm:$0xff] %vm727, %v691
          %800 = vst.msk [vmem:[#allocation2 + $0x8] sm:$0xff] %vm727, %v692
        $region179: #{bloom_forward.20} parent=154 // pred_fallthru
          _
        // Predicated region
        $region180: #{bloom_forward.20} parent=154 // pred_check
          %p801 = pneg %p573
        $region181: #{bloom_forward.20} parent=154 // pred_check_branch
          %803 = sbr.rel (%p801) target = $region183
        $region182: #{bloom_forward.20} parent=154 // pred_region
          %v804 = vld [vmem:[#allocation4] sm:$0xff]
          %v805 = vld [vmem:[#allocation4 + $0x8] sm:$0xff]
          %v806 = vld [vmem:[#allocation3] sm:$0xff]
          %v807 = vld [vmem:[#allocation3 + $0x8] sm:$0xff]
          %v808 = vrcp.pop %v806
          %v809 = vrcp.pop %v807
          %811 = vset.pattern.permute.xlu0 0
          %812 = vperm.xlu0 %811, %v808
          %v813 = vpop.permute.xlu0 %812
          %816 = vset.pattern.permute.xlu0 0
          %817 = vperm.xlu0 %816, %v809
          %v818 = vpop.permute.xlu0 %817
          %v820 = vmul.f32 %v804, %v813
          %v821 = vmul.f32 %v805, %v818
          %v822 = vpack.c.bf16 %v821, %v820
          %v824 = vunpack.c.l.b16 %v822
          %v825 = vunpack.c.h.b16 %v822
          %v826 = vpack.c.b16 %v824, %v824
          %v827 = vpack.c.b16 %v825, %v825
          %830 = vst [vmem:[%s550] sm:$0xf] %v826
          %831 = vst [vmem:[%s550 + $0x4] sm:$0xf] %v827
        $region183: #{bloom_forward.20} parent=154 // pred_fallthru
          _
        %s832 = sand.u32 %s233, 1
        %s833 = sand.u32 %s233, 1
        %s834 = smul.addr %s833, 8
        %s835 = scalar_lea.vmem [#allocation10], %s834
        // Predicated region
        $region184: #{bloom_forward.20} parent=154 // pred_check
          %p836 = pneg %p243
        $region185: #{bloom_forward.20} parent=154 // pred_check_branch
          %838 = sbr.rel (%p836) target = $region187
        $region186: #{bloom_forward.20} parent=154 // pred_region
          %s839 = smul.u32 2, %s26
          %s840 = smul.addr %s839, 2
          %s841 = sadd.s32 %s25, %s840
          %s842 = smul.addr %s24, 4
          %s843 = sadd.s32 %s841, %s842
          %s844 = smul.addr %s843, 4
          %s845 = scalar_lea.vmem %s6, %s844
          // Predicated region
          $region188: #{bloom_forward.20} parent=186 // pred_check
            _
          $region189: #{bloom_forward.20} parent=186 // pred_check_branch
            %847 = sbr.rel (0) target = $region191
          $region190: #{bloom_forward.20} parent=186 // pred_region
            // Predicated region
            $region192: #{bloom_forward.20} parent=190 // pred_check
              _
            $region193: #{bloom_forward.20} parent=190 // pred_check_branch
              %849 = sbr.rel target = $region195
            $region194: #{bloom_forward.20} parent=190 // pred_region
              // Predicated region
              $region207: #{bloom_forward.20} parent=194 // pred_check
                _
              $region208: #{bloom_forward.20} parent=194 // pred_check_branch
                %867 = sbr.rel (0) target = $region210
              $region209: #{bloom_forward.20} parent=194 // pred_region
                loop: start=0, step=1, limit=1
                $region211: #{bloom_forward.20} parent=209 // loop_pre_header
                  _
                $region212: #{bloom_forward.20} parent=209 // loop_header
                  %s869 = sphi 0, %s873
                  %p870 = scmp.ge.s32.totalorder %s869, 1
                  %s874 = sphi %s835, %s835
                  %s875 = sphi %s845, %s845
                $region213: #{bloom_forward.20} parent=209 // loop_header_branch
                  %872 = sbr.rel (%p870) target = $region217
                $region214: #{bloom_forward.20} parent=209 // loop_body
                  _
                $region215: #{bloom_forward.20} parent=209 // loop_footer
                  %s873 = sadd.s32 1, %s869
                $region216: #{bloom_forward.20} parent=209 // loop_footer_branch
                  %868 = sbr.rel target = $region212
                $region217: #{bloom_forward.20} parent=209 // loop_exit
                  _
                %s877 = ssub.s32 16, 1
                loop: start=0, step=1, limit=1
                $region218: #{bloom_forward.20} parent=209 // loop_pre_header
                  _
                $region219: #{bloom_forward.20} parent=209 // loop_header
                  %s879 = sphi 0, %s883
                  %p880 = scmp.ge.s32.totalorder %s879, 1
                  %s884 = sphi %s835, %s835
                  %s885 = sphi %s845, %s845
                $region220: #{bloom_forward.20} parent=209 // loop_header_branch
                  %882 = sbr.rel (%p880) target = $region224
                $region221: #{bloom_forward.20} parent=209 // loop_body
                  %v886 = vld [vmem:[%s884] sm:%s877]
                  %887 = vst [vmem:[%s885] sm:%s877] %v886
                  %v888 = vld [vmem:[%s884 + $0x4] sm:%s877]
                  %889 = vst [vmem:[%s885 + $0x8] sm:%s877] %v888
                $region222: #{bloom_forward.20} parent=209 // loop_footer
                  %s883 = sadd.s32 1, %s879
                $region223: #{bloom_forward.20} parent=209 // loop_footer_branch
                  %878 = sbr.rel target = $region219
                $region224: #{bloom_forward.20} parent=209 // loop_exit
                  _
              $region210: #{bloom_forward.20} parent=194 // pred_fallthru
                _
            $region195: #{bloom_forward.20} parent=190 // pred_fallthru
              _
            // Predicated region
            $region196: #{bloom_forward.20} parent=190 // pred_check
              _
            $region197: #{bloom_forward.20} parent=190 // pred_check_branch
              %851 = sbr.rel (0) target = $region199
            $region198: #{bloom_forward.20} parent=190 // pred_region
              %s853 = ssub.s32 16, 1
              loop: start=0, step=1, limit=1
              $region200: #{bloom_forward.20} parent=198 // loop_pre_header
                _
              $region201: #{bloom_forward.20} parent=198 // loop_header
                %s855 = sphi 0, %s859
                %p856 = scmp.ge.s32.totalorder %s855, 1
                %s860 = sphi %s835, %s835
                %s861 = sphi %s845, %s845
              $region202: #{bloom_forward.20} parent=198 // loop_header_branch
                %858 = sbr.rel (%p856) target = $region206
              $region203: #{bloom_forward.20} parent=198 // loop_body
                %v862 = vld [vmem:[%s860] sm:%s853]
                %863 = vst [vmem:[%s861] sm:%s853] %v862
                %v864 = vld [vmem:[%s860 + $0x4] sm:%s853]
                %865 = vst [vmem:[%s861 + $0x8] sm:%s853] %v864
              $region204: #{bloom_forward.20} parent=198 // loop_footer
                %s859 = sadd.s32 1, %s855
              $region205: #{bloom_forward.20} parent=198 // loop_footer_branch
                %854 = sbr.rel target = $region201
              $region206: #{bloom_forward.20} parent=198 // loop_exit
                _
            $region199: #{bloom_forward.20} parent=190 // pred_fallthru
              _
          $region191: #{bloom_forward.20} parent=186 // pred_fallthru
            _
          %890 = vnop
        $region187: #{bloom_forward.20} parent=154 // pred_fallthru
          _
      $region155: #{bloom_forward.20} parent=5 // pred_fallthru
        _
      %p891 = scmp.le.s32.totalorder 2, %s13
      // Predicated region
      $region225: #{bloom_forward.20} parent=5 // pred_check
        %p892 = pneg %p891
      $region226: #{bloom_forward.20} parent=5 // pred_check_branch
        %894 = sbr.rel (%p892) target = $region228
      $region227: #{bloom_forward.20} parent=5 // pred_region
        %s895 = ssub.s32 %s13, 2
        // Predicated region
        $region229: #{bloom_forward.20} parent=227 // pred_check
          %p896 = pneg %p249
        $region230: #{bloom_forward.20} parent=227 // pred_check_branch
          %898 = sbr.rel (%p896) target = $region232
        $region231: #{bloom_forward.20} parent=227 // pred_region
          %s899 = sand.u32 %s234, 1
          %s900 = sand.u32 %s234, 1
          %s901 = smul.addr %s900, 8
          %s902 = scalar_lea.vmem [#allocation10], %s901
        $region232: #{bloom_forward.20} parent=227 // pred_fallthru
          _
      $region228: #{bloom_forward.20} parent=5 // pred_fallthru
        _
    $region6: #{bloom_forward.20} parent=1 // loop_footer
      %s17 = sadd.s32 1, %s13
    $region7: #{bloom_forward.20} parent=1 // loop_footer_branch
      %12 = sbr.rel target = $region3
    $region8: #{bloom_forward.20} parent=1 // loop_exit
      _
    %903 = vsyncpa [#allocation6], 1
    %s904 = scalar_lea.sflag [#allocation6], 1
    %905 = vsyncpa %s904, 1

// kernel: bloom_forward.19
$region0: #{bloom_forward.19}
  #allocation0 [shape = 'u32[]', space=smem, size = 0x4, offset = 0x4, fixed_abs, tag = 'smem constant byte address 0x4 - core index']
  #allocation1 [shape = 'u32[144,128]{1,0:T(1,128)}', space=vmem, size = 0x12000, scoped, tag = 'internal scratch']
  #allocation2 [shape = 'f32[32,768]{1,0:T(8,128)}', space=vmem, size = 0x18000, scoped, tag = 'scratch operand']
  %s0 = inlined_call_operand.vmem [shape: bf16[32,256], index: 0, kind: input, shape index: {}]
  %s1 = inlined_call_operand.vmem [shape: bf16[256,768], index: 1, kind: input, shape index: {}]
  %s2 = inlined_call_operand.vmem [shape: f32[1,768], index: 2, kind: input, shape index: {}]
  %s3 = inlined_call_operand.vmem [shape: bf16[32,768], index: 3, kind: output, shape index: {}]
  %s4 = sld [smem:[#allocation0]]
  $region30: #{bloom_forward.19} parent=0
    _
  %s6 = ssub.s32 1, %s4
  %s7 = scalar_select 0, %s6, %s4
  // Predicated region
  $region2: #{bloom_forward.19} parent=0 // pred_check
    _
  $region3: #{bloom_forward.19} parent=0 // pred_check_branch
    %9 = sbr.rel (0) target = $region5
  $region4: #{bloom_forward.19} parent=0 // pred_region
    _
  $region5: #{bloom_forward.19} parent=0 // pred_fallthru
    _
  // Predicated region
  $region6: #{bloom_forward.19} parent=0 // pred_check
    _
  $region7: #{bloom_forward.19} parent=0 // pred_check_branch
    %11 = sbr.rel (0) target = $region9
  $region8: #{bloom_forward.19} parent=0 // pred_region
    _
  $region9: #{bloom_forward.19} parent=0 // pred_fallthru
    _
  // Predicated region
  $region10: #{bloom_forward.19} parent=0 // pred_check
    _
  $region11: #{bloom_forward.19} parent=0 // pred_check_branch
    %13 = sbr.rel (0) target = $region13
  $region12: #{bloom_forward.19} parent=0 // pred_region
    _
  $region13: #{bloom_forward.19} parent=0 // pred_fallthru
    _
  %p14 = scmp.eq.s32.totalorder 0, 0
  // Predicated region
  $region14: #{bloom_forward.19} parent=0 // pred_check
    %p15 = pneg %p14
  $region15: #{bloom_forward.19} parent=0 // pred_check_branch
    %17 = sbr.rel (%p15) target = $region17
  $region16: #{bloom_forward.19} parent=0 // pred_region
    %18 = vst [vmem:[#allocation2] sm:$0xff] 0.0
    %19 = vst [vmem:[#allocation2 + $0x8] sm:$0xff] 0.0
    %20 = vst [vmem:[#allocation2 + $0x10] sm:$0xff] 0.0
    %21 = vst [vmem:[#allocation2 + $0x18] sm:$0xff] 0.0
    %22 = vst [vmem:[#allocation2 + $0x20] sm:$0xff] 0.0
    %23 = vst [vmem:[#allocation2 + $0x28] sm:$0xff] 0.0
    %24 = vst [vmem:[#allocation2 + $0x30] sm:$0xff] 0.0
    %25 = vst [vmem:[#allocation2 + $0x38] sm:$0xff] 0.0
    %26 = vst [vmem:[#allocation2 + $0x40] sm:$0xff] 0.0
    %27 = vst [vmem:[#allocation2 + $0x48] sm:$0xff] 0.0
    %28 = vst [vmem:[#allocation2 + $0x50] sm:$0xff] 0.0
    %29 = vst [vmem:[#allocation2 + $0x58] sm:$0xff] 0.0
    %30 = vst [vmem:[#allocation2 + $0x60] sm:$0xff] 0.0
    %31 = vst [vmem:[#allocation2 + $0x68] sm:$0xff] 0.0
    %32 = vst [vmem:[#allocation2 + $0x70] sm:$0xff] 0.0
    %33 = vst [vmem:[#allocation2 + $0x78] sm:$0xff] 0.0
    %34 = vst [vmem:[#allocation2 + $0x80] sm:$0xff] 0.0
    %35 = vst [vmem:[#allocation2 + $0x88] sm:$0xff] 0.0
    %36 = vst [vmem:[#allocation2 + $0x90] sm:$0xff] 0.0
    %37 = vst [vmem:[#allocation2 + $0x98] sm:$0xff] 0.0
    %38 = vst [vmem:[#allocation2 + $0xa0] sm:$0xff] 0.0
    %39 = vst [vmem:[#allocation2 + $0xa8] sm:$0xff] 0.0
    %40 = vst [vmem:[#allocation2 + $0xb0] sm:$0xff] 0.0
    %41 = vst [vmem:[#allocation2 + $0xb8] sm:$0xff] 0.0
  $region17: #{bloom_forward.19} parent=0 // pred_fallthru
    _
  %v42 = vld [vmem:[#allocation2] sm:$0xff]
  %v43 = vld [vmem:[#allocation2 + $0x8] sm:$0xff]
  %v44 = vld [vmem:[#allocation2 + $0x10] sm:$0xff]
  %v45 = vld [vmem:[#allocation2 + $0x18] sm:$0xff]
  %v46 = vld [vmem:[#allocation2 + $0x20] sm:$0xff]
  %v47 = vld [vmem:[#allocation2 + $0x28] sm:$0xff]
  %v48 = vld [vmem:[#allocation2 + $0x30] sm:$0xff]
  %v49 = vld [vmem:[#allocation2 + $0x38] sm:$0xff]
  %v50 = vld [vmem:[#allocation2 + $0x40] sm:$0xff]
  %v51 = vld [vmem:[#allocation2 + $0x48] sm:$0xff]
  %v52 = vld [vmem:[#allocation2 + $0x50] sm:$0xff]
  %v53 = vld [vmem:[#allocation2 + $0x58] sm:$0xff]
  %v54 = vld [vmem:[#allocation2 + $0x60] sm:$0xff]
  %v55 = vld [vmem:[#allocation2 + $0x68] sm:$0xff]
  %v56 = vld [vmem:[#allocation2 + $0x70] sm:$0xff]
  %v57 = vld [vmem:[#allocation2 + $0x78] sm:$0xff]
  %v58 = vld [vmem:[#allocation2 + $0x80] sm:$0xff]
  %v59 = vld [vmem:[#allocation2 + $0x88] sm:$0xff]
  %v60 = vld [vmem:[#allocation2 + $0x90] sm:$0xff]
  %v61 = vld [vmem:[#allocation2 + $0x98] sm:$0xff]
  %v62 = vld [vmem:[#allocation2 + $0xa0] sm:$0xff]
  %v63 = vld [vmem:[#allocation2 + $0xa8] sm:$0xff]
  %v64 = vld [vmem:[#allocation2 + $0xb0] sm:$0xff]
  %v65 = vld [vmem:[#allocation2 + $0xb8] sm:$0xff]
  %v66 = vld [vmem:[%s0] sm:$0xff]
  %v67 = vld [vmem:[%s0 + $0x8] sm:$0xff]
  %v68 = vld [vmem:[%s0 + $0x10] sm:$0xff]
  %v69 = vld [vmem:[%s0 + $0x18] sm:$0xff]
  %v70 = vld [vmem:[%s1] sm:$0xff]
  %v71 = vld [vmem:[%s1 + $0x8] sm:$0xff]
  %v72 = vld [vmem:[%s1 + $0x10] sm:$0xff]
  %v73 = vld [vmem:[%s1 + $0x18] sm:$0xff]
  %v74 = vld [vmem:[%s1 + $0x20] sm:$0xff]
  %v75 = vld [vmem:[%s1 + $0x28] sm:$0xff]
  %v76 = vld [vmem:[%s1 + $0x30] sm:$0xff]
  %v77 = vld [vmem:[%s1 + $0x38] sm:$0xff]
  %v78 = vld [vmem:[%s1 + $0x40] sm:$0xff]
  %v79 = vld [vmem:[%s1 + $0x48] sm:$0xff]
  %v80 = vld [vmem:[%s1 + $0x50] sm:$0xff]
  %v81 = vld [vmem:[%s1 + $0x58] sm:$0xff]
  %v82 = vld [vmem:[%s1 + $0x60] sm:$0xff]
  %v83 = vld [vmem:[%s1 + $0x68] sm:$0xff]
  %v84 = vld [vmem:[%s1 + $0x70] sm:$0xff]
  %v85 = vld [vmem:[%s1 + $0x78] sm:$0xff]
  %v86 = vld [vmem:[%s1 + $0x80] sm:$0xff]
  %v87 = vld [vmem:[%s1 + $0x88] sm:$0xff]
  %v88 = vld [vmem:[%s1 + $0x90] sm:$0xff]
  %v89 = vld [vmem:[%s1 + $0x98] sm:$0xff]
  %v90 = vld [vmem:[%s1 + $0xa0] sm:$0xff]
  %v91 = vld [vmem:[%s1 + $0xa8] sm:$0xff]
  %v92 = vld [vmem:[%s1 + $0xb0] sm:$0xff]
  %v93 = vld [vmem:[%s1 + $0xb8] sm:$0xff]
  %v94 = vld [vmem:[%s1 + $0xc0] sm:$0xff]
  %v95 = vld [vmem:[%s1 + $0xc8] sm:$0xff]
  %v96 = vld [vmem:[%s1 + $0xd0] sm:$0xff]
  %v97 = vld [vmem:[%s1 + $0xd8] sm:$0xff]
  %v98 = vld [vmem:[%s1 + $0xe0] sm:$0xff]
  %v99 = vld [vmem:[%s1 + $0xe8] sm:$0xff]
  %v100 = vld [vmem:[%s1 + $0xf0] sm:$0xff]
  %v101 = vld [vmem:[%s1 + $0xf8] sm:$0xff]
  %v102 = vld [vmem:[%s1 + $0x100] sm:$0xff]
  %v103 = vld [vmem:[%s1 + $0x108] sm:$0xff]
  %v104 = vld [vmem:[%s1 + $0x110] sm:$0xff]
  %v105 = vld [vmem:[%s1 + $0x118] sm:$0xff]
  %v106 = vld [vmem:[%s1 + $0x120] sm:$0xff]
  %v107 = vld [vmem:[%s1 + $0x128] sm:$0xff]
  %v108 = vld [vmem:[%s1 + $0x130] sm:$0xff]
  %v109 = vld [vmem:[%s1 + $0x138] sm:$0xff]
  %v110 = vld [vmem:[%s1 + $0x140] sm:$0xff]
  %v111 = vld [vmem:[%s1 + $0x148] sm:$0xff]
  %v112 = vld [vmem:[%s1 + $0x150] sm:$0xff]
  %v113 = vld [vmem:[%s1 + $0x158] sm:$0xff]
  %v114 = vld [vmem:[%s1 + $0x160] sm:$0xff]
  %v115 = vld [vmem:[%s1 + $0x168] sm:$0xff]
  %v116 = vld [vmem:[%s1 + $0x170] sm:$0xff]
  %v117 = vld [vmem:[%s1 + $0x178] sm:$0xff]
  %v118 = vld [vmem:[%s1 + $0x180] sm:$0xff]
  %v119 = vld [vmem:[%s1 + $0x188] sm:$0xff]
  %v120 = vld [vmem:[%s1 + $0x190] sm:$0xff]
  %v121 = vld [vmem:[%s1 + $0x198] sm:$0xff]
  %v122 = vld [vmem:[%s1 + $0x1a0] sm:$0xff]
  %v123 = vld [vmem:[%s1 + $0x1a8] sm:$0xff]
  %v124 = vld [vmem:[%s1 + $0x1b0] sm:$0xff]
  %v125 = vld [vmem:[%s1 + $0x1b8] sm:$0xff]
  %v126 = vld [vmem:[%s1 + $0x1c0] sm:$0xff]
  %v127 = vld [vmem:[%s1 + $0x1c8] sm:$0xff]
  %v128 = vld [vmem:[%s1 + $0x1d0] sm:$0xff]
  %v129 = vld [vmem:[%s1 + $0x1d8] sm:$0xff]
  %v130 = vld [vmem:[%s1 + $0x1e0] sm:$0xff]
  %v131 = vld [vmem:[%s1 + $0x1e8] sm:$0xff]
  %v132 = vld [vmem:[%s1 + $0x1f0] sm:$0xff]
  %v133 = vld [vmem:[%s1 + $0x1f8] sm:$0xff]
  %v134 = vld [vmem:[%s1 + $0x200] sm:$0xff]
  %v135 = vld [vmem:[%s1 + $0x208] sm:$0xff]
  %v136 = vld [vmem:[%s1 + $0x210] sm:$0xff]
  %v137 = vld [vmem:[%s1 + $0x218] sm:$0xff]
  %v138 = vld [vmem:[%s1 + $0x220] sm:$0xff]
  %v139 = vld [vmem:[%s1 + $0x228] sm:$0xff]
  %v140 = vld [vmem:[%s1 + $0x230] sm:$0xff]
  %v141 = vld [vmem:[%s1 + $0x238] sm:$0xff]
  %v142 = vld [vmem:[%s1 + $0x240] sm:$0xff]
  %v143 = vld [vmem:[%s1 + $0x248] sm:$0xff]
  %v144 = vld [vmem:[%s1 + $0x250] sm:$0xff]
  %v145 = vld [vmem:[%s1 + $0x258] sm:$0xff]
  %v146 = vld [vmem:[%s1 + $0x260] sm:$0xff]
  %v147 = vld [vmem:[%s1 + $0x268] sm:$0xff]
  %v148 = vld [vmem:[%s1 + $0x270] sm:$0xff]
  %v149 = vld [vmem:[%s1 + $0x278] sm:$0xff]
  %v150 = vld [vmem:[%s1 + $0x280] sm:$0xff]
  %v151 = vld [vmem:[%s1 + $0x288] sm:$0xff]
  %v152 = vld [vmem:[%s1 + $0x290] sm:$0xff]
  %v153 = vld [vmem:[%s1 + $0x298] sm:$0xff]
  %v154 = vld [vmem:[%s1 + $0x2a0] sm:$0xff]
  %v155 = vld [vmem:[%s1 + $0x2a8] sm:$0xff]
  %v156 = vld [vmem:[%s1 + $0x2b0] sm:$0xff]
  %v157 = vld [vmem:[%s1 + $0x2b8] sm:$0xff]
  %v158 = vld [vmem:[%s1 + $0x2c0] sm:$0xff]
  %v159 = vld [vmem:[%s1 + $0x2c8] sm:$0xff]
  %v160 = vld [vmem:[%s1 + $0x2d0] sm:$0xff]
  %v161 = vld [vmem:[%s1 + $0x2d8] sm:$0xff]
  %v162 = vld [vmem:[%s1 + $0x2e0] sm:$0xff]
  %v163 = vld [vmem:[%s1 + $0x2e8] sm:$0xff]
  %v164 = vld [vmem:[%s1 + $0x2f0] sm:$0xff]
  %v165 = vld [vmem:[%s1 + $0x2f8] sm:$0xff]
  %v170 = vunpack.c.l.b16 %v66
  %v171 = vunpack.c.h.b16 %v66
  %v172 = vunpack.c.l.b16 %v67
  %v173 = vunpack.c.h.b16 %v67
  %v174 = vunpack.c.l.b16 %v68
  %v175 = vunpack.c.h.b16 %v68
  %v176 = vunpack.c.l.b16 %v69
  %v177 = vunpack.c.h.b16 %v69
  %v178 = vpack.c.b16 %v172, %v170
  %v179 = vpack.c.b16 %v173, %v171
  %v180 = vpack.c.b16 %v176, %v174
  %v181 = vpack.c.b16 %v177, %v175
  %v282 = vunpack.c.l.b16 %v70
  %v283 = vunpack.c.h.b16 %v70
  %v284 = vunpack.c.l.b16 %v71
  %v285 = vunpack.c.h.b16 %v71
  %v286 = vunpack.c.l.b16 %v72
  %v287 = vunpack.c.h.b16 %v72
  %v288 = vunpack.c.l.b16 %v73
  %v289 = vunpack.c.h.b16 %v73
  %v290 = vunpack.c.l.b16 %v74
  %v291 = vunpack.c.h.b16 %v74
  %v292 = vunpack.c.l.b16 %v75
  %v293 = vunpack.c.h.b16 %v75
  %v294 = vunpack.c.l.b16 %v76
  %v295 = vunpack.c.h.b16 %v76
  %v296 = vunpack.c.l.b16 %v77
  %v297 = vunpack.c.h.b16 %v77
  %v298 = vunpack.c.l.b16 %v78
  %v299 = vunpack.c.h.b16 %v78
  %v300 = vunpack.c.l.b16 %v79
  %v301 = vunpack.c.h.b16 %v79
  %v302 = vunpack.c.l.b16 %v80
  %v303 = vunpack.c.h.b16 %v80
  %v304 = vunpack.c.l.b16 %v81
  %v305 = vunpack.c.h.b16 %v81
  %v306 = vunpack.c.l.b16 %v82
  %v307 = vunpack.c.h.b16 %v82
  %v308 = vunpack.c.l.b16 %v83
  %v309 = vunpack.c.h.b16 %v83
  %v310 = vunpack.c.l.b16 %v84
  %v311 = vunpack.c.h.b16 %v84
  %v312 = vunpack.c.l.b16 %v85
  %v313 = vunpack.c.h.b16 %v85
  %v314 = vunpack.c.l.b16 %v86
  %v315 = vunpack.c.h.b16 %v86
  %v316 = vunpack.c.l.b16 %v87
  %v317 = vunpack.c.h.b16 %v87
  %v318 = vunpack.c.l.b16 %v88
  %v319 = vunpack.c.h.b16 %v88
  %v320 = vunpack.c.l.b16 %v89
  %v321 = vunpack.c.h.b16 %v89
  %v322 = vunpack.c.l.b16 %v90
  %v323 = vunpack.c.h.b16 %v90
  %v324 = vunpack.c.l.b16 %v91
  %v325 = vunpack.c.h.b16 %v91
  %v326 = vunpack.c.l.b16 %v92
  %v327 = vunpack.c.h.b16 %v92
  %v328 = vunpack.c.l.b16 %v93
  %v329 = vunpack.c.h.b16 %v93
  %v330 = vunpack.c.l.b16 %v94
  %v331 = vunpack.c.h.b16 %v94
  %v332 = vunpack.c.l.b16 %v95
  %v333 = vunpack.c.h.b16 %v95
  %v334 = vunpack.c.l.b16 %v96
  %v335 = vunpack.c.h.b16 %v96
  %v336 = vunpack.c.l.b16 %v97
  %v337 = vunpack.c.h.b16 %v97
  %v338 = vunpack.c.l.b16 %v98
  %v339 = vunpack.c.h.b16 %v98
  %v340 = vunpack.c.l.b16 %v99
  %v341 = vunpack.c.h.b16 %v99
  %v342 = vunpack.c.l.b16 %v100
  %v343 = vunpack.c.h.b16 %v100
  %v344 = vunpack.c.l.b16 %v101
  %v345 = vunpack.c.h.b16 %v101
  %v346 = vunpack.c.l.b16 %v102
  %v347 = vunpack.c.h.b16 %v102
  %v348 = vunpack.c.l.b16 %v103
  %v349 = vunpack.c.h.b16 %v103
  %v350 = vunpack.c.l.b16 %v104
  %v351 = vunpack.c.h.b16 %v104
  %v352 = vunpack.c.l.b16 %v105
  %v353 = vunpack.c.h.b16 %v105
  %v354 = vunpack.c.l.b16 %v106
  %v355 = vunpack.c.h.b16 %v106
  %v356 = vunpack.c.l.b16 %v107
  %v357 = vunpack.c.h.b16 %v107
  %v358 = vunpack.c.l.b16 %v108
  %v359 = vunpack.c.h.b16 %v108
  %v360 = vunpack.c.l.b16 %v109
  %v361 = vunpack.c.h.b16 %v109
  %v362 = vunpack.c.l.b16 %v110
  %v363 = vunpack.c.h.b16 %v110
  %v364 = vunpack.c.l.b16 %v111
  %v365 = vunpack.c.h.b16 %v111
  %v366 = vunpack.c.l.b16 %v112
  %v367 = vunpack.c.h.b16 %v112
  %v368 = vunpack.c.l.b16 %v113
  %v369 = vunpack.c.h.b16 %v113
  %v370 = vunpack.c.l.b16 %v114
  %v371 = vunpack.c.h.b16 %v114
  %v372 = vunpack.c.l.b16 %v115
  %v373 = vunpack.c.h.b16 %v115
  %v374 = vunpack.c.l.b16 %v116
  %v375 = vunpack.c.h.b16 %v116
  %v376 = vunpack.c.l.b16 %v117
  %v377 = vunpack.c.h.b16 %v117
  %v378 = vunpack.c.l.b16 %v118
  %v379 = vunpack.c.h.b16 %v118
  %v380 = vunpack.c.l.b16 %v119
  %v381 = vunpack.c.h.b16 %v119
  %v382 = vunpack.c.l.b16 %v120
  %v383 = vunpack.c.h.b16 %v120
  %v384 = vunpack.c.l.b16 %v121
  %v385 = vunpack.c.h.b16 %v121
  %v386 = vunpack.c.l.b16 %v122
  %v387 = vunpack.c.h.b16 %v122
  %v388 = vunpack.c.l.b16 %v123
  %v389 = vunpack.c.h.b16 %v123
  %v390 = vunpack.c.l.b16 %v124
  %v391 = vunpack.c.h.b16 %v124
  %v392 = vunpack.c.l.b16 %v125
  %v393 = vunpack.c.h.b16 %v125
  %v394 = vunpack.c.l.b16 %v126
  %v395 = vunpack.c.h.b16 %v126
  %v396 = vunpack.c.l.b16 %v127
  %v397 = vunpack.c.h.b16 %v127
  %v398 = vunpack.c.l.b16 %v128
  %v399 = vunpack.c.h.b16 %v128
  %v400 = vunpack.c.l.b16 %v129
  %v401 = vunpack.c.h.b16 %v129
  %v402 = vunpack.c.l.b16 %v130
  %v403 = vunpack.c.h.b16 %v130
  %v404 = vunpack.c.l.b16 %v131
  %v405 = vunpack.c.h.b16 %v131
  %v406 = vunpack.c.l.b16 %v132
  %v407 = vunpack.c.h.b16 %v132
  %v408 = vunpack.c.l.b16 %v133
  %v409 = vunpack.c.h.b16 %v133
  %v410 = vunpack.c.l.b16 %v134
  %v411 = vunpack.c.h.b16 %v134
  %v412 = vunpack.c.l.b16 %v135
  %v413 = vunpack.c.h.b16 %v135
  %v414 = vunpack.c.l.b16 %v136
  %v415 = vunpack.c.h.b16 %v136
  %v416 = vunpack.c.l.b16 %v137
  %v417 = vunpack.c.h.b16 %v137
  %v418 = vunpack.c.l.b16 %v138
  %v419 = vunpack.c.h.b16 %v138
  %v420 = vunpack.c.l.b16 %v139
  %v421 = vunpack.c.h.b16 %v139
  %v422 = vunpack.c.l.b16 %v140
  %v423 = vunpack.c.h.b16 %v140
  %v424 = vunpack.c.l.b16 %v141
  %v425 = vunpack.c.h.b16 %v141
  %v426 = vunpack.c.l.b16 %v142
  %v427 = vunpack.c.h.b16 %v142
  %v428 = vunpack.c.l.b16 %v143
  %v429 = vunpack.c.h.b16 %v143
  %v430 = vunpack.c.l.b16 %v144
  %v431 = vunpack.c.h.b16 %v144
  %v432 = vunpack.c.l.b16 %v145
  %v433 = vunpack.c.h.b16 %v145
  %v434 = vunpack.c.l.b16 %v146
  %v435 = vunpack.c.h.b16 %v146
  %v436 = vunpack.c.l.b16 %v147
  %v437 = vunpack.c.h.b16 %v147
  %v438 = vunpack.c.l.b16 %v148
  %v439 = vunpack.c.h.b16 %v148
  %v440 = vunpack.c.l.b16 %v149
  %v441 = vunpack.c.h.b16 %v149
  %v442 = vunpack.c.l.b16 %v150
  %v443 = vunpack.c.h.b16 %v150
  %v444 = vunpack.c.l.b16 %v151
  %v445 = vunpack.c.h.b16 %v151
  %v446 = vunpack.c.l.b16 %v152
  %v447 = vunpack.c.h.b16 %v152
  %v448 = vunpack.c.l.b16 %v153
  %v449 = vunpack.c.h.b16 %v153
  %v450 = vunpack.c.l.b16 %v154
  %v451 = vunpack.c.h.b16 %v154
  %v452 = vunpack.c.l.b16 %v155
  %v453 = vunpack.c.h.b16 %v155
  %v454 = vunpack.c.l.b16 %v156
  %v455 = vunpack.c.h.b16 %v156
  %v456 = vunpack.c.l.b16 %v157
  %v457 = vunpack.c.h.b16 %v157
  %v458 = vunpack.c.l.b16 %v158
  %v459 = vunpack.c.h.b16 %v158
  %v460 = vunpack.c.l.b16 %v159
  %v461 = vunpack.c.h.b16 %v159
  %v462 = vunpack.c.l.b16 %v160
  %v463 = vunpack.c.h.b16 %v160
  %v464 = vunpack.c.l.b16 %v161
  %v465 = vunpack.c.h.b16 %v161
  %v466 = vunpack.c.l.b16 %v162
  %v467 = vunpack.c.h.b16 %v162
  %v468 = vunpack.c.l.b16 %v163
  %v469 = vunpack.c.h.b16 %v163
  %v470 = vunpack.c.l.b16 %v164
  %v471 = vunpack.c.h.b16 %v164
  %v472 = vunpack.c.l.b16 %v165
  %v473 = vunpack.c.h.b16 %v165
  %v474 = vpack.c.b16 %v288, %v282
  %v475 = vpack.c.b16 %v289, %v283
  %v476 = vpack.c.b16 %v290, %v284
  %v477 = vpack.c.b16 %v291, %v285
  %v478 = vpack.c.b16 %v292, %v286
  %v479 = vpack.c.b16 %v293, %v287
  %v480 = vpack.c.b16 %v300, %v294
  %v481 = vpack.c.b16 %v301, %v295
  %v482 = vpack.c.b16 %v302, %v296
  %v483 = vpack.c.b16 %v303, %v297
  %v484 = vpack.c.b16 %v304, %v298
  %v485 = vpack.c.b16 %v305, %v299
  %v486 = vpack.c.b16 %v312, %v306
  %v487 = vpack.c.b16 %v313, %v307
  %v488 = vpack.c.b16 %v314, %v308
  %v489 = vpack.c.b16 %v315, %v309
  %v490 = vpack.c.b16 %v316, %v310
  %v491 = vpack.c.b16 %v317, %v311
  %v492 = vpack.c.b16 %v324, %v318
  %v493 = vpack.c.b16 %v325, %v319
  %v494 = vpack.c.b16 %v326, %v320
  %v495 = vpack.c.b16 %v327, %v321
  %v496 = vpack.c.b16 %v328, %v322
  %v497 = vpack.c.b16 %v329, %v323
  %v498 = vpack.c.b16 %v336, %v330
  %v499 = vpack.c.b16 %v337, %v331
  %v500 = vpack.c.b16 %v338, %v332
  %v501 = vpack.c.b16 %v339, %v333
  %v502 = vpack.c.b16 %v340, %v334
  %v503 = vpack.c.b16 %v341, %v335
  %v504 = vpack.c.b16 %v348, %v342
  %v505 = vpack.c.b16 %v349, %v343
  %v506 = vpack.c.b16 %v350, %v344
  %v507 = vpack.c.b16 %v351, %v345
  %v508 = vpack.c.b16 %v352, %v346
  %v509 = vpack.c.b16 %v353, %v347
  %v510 = vpack.c.b16 %v360, %v354
  %v511 = vpack.c.b16 %v361, %v355
  %v512 = vpack.c.b16 %v362, %v356
  %v513 = vpack.c.b16 %v363, %v357
  %v514 = vpack.c.b16 %v364, %v358
  %v515 = vpack.c.b16 %v365, %v359
  %v516 = vpack.c.b16 %v372, %v366
  %v517 = vpack.c.b16 %v373, %v367
  %v518 = vpack.c.b16 %v374, %v368
  %v519 = vpack.c.b16 %v375, %v369
  %v520 = vpack.c.b16 %v376, %v370
  %v521 = vpack.c.b16 %v377, %v371
  %v522 = vpack.c.b16 %v384, %v378
  %v523 = vpack.c.b16 %v385, %v379
  %v524 = vpack.c.b16 %v386, %v380
  %v525 = vpack.c.b16 %v387, %v381
  %v526 = vpack.c.b16 %v388, %v382
  %v527 = vpack.c.b16 %v389, %v383
  %v528 = vpack.c.b16 %v396, %v390
  %v529 = vpack.c.b16 %v397, %v391
  %v530 = vpack.c.b16 %v398, %v392
  %v531 = vpack.c.b16 %v399, %v393
  %v532 = vpack.c.b16 %v400, %v394
  %v533 = vpack.c.b16 %v401, %v395
  %v534 = vpack.c.b16 %v408, %v402
  %v535 = vpack.c.b16 %v409, %v403
  %v536 = vpack.c.b16 %v410, %v404
  %v537 = vpack.c.b16 %v411, %v405
  %v538 = vpack.c.b16 %v412, %v406
  %v539 = vpack.c.b16 %v413, %v407
  %v540 = vpack.c.b16 %v420, %v414
  %v541 = vpack.c.b16 %v421, %v415
  %v542 = vpack.c.b16 %v422, %v416
  %v543 = vpack.c.b16 %v423, %v417
  %v544 = vpack.c.b16 %v424, %v418
  %v545 = vpack.c.b16 %v425, %v419
  %v546 = vpack.c.b16 %v432, %v426
  %v547 = vpack.c.b16 %v433, %v427
  %v548 = vpack.c.b16 %v434, %v428
  %v549 = vpack.c.b16 %v435, %v429
  %v550 = vpack.c.b16 %v436, %v430
  %v551 = vpack.c.b16 %v437, %v431
  %v552 = vpack.c.b16 %v444, %v438
  %v553 = vpack.c.b16 %v445, %v439
  %v554 = vpack.c.b16 %v446, %v440
  %v555 = vpack.c.b16 %v447, %v441
  %v556 = vpack.c.b16 %v448, %v442
  %v557 = vpack.c.b16 %v449, %v443
  %v558 = vpack.c.b16 %v456, %v450
  %v559 = vpack.c.b16 %v457, %v451
  %v560 = vpack.c.b16 %v458, %v452
  %v561 = vpack.c.b16 %v459, %v453
  %v562 = vpack.c.b16 %v460, %v454
  %v563 = vpack.c.b16 %v461, %v455
  %v564 = vpack.c.b16 %v468, %v462
  %v565 = vpack.c.b16 %v469, %v463
  %v566 = vpack.c.b16 %v470, %v464
  %v567 = vpack.c.b16 %v471, %v465
  %v568 = vpack.c.b16 %v472, %v466
  %v569 = vpack.c.b16 %v473, %v467
  %666 = vmatprep.subr.bf16.mxu0 %v517
  %667 = vmatpush1.bf16.msra.mxu0 %v516
  %668 = vmatprep.subr.bf16.mxu0 %v511
  %669 = vmatpush1.bf16.msra.mxu0 %v510
  %670 = vmatprep.subr.bf16.mxu0 %v505
  %671 = vmatpush1.bf16.msra.mxu0 %v504
  %672 = vmatprep.subr.bf16.mxu0 %v499
  %673 = vmatpush1.bf16.msra.mxu0 %v498
  %674 = vmatprep.subr.bf16.mxu0 %v493
  %675 = vmatpush1.bf16.msra.mxu0 %v492
  %676 = vmatprep.subr.bf16.mxu0 %v487
  %677 = vmatpush1.bf16.msra.mxu0 %v486
  %678 = vmatprep.subr.bf16.mxu0 %v481
  %679 = vmatpush1.bf16.msra.mxu0 %v480
  %680 = vmatprep.subr.bf16.mxu0 %v475
  %681 = vmatpush1.bf16.msra.mxu0 %v474
  %682 = vmatprep.subr.bf16.mxu0 %v565
  %683 = vmatpush2.bf16.msra.mxu0 %v564
  %684 = vmatprep.subr.bf16.mxu0 %v559
  %685 = vmatpush2.bf16.msra.mxu0 %v558
  %686 = vmatprep.subr.bf16.mxu0 %v553
  %687 = vmatpush2.bf16.msra.mxu0 %v552
  %688 = vmatprep.subr.bf16.mxu0 %v547
  %689 = vmatpush2.bf16.msra.mxu0 %v546
  %690 = vmatprep.subr.bf16.mxu0 %v541
  %691 = vmatpush2.bf16.msra.mxu0 %v540
  %692 = vmatprep.subr.bf16.mxu0 %v535
  %693 = vmatpush2.bf16.msra.mxu0 %v534
  %694 = vmatprep.subr.bf16.mxu0 %v529
  %695 = vmatpush2.bf16.msra.mxu0 %v528
  %696 = vmatprep.subr.bf16.mxu0 %v523
  %697 = vmatpush2.bf16.msra.mxu0 %v522
  %698 = vmatprep.mubr.bf16.mxu0 %v179
  %699 = vmatmul.mubr.bf16.gmra.mxu0 %v178
  %v700 = vpop.f32.mrf.mxu0
  %v701 = vadd.f32 0.0, %v700
  %v702 = vpop.f32.mrf.mxu0
  %v703 = vadd.f32 0.0, %v702
  %v704 = vpop.f32.mrf.mxu0
  %v705 = vadd.f32 0.0, %v704
  %v706 = vpop.f32.mrf.mxu0
  %v707 = vadd.f32 0.0, %v706
  %708 = vmatprep.mubr.bf16.mxu0 %v181
  %709 = vmatmul.mubr.bf16.gmra.mxu0 %v180
  %v710 = vpop.f32.mrf.mxu0
  %v711 = vadd.f32 0.0, %v710
  %v712 = vpop.f32.mrf.mxu0
  %v713 = vadd.f32 0.0, %v712
  %v714 = vpop.f32.mrf.mxu0
  %v715 = vadd.f32 0.0, %v714
  %v716 = vpop.f32.mrf.mxu0
  %v717 = vadd.f32 0.0, %v716
  %718 = vdwg.mxu0
  %719 = vmatprep.subr.bf16.mxu0 %v519
  %720 = vmatpush1.bf16.msra.mxu0 %v518
  %721 = vmatprep.subr.bf16.mxu0 %v513
  %722 = vmatpush1.bf16.msra.mxu0 %v512
  %723 = vmatprep.subr.bf16.mxu0 %v507
  %724 = vmatpush1.bf16.msra.mxu0 %v506
  %725 = vmatprep.subr.bf16.mxu0 %v501
  %726 = vmatpush1.bf16.msra.mxu0 %v500
  %727 = vmatprep.subr.bf16.mxu0 %v495
  %728 = vmatpush1.bf16.msra.mxu0 %v494
  %729 = vmatprep.subr.bf16.mxu0 %v489
  %730 = vmatpush1.bf16.msra.mxu0 %v488
  %731 = vmatprep.subr.bf16.mxu0 %v483
  %732 = vmatpush1.bf16.msra.mxu0 %v482
  %733 = vmatprep.subr.bf16.mxu0 %v477
  %734 = vmatpush1.bf16.msra.mxu0 %v476
  %735 = vmatprep.subr.bf16.mxu0 %v567
  %736 = vmatpush2.bf16.msra.mxu0 %v566
  %737 = vmatprep.subr.bf16.mxu0 %v561
  %738 = vmatpush2.bf16.msra.mxu0 %v560
  %739 = vmatprep.subr.bf16.mxu0 %v555
  %740 = vmatpush2.bf16.msra.mxu0 %v554
  %741 = vmatprep.subr.bf16.mxu0 %v549
  %742 = vmatpush2.bf16.msra.mxu0 %v548
  %743 = vmatprep.subr.bf16.mxu0 %v543
  %744 = vmatpush2.bf16.msra.mxu0 %v542
  %745 = vmatprep.subr.bf16.mxu0 %v537
  %746 = vmatpush2.bf16.msra.mxu0 %v536
  %747 = vmatprep.subr.bf16.mxu0 %v531
  %748 = vmatpush2.bf16.msra.mxu0 %v530
  %749 = vmatprep.subr.bf16.mxu0 %v525
  %750 = vmatpush2.bf16.msra.mxu0 %v524
  %751 = vmatprep.mubr.bf16.mxu0 %v179
  %752 = vmatmul.mubr.bf16.gmra.mxu0 %v178
  %v753 = vpop.f32.mrf.mxu0
  %v754 = vadd.f32 0.0, %v753
  %v755 = vpop.f32.mrf.mxu0
  %v756 = vadd.f32 0.0, %v755
  %v757 = vpop.f32.mrf.mxu0
  %v758 = vadd.f32 0.0, %v757
  %v759 = vpop.f32.mrf.mxu0
  %v760 = vadd.f32 0.0, %v759
  %761 = vmatprep.mubr.bf16.mxu0 %v181
  %762 = vmatmul.mubr.bf16.gmra.mxu0 %v180
  %v763 = vpop.f32.mrf.mxu0
  %v764 = vadd.f32 0.0, %v763
  %v765 = vpop.f32.mrf.mxu0
  %v766 = vadd.f32 0.0, %v765
  %v767 = vpop.f32.mrf.mxu0
  %v768 = vadd.f32 0.0, %v767
  %v769 = vpop.f32.mrf.mxu0
  %v770 = vadd.f32 0.0, %v769
  %771 = vdwg.mxu0
  %772 = vmatprep.subr.bf16.mxu0 %v521
  %773 = vmatpush1.bf16.msra.mxu0 %v520
  %774 = vmatprep.subr.bf16.mxu0 %v515
  %775 = vmatpush1.bf16.msra.mxu0 %v514
  %776 = vmatprep.subr.bf16.mxu0 %v509
  %777 = vmatpush1.bf16.msra.mxu0 %v508
  %778 = vmatprep.subr.bf16.mxu0 %v503
  %779 = vmatpush1.bf16.msra.mxu0 %v502
  %780 = vmatprep.subr.bf16.mxu0 %v497
  %781 = vmatpush1.bf16.msra.mxu0 %v496
  %782 = vmatprep.subr.bf16.mxu0 %v491
  %783 = vmatpush1.bf16.msra.mxu0 %v490
  %784 = vmatprep.subr.bf16.mxu0 %v485
  %785 = vmatpush1.bf16.msra.mxu0 %v484
  %786 = vmatprep.subr.bf16.mxu0 %v479
  %787 = vmatpush1.bf16.msra.mxu0 %v478
  %788 = vmatprep.subr.bf16.mxu0 %v569
  %789 = vmatpush2.bf16.msra.mxu0 %v568
  %790 = vmatprep.subr.bf16.mxu0 %v563
  %791 = vmatpush2.bf16.msra.mxu0 %v562
  %792 = vmatprep.subr.bf16.mxu0 %v557
  %793 = vmatpush2.bf16.msra.mxu0 %v556
  %794 = vmatprep.subr.bf16.mxu0 %v551
  %795 = vmatpush2.bf16.msra.mxu0 %v550
  %796 = vmatprep.subr.bf16.mxu0 %v545
  %797 = vmatpush2.bf16.msra.mxu0 %v544
  %798 = vmatprep.subr.bf16.mxu0 %v539
  %799 = vmatpush2.bf16.msra.mxu0 %v538
  %800 = vmatprep.subr.bf16.mxu0 %v533
  %801 = vmatpush2.bf16.msra.mxu0 %v532
  %802 = vmatprep.subr.bf16.mxu0 %v527
  %803 = vmatpush2.bf16.msra.mxu0 %v526
  %804 = vmatprep.mubr.bf16.mxu0 %v179
  %805 = vmatmul.mubr.bf16.gmra.mxu0 %v178
  %v806 = vpop.f32.mrf.mxu0
  %v807 = vadd.f32 0.0, %v806
  %v808 = vpop.f32.mrf.mxu0
  %v809 = vadd.f32 0.0, %v808
  %v810 = vpop.f32.mrf.mxu0
  %v811 = vadd.f32 0.0, %v810
  %v812 = vpop.f32.mrf.mxu0
  %v813 = vadd.f32 0.0, %v812
  %814 = vmatprep.mubr.bf16.mxu0 %v181
  %815 = vmatmul.mubr.bf16.gmra.mxu0 %v180
  %v816 = vpop.f32.mrf.mxu0
  %v817 = vadd.f32 0.0, %v816
  %v818 = vpop.f32.mrf.mxu0
  %v819 = vadd.f32 0.0, %v818
  %v820 = vpop.f32.mrf.mxu0
  %v821 = vadd.f32 0.0, %v820
  %v822 = vpop.f32.mrf.mxu0
  %v823 = vadd.f32 0.0, %v822
  %824 = vdwg.mxu0
  %v825 = vadd.f32 %v42, %v701
  %v826 = vadd.f32 %v43, %v703
  %v827 = vadd.f32 %v44, %v754
  %v828 = vadd.f32 %v45, %v756
  %v829 = vadd.f32 %v46, %v807
  %v830 = vadd.f32 %v47, %v809
  %v831 = vadd.f32 %v48, %v705
  %v832 = vadd.f32 %v49, %v707
  %v833 = vadd.f32 %v50, %v758
  %v834 = vadd.f32 %v51, %v760
  %v835 = vadd.f32 %v52, %v811
  %v836 = vadd.f32 %v53, %v813
  %v837 = vadd.f32 %v54, %v711
  %v838 = vadd.f32 %v55, %v713
  %v839 = vadd.f32 %v56, %v764
  %v840 = vadd.f32 %v57, %v766
  %v841 = vadd.f32 %v58, %v817
  %v842 = vadd.f32 %v59, %v819
  %v843 = vadd.f32 %v60, %v715
  %v844 = vadd.f32 %v61, %v717
  %v845 = vadd.f32 %v62, %v768
  %v846 = vadd.f32 %v63, %v770
  %v847 = vadd.f32 %v64, %v821
  %v848 = vadd.f32 %v65, %v823
  %849 = vst [vmem:[#allocation2] sm:$0xff] %v825
  %850 = vst [vmem:[#allocation2 + $0x8] sm:$0xff] %v826
  %851 = vst [vmem:[#allocation2 + $0x10] sm:$0xff] %v827
  %852 = vst [vmem:[#allocation2 + $0x18] sm:$0xff] %v828
  %853 = vst [vmem:[#allocation2 + $0x20] sm:$0xff] %v829
  %854 = vst [vmem:[#allocation2 + $0x28] sm:$0xff] %v830
  %855 = vst [vmem:[#allocation2 + $0x30] sm:$0xff] %v831
  %856 = vst [vmem:[#allocation2 + $0x38] sm:$0xff] %v832
  %857 = vst [vmem:[#allocation2 + $0x40] sm:$0xff] %v833
  %858 = vst [vmem:[#allocation2 + $0x48] sm:$0xff] %v834
  %859 = vst [vmem:[#allocation2 + $0x50] sm:$0xff] %v835
  %860 = vst [vmem:[#allocation2 + $0x58] sm:$0xff] %v836
  %861 = vst [vmem:[#allocation2 + $0x60] sm:$0xff] %v837
  %862 = vst [vmem:[#allocation2 + $0x68] sm:$0xff] %v838
  %863 = vst [vmem:[#allocation2 + $0x70] sm:$0xff] %v839
  %864 = vst [vmem:[#allocation2 + $0x78] sm:$0xff] %v840
  %865 = vst [vmem:[#allocation2 + $0x80] sm:$0xff] %v841
  %866 = vst [vmem:[#allocation2 + $0x88] sm:$0xff] %v842
  %867 = vst [vmem:[#allocation2 + $0x90] sm:$0xff] %v843
  %868 = vst [vmem:[#allocation2 + $0x98] sm:$0xff] %v844
  %869 = vst [vmem:[#allocation2 + $0xa0] sm:$0xff] %v845
  %870 = vst [vmem:[#allocation2 + $0xa8] sm:$0xff] %v846
  %871 = vst [vmem:[#allocation2 + $0xb0] sm:$0xff] %v847
  %872 = vst [vmem:[#allocation2 + $0xb8] sm:$0xff] %v848
  // Predicated region
  $region18: #{bloom_forward.19} parent=0 // pred_check
    %p873 = pneg %p14
  $region19: #{bloom_forward.19} parent=0 // pred_check_branch
    %875 = sbr.rel (%p873) target = $region21
  $region20: #{bloom_forward.19} parent=0 // pred_region
    %v876 = vld [vmem:[#allocation2] sm:$0xff]
    %v877 = vld [vmem:[#allocation2 + $0x8] sm:$0xff]
    %v878 = vld [vmem:[#allocation2 + $0x10] sm:$0xff]
    %v879 = vld [vmem:[#allocation2 + $0x18] sm:$0xff]
    %v880 = vld [vmem:[#allocation2 + $0x20] sm:$0xff]
    %v881 = vld [vmem:[#allocation2 + $0x28] sm:$0xff]
    %v882 = vld [vmem:[#allocation2 + $0x30] sm:$0xff]
    %v883 = vld [vmem:[#allocation2 + $0x38] sm:$0xff]
    %v884 = vld [vmem:[#allocation2 + $0x40] sm:$0xff]
    %v885 = vld [vmem:[#allocation2 + $0x48] sm:$0xff]
    %v886 = vld [vmem:[#allocation2 + $0x50] sm:$0xff]
    %v887 = vld [vmem:[#allocation2 + $0x58] sm:$0xff]
    %v888 = vld [vmem:[#allocation2 + $0x60] sm:$0xff]
    %v889 = vld [vmem:[#allocation2 + $0x68] sm:$0xff]
    %v890 = vld [vmem:[#allocation2 + $0x70] sm:$0xff]
    %v891 = vld [vmem:[#allocation2 + $0x78] sm:$0xff]
    %v892 = vld [vmem:[#allocation2 + $0x80] sm:$0xff]
    %v893 = vld [vmem:[#allocation2 + $0x88] sm:$0xff]
    %v894 = vld [vmem:[#allocation2 + $0x90] sm:$0xff]
    %v895 = vld [vmem:[#allocation2 + $0x98] sm:$0xff]
    %v896 = vld [vmem:[#allocation2 + $0xa0] sm:$0xff]
    %v897 = vld [vmem:[#allocation2 + $0xa8] sm:$0xff]
    %v898 = vld [vmem:[#allocation2 + $0xb0] sm:$0xff]
    %v899 = vld [vmem:[#allocation2 + $0xb8] sm:$0xff]
    %v900 = vld [vmem:[%s2] sm:$0x3f]
    %v902 = vlaneseq
    %v903 = vshrl.u32 %v902, 7
    %v904 = vsub.s32 0, %v903
    %v905 = vrot.slane %v900, %v904
    %v906 = vlaneseq
    %v907 = vshrl.u32 %v906, 7
    %v908 = vsub.s32 1, %v907
    %v909 = vrot.slane %v900, %v908
    %v910 = vlaneseq
    %v911 = vshrl.u32 %v910, 7
    %v912 = vsub.s32 2, %v911
    %v913 = vrot.slane %v900, %v912
    %v914 = vlaneseq
    %v915 = vshrl.u32 %v914, 7
    %v916 = vsub.s32 3, %v915
    %v917 = vrot.slane %v900, %v916
    %v918 = vlaneseq
    %v919 = vshrl.u32 %v918, 7
    %v920 = vsub.s32 4, %v919
    %v921 = vrot.slane %v900, %v920
    %v922 = vlaneseq
    %v923 = vshrl.u32 %v922, 7
    %v924 = vsub.s32 5, %v923
    %v925 = vrot.slane %v900, %v924
    %v932 = vadd.f32 %v876, %v905
    %v933 = vadd.f32 %v877, %v909
    %v934 = vadd.f32 %v878, %v913
    %v935 = vadd.f32 %v879, %v917
    %v936 = vadd.f32 %v880, %v921
    %v937 = vadd.f32 %v881, %v925
    %v938 = vadd.f32 %v882, %v905
    %v939 = vadd.f32 %v883, %v909
    %v940 = vadd.f32 %v884, %v913
    %v941 = vadd.f32 %v885, %v917
    %v942 = vadd.f32 %v886, %v921
    %v943 = vadd.f32 %v887, %v925
    %v944 = vadd.f32 %v888, %v905
    %v945 = vadd.f32 %v889, %v909
    %v946 = vadd.f32 %v890, %v913
    %v947 = vadd.f32 %v891, %v917
    %v948 = vadd.f32 %v892, %v921
    %v949 = vadd.f32 %v893, %v925
    %v950 = vadd.f32 %v894, %v905
    %v951 = vadd.f32 %v895, %v909
    %v952 = vadd.f32 %v896, %v913
    %v953 = vadd.f32 %v897, %v917
    %v954 = vadd.f32 %v898, %v921
    %v955 = vadd.f32 %v899, %v925
    %v956 = vpack.c.bf16 %v938, %v932
    %v957 = vpack.c.bf16 %v939, %v933
    %v958 = vpack.c.bf16 %v940, %v934
    %v959 = vpack.c.bf16 %v941, %v935
    %v960 = vpack.c.bf16 %v942, %v936
    %v961 = vpack.c.bf16 %v943, %v937
    %v962 = vpack.c.bf16 %v950, %v944
    %v963 = vpack.c.bf16 %v951, %v945
    %v964 = vpack.c.bf16 %v952, %v946
    %v965 = vpack.c.bf16 %v953, %v947
    %v966 = vpack.c.bf16 %v954, %v948
    %v967 = vpack.c.bf16 %v955, %v949
    %v980 = vunpack.c.l.b16 %v956
    %v981 = vunpack.c.l.b16 %v957
    %v982 = vunpack.c.l.b16 %v958
    %v983 = vunpack.c.l.b16 %v959
    %v984 = vunpack.c.l.b16 %v960
    %v985 = vunpack.c.l.b16 %v961
    %v986 = vunpack.c.h.b16 %v956
    %v987 = vunpack.c.h.b16 %v957
    %v988 = vunpack.c.h.b16 %v958
    %v989 = vunpack.c.h.b16 %v959
    %v990 = vunpack.c.h.b16 %v960
    %v991 = vunpack.c.h.b16 %v961
    %v992 = vunpack.c.l.b16 %v962
    %v993 = vunpack.c.l.b16 %v963
    %v994 = vunpack.c.l.b16 %v964
    %v995 = vunpack.c.l.b16 %v965
    %v996 = vunpack.c.l.b16 %v966
    %v997 = vunpack.c.l.b16 %v967
    %v998 = vunpack.c.h.b16 %v962
    %v999 = vunpack.c.h.b16 %v963
    %v1000 = vunpack.c.h.b16 %v964
    %v1001 = vunpack.c.h.b16 %v965
    %v1002 = vunpack.c.h.b16 %v966
    %v1003 = vunpack.c.h.b16 %v967
    %v1004 = vpack.c.b16 %v981, %v980
    %v1005 = vpack.c.b16 %v983, %v982
    %v1006 = vpack.c.b16 %v985, %v984
    %v1007 = vpack.c.b16 %v987, %v986
    %v1008 = vpack.c.b16 %v989, %v988
    %v1009 = vpack.c.b16 %v991, %v990
    %v1010 = vpack.c.b16 %v993, %v992
    %v1011 = vpack.c.b16 %v995, %v994
    %v1012 = vpack.c.b16 %v997, %v996
    %v1013 = vpack.c.b16 %v999, %v998
    %v1014 = vpack.c.b16 %v1001, %v1000
    %v1015 = vpack.c.b16 %v1003, %v1002
    %1028 = vst [vmem:[%s3] sm:$0xff] %v1004
    %1029 = vst [vmem:[%s3 + $0x8] sm:$0xff] %v1005
    %1030 = vst [vmem:[%s3 + $0x10] sm:$0xff] %v1006
    %1031 = vst [vmem:[%s3 + $0x18] sm:$0xff] %v1007
    %1032 = vst [vmem:[%s3 + $0x20] sm:$0xff] %v1008
    %1033 = vst [vmem:[%s3 + $0x28] sm:$0xff] %v1009
    %1034 = vst [vmem:[%s3 + $0x30] sm:$0xff] %v1010
    %1035 = vst [vmem:[%s3 + $0x38] sm:$0xff] %v1011
    %1036 = vst [vmem:[%s3 + $0x40] sm:$0xff] %v1012
    %1037 = vst [vmem:[%s3 + $0x48] sm:$0xff] %v1013
    %1038 = vst [vmem:[%s3 + $0x50] sm:$0xff] %v1014
    %1039 = vst [vmem:[%s3 + $0x58] sm:$0xff] %v1015
  $region21: #{bloom_forward.19} parent=0 // pred_fallthru
    _
  // Predicated region
  $region22: #{bloom_forward.19} parent=0 // pred_check
    _
  $region23: #{bloom_forward.19} parent=0 // pred_check_branch
    %1041 = sbr.rel (0) target = $region25
  $region24: #{bloom_forward.19} parent=0 // pred_region
    _
  $region25: #{bloom_forward.19} parent=0 // pred_fallthru
    _
  // Predicated region
  $region26: #{bloom_forward.19} parent=0 // pred_check
    _
  $region27: #{bloom_forward.19} parent=0 // pred_check_branch
    %1043 = sbr.rel (0) target = $region29
  $region28: #{bloom_forward.19} parent=0 // pred_region
    _
  $region29: #{bloom_forward.19} parent=0 // pred_fallthru
    _

// kernel: bloom_forward.21
$region0: #{bloom_forward.21}
  #allocation0 [shape = 'u32[]', space=smem, size = 0x4, offset = 0x4, fixed_abs, tag = 'smem constant byte address 0x4 - core index']
  #allocation1 [shape = 'u32[144,128]{1,0:T(1,128)}', space=vmem, size = 0x12000, scoped, tag = 'internal scratch']
  #allocation2 [shape = 'f32[32,256]{1,0:T(8,128)}', space=vmem, size = 0x8000, scoped, tag = 'scratch operand']
  %s0 = inlined_call_operand.vmem [shape: bf16[32,256], index: 0, kind: input, shape index: {}]
  %s1 = inlined_call_operand.vmem [shape: bf16[256,256], index: 1, kind: input, shape index: {}]
  %s2 = inlined_call_operand.vmem [shape: f32[1,256], index: 2, kind: input, shape index: {}]
  %s3 = inlined_call_operand.vmem [shape: bf16[32,256], index: 3, kind: input, shape index: {}]
  %s4 = inlined_call_operand.vmem [shape: bf16[32,256], index: 4, kind: output, shape index: {}]
  %s5 = sld [smem:[#allocation0]]
  $region34: #{bloom_forward.21} parent=0
    _
  %s7 = ssub.s32 1, %s5
  %s8 = scalar_select 0, %s7, %s5
  // Predicated region
  $region2: #{bloom_forward.21} parent=0 // pred_check
    _
  $region3: #{bloom_forward.21} parent=0 // pred_check_branch
    %10 = sbr.rel (0) target = $region5
  $region4: #{bloom_forward.21} parent=0 // pred_region
    _
  $region5: #{bloom_forward.21} parent=0 // pred_fallthru
    _
  // Predicated region
  $region6: #{bloom_forward.21} parent=0 // pred_check
    _
  $region7: #{bloom_forward.21} parent=0 // pred_check_branch
    %12 = sbr.rel (0) target = $region9
  $region8: #{bloom_forward.21} parent=0 // pred_region
    _
  $region9: #{bloom_forward.21} parent=0 // pred_fallthru
    _
  // Predicated region
  $region10: #{bloom_forward.21} parent=0 // pred_check
    _
  $region11: #{bloom_forward.21} parent=0 // pred_check_branch
    %14 = sbr.rel (0) target = $region13
  $region12: #{bloom_forward.21} parent=0 // pred_region
    _
  $region13: #{bloom_forward.21} parent=0 // pred_fallthru
    _
  // Predicated region
  $region14: #{bloom_forward.21} parent=0 // pred_check
    _
  $region15: #{bloom_forward.21} parent=0 // pred_check_branch
    %16 = sbr.rel (0) target = $region17
  $region16: #{bloom_forward.21} parent=0 // pred_region
    _
  $region17: #{bloom_forward.21} parent=0 // pred_fallthru
    _
  %p17 = scmp.eq.s32.totalorder 0, 0
  // Predicated region
  $region18: #{bloom_forward.21} parent=0 // pred_check
    %p18 = pneg %p17
  $region19: #{bloom_forward.21} parent=0 // pred_check_branch
    %20 = sbr.rel (%p18) target = $region21
  $region20: #{bloom_forward.21} parent=0 // pred_region
    %21 = vst [vmem:[#allocation2] sm:$0xff] 0.0
    %22 = vst [vmem:[#allocation2 + $0x8] sm:$0xff] 0.0
    %23 = vst [vmem:[#allocation2 + $0x10] sm:$0xff] 0.0
    %24 = vst [vmem:[#allocation2 + $0x18] sm:$0xff] 0.0
    %25 = vst [vmem:[#allocation2 + $0x20] sm:$0xff] 0.0
    %26 = vst [vmem:[#allocation2 + $0x28] sm:$0xff] 0.0
    %27 = vst [vmem:[#allocation2 + $0x30] sm:$0xff] 0.0
    %28 = vst [vmem:[#allocation2 + $0x38] sm:$0xff] 0.0
  $region21: #{bloom_forward.21} parent=0 // pred_fallthru
    _
  %v29 = vld [vmem:[#allocation2] sm:$0xff]
  %v30 = vld [vmem:[#allocation2 + $0x8] sm:$0xff]
  %v31 = vld [vmem:[#allocation2 + $0x10] sm:$0xff]
  %v32 = vld [vmem:[#allocation2 + $0x18] sm:$0xff]
  %v33 = vld [vmem:[#allocation2 + $0x20] sm:$0xff]
  %v34 = vld [vmem:[#allocation2 + $0x28] sm:$0xff]
  %v35 = vld [vmem:[#allocation2 + $0x30] sm:$0xff]
  %v36 = vld [vmem:[#allocation2 + $0x38] sm:$0xff]
  %v37 = vld [vmem:[%s0] sm:$0xff]
  %v38 = vld [vmem:[%s0 + $0x8] sm:$0xff]
  %v39 = vld [vmem:[%s0 + $0x10] sm:$0xff]
  %v40 = vld [vmem:[%s0 + $0x18] sm:$0xff]
  %v41 = vld [vmem:[%s1] sm:$0xff]
  %v42 = vld [vmem:[%s1 + $0x8] sm:$0xff]
  %v43 = vld [vmem:[%s1 + $0x10] sm:$0xff]
  %v44 = vld [vmem:[%s1 + $0x18] sm:$0xff]
  %v45 = vld [vmem:[%s1 + $0x20] sm:$0xff]
  %v46 = vld [vmem:[%s1 + $0x28] sm:$0xff]
  %v47 = vld [vmem:[%s1 + $0x30] sm:$0xff]
  %v48 = vld [vmem:[%s1 + $0x38] sm:$0xff]
  %v49 = vld [vmem:[%s1 + $0x40] sm:$0xff]
  %v50 = vld [vmem:[%s1 + $0x48] sm:$0xff]
  %v51 = vld [vmem:[%s1 + $0x50] sm:$0xff]
  %v52 = vld [vmem:[%s1 + $0x58] sm:$0xff]
  %v53 = vld [vmem:[%s1 + $0x60] sm:$0xff]
  %v54 = vld [vmem:[%s1 + $0x68] sm:$0xff]
  %v55 = vld [vmem:[%s1 + $0x70] sm:$0xff]
  %v56 = vld [vmem:[%s1 + $0x78] sm:$0xff]
  %v57 = vld [vmem:[%s1 + $0x80] sm:$0xff]
  %v58 = vld [vmem:[%s1 + $0x88] sm:$0xff]
  %v59 = vld [vmem:[%s1 + $0x90] sm:$0xff]
  %v60 = vld [vmem:[%s1 + $0x98] sm:$0xff]
  %v61 = vld [vmem:[%s1 + $0xa0] sm:$0xff]
  %v62 = vld [vmem:[%s1 + $0xa8] sm:$0xff]
  %v63 = vld [vmem:[%s1 + $0xb0] sm:$0xff]
  %v64 = vld [vmem:[%s1 + $0xb8] sm:$0xff]
  %v65 = vld [vmem:[%s1 + $0xc0] sm:$0xff]
  %v66 = vld [vmem:[%s1 + $0xc8] sm:$0xff]
  %v67 = vld [vmem:[%s1 + $0xd0] sm:$0xff]
  %v68 = vld [vmem:[%s1 + $0xd8] sm:$0xff]
  %v69 = vld [vmem:[%s1 + $0xe0] sm:$0xff]
  %v70 = vld [vmem:[%s1 + $0xe8] sm:$0xff]
  %v71 = vld [vmem:[%s1 + $0xf0] sm:$0xff]
  %v72 = vld [vmem:[%s1 + $0xf8] sm:$0xff]
  %v77 = vunpack.c.l.b16 %v37
  %v78 = vunpack.c.h.b16 %v37
  %v79 = vunpack.c.l.b16 %v38
  %v80 = vunpack.c.h.b16 %v38
  %v81 = vunpack.c.l.b16 %v39
  %v82 = vunpack.c.h.b16 %v39
  %v83 = vunpack.c.l.b16 %v40
  %v84 = vunpack.c.h.b16 %v40
  %v85 = vpack.c.b16 %v79, %v77
  %v86 = vpack.c.b16 %v80, %v78
  %v87 = vpack.c.b16 %v83, %v81
  %v88 = vpack.c.b16 %v84, %v82
  %v125 = vunpack.c.l.b16 %v41
  %v126 = vunpack.c.h.b16 %v41
  %v127 = vunpack.c.l.b16 %v42
  %v128 = vunpack.c.h.b16 %v42
  %v129 = vunpack.c.l.b16 %v43
  %v130 = vunpack.c.h.b16 %v43
  %v131 = vunpack.c.l.b16 %v44
  %v132 = vunpack.c.h.b16 %v44
  %v133 = vunpack.c.l.b16 %v45
  %v134 = vunpack.c.h.b16 %v45
  %v135 = vunpack.c.l.b16 %v46
  %v136 = vunpack.c.h.b16 %v46
  %v137 = vunpack.c.l.b16 %v47
  %v138 = vunpack.c.h.b16 %v47
  %v139 = vunpack.c.l.b16 %v48
  %v140 = vunpack.c.h.b16 %v48
  %v141 = vunpack.c.l.b16 %v49
  %v142 = vunpack.c.h.b16 %v49
  %v143 = vunpack.c.l.b16 %v50
  %v144 = vunpack.c.h.b16 %v50
  %v145 = vunpack.c.l.b16 %v51
  %v146 = vunpack.c.h.b16 %v51
  %v147 = vunpack.c.l.b16 %v52
  %v148 = vunpack.c.h.b16 %v52
  %v149 = vunpack.c.l.b16 %v53
  %v150 = vunpack.c.h.b16 %v53
  %v151 = vunpack.c.l.b16 %v54
  %v152 = vunpack.c.h.b16 %v54
  %v153 = vunpack.c.l.b16 %v55
  %v154 = vunpack.c.h.b16 %v55
  %v155 = vunpack.c.l.b16 %v56
  %v156 = vunpack.c.h.b16 %v56
  %v157 = vunpack.c.l.b16 %v57
  %v158 = vunpack.c.h.b16 %v57
  %v159 = vunpack.c.l.b16 %v58
  %v160 = vunpack.c.h.b16 %v58
  %v161 = vunpack.c.l.b16 %v59
  %v162 = vunpack.c.h.b16 %v59
  %v163 = vunpack.c.l.b16 %v60
  %v164 = vunpack.c.h.b16 %v60
  %v165 = vunpack.c.l.b16 %v61
  %v166 = vunpack.c.h.b16 %v61
  %v167 = vunpack.c.l.b16 %v62
  %v168 = vunpack.c.h.b16 %v62
  %v169 = vunpack.c.l.b16 %v63
  %v170 = vunpack.c.h.b16 %v63
  %v171 = vunpack.c.l.b16 %v64
  %v172 = vunpack.c.h.b16 %v64
  %v173 = vunpack.c.l.b16 %v65
  %v174 = vunpack.c.h.b16 %v65
  %v175 = vunpack.c.l.b16 %v66
  %v176 = vunpack.c.h.b16 %v66
  %v177 = vunpack.c.l.b16 %v67
  %v178 = vunpack.c.h.b16 %v67
  %v179 = vunpack.c.l.b16 %v68
  %v180 = vunpack.c.h.b16 %v68
  %v181 = vunpack.c.l.b16 %v69
  %v182 = vunpack.c.h.b16 %v69
  %v183 = vunpack.c.l.b16 %v70
  %v184 = vunpack.c.h.b16 %v70
  %v185 = vunpack.c.l.b16 %v71
  %v186 = vunpack.c.h.b16 %v71
  %v187 = vunpack.c.l.b16 %v72
  %v188 = vunpack.c.h.b16 %v72
  %v189 = vpack.c.b16 %v127, %v125
  %v190 = vpack.c.b16 %v128, %v126
  %v191 = vpack.c.b16 %v131, %v129
  %v192 = vpack.c.b16 %v132, %v130
  %v193 = vpack.c.b16 %v135, %v133
  %v194 = vpack.c.b16 %v136, %v134
  %v195 = vpack.c.b16 %v139, %v137
  %v196 = vpack.c.b16 %v140, %v138
  %v197 = vpack.c.b16 %v143, %v141
  %v198 = vpack.c.b16 %v144, %v142
  %v199 = vpack.c.b16 %v147, %v145
  %v200 = vpack.c.b16 %v148, %v146
  %v201 = vpack.c.b16 %v151, %v149
  %v202 = vpack.c.b16 %v152, %v150
  %v203 = vpack.c.b16 %v155, %v153
  %v204 = vpack.c.b16 %v156, %v154
  %v205 = vpack.c.b16 %v159, %v157
  %v206 = vpack.c.b16 %v160, %v158
  %v207 = vpack.c.b16 %v163, %v161
  %v208 = vpack.c.b16 %v164, %v162
  %v209 = vpack.c.b16 %v167, %v165
  %v210 = vpack.c.b16 %v168, %v166
  %v211 = vpack.c.b16 %v171, %v169
  %v212 = vpack.c.b16 %v172, %v170
  %v213 = vpack.c.b16 %v175, %v173
  %v214 = vpack.c.b16 %v176, %v174
  %v215 = vpack.c.b16 %v179, %v177
  %v216 = vpack.c.b16 %v180, %v178
  %v217 = vpack.c.b16 %v183, %v181
  %v218 = vpack.c.b16 %v184, %v182
  %v219 = vpack.c.b16 %v187, %v185
  %v220 = vpack.c.b16 %v188, %v186
  %253 = vmatprep.subr.bf16.mxu0 %v204
  %254 = vmatpush1.bf16.msra.mxu0 %v203
  %255 = vmatprep.subr.bf16.mxu0 %v202
  %256 = vmatpush1.bf16.msra.mxu0 %v201
  %257 = vmatprep.subr.bf16.mxu0 %v200
  %258 = vmatpush1.bf16.msra.mxu0 %v199
  %259 = vmatprep.subr.bf16.mxu0 %v198
  %260 = vmatpush1.bf16.msra.mxu0 %v197
  %261 = vmatprep.subr.bf16.mxu0 %v196
  %262 = vmatpush1.bf16.msra.mxu0 %v195
  %263 = vmatprep.subr.bf16.mxu0 %v194
  %264 = vmatpush1.bf16.msra.mxu0 %v193
  %265 = vmatprep.subr.bf16.mxu0 %v192
  %266 = vmatpush1.bf16.msra.mxu0 %v191
  %267 = vmatprep.subr.bf16.mxu0 %v190
  %268 = vmatpush1.bf16.msra.mxu0 %v189
  %269 = vmatprep.subr.bf16.mxu0 %v220
  %270 = vmatpush2.bf16.msra.mxu0 %v219
  %271 = vmatprep.subr.bf16.mxu0 %v218
  %272 = vmatpush2.bf16.msra.mxu0 %v217
  %273 = vmatprep.subr.bf16.mxu0 %v216
  %274 = vmatpush2.bf16.msra.mxu0 %v215
  %275 = vmatprep.subr.bf16.mxu0 %v214
  %276 = vmatpush2.bf16.msra.mxu0 %v213
  %277 = vmatprep.subr.bf16.mxu0 %v212
  %278 = vmatpush2.bf16.msra.mxu0 %v211
  %279 = vmatprep.subr.bf16.mxu0 %v210
  %280 = vmatpush2.bf16.msra.mxu0 %v209
  %281 = vmatprep.subr.bf16.mxu0 %v208
  %282 = vmatpush2.bf16.msra.mxu0 %v207
  %283 = vmatprep.subr.bf16.mxu0 %v206
  %284 = vmatpush2.bf16.msra.mxu0 %v205
  %285 = vmatprep.mubr.bf16.mxu0 %v86
  %286 = vmatmul.mubr.bf16.gmra.mxu0 %v85
  %v287 = vpop.f32.mrf.mxu0
  %v288 = vadd.f32 0.0, %v287
  %v289 = vpop.f32.mrf.mxu0
  %v290 = vadd.f32 0.0, %v289
  %v291 = vpop.f32.mrf.mxu0
  %v292 = vadd.f32 0.0, %v291
  %v293 = vpop.f32.mrf.mxu0
  %v294 = vadd.f32 0.0, %v293
  %295 = vmatprep.mubr.bf16.mxu0 %v88
  %296 = vmatmul.mubr.bf16.gmra.mxu0 %v87
  %v297 = vpop.f32.mrf.mxu0
  %v298 = vadd.f32 0.0, %v297
  %v299 = vpop.f32.mrf.mxu0
  %v300 = vadd.f32 0.0, %v299
  %v301 = vpop.f32.mrf.mxu0
  %v302 = vadd.f32 0.0, %v301
  %v303 = vpop.f32.mrf.mxu0
  %v304 = vadd.f32 0.0, %v303
  %305 = vdwg.mxu0
  %v306 = vadd.f32 %v29, %v288
  %v307 = vadd.f32 %v30, %v290
  %v308 = vadd.f32 %v31, %v292
  %v309 = vadd.f32 %v32, %v294
  %v310 = vadd.f32 %v33, %v298
  %v311 = vadd.f32 %v34, %v300
  %v312 = vadd.f32 %v35, %v302
  %v313 = vadd.f32 %v36, %v304
  %314 = vst [vmem:[#allocation2] sm:$0xff] %v306
  %315 = vst [vmem:[#allocation2 + $0x8] sm:$0xff] %v307
  %316 = vst [vmem:[#allocation2 + $0x10] sm:$0xff] %v308
  %317 = vst [vmem:[#allocation2 + $0x18] sm:$0xff] %v309
  %318 = vst [vmem:[#allocation2 + $0x20] sm:$0xff] %v310
  %319 = vst [vmem:[#allocation2 + $0x28] sm:$0xff] %v311
  %320 = vst [vmem:[#allocation2 + $0x30] sm:$0xff] %v312
  %321 = vst [vmem:[#allocation2 + $0x38] sm:$0xff] %v313
  // Predicated region
  $region22: #{bloom_forward.21} parent=0 // pred_check
    %p322 = pneg %p17
  $region23: #{bloom_forward.21} parent=0 // pred_check_branch
    %324 = sbr.rel (%p322) target = $region25
  $region24: #{bloom_forward.21} parent=0 // pred_region
    %v325 = vld [vmem:[#allocation2] sm:$0xff]
    %v326 = vld [vmem:[#allocation2 + $0x8] sm:$0xff]
    %v327 = vld [vmem:[#allocation2 + $0x10] sm:$0xff]
    %v328 = vld [vmem:[#allocation2 + $0x18] sm:$0xff]
    %v329 = vld [vmem:[#allocation2 + $0x20] sm:$0xff]
    %v330 = vld [vmem:[#allocation2 + $0x28] sm:$0xff]
    %v331 = vld [vmem:[#allocation2 + $0x30] sm:$0xff]
    %v332 = vld [vmem:[#allocation2 + $0x38] sm:$0xff]
    %v333 = vld [vmem:[%s2] sm:$0x3]
    %v335 = vlaneseq
    %v336 = vshrl.u32 %v335, 7
    %v337 = vsub.s32 0, %v336
    %v338 = vrot.slane %v333, %v337
    %v339 = vlaneseq
    %v340 = vshrl.u32 %v339, 7
    %v341 = vsub.s32 1, %v340
    %v342 = vrot.slane %v333, %v341
    %v345 = vadd.f32 %v325, %v338
    %v346 = vadd.f32 %v326, %v342
    %v347 = vadd.f32 %v327, %v338
    %v348 = vadd.f32 %v328, %v342
    %v349 = vadd.f32 %v329, %v338
    %v350 = vadd.f32 %v330, %v342
    %v351 = vadd.f32 %v331, %v338
    %v352 = vadd.f32 %v332, %v342
    %v353 = vld [vmem:[%s3] sm:$0xff]
    %v354 = vld [vmem:[%s3 + $0x8] sm:$0xff]
    %v355 = vld [vmem:[%s3 + $0x10] sm:$0xff]
    %v356 = vld [vmem:[%s3 + $0x18] sm:$0xff]
    %v357 = vunpack.c.l.bf16 %v353
    %v358 = vunpack.c.h.bf16 %v353
    %v359 = vunpack.c.l.bf16 %v354
    %v360 = vunpack.c.h.bf16 %v354
    %v361 = vunpack.c.l.bf16 %v355
    %v362 = vunpack.c.h.bf16 %v355
    %v363 = vunpack.c.l.bf16 %v356
    %v364 = vunpack.c.h.bf16 %v356
    %v365 = vadd.f32 %v345, %v357
    %v366 = vadd.f32 %v346, %v358
    %v367 = vadd.f32 %v347, %v359
    %v368 = vadd.f32 %v348, %v360
    %v369 = vadd.f32 %v349, %v361
    %v370 = vadd.f32 %v350, %v362
    %v371 = vadd.f32 %v351, %v363
    %v372 = vadd.f32 %v352, %v364
    %v373 = vpack.c.bf16 %v367, %v365
    %v374 = vpack.c.bf16 %v368, %v366
    %v375 = vpack.c.bf16 %v371, %v369
    %v376 = vpack.c.bf16 %v372, %v370
    %v381 = vunpack.c.l.b16 %v373
    %v382 = vunpack.c.l.b16 %v374
    %v383 = vunpack.c.h.b16 %v373
    %v384 = vunpack.c.h.b16 %v374
    %v385 = vunpack.c.l.b16 %v375
    %v386 = vunpack.c.l.b16 %v376
    %v387 = vunpack.c.h.b16 %v375
    %v388 = vunpack.c.h.b16 %v376
    %v389 = vpack.c.b16 %v382, %v381
    %v390 = vpack.c.b16 %v384, %v383
    %v391 = vpack.c.b16 %v386, %v385
    %v392 = vpack.c.b16 %v388, %v387
    %397 = vst [vmem:[%s4] sm:$0xff] %v389
    %398 = vst [vmem:[%s4 + $0x8] sm:$0xff] %v390
    %399 = vst [vmem:[%s4 + $0x10] sm:$0xff] %v391
    %400 = vst [vmem:[%s4 + $0x18] sm:$0xff] %v392
  $region25: #{bloom_forward.21} parent=0 // pred_fallthru
    _
  // Predicated region
  $region26: #{bloom_forward.21} parent=0 // pred_check
    _
  $region27: #{bloom_forward.21} parent=0 // pred_check_branch
    %402 = sbr.rel (0) target = $region29
  $region28: #{bloom_forward.21} parent=0 // pred_region
    _
  $region29: #{bloom_forward.21} parent=0 // pred_fallthru
    _
  // Predicated region
  $region30: #{bloom_forward.21} parent=0 // pred_check
    _
  $region31: #{bloom_forward.21} parent=0 // pred_check_branch
    %404 = sbr.rel (0) target = $region33
  $region32: #{bloom_forward.21} parent=0 // pred_region
    _
  $region33: #{bloom_forward.21} parent=0 // pred_fallthru
    _

// kernel: bloom_forward.24
$region0: #{bloom_forward.24}
  #allocation0 [shape = 'u32[]', space=smem, size = 0x4, offset = 0x4, fixed_abs, tag = 'smem constant byte address 0x4 - core index']
  #allocation1 [shape = 'u32[144,128]{1,0:T(1,128)}', space=vmem, size = 0x12000, scoped, tag = 'internal scratch']
  #allocation2 [shape = 'f32[32,256]{1,0:T(8,128)}', space=vmem, size = 0x8000, scoped, tag = 'scratch operand']
  %s0 = inlined_call_operand.vmem [shape: bf16[32,1024], index: 0, kind: input, shape index: {}]
  %s1 = inlined_call_operand.vmem [shape: bf16[1024,256], index: 1, kind: input, shape index: {}]
  %s2 = inlined_call_operand.vmem [shape: f32[1,256], index: 2, kind: input, shape index: {}]
  %s3 = inlined_call_operand.vmem [shape: bf16[32,256], index: 3, kind: input, shape index: {}]
  %s4 = inlined_call_operand.vmem [shape: bf16[32,256], index: 4, kind: output, shape index: {}]
  %s5 = sld [smem:[#allocation0]]
  $region80: #{bloom_forward.24} parent=0
    _
  %s7 = ssub.s32 1, %s5
  %s8 = scalar_select 0, %s7, %s5
  $region1: #{bloom_forward.24} parent=0
    #allocation3 [shape = 'u8[65536]{0}', space=vmem, size = 0x10000, scoped, tag = 'input window, operand 0']
    loop: start=0, step=1, limit=4
    $region2: #{bloom_forward.24} parent=1 // loop_pre_header
      _
    $region3: #{bloom_forward.24} parent=1 // loop_header
      %s10 = sphi 0, %s14
      %p11 = scmp.ge.s32.totalorder %s10, 4
      %s17 = sphi 0, %s36
      %s18 = sphi 0, %s32
      %s19 = sphi 0, %s28
      %s20 = sphi 0, %s17
      %s21 = sphi 0, %s18
      %s22 = sphi 0, %s19
      %s23 = sphi 0, %s20
      %s24 = sphi 0, %s21
      %s25 = sphi 0, %s22
      %s41 = sphi 0, %s43
      %s44 = sphi 0, %s41
      %s45 = sphi 0, %s44
      %s61 = sphi 0, %s45
      %s69 = sphi 0, %s71
      %s72 = sphi 0, %s69
      %s73 = sphi 0, %s72
      %s89 = sphi 0, %s73
      %s95 = sphi 0, %s97
      %s98 = sphi 0, %s95
      %s99 = sphi 0, %s98
      %s115 = sphi 0, %s99
      %s123 = sphi 0, %s125
      %s126 = sphi 0, %s123
      %s127 = sphi 0, %s126
      %s143 = sphi 0, %s127
      %s151 = sphi 0, %s153
      %s154 = sphi 0, %s151
      %s155 = sphi 0, %s154
      %s171 = sphi 0, %s155
    $region4: #{bloom_forward.24} parent=1 // loop_header_branch
      %13 = sbr.rel (%p11) target = $region8
    $region5: #{bloom_forward.24} parent=1 // loop_body
      %s15 = ssub.s32 %s10, 1
      %s16 = ssub.s32 %s10, 2
      %s26 = sadd.s32 1, %s19
      %p27 = scmp.ge.s32.totalorder %s26, 2
      %s28 = scalar_select %p27, 0, %s26
      %s29 = sadd.s32 1, %s18
      %s30 = scalar_select %p27, %s29, %s18
      %p31 = scmp.ge.s32.totalorder %s30, 1
      %s32 = scalar_select %p31, 0, %s30
      %s33 = sadd.s32 1, %s17
      %s34 = scalar_select %p31, %s33, %s17
      %p35 = scmp.ge.s32.totalorder %s34, 1
      %s36 = scalar_select %p35, 0, %s34
      %s37 = ssub.s32 %s17, %s36
      %s38 = ssub.s32 %s19, %s28
      %s39 = sor.u32 %s37, %s38
      %p40 = scmp.eq.s32.totalorder %s39, 0
      %s42 = sadd.s32 %s41, 1
      %s43 = scalar_select %p40, %s41, %s42
      %p46 = pneg %p40
      %p47 = scmp.eq.s32.totalorder %s10, 1
      %p48 = por %p46, %p47
      %p49 = scmp.ne.s32.totalorder %s41, %s44
      %p50 = scmp.eq.s32.totalorder %s10, 0
      %p51 = por %p49, %p50
      %p52 = scmp.ne.s32.totalorder %s41, %s44
      %p53 = scmp.eq.s32.totalorder %s15, 1
      %p54 = por %p52, %p53
      %p55 = scmp.ne.s32.totalorder %s44, %s45
      %p56 = scmp.eq.s32.totalorder %s15, 0
      %p57 = por %p55, %p56
      %p58 = scmp.ne.s32.totalorder %s44, %s45
      %p59 = scmp.eq.s32.totalorder %s16, 1
      %p60 = por %p58, %p59
      %p62 = scmp.ne.s32.totalorder %s45, %s61
      %p63 = scmp.eq.s32.totalorder %s16, 0
      %p64 = por %p62, %p63
      %s65 = ssub.s32 %s19, %s28
      %s66 = ssub.s32 %s18, %s32
      %s67 = sor.u32 %s65, %s66
      %p68 = scmp.eq.s32.totalorder %s67, 0
      %s70 = sadd.s32 %s69, 1
      %s71 = scalar_select %p68, %s69, %s70
      %p74 = pneg %p68
      %p75 = scmp.eq.s32.totalorder %s10, 1
      %p76 = por %p74, %p75
      %p77 = scmp.ne.s32.totalorder %s69, %s72
      %p78 = scmp.eq.s32.totalorder %s10, 0
      %p79 = por %p77, %p78
      %p80 = scmp.ne.s32.totalorder %s69, %s72
      %p81 = scmp.eq.s32.totalorder %s15, 1
      %p82 = por %p80, %p81
      %p83 = scmp.ne.s32.totalorder %s72, %s73
      %p84 = scmp.eq.s32.totalorder %s15, 0
      %p85 = por %p83, %p84
      %p86 = scmp.ne.s32.totalorder %s72, %s73
      %p87 = scmp.eq.s32.totalorder %s16, 1
      %p88 = por %p86, %p87
      %p90 = scmp.ne.s32.totalorder %s73, %s89
      %p91 = scmp.eq.s32.totalorder %s16, 0
      %p92 = por %p90, %p91
      %s93 = ssub.s32 %s18, %s32
      %p94 = scmp.eq.s32.totalorder %s93, 0
      %s96 = sadd.s32 %s95, 1
      %s97 = scalar_select %p94, %s95, %s96
      %p100 = pneg %p94
      %p101 = scmp.eq.s32.totalorder %s10, 1
      %p102 = por %p100, %p101
      %p103 = scmp.ne.s32.totalorder %s95, %s98
      %p104 = scmp.eq.s32.totalorder %s10, 0
      %p105 = por %p103, %p104
      %p106 = scmp.ne.s32.totalorder %s95, %s98
      %p107 = scmp.eq.s32.totalorder %s15, 1
      %p108 = por %p106, %p107
      %p109 = scmp.ne.s32.totalorder %s98, %s99
      %p110 = scmp.eq.s32.totalorder %s15, 0
      %p111 = por %p109, %p110
      %p112 = scmp.ne.s32.totalorder %s98, %s99
      %p113 = scmp.eq.s32.totalorder %s16, 1
      %p114 = por %p112, %p113
      %p116 = scmp.ne.s32.totalorder %s99, %s115
      %p117 = scmp.eq.s32.totalorder %s16, 0
      %p118 = por %p116, %p117
      %s119 = ssub.s32 %s17, %s36
      %s120 = ssub.s32 %s18, %s32
      %s121 = sor.u32 %s119, %s120
      %p122 = scmp.eq.s32.totalorder %s121, 0
      %s124 = sadd.s32 %s123, 1
      %s125 = scalar_select %p122, %s123, %s124
      %p128 = pneg %p122
      %p129 = scmp.eq.s32.totalorder %s10, 1
      %p130 = por %p128, %p129
      %p131 = scmp.ne.s32.totalorder %s123, %s126
      %p132 = scmp.eq.s32.totalorder %s10, 0
      %p133 = por %p131, %p132
      %p134 = scmp.ne.s32.totalorder %s123, %s126
      %p135 = scmp.eq.s32.totalorder %s15, 1
      %p136 = por %p134, %p135
      %p137 = scmp.ne.s32.totalorder %s126, %s127
      %p138 = scmp.eq.s32.totalorder %s15, 0
      %p139 = por %p137, %p138
      %p140 = scmp.ne.s32.totalorder %s126, %s127
      %p141 = scmp.eq.s32.totalorder %s16, 1
      %p142 = por %p140, %p141
      %p144 = scmp.ne.s32.totalorder %s127, %s143
      %p145 = scmp.eq.s32.totalorder %s16, 0
      %p146 = por %p144, %p145
      %s147 = ssub.s32 %s17, %s36
      %s148 = ssub.s32 %s18, %s32
      %s149 = sor.u32 %s147, %s148
      %p150 = scmp.eq.s32.totalorder %s149, 0
      %s152 = sadd.s32 %s151, 1
      %s153 = scalar_select %p150, %s151, %s152
      %p156 = pneg %p150
      %p157 = scmp.eq.s32.totalorder %s10, 1
      %p158 = por %p156, %p157
      %p159 = scmp.ne.s32.totalorder %s151, %s154
      %p160 = scmp.eq.s32.totalorder %s10, 0
      %p161 = por %p159, %p160
      %p162 = scmp.ne.s32.totalorder %s151, %s154
      %p163 = scmp.eq.s32.totalorder %s15, 1
      %p164 = por %p162, %p163
      %p165 = scmp.ne.s32.totalorder %s154, %s155
      %p166 = scmp.eq.s32.totalorder %s15, 0
      %p167 = por %p165, %p166
      %p168 = scmp.ne.s32.totalorder %s154, %s155
      %p169 = scmp.eq.s32.totalorder %s16, 1
      %p170 = por %p168, %p169
      %p172 = scmp.ne.s32.totalorder %s155, %s171
      %p173 = scmp.eq.s32.totalorder %s16, 0
      %p174 = por %p172, %p173
      %p175 = scmp.le.s32.totalorder 1, %s10
      %p176 = scmp.lt.s32.totalorder %s10, 3
      %p177 = pnand %p175, %p176
      %p178 = pneg %p177
      // Predicated region
      $region9: #{bloom_forward.24} parent=5 // pred_check
        _
      $region10: #{bloom_forward.24} parent=5 // pred_check_branch
        %180 = sbr.rel (%p177) target = $region12
      $region11: #{bloom_forward.24} parent=5 // pred_region
        %s181 = ssub.s32 %s10, 1
        // Predicated region
        $region13: #{bloom_forward.24} parent=11 // pred_check
          %p182 = pneg %p111
        $region14: #{bloom_forward.24} parent=11 // pred_check_branch
          %184 = sbr.rel (%p182) target = $region16
        $region15: #{bloom_forward.24} parent=11 // pred_region
          %s185 = smul.u32 2, %s21
          %p186 = scmp.lt.s32.totalorder %s185, 1
          %s187 = scalar_select %p186, %s185, 1
          %s188 = scalar_lea.vmem %s2, %s187
          %s189 = smul.u32 2, %s21
        $region16: #{bloom_forward.24} parent=11 // pred_fallthru
          _
        // Predicated region
        $region17: #{bloom_forward.24} parent=11 // pred_check
          %p190 = pneg %p139
        $region18: #{bloom_forward.24} parent=11 // pred_check_branch
          %192 = sbr.rel (%p190) target = $region20
        $region19: #{bloom_forward.24} parent=11 // pred_region
          %s193 = smul.u32 4, %s20
          %s194 = smul.u32 2, %s21
          %p195 = scmp.lt.s32.totalorder %s193, 3
          %s196 = scalar_select %p195, %s193, 3
          %p197 = scmp.lt.s32.totalorder %s194, 1
          %s198 = scalar_select %p197, %s194, 1
          %s199 = smul.addr %s196, 2
          %s200 = sadd.s32 %s198, %s199
          %s201 = smul.addr %s200, 4
          %s202 = scalar_lea.vmem %s3, %s201
          %s203 = smul.u32 4, %s20
          %s204 = smul.u32 2, %s21
        $region20: #{bloom_forward.24} parent=11 // pred_fallthru
          _
      $region12: #{bloom_forward.24} parent=5 // pred_fallthru
        _
      %p205 = scmp.lt.s32.totalorder %s10, 2
      // Predicated region
      $region21: #{bloom_forward.24} parent=5 // pred_check
        %p206 = pneg %p205
      $region22: #{bloom_forward.24} parent=5 // pred_check_branch
        %208 = sbr.rel (%p206) target = $region24
      $region23: #{bloom_forward.24} parent=5 // pred_region
        // Predicated region
        $region25: #{bloom_forward.24} parent=23 // pred_check
          %p209 = pneg %p51
        $region26: #{bloom_forward.24} parent=23 // pred_check_branch
          %211 = sbr.rel (%p209) target = $region28
        $region27: #{bloom_forward.24} parent=23 // pred_region
          %s212 = sand.u32 %s41, 1
          %s213 = sand.u32 %s41, 1
          %s214 = smul.addr %s213, 64
          %s215 = scalar_lea.vmem [#allocation3], %s214
          %s216 = smul.u32 4, %s17
          %s217 = smul.u32 4, %s19
          %s218 = smul.addr %s216, 8
          %s219 = sadd.s32 %s217, %s218
          %s220 = smul.addr %s219, 4
          %s221 = scalar_lea.vmem %s0, %s220
          // Predicated region
          $region29: #{bloom_forward.24} parent=27 // pred_check
            _
          $region30: #{bloom_forward.24} parent=27 // pred_check_branch
            %223 = sbr.rel (0) target = $region32
          $region31: #{bloom_forward.24} parent=27 // pred_region
            // Predicated region
            $region33: #{bloom_forward.24} parent=31 // pred_check
              _
            $region34: #{bloom_forward.24} parent=31 // pred_check_branch
              %225 = sbr.rel (0) target = $region36
            $region35: #{bloom_forward.24} parent=31 // pred_region
              loop: start=0, step=1, limit=1
              $region37: #{bloom_forward.24} parent=35 // loop_pre_header
                _
              $region38: #{bloom_forward.24} parent=35 // loop_header
                %s227 = sphi 0, %s231
                %p228 = scmp.ge.s32.totalorder %s227, 1
                %s232 = sphi %s221, %s221
                %s233 = sphi %s215, %s215
              $region39: #{bloom_forward.24} parent=35 // loop_header_branch
                %230 = sbr.rel (%p228) target = $region43
              $region40: #{bloom_forward.24} parent=35 // loop_body
                %v234 = vld [vmem:[%s232] sm:$0xff]
                %235 = vst [vmem:[%s233] sm:$0xff] %v234
                %v236 = vld [vmem:[%s232 + $0x8] sm:$0xff]
                %237 = vst [vmem:[%s233 + $0x8] sm:$0xff] %v236
                %v238 = vld [vmem:[%s232 + $0x20] sm:$0xff]
                %239 = vst [vmem:[%s233 + $0x10] sm:$0xff] %v238
                %v240 = vld [vmem:[%s232 + $0x28] sm:$0xff]
                %241 = vst [vmem:[%s233 + $0x18] sm:$0xff] %v240
                %v242 = vld [vmem:[%s232 + $0x40] sm:$0xff]
                %243 = vst [vmem:[%s233 + $0x20] sm:$0xff] %v242
                %v244 = vld [vmem:[%s232 + $0x48] sm:$0xff]
                %245 = vst [vmem:[%s233 + $0x28] sm:$0xff] %v244
                %v246 = vld [vmem:[%s232 + $0x60] sm:$0xff]
                %247 = vst [vmem:[%s233 + $0x30] sm:$0xff] %v246
                %v248 = vld [vmem:[%s232 + $0x68] sm:$0xff]
                %249 = vst [vmem:[%s233 + $0x38] sm:$0xff] %v248
              $region41: #{bloom_forward.24} parent=35 // loop_footer
                %s231 = sadd.s32 1, %s227
              $region42: #{bloom_forward.24} parent=35 // loop_footer_branch
                %226 = sbr.rel target = $region38
              $region43: #{bloom_forward.24} parent=35 // loop_exit
                _
            $region36: #{bloom_forward.24} parent=31 // pred_fallthru
              _
            // Predicated region
            $region44: #{bloom_forward.24} parent=31 // pred_check
              _
            $region45: #{bloom_forward.24} parent=31 // pred_check_branch
              %251 = sbr.rel target = $region47
            $region46: #{bloom_forward.24} parent=31 // pred_region
              _
            $region47: #{bloom_forward.24} parent=31 // pred_fallthru
              _
          $region32: #{bloom_forward.24} parent=27 // pred_fallthru
            _
          %252 = vnop
        $region28: #{bloom_forward.24} parent=23 // pred_fallthru
          _
        // Predicated region
        $region48: #{bloom_forward.24} parent=23 // pred_check
          %p253 = pneg %p79
        $region49: #{bloom_forward.24} parent=23 // pred_check_branch
          %255 = sbr.rel (%p253) target = $region51
        $region50: #{bloom_forward.24} parent=23 // pred_region
          %s256 = smul.u32 64, %s19
          %s257 = smul.u32 2, %s18
          %p258 = scmp.lt.s32.totalorder %s256, 127
          %s259 = scalar_select %p258, %s256, 127
          %p260 = scmp.lt.s32.totalorder %s257, 1
          %s261 = scalar_select %p260, %s257, 1
          %s262 = smul.addr %s259, 2
          %s263 = sadd.s32 %s261, %s262
          %s264 = smul.addr %s263, 4
          %s265 = scalar_lea.vmem %s1, %s264
          %s266 = smul.u32 64, %s19
          %s267 = smul.u32 2, %s18
        $region51: #{bloom_forward.24} parent=23 // pred_fallthru
          _
      $region24: #{bloom_forward.24} parent=5 // pred_fallthru
        _
      %p268 = scmp.le.s32.totalorder 1, %s10
      %p269 = scmp.lt.s32.totalorder %s10, 3
      %p270 = pnand %p268, %p269
      %p271 = pneg %p270
      // Predicated region
      $region52: #{bloom_forward.24} parent=5 // pred_check
        _
      $region53: #{bloom_forward.24} parent=5 // pred_check_branch
        %273 = sbr.rel (%p270) target = $region55
      $region54: #{bloom_forward.24} parent=5 // pred_region
        %s274 = ssub.s32 %s10, 1
        %s275 = sand.u32 %s44, 1
        %s276 = sand.u32 %s44, 1
        %s277 = smul.addr %s276, 64
        %s278 = scalar_lea.vmem [#allocation3], %s277
        // Predicated region
        $region56: #{bloom_forward.24} parent=54 // pred_check
          %p279 = pneg %p57
        $region57: #{bloom_forward.24} parent=54 // pred_check_branch
          %281 = sbr.rel (%p279) target = $region59
        $region58: #{bloom_forward.24} parent=54 // pred_region
          _
        $region59: #{bloom_forward.24} parent=54 // pred_fallthru
          _
        %s282 = sand.u32 %s44, 1
        %s283 = sand.u32 %s44, 1
        %s284 = smul.addr %s283, 64
        %s285 = scalar_lea.vmem [#allocation3], %s284
        %p286 = pneg %p57
        %p287 = pneg %p54
        %s288 = smul.u32 64, %s22
        %s289 = smul.u32 2, %s21
        %p290 = scmp.lt.s32.totalorder %s288, 127
        %s291 = scalar_select %p290, %s288, 127
        %p292 = scmp.lt.s32.totalorder %s289, 1
        %s293 = scalar_select %p292, %s289, 1
        %s294 = smul.addr %s291, 2
        %s295 = sadd.s32 %s293, %s294
        %s296 = smul.addr %s295, 4
        %s297 = scalar_lea.vmem %s1, %s296
        %p298 = pneg %p85
        %p299 = pneg %p82
        %s300 = smul.u32 2, %s21
        %p301 = scmp.lt.s32.totalorder %s300, 1
        %s302 = scalar_select %p301, %s300, 1
        %s303 = scalar_lea.vmem %s2, %s302
        %p304 = pneg %p111
        %p305 = pneg %p108
        %s306 = smul.u32 4, %s20
        %s307 = smul.u32 2, %s21
        %p308 = scmp.lt.s32.totalorder %s306, 3
        %s309 = scalar_select %p308, %s306, 3
        %p310 = scmp.lt.s32.totalorder %s307, 1
        %s311 = scalar_select %p310, %s307, 1
        %s312 = smul.addr %s309, 2
        %s313 = sadd.s32 %s311, %s312
        %s314 = smul.addr %s313, 4
        %s315 = scalar_lea.vmem %s3, %s314
        %p316 = pneg %p139
        %p317 = pneg %p136
        %p318 = pneg %p167
        %p319 = pneg %p164
        %s320 = smul.u32 4, %s20
        %s321 = smul.u32 2, %s21
        %p322 = scmp.lt.s32.totalorder %s320, 3
        %s323 = scalar_select %p322, %s320, 3
        %p324 = scmp.lt.s32.totalorder %s321, 1
        %s325 = scalar_select %p324, %s321, 1
        %s326 = smul.addr %s323, 2
        %s327 = sadd.s32 %s325, %s326
        %s328 = smul.addr %s327, 4
        %s329 = scalar_lea.vmem %s4, %s328
        %s330 = smul.u32 4, %s20
        %s331 = smul.u32 4, %s22
        %s332 = smul.u32 64, %s22
        %s333 = smul.u32 2, %s21
        %p334 = scmp.lt.s32.totalorder %s332, 127
        %s335 = scalar_select %p334, %s332, 127
        %p336 = scmp.lt.s32.totalorder %s333, 1
        %s337 = scalar_select %p336, %s333, 1
        %s338 = smul.addr %s335, 2
        %s339 = sadd.s32 %s337, %s338
        %s340 = smul.addr %s339, 4
        %s341 = scalar_lea.vmem %s1, %s340
        %s342 = smul.u32 64, %s22
        %s343 = smul.u32 2, %s21
        %s344 = smul.u32 2, %s21
        %p345 = scmp.lt.s32.totalorder %s344, 1
        %s346 = scalar_select %p345, %s344, 1
        %s347 = scalar_lea.vmem %s2, %s346
        %s348 = smul.u32 2, %s21
        %s349 = smul.u32 4, %s20
        %s350 = smul.u32 2, %s21
        %p351 = scmp.lt.s32.totalorder %s349, 3
        %s352 = scalar_select %p351, %s349, 3
        %p353 = scmp.lt.s32.totalorder %s350, 1
        %s354 = scalar_select %p353, %s350, 1
        %s355 = smul.addr %s352, 2
        %s356 = sadd.s32 %s354, %s355
        %s357 = smul.addr %s356, 4
        %s358 = scalar_lea.vmem %s3, %s357
        %s359 = smul.u32 4, %s20
        %s360 = smul.u32 2, %s21
        %s361 = smul.u32 4, %s20
        %s362 = smul.u32 2, %s21
        %p363 = scmp.lt.s32.totalorder %s361, 3
        %s364 = scalar_select %p363, %s361, 3
        %p365 = scmp.lt.s32.totalorder %s362, 1
        %s366 = scalar_select %p365, %s362, 1
        %s367 = smul.addr %s364, 2
        %s368 = sadd.s32 %s366, %s367
        %s369 = smul.addr %s368, 4
        %s370 = scalar_lea.vmem %s4, %s369
        %s371 = smul.u32 4, %s20
        %s372 = smul.u32 2, %s21
        %p373 = scmp.eq.s32.totalorder %s22, 0
        // Predicated region
        $region60: #{bloom_forward.24} parent=54 // pred_check
          %p374 = pneg %p373
        $region61: #{bloom_forward.24} parent=54 // pred_check_branch
          %376 = sbr.rel (%p374) target = $region63
        $region62: #{bloom_forward.24} parent=54 // pred_region
          %377 = vst [vmem:[#allocation2] sm:$0xff] 0.0
          %378 = vst [vmem:[#allocation2 + $0x8] sm:$0xff] 0.0
          %379 = vst [vmem:[#allocation2 + $0x10] sm:$0xff] 0.0
          %380 = vst [vmem:[#allocation2 + $0x18] sm:$0xff] 0.0
          %381 = vst [vmem:[#allocation2 + $0x20] sm:$0xff] 0.0
          %382 = vst [vmem:[#allocation2 + $0x28] sm:$0xff] 0.0
          %383 = vst [vmem:[#allocation2 + $0x30] sm:$0xff] 0.0
          %384 = vst [vmem:[#allocation2 + $0x38] sm:$0xff] 0.0
        $region63: #{bloom_forward.24} parent=54 // pred_fallthru
          _
        %v385 = vld [vmem:[#allocation2] sm:$0xff]
        %v386 = vld [vmem:[#allocation2 + $0x8] sm:$0xff]
        %v387 = vld [vmem:[#allocation2 + $0x10] sm:$0xff]
        %v388 = vld [vmem:[#allocation2 + $0x18] sm:$0xff]
        %v389 = vld [vmem:[#allocation2 + $0x20] sm:$0xff]
        %v390 = vld [vmem:[#allocation2 + $0x28] sm:$0xff]
        %v391 = vld [vmem:[#allocation2 + $0x30] sm:$0xff]
        %v392 = vld [vmem:[#allocation2 + $0x38] sm:$0xff]
        %v393 = vld [vmem:[%s278] sm:$0xff]
        %v394 = vld [vmem:[%s278 + $0x8] sm:$0xff]
        %v395 = vld [vmem:[%s278 + $0x10] sm:$0xff]
        %v396 = vld [vmem:[%s278 + $0x18] sm:$0xff]
        %v397 = vld [vmem:[%s278 + $0x20] sm:$0xff]
        %v398 = vld [vmem:[%s278 + $0x28] sm:$0xff]
        %v399 = vld [vmem:[%s278 + $0x30] sm:$0xff]
        %v400 = vld [vmem:[%s278 + $0x38] sm:$0xff]
        %v401 = vld [vmem:[%s341] sm:$0xff]
        %v402 = vld [vmem:[%s341 + $0x8] sm:$0xff]
        %v403 = vld [vmem:[%s341 + $0x10] sm:$0xff]
        %v404 = vld [vmem:[%s341 + $0x18] sm:$0xff]
        %v405 = vld [vmem:[%s341 + $0x20] sm:$0xff]
        %v406 = vld [vmem:[%s341 + $0x28] sm:$0xff]
        %v407 = vld [vmem:[%s341 + $0x30] sm:$0xff]
        %v408 = vld [vmem:[%s341 + $0x38] sm:$0xff]
        %v409 = vld [vmem:[%s341 + $0x40] sm:$0xff]
        %v410 = vld [vmem:[%s341 + $0x48] sm:$0xff]
        %v411 = vld [vmem:[%s341 + $0x50] sm:$0xff]
        %v412 = vld [vmem:[%s341 + $0x58] sm:$0xff]
        %v413 = vld [vmem:[%s341 + $0x60] sm:$0xff]
        %v414 = vld [vmem:[%s341 + $0x68] sm:$0xff]
        %v415 = vld [vmem:[%s341 + $0x70] sm:$0xff]
        %v416 = vld [vmem:[%s341 + $0x78] sm:$0xff]
        %v417 = vld [vmem:[%s341 + $0x80] sm:$0xff]
        %v418 = vld [vmem:[%s341 + $0x88] sm:$0xff]
        %v419 = vld [vmem:[%s341 + $0x90] sm:$0xff]
        %v420 = vld [vmem:[%s341 + $0x98] sm:$0xff]
        %v421 = vld [vmem:[%s341 + $0xa0] sm:$0xff]
        %v422 = vld [vmem:[%s341 + $0xa8] sm:$0xff]
        %v423 = vld [vmem:[%s341 + $0xb0] sm:$0xff]
        %v424 = vld [vmem:[%s341 + $0xb8] sm:$0xff]
        %v425 = vld [vmem:[%s341 + $0xc0] sm:$0xff]
        %v426 = vld [vmem:[%s341 + $0xc8] sm:$0xff]
        %v427 = vld [vmem:[%s341 + $0xd0] sm:$0xff]
        %v428 = vld [vmem:[%s341 + $0xd8] sm:$0xff]
        %v429 = vld [vmem:[%s341 + $0xe0] sm:$0xff]
        %v430 = vld [vmem:[%s341 + $0xe8] sm:$0xff]
        %v431 = vld [vmem:[%s341 + $0xf0] sm:$0xff]
        %v432 = vld [vmem:[%s341 + $0xf8] sm:$0xff]
        %v433 = vld [vmem:[%s341 + $0x100] sm:$0xff]
        %v434 = vld [vmem:[%s341 + $0x108] sm:$0xff]
        %v435 = vld [vmem:[%s341 + $0x110] sm:$0xff]
        %v436 = vld [vmem:[%s341 + $0x118] sm:$0xff]
        %v437 = vld [vmem:[%s341 + $0x120] sm:$0xff]
        %v438 = vld [vmem:[%s341 + $0x128] sm:$0xff]
        %v439 = vld [vmem:[%s341 + $0x130] sm:$0xff]
        %v440 = vld [vmem:[%s341 + $0x138] sm:$0xff]
        %v441 = vld [vmem:[%s341 + $0x140] sm:$0xff]
        %v442 = vld [vmem:[%s341 + $0x148] sm:$0xff]
        %v443 = vld [vmem:[%s341 + $0x150] sm:$0xff]
        %v444 = vld [vmem:[%s341 + $0x158] sm:$0xff]
        %v445 = vld [vmem:[%s341 + $0x160] sm:$0xff]
        %v446 = vld [vmem:[%s341 + $0x168] sm:$0xff]
        %v447 = vld [vmem:[%s341 + $0x170] sm:$0xff]
        %v448 = vld [vmem:[%s341 + $0x178] sm:$0xff]
        %v449 = vld [vmem:[%s341 + $0x180] sm:$0xff]
        %v450 = vld [vmem:[%s341 + $0x188] sm:$0xff]
        %v451 = vld [vmem:[%s341 + $0x190] sm:$0xff]
        %v452 = vld [vmem:[%s341 + $0x198] sm:$0xff]
        %v453 = vld [vmem:[%s341 + $0x1a0] sm:$0xff]
        %v454 = vld [vmem:[%s341 + $0x1a8] sm:$0xff]
        %v455 = vld [vmem:[%s341 + $0x1b0] sm:$0xff]
        %v456 = vld [vmem:[%s341 + $0x1b8] sm:$0xff]
        %v457 = vld [vmem:[%s341 + $0x1c0] sm:$0xff]
        %v458 = vld [vmem:[%s341 + $0x1c8] sm:$0xff]
        %v459 = vld [vmem:[%s341 + $0x1d0] sm:$0xff]
        %v460 = vld [vmem:[%s341 + $0x1d8] sm:$0xff]
        %v461 = vld [vmem:[%s341 + $0x1e0] sm:$0xff]
        %v462 = vld [vmem:[%s341 + $0x1e8] sm:$0xff]
        %v463 = vld [vmem:[%s341 + $0x1f0] sm:$0xff]
        %v464 = vld [vmem:[%s341 + $0x1f8] sm:$0xff]
        %v473 = vunpack.c.l.b16 %v393
        %v474 = vunpack.c.h.b16 %v393
        %v475 = vunpack.c.l.b16 %v394
        %v476 = vunpack.c.h.b16 %v394
        %v477 = vunpack.c.l.b16 %v395
        %v478 = vunpack.c.h.b16 %v395
        %v479 = vunpack.c.l.b16 %v396
        %v480 = vunpack.c.h.b16 %v396
        %v481 = vunpack.c.l.b16 %v397
        %v482 = vunpack.c.h.b16 %v397
        %v483 = vunpack.c.l.b16 %v398
        %v484 = vunpack.c.h.b16 %v398
        %v485 = vunpack.c.l.b16 %v399
        %v486 = vunpack.c.h.b16 %v399
        %v487 = vunpack.c.l.b16 %v400
        %v488 = vunpack.c.h.b16 %v400
        %v489 = vpack.c.b16 %v477, %v473
        %v490 = vpack.c.b16 %v478, %v474
        %v491 = vpack.c.b16 %v479, %v475
        %v492 = vpack.c.b16 %v480, %v476
        %v493 = vpack.c.b16 %v485, %v481
        %v494 = vpack.c.b16 %v486, %v482
        %v495 = vpack.c.b16 %v487, %v483
        %v496 = vpack.c.b16 %v488, %v484
        %v569 = vunpack.c.l.b16 %v401
        %v570 = vunpack.c.h.b16 %v401
        %v571 = vunpack.c.l.b16 %v402
        %v572 = vunpack.c.h.b16 %v402
        %v573 = vunpack.c.l.b16 %v403
        %v574 = vunpack.c.h.b16 %v403
        %v575 = vunpack.c.l.b16 %v404
        %v576 = vunpack.c.h.b16 %v404
        %v577 = vunpack.c.l.b16 %v405
        %v578 = vunpack.c.h.b16 %v405
        %v579 = vunpack.c.l.b16 %v406
        %v580 = vunpack.c.h.b16 %v406
        %v581 = vunpack.c.l.b16 %v407
        %v582 = vunpack.c.h.b16 %v407
        %v583 = vunpack.c.l.b16 %v408
        %v584 = vunpack.c.h.b16 %v408
        %v585 = vunpack.c.l.b16 %v409
        %v586 = vunpack.c.h.b16 %v409
        %v587 = vunpack.c.l.b16 %v410
        %v588 = vunpack.c.h.b16 %v410
        %v589 = vunpack.c.l.b16 %v411
        %v590 = vunpack.c.h.b16 %v411
        %v591 = vunpack.c.l.b16 %v412
        %v592 = vunpack.c.h.b16 %v412
        %v593 = vunpack.c.l.b16 %v413
        %v594 = vunpack.c.h.b16 %v413
        %v595 = vunpack.c.l.b16 %v414
        %v596 = vunpack.c.h.b16 %v414
        %v597 = vunpack.c.l.b16 %v415
        %v598 = vunpack.c.h.b16 %v415
        %v599 = vunpack.c.l.b16 %v416
        %v600 = vunpack.c.h.b16 %v416
        %v601 = vunpack.c.l.b16 %v417
        %v602 = vunpack.c.h.b16 %v417
        %v603 = vunpack.c.l.b16 %v418
        %v604 = vunpack.c.h.b16 %v418
        %v605 = vunpack.c.l.b16 %v419
        %v606 = vunpack.c.h.b16 %v419
        %v607 = vunpack.c.l.b16 %v420
        %v608 = vunpack.c.h.b16 %v420
        %v609 = vunpack.c.l.b16 %v421
        %v610 = vunpack.c.h.b16 %v421
        %v611 = vunpack.c.l.b16 %v422
        %v612 = vunpack.c.h.b16 %v422
        %v613 = vunpack.c.l.b16 %v423
        %v614 = vunpack.c.h.b16 %v423
        %v615 = vunpack.c.l.b16 %v424
        %v616 = vunpack.c.h.b16 %v424
        %v617 = vunpack.c.l.b16 %v425
        %v618 = vunpack.c.h.b16 %v425
        %v619 = vunpack.c.l.b16 %v426
        %v620 = vunpack.c.h.b16 %v426
        %v621 = vunpack.c.l.b16 %v427
        %v622 = vunpack.c.h.b16 %v427
        %v623 = vunpack.c.l.b16 %v428
        %v624 = vunpack.c.h.b16 %v428
        %v625 = vunpack.c.l.b16 %v429
        %v626 = vunpack.c.h.b16 %v429
        %v627 = vunpack.c.l.b16 %v430
        %v628 = vunpack.c.h.b16 %v430
        %v629 = vunpack.c.l.b16 %v431
        %v630 = vunpack.c.h.b16 %v431
        %v631 = vunpack.c.l.b16 %v432
        %v632 = vunpack.c.h.b16 %v432
        %v633 = vunpack.c.l.b16 %v433
        %v634 = vunpack.c.h.b16 %v433
        %v635 = vunpack.c.l.b16 %v434
        %v636 = vunpack.c.h.b16 %v434
        %v637 = vunpack.c.l.b16 %v435
        %v638 = vunpack.c.h.b16 %v435
        %v639 = vunpack.c.l.b16 %v436
        %v640 = vunpack.c.h.b16 %v436
        %v641 = vunpack.c.l.b16 %v437
        %v642 = vunpack.c.h.b16 %v437
        %v643 = vunpack.c.l.b16 %v438
        %v644 = vunpack.c.h.b16 %v438
        %v645 = vunpack.c.l.b16 %v439
        %v646 = vunpack.c.h.b16 %v439
        %v647 = vunpack.c.l.b16 %v440
        %v648 = vunpack.c.h.b16 %v440
        %v649 = vunpack.c.l.b16 %v441
        %v650 = vunpack.c.h.b16 %v441
        %v651 = vunpack.c.l.b16 %v442
        %v652 = vunpack.c.h.b16 %v442
        %v653 = vunpack.c.l.b16 %v443
        %v654 = vunpack.c.h.b16 %v443
        %v655 = vunpack.c.l.b16 %v444
        %v656 = vunpack.c.h.b16 %v444
        %v657 = vunpack.c.l.b16 %v445
        %v658 = vunpack.c.h.b16 %v445
        %v659 = vunpack.c.l.b16 %v446
        %v660 = vunpack.c.h.b16 %v446
        %v661 = vunpack.c.l.b16 %v447
        %v662 = vunpack.c.h.b16 %v447
        %v663 = vunpack.c.l.b16 %v448
        %v664 = vunpack.c.h.b16 %v448
        %v665 = vunpack.c.l.b16 %v449
        %v666 = vunpack.c.h.b16 %v449
        %v667 = vunpack.c.l.b16 %v450
        %v668 = vunpack.c.h.b16 %v450
        %v669 = vunpack.c.l.b16 %v451
        %v670 = vunpack.c.h.b16 %v451
        %v671 = vunpack.c.l.b16 %v452
        %v672 = vunpack.c.h.b16 %v452
        %v673 = vunpack.c.l.b16 %v453
        %v674 = vunpack.c.h.b16 %v453
        %v675 = vunpack.c.l.b16 %v454
        %v676 = vunpack.c.h.b16 %v454
        %v677 = vunpack.c.l.b16 %v455
        %v678 = vunpack.c.h.b16 %v455
        %v679 = vunpack.c.l.b16 %v456
        %v680 = vunpack.c.h.b16 %v456
        %v681 = vunpack.c.l.b16 %v457
        %v682 = vunpack.c.h.b16 %v457
        %v683 = vunpack.c.l.b16 %v458
        %v684 = vunpack.c.h.b16 %v458
        %v685 = vunpack.c.l.b16 %v459
        %v686 = vunpack.c.h.b16 %v459
        %v687 = vunpack.c.l.b16 %v460
        %v688 = vunpack.c.h.b16 %v460
        %v689 = vunpack.c.l.b16 %v461
        %v690 = vunpack.c.h.b16 %v461
        %v691 = vunpack.c.l.b16 %v462
        %v692 = vunpack.c.h.b16 %v462
        %v693 = vunpack.c.l.b16 %v463
        %v694 = vunpack.c.h.b16 %v463
        %v695 = vunpack.c.l.b16 %v464
        %v696 = vunpack.c.h.b16 %v464
        %v697 = vpack.c.b16 %v571, %v569
        %v698 = vpack.c.b16 %v572, %v570
        %v699 = vpack.c.b16 %v575, %v573
        %v700 = vpack.c.b16 %v576, %v574
        %v701 = vpack.c.b16 %v579, %v577
        %v702 = vpack.c.b16 %v580, %v578
        %v703 = vpack.c.b16 %v583, %v581
        %v704 = vpack.c.b16 %v584, %v582
        %v705 = vpack.c.b16 %v587, %v585
        %v706 = vpack.c.b16 %v588, %v586
        %v707 = vpack.c.b16 %v591, %v589
        %v708 = vpack.c.b16 %v592, %v590
        %v709 = vpack.c.b16 %v595, %v593
        %v710 = vpack.c.b16 %v596, %v594
        %v711 = vpack.c.b16 %v599, %v597
        %v712 = vpack.c.b16 %v600, %v598
        %v713 = vpack.c.b16 %v603, %v601
        %v714 = vpack.c.b16 %v604, %v602
        %v715 = vpack.c.b16 %v607, %v605
        %v716 = vpack.c.b16 %v608, %v606
        %v717 = vpack.c.b16 %v611, %v609
        %v718 = vpack.c.b16 %v612, %v610
        %v719 = vpack.c.b16 %v615, %v613
        %v720 = vpack.c.b16 %v616, %v614
        %v721 = vpack.c.b16 %v619, %v617
        %v722 = vpack.c.b16 %v620, %v618
        %v723 = vpack.c.b16 %v623, %v621
        %v724 = vpack.c.b16 %v624, %v622
        %v725 = vpack.c.b16 %v627, %v625
        %v726 = vpack.c.b16 %v628, %v626
        %v727 = vpack.c.b16 %v631, %v629
        %v728 = vpack.c.b16 %v632, %v630
        %v729 = vpack.c.b16 %v635, %v633
        %v730 = vpack.c.b16 %v636, %v634
        %v731 = vpack.c.b16 %v639, %v637
        %v732 = vpack.c.b16 %v640, %v638
        %v733 = vpack.c.b16 %v643, %v641
        %v734 = vpack.c.b16 %v644, %v642
        %v735 = vpack.c.b16 %v647, %v645
        %v736 = vpack.c.b16 %v648, %v646
        %v737 = vpack.c.b16 %v651, %v649
        %v738 = vpack.c.b16 %v652, %v650
        %v739 = vpack.c.b16 %v655, %v653
        %v740 = vpack.c.b16 %v656, %v654
        %v741 = vpack.c.b16 %v659, %v657
        %v742 = vpack.c.b16 %v660, %v658
        %v743 = vpack.c.b16 %v663, %v661
        %v744 = vpack.c.b16 %v664, %v662
        %v745 = vpack.c.b16 %v667, %v665
        %v746 = vpack.c.b16 %v668, %v666
        %v747 = vpack.c.b16 %v671, %v669
        %v748 = vpack.c.b16 %v672, %v670
        %v749 = vpack.c.b16 %v675, %v673
        %v750 = vpack.c.b16 %v676, %v674
        %v751 = vpack.c.b16 %v679, %v677
        %v752 = vpack.c.b16 %v680, %v678
        %v753 = vpack.c.b16 %v683, %v681
        %v754 = vpack.c.b16 %v684, %v682
        %v755 = vpack.c.b16 %v687, %v685
        %v756 = vpack.c.b16 %v688, %v686
        %v757 = vpack.c.b16 %v691, %v689
        %v758 = vpack.c.b16 %v692, %v690
        %v759 = vpack.c.b16 %v695, %v693
        %v760 = vpack.c.b16 %v696, %v694
        %825 = vmatprep.subr.bf16.mxu0 %v712
        %826 = vmatpush1.bf16.msra.mxu0 %v711
        %827 = vmatprep.subr.bf16.mxu0 %v710
        %828 = vmatpush1.bf16.msra.mxu0 %v709
        %829 = vmatprep.subr.bf16.mxu0 %v708
        %830 = vmatpush1.bf16.msra.mxu0 %v707
        %831 = vmatprep.subr.bf16.mxu0 %v706
        %832 = vmatpush1.bf16.msra.mxu0 %v705
        %833 = vmatprep.subr.bf16.mxu0 %v704
        %834 = vmatpush1.bf16.msra.mxu0 %v703
        %835 = vmatprep.subr.bf16.mxu0 %v702
        %836 = vmatpush1.bf16.msra.mxu0 %v701
        %837 = vmatprep.subr.bf16.mxu0 %v700
        %838 = vmatpush1.bf16.msra.mxu0 %v699
        %839 = vmatprep.subr.bf16.mxu0 %v698
        %840 = vmatpush1.bf16.msra.mxu0 %v697
        %841 = vmatprep.subr.bf16.mxu0 %v728
        %842 = vmatpush2.bf16.msra.mxu0 %v727
        %843 = vmatprep.subr.bf16.mxu0 %v726
        %844 = vmatpush2.bf16.msra.mxu0 %v725
        %845 = vmatprep.subr.bf16.mxu0 %v724
        %846 = vmatpush2.bf16.msra.mxu0 %v723
        %847 = vmatprep.subr.bf16.mxu0 %v722
        %848 = vmatpush2.bf16.msra.mxu0 %v721
        %849 = vmatprep.subr.bf16.mxu0 %v720
        %850 = vmatpush2.bf16.msra.mxu0 %v719
        %851 = vmatprep.subr.bf16.mxu0 %v718
        %852 = vmatpush2.bf16.msra.mxu0 %v717
        %853 = vmatprep.subr.bf16.mxu0 %v716
        %854 = vmatpush2.bf16.msra.mxu0 %v715
        %855 = vmatprep.subr.bf16.mxu0 %v714
        %856 = vmatpush2.bf16.msra.mxu0 %v713
        %857 = vmatprep.mubr.bf16.mxu0 %v490
        %858 = vmatmul.mubr.bf16.gmra.mxu0 %v489
        %v859 = vpop.f32.mrf.mxu0
        %v860 = vadd.f32 0.0, %v859
        %v861 = vpop.f32.mrf.mxu0
        %v862 = vadd.f32 0.0, %v861
        %v863 = vpop.f32.mrf.mxu0
        %v864 = vadd.f32 0.0, %v863
        %v865 = vpop.f32.mrf.mxu0
        %v866 = vadd.f32 0.0, %v865
        %867 = vmatprep.mubr.bf16.mxu0 %v494
        %868 = vmatmul.mubr.bf16.gmra.mxu0 %v493
        %v869 = vpop.f32.mrf.mxu0
        %v870 = vadd.f32 0.0, %v869
        %v871 = vpop.f32.mrf.mxu0
        %v872 = vadd.f32 0.0, %v871
        %v873 = vpop.f32.mrf.mxu0
        %v874 = vadd.f32 0.0, %v873
        %v875 = vpop.f32.mrf.mxu0
        %v876 = vadd.f32 0.0, %v875
        %877 = vdwg.mxu0
        %878 = vmatprep.subr.bf16.mxu0 %v744
        %879 = vmatpush1.bf16.msra.mxu0 %v743
        %880 = vmatprep.subr.bf16.mxu0 %v742
        %881 = vmatpush1.bf16.msra.mxu0 %v741
        %882 = vmatprep.subr.bf16.mxu0 %v740
        %883 = vmatpush1.bf16.msra.mxu0 %v739
        %884 = vmatprep.subr.bf16.mxu0 %v738
        %885 = vmatpush1.bf16.msra.mxu0 %v737
        %886 = vmatprep.subr.bf16.mxu0 %v736
        %887 = vmatpush1.bf16.msra.mxu0 %v735
        %888 = vmatprep.subr.bf16.mxu0 %v734
        %889 = vmatpush1.bf16.msra.mxu0 %v733
        %890 = vmatprep.subr.bf16.mxu0 %v732
        %891 = vmatpush1.bf16.msra.mxu0 %v731
        %892 = vmatprep.subr.bf16.mxu0 %v730
        %893 = vmatpush1.bf16.msra.mxu0 %v729
        %894 = vmatprep.subr.bf16.mxu0 %v760
        %895 = vmatpush2.bf16.msra.mxu0 %v759
        %896 = vmatprep.subr.bf16.mxu0 %v758
        %897 = vmatpush2.bf16.msra.mxu0 %v757
        %898 = vmatprep.subr.bf16.mxu0 %v756
        %899 = vmatpush2.bf16.msra.mxu0 %v755
        %900 = vmatprep.subr.bf16.mxu0 %v754
        %901 = vmatpush2.bf16.msra.mxu0 %v753
        %902 = vmatprep.subr.bf16.mxu0 %v752
        %903 = vmatpush2.bf16.msra.mxu0 %v751
        %904 = vmatprep.subr.bf16.mxu0 %v750
        %905 = vmatpush2.bf16.msra.mxu0 %v749
        %906 = vmatprep.subr.bf16.mxu0 %v748
        %907 = vmatpush2.bf16.msra.mxu0 %v747
        %908 = vmatprep.subr.bf16.mxu0 %v746
        %909 = vmatpush2.bf16.msra.mxu0 %v745
        %910 = vmatprep.mubr.bf16.mxu0 %v492
        %911 = vmatmul.mubr.bf16.gmra.mxu0 %v491
        %v912 = vpop.f32.mrf.mxu0
        %v913 = vadd.f32 %v860, %v912
        %v914 = vpop.f32.mrf.mxu0
        %v915 = vadd.f32 %v862, %v914
        %v916 = vpop.f32.mrf.mxu0
        %v917 = vadd.f32 %v864, %v916
        %v918 = vpop.f32.mrf.mxu0
        %v919 = vadd.f32 %v866, %v918
        %920 = vmatprep.mubr.bf16.mxu0 %v496
        %921 = vmatmul.mubr.bf16.gmra.mxu0 %v495
        %v922 = vpop.f32.mrf.mxu0
        %v923 = vadd.f32 %v870, %v922
        %v924 = vpop.f32.mrf.mxu0
        %v925 = vadd.f32 %v872, %v924
        %v926 = vpop.f32.mrf.mxu0
        %v927 = vadd.f32 %v874, %v926
        %v928 = vpop.f32.mrf.mxu0
        %v929 = vadd.f32 %v876, %v928
        %930 = vdwg.mxu0
        %v931 = vadd.f32 %v385, %v913
        %v932 = vadd.f32 %v386, %v915
        %v933 = vadd.f32 %v387, %v917
        %v934 = vadd.f32 %v388, %v919
        %v935 = vadd.f32 %v389, %v923
        %v936 = vadd.f32 %v390, %v925
        %v937 = vadd.f32 %v391, %v927
        %v938 = vadd.f32 %v392, %v929
        %939 = vst [vmem:[#allocation2] sm:$0xff] %v931
        %940 = vst [vmem:[#allocation2 + $0x8] sm:$0xff] %v932
        %941 = vst [vmem:[#allocation2 + $0x10] sm:$0xff] %v933
        %942 = vst [vmem:[#allocation2 + $0x18] sm:$0xff] %v934
        %943 = vst [vmem:[#allocation2 + $0x20] sm:$0xff] %v935
        %944 = vst [vmem:[#allocation2 + $0x28] sm:$0xff] %v936
        %945 = vst [vmem:[#allocation2 + $0x30] sm:$0xff] %v937
        %946 = vst [vmem:[#allocation2 + $0x38] sm:$0xff] %v938
        %p947 = scmp.eq.s32.totalorder %s22, 1
        // Predicated region
        $region64: #{bloom_forward.24} parent=54 // pred_check
          %p948 = pneg %p947
        $region65: #{bloom_forward.24} parent=54 // pred_check_branch
          %950 = sbr.rel (%p948) target = $region67
        $region66: #{bloom_forward.24} parent=54 // pred_region
          %v951 = vld [vmem:[#allocation2] sm:$0xff]
          %v952 = vld [vmem:[#allocation2 + $0x8] sm:$0xff]
          %v953 = vld [vmem:[#allocation2 + $0x10] sm:$0xff]
          %v954 = vld [vmem:[#allocation2 + $0x18] sm:$0xff]
          %v955 = vld [vmem:[#allocation2 + $0x20] sm:$0xff]
          %v956 = vld [vmem:[#allocation2 + $0x28] sm:$0xff]
          %v957 = vld [vmem:[#allocation2 + $0x30] sm:$0xff]
          %v958 = vld [vmem:[#allocation2 + $0x38] sm:$0xff]
          %v959 = vld [vmem:[%s347] sm:$0x3]
          %v961 = vlaneseq
          %v962 = vshrl.u32 %v961, 7
          %v963 = vsub.s32 0, %v962
          %v964 = vrot.slane %v959, %v963
          %v965 = vlaneseq
          %v966 = vshrl.u32 %v965, 7
          %v967 = vsub.s32 1, %v966
          %v968 = vrot.slane %v959, %v967
          %v971 = vadd.f32 %v951, %v964
          %v972 = vadd.f32 %v952, %v968
          %v973 = vadd.f32 %v953, %v964
          %v974 = vadd.f32 %v954, %v968
          %v975 = vadd.f32 %v955, %v964
          %v976 = vadd.f32 %v956, %v968
          %v977 = vadd.f32 %v957, %v964
          %v978 = vadd.f32 %v958, %v968
          %v979 = vld [vmem:[%s358] sm:$0xff]
          %v980 = vld [vmem:[%s358 + $0x8] sm:$0xff]
          %v981 = vld [vmem:[%s358 + $0x10] sm:$0xff]
          %v982 = vld [vmem:[%s358 + $0x18] sm:$0xff]
          %v983 = vunpack.c.l.bf16 %v979
          %v984 = vunpack.c.h.bf16 %v979
          %v985 = vunpack.c.l.bf16 %v980
          %v986 = vunpack.c.h.bf16 %v980
          %v987 = vunpack.c.l.bf16 %v981
          %v988 = vunpack.c.h.bf16 %v981
          %v989 = vunpack.c.l.bf16 %v982
          %v990 = vunpack.c.h.bf16 %v982
          %v991 = vadd.f32 %v971, %v983
          %v992 = vadd.f32 %v972, %v984
          %v993 = vadd.f32 %v973, %v985
          %v994 = vadd.f32 %v974, %v986
          %v995 = vadd.f32 %v975, %v987
          %v996 = vadd.f32 %v976, %v988
          %v997 = vadd.f32 %v977, %v989
          %v998 = vadd.f32 %v978, %v990
          %v999 = vpack.c.bf16 %v993, %v991
          %v1000 = vpack.c.bf16 %v994, %v992
          %v1001 = vpack.c.bf16 %v997, %v995
          %v1002 = vpack.c.bf16 %v998, %v996
          %v1007 = vunpack.c.l.b16 %v999
          %v1008 = vunpack.c.l.b16 %v1000
          %v1009 = vunpack.c.h.b16 %v999
          %v1010 = vunpack.c.h.b16 %v1000
          %v1011 = vunpack.c.l.b16 %v1001
          %v1012 = vunpack.c.l.b16 %v1002
          %v1013 = vunpack.c.h.b16 %v1001
          %v1014 = vunpack.c.h.b16 %v1002
          %v1015 = vpack.c.b16 %v1008, %v1007
          %v1016 = vpack.c.b16 %v1010, %v1009
          %v1017 = vpack.c.b16 %v1012, %v1011
          %v1018 = vpack.c.b16 %v1014, %v1013
          %1023 = vst [vmem:[%s370] sm:$0xff] %v1015
          %1024 = vst [vmem:[%s370 + $0x8] sm:$0xff] %v1016
          %1025 = vst [vmem:[%s370 + $0x10] sm:$0xff] %v1017
          %1026 = vst [vmem:[%s370 + $0x18] sm:$0xff] %v1018
        $region67: #{bloom_forward.24} parent=54 // pred_fallthru
          _
        %s1027 = smul.u32 4, %s20
        %s1028 = smul.u32 2, %s21
        %p1029 = scmp.lt.s32.totalorder %s1027, 3
        %s1030 = scalar_select %p1029, %s1027, 3
        %p1031 = scmp.lt.s32.totalorder %s1028, 1
        %s1032 = scalar_select %p1031, %s1028, 1
        %s1033 = smul.addr %s1030, 2
        %s1034 = sadd.s32 %s1032, %s1033
        %s1035 = smul.addr %s1034, 4
        %s1036 = scalar_lea.vmem %s4, %s1035
        // Predicated region
        $region68: #{bloom_forward.24} parent=54 // pred_check
          %p1037 = pneg %p164
        $region69: #{bloom_forward.24} parent=54 // pred_check_branch
          %1039 = sbr.rel (%p1037) target = $region71
        $region70: #{bloom_forward.24} parent=54 // pred_region
          %s1040 = smul.u32 4, %s20
          %s1041 = smul.u32 2, %s21
        $region71: #{bloom_forward.24} parent=54 // pred_fallthru
          _
        // Predicated region
        $region72: #{bloom_forward.24} parent=54 // pred_check
          %p1042 = pneg %p164
        $region73: #{bloom_forward.24} parent=54 // pred_check_branch
          %1044 = sbr.rel (%p1042) target = $region75
        $region74: #{bloom_forward.24} parent=54 // pred_region
          %s1045 = smul.u32 4, %s20
          %s1046 = smul.u32 2, %s21
          %p1047 = scmp.lt.s32.totalorder %s1045, 3
          %s1048 = scalar_select %p1047, %s1045, 3
          %p1049 = scmp.lt.s32.totalorder %s1046, 1
          %s1050 = scalar_select %p1049, %s1046, 1
          %s1051 = smul.addr %s1048, 2
          %s1052 = sadd.s32 %s1050, %s1051
          %s1053 = smul.addr %s1052, 4
          %s1054 = scalar_lea.vmem %s4, %s1053
        $region75: #{bloom_forward.24} parent=54 // pred_fallthru
          _
      $region55: #{bloom_forward.24} parent=5 // pred_fallthru
        _
      %p1055 = scmp.le.s32.totalorder 2, %s10
      // Predicated region
      $region76: #{bloom_forward.24} parent=5 // pred_check
        %p1056 = pneg %p1055
      $region77: #{bloom_forward.24} parent=5 // pred_check_branch
        %1058 = sbr.rel (%p1056) target = $region79
      $region78: #{bloom_forward.24} parent=5 // pred_region
        %s1059 = ssub.s32 %s10, 2
      $region79: #{bloom_forward.24} parent=5 // pred_fallthru
        _
    $region6: #{bloom_forward.24} parent=1 // loop_footer
      %s14 = sadd.s32 1, %s10
    $region7: #{bloom_forward.24} parent=1 // loop_footer_branch
      %9 = sbr.rel target = $region3
    $region8: #{bloom_forward.24} parent=1 // loop_exit
      _

// kernel: bloom_forward.33
$region0: #{bloom_forward.33}
  #allocation0 [shape = 'u32[]', space=smem, size = 0x4, offset = 0x4, fixed_abs, tag = 'smem constant byte address 0x4 - core index']
  #allocation1 [shape = 'u32[144,128]{1,0:T(1,128)}', space=vmem, size = 0x12000, scoped, tag = 'internal scratch']
  #allocation2 [shape = 'f32[32,512]{1,0:T(8,128)}', space=vmem, size = 0x10000, scoped, tag = 'scratch operand']
  %s0 = inlined_call_operand.vmem [shape: bf16[32,256], index: 0, kind: input, shape index: {}]
  %s1 = inlined_call_operand.vmem [shape: bf16[256,512], index: 1, kind: input, shape index: {}]
  %s2 = inlined_call_operand.hbm [shape: f32[32,512], index: 2, kind: output, shape index: {}]
  %s3 = sld [smem:[#allocation0]]
  $region26: #{bloom_forward.33} parent=0
    _
  %s5 = ssub.s32 1, %s3
  %s6 = scalar_select 0, %s5, %s3
  $region1: #{bloom_forward.33} parent=0
    #allocation3 [shape = 'u8[65536]{0}', space=vmem, size = 0x10000, scoped, tag = 'output window, operand 0, single buffered']
    #allocation4 [shape = 's32[1]{0}', space=sflag, size = 0x4, scoped, tag = 'scoped memory for bloom_forward.33']
    %7 = vsyncpa [#allocation4], 0
    // Predicated region
    $region2: #{bloom_forward.33} parent=1 // pred_check
      _
    $region3: #{bloom_forward.33} parent=1 // pred_check_branch
      %9 = sbr.rel (0) target = $region5
    $region4: #{bloom_forward.33} parent=1 // pred_region
      _
    $region5: #{bloom_forward.33} parent=1 // pred_fallthru
      _
    // Predicated region
    $region6: #{bloom_forward.33} parent=1 // pred_check
      _
    $region7: #{bloom_forward.33} parent=1 // pred_check_branch
      %11 = sbr.rel (0) target = $region9
    $region8: #{bloom_forward.33} parent=1 // pred_region
      _
    $region9: #{bloom_forward.33} parent=1 // pred_fallthru
      _
    %p12 = scmp.eq.s32.totalorder 0, 0
    // Predicated region
    $region10: #{bloom_forward.33} parent=1 // pred_check
      %p13 = pneg %p12
    $region11: #{bloom_forward.33} parent=1 // pred_check_branch
      %15 = sbr.rel (%p13) target = $region13
    $region12: #{bloom_forward.33} parent=1 // pred_region
      %16 = vst [vmem:[#allocation2] sm:$0xff] 0.0
      %17 = vst [vmem:[#allocation2 + $0x8] sm:$0xff] 0.0
      %18 = vst [vmem:[#allocation2 + $0x10] sm:$0xff] 0.0
      %19 = vst [vmem:[#allocation2 + $0x18] sm:$0xff] 0.0
      %20 = vst [vmem:[#allocation2 + $0x20] sm:$0xff] 0.0
      %21 = vst [vmem:[#allocation2 + $0x28] sm:$0xff] 0.0
      %22 = vst [vmem:[#allocation2 + $0x30] sm:$0xff] 0.0
      %23 = vst [vmem:[#allocation2 + $0x38] sm:$0xff] 0.0
      %24 = vst [vmem:[#allocation2 + $0x40] sm:$0xff] 0.0
      %25 = vst [vmem:[#allocation2 + $0x48] sm:$0xff] 0.0
      %26 = vst [vmem:[#allocation2 + $0x50] sm:$0xff] 0.0
      %27 = vst [vmem:[#allocation2 + $0x58] sm:$0xff] 0.0
      %28 = vst [vmem:[#allocation2 + $0x60] sm:$0xff] 0.0
      %29 = vst [vmem:[#allocation2 + $0x68] sm:$0xff] 0.0
      %30 = vst [vmem:[#allocation2 + $0x70] sm:$0xff] 0.0
      %31 = vst [vmem:[#allocation2 + $0x78] sm:$0xff] 0.0
    $region13: #{bloom_forward.33} parent=1 // pred_fallthru
      _
    %v32 = vld [vmem:[#allocation2] sm:$0xff]
    %v33 = vld [vmem:[#allocation2 + $0x8] sm:$0xff]
    %v34 = vld [vmem:[#allocation2 + $0x10] sm:$0xff]
    %v35 = vld [vmem:[#allocation2 + $0x18] sm:$0xff]
    %v36 = vld [vmem:[#allocation2 + $0x20] sm:$0xff]
    %v37 = vld [vmem:[#allocation2 + $0x28] sm:$0xff]
    %v38 = vld [vmem:[#allocation2 + $0x30] sm:$0xff]
    %v39 = vld [vmem:[#allocation2 + $0x38] sm:$0xff]
    %v40 = vld [vmem:[#allocation2 + $0x40] sm:$0xff]
    %v41 = vld [vmem:[#allocation2 + $0x48] sm:$0xff]
    %v42 = vld [vmem:[#allocation2 + $0x50] sm:$0xff]
    %v43 = vld [vmem:[#allocation2 + $0x58] sm:$0xff]
    %v44 = vld [vmem:[#allocation2 + $0x60] sm:$0xff]
    %v45 = vld [vmem:[#allocation2 + $0x68] sm:$0xff]
    %v46 = vld [vmem:[#allocation2 + $0x70] sm:$0xff]
    %v47 = vld [vmem:[#allocation2 + $0x78] sm:$0xff]
    %v48 = vld [vmem:[%s0] sm:$0xff]
    %v49 = vld [vmem:[%s0 + $0x8] sm:$0xff]
    %v50 = vld [vmem:[%s0 + $0x10] sm:$0xff]
    %v51 = vld [vmem:[%s0 + $0x18] sm:$0xff]
    %v52 = vld [vmem:[%s1] sm:$0xff]
    %v53 = vld [vmem:[%s1 + $0x8] sm:$0xff]
    %v54 = vld [vmem:[%s1 + $0x10] sm:$0xff]
    %v55 = vld [vmem:[%s1 + $0x18] sm:$0xff]
    %v56 = vld [vmem:[%s1 + $0x20] sm:$0xff]
    %v57 = vld [vmem:[%s1 + $0x28] sm:$0xff]
    %v58 = vld [vmem:[%s1 + $0x30] sm:$0xff]
    %v59 = vld [vmem:[%s1 + $0x38] sm:$0xff]
    %v60 = vld [vmem:[%s1 + $0x40] sm:$0xff]
    %v61 = vld [vmem:[%s1 + $0x48] sm:$0xff]
    %v62 = vld [vmem:[%s1 + $0x50] sm:$0xff]
    %v63 = vld [vmem:[%s1 + $0x58] sm:$0xff]
    %v64 = vld [vmem:[%s1 + $0x60] sm:$0xff]
    %v65 = vld [vmem:[%s1 + $0x68] sm:$0xff]
    %v66 = vld [vmem:[%s1 + $0x70] sm:$0xff]
    %v67 = vld [vmem:[%s1 + $0x78] sm:$0xff]
    %v68 = vld [vmem:[%s1 + $0x80] sm:$0xff]
    %v69 = vld [vmem:[%s1 + $0x88] sm:$0xff]
    %v70 = vld [vmem:[%s1 + $0x90] sm:$0xff]
    %v71 = vld [vmem:[%s1 + $0x98] sm:$0xff]
    %v72 = vld [vmem:[%s1 + $0xa0] sm:$0xff]
    %v73 = vld [vmem:[%s1 + $0xa8] sm:$0xff]
    %v74 = vld [vmem:[%s1 + $0xb0] sm:$0xff]
    %v75 = vld [vmem:[%s1 + $0xb8] sm:$0xff]
    %v76 = vld [vmem:[%s1 + $0xc0] sm:$0xff]
    %v77 = vld [vmem:[%s1 + $0xc8] sm:$0xff]
    %v78 = vld [vmem:[%s1 + $0xd0] sm:$0xff]
    %v79 = vld [vmem:[%s1 + $0xd8] sm:$0xff]
    %v80 = vld [vmem:[%s1 + $0xe0] sm:$0xff]
    %v81 = vld [vmem:[%s1 + $0xe8] sm:$0xff]
    %v82 = vld [vmem:[%s1 + $0xf0] sm:$0xff]
    %v83 = vld [vmem:[%s1 + $0xf8] sm:$0xff]
    %v84 = vld [vmem:[%s1 + $0x100] sm:$0xff]
    %v85 = vld [vmem:[%s1 + $0x108] sm:$0xff]
    %v86 = vld [vmem:[%s1 + $0x110] sm:$0xff]
    %v87 = vld [vmem:[%s1 + $0x118] sm:$0xff]
    %v88 = vld [vmem:[%s1 + $0x120] sm:$0xff]
    %v89 = vld [vmem:[%s1 + $0x128] sm:$0xff]
    %v90 = vld [vmem:[%s1 + $0x130] sm:$0xff]
    %v91 = vld [vmem:[%s1 + $0x138] sm:$0xff]
    %v92 = vld [vmem:[%s1 + $0x140] sm:$0xff]
    %v93 = vld [vmem:[%s1 + $0x148] sm:$0xff]
    %v94 = vld [vmem:[%s1 + $0x150] sm:$0xff]
    %v95 = vld [vmem:[%s1 + $0x158] sm:$0xff]
    %v96 = vld [vmem:[%s1 + $0x160] sm:$0xff]
    %v97 = vld [vmem:[%s1 + $0x168] sm:$0xff]
    %v98 = vld [vmem:[%s1 + $0x170] sm:$0xff]
    %v99 = vld [vmem:[%s1 + $0x178] sm:$0xff]
    %v100 = vld [vmem:[%s1 + $0x180] sm:$0xff]
    %v101 = vld [vmem:[%s1 + $0x188] sm:$0xff]
    %v102 = vld [vmem:[%s1 + $0x190] sm:$0xff]
    %v103 = vld [vmem:[%s1 + $0x198] sm:$0xff]
    %v104 = vld [vmem:[%s1 + $0x1a0] sm:$0xff]
    %v105 = vld [vmem:[%s1 + $0x1a8] sm:$0xff]
    %v106 = vld [vmem:[%s1 + $0x1b0] sm:$0xff]
    %v107 = vld [vmem:[%s1 + $0x1b8] sm:$0xff]
    %v108 = vld [vmem:[%s1 + $0x1c0] sm:$0xff]
    %v109 = vld [vmem:[%s1 + $0x1c8] sm:$0xff]
    %v110 = vld [vmem:[%s1 + $0x1d0] sm:$0xff]
    %v111 = vld [vmem:[%s1 + $0x1d8] sm:$0xff]
    %v112 = vld [vmem:[%s1 + $0x1e0] sm:$0xff]
    %v113 = vld [vmem:[%s1 + $0x1e8] sm:$0xff]
    %v114 = vld [vmem:[%s1 + $0x1f0] sm:$0xff]
    %v115 = vld [vmem:[%s1 + $0x1f8] sm:$0xff]
    %v120 = vunpack.c.l.b16 %v48
    %v121 = vunpack.c.h.b16 %v48
    %v122 = vunpack.c.l.b16 %v49
    %v123 = vunpack.c.h.b16 %v49
    %v124 = vunpack.c.l.b16 %v50
    %v125 = vunpack.c.h.b16 %v50
    %v126 = vunpack.c.l.b16 %v51
    %v127 = vunpack.c.h.b16 %v51
    %v128 = vpack.c.b16 %v122, %v120
    %v129 = vpack.c.b16 %v123, %v121
    %v130 = vpack.c.b16 %v126, %v124
    %v131 = vpack.c.b16 %v127, %v125
    %v200 = vunpack.c.l.b16 %v52
    %v201 = vunpack.c.h.b16 %v52
    %v202 = vunpack.c.l.b16 %v53
    %v203 = vunpack.c.h.b16 %v53
    %v204 = vunpack.c.l.b16 %v54
    %v205 = vunpack.c.h.b16 %v54
    %v206 = vunpack.c.l.b16 %v55
    %v207 = vunpack.c.h.b16 %v55
    %v208 = vunpack.c.l.b16 %v56
    %v209 = vunpack.c.h.b16 %v56
    %v210 = vunpack.c.l.b16 %v57
    %v211 = vunpack.c.h.b16 %v57
    %v212 = vunpack.c.l.b16 %v58
    %v213 = vunpack.c.h.b16 %v58
    %v214 = vunpack.c.l.b16 %v59
    %v215 = vunpack.c.h.b16 %v59
    %v216 = vunpack.c.l.b16 %v60
    %v217 = vunpack.c.h.b16 %v60
    %v218 = vunpack.c.l.b16 %v61
    %v219 = vunpack.c.h.b16 %v61
    %v220 = vunpack.c.l.b16 %v62
    %v221 = vunpack.c.h.b16 %v62
    %v222 = vunpack.c.l.b16 %v63
    %v223 = vunpack.c.h.b16 %v63
    %v224 = vunpack.c.l.b16 %v64
    %v225 = vunpack.c.h.b16 %v64
    %v226 = vunpack.c.l.b16 %v65
    %v227 = vunpack.c.h.b16 %v65
    %v228 = vunpack.c.l.b16 %v66
    %v229 = vunpack.c.h.b16 %v66
    %v230 = vunpack.c.l.b16 %v67
    %v231 = vunpack.c.h.b16 %v67
    %v232 = vunpack.c.l.b16 %v68
    %v233 = vunpack.c.h.b16 %v68
    %v234 = vunpack.c.l.b16 %v69
    %v235 = vunpack.c.h.b16 %v69
    %v236 = vunpack.c.l.b16 %v70
    %v237 = vunpack.c.h.b16 %v70
    %v238 = vunpack.c.l.b16 %v71
    %v239 = vunpack.c.h.b16 %v71
    %v240 = vunpack.c.l.b16 %v72
    %v241 = vunpack.c.h.b16 %v72
    %v242 = vunpack.c.l.b16 %v73
    %v243 = vunpack.c.h.b16 %v73
    %v244 = vunpack.c.l.b16 %v74
    %v245 = vunpack.c.h.b16 %v74
    %v246 = vunpack.c.l.b16 %v75
    %v247 = vunpack.c.h.b16 %v75
    %v248 = vunpack.c.l.b16 %v76
    %v249 = vunpack.c.h.b16 %v76
    %v250 = vunpack.c.l.b16 %v77
    %v251 = vunpack.c.h.b16 %v77
    %v252 = vunpack.c.l.b16 %v78
    %v253 = vunpack.c.h.b16 %v78
    %v254 = vunpack.c.l.b16 %v79
    %v255 = vunpack.c.h.b16 %v79
    %v256 = vunpack.c.l.b16 %v80
    %v257 = vunpack.c.h.b16 %v80
    %v258 = vunpack.c.l.b16 %v81
    %v259 = vunpack.c.h.b16 %v81
    %v260 = vunpack.c.l.b16 %v82
    %v261 = vunpack.c.h.b16 %v82
    %v262 = vunpack.c.l.b16 %v83
    %v263 = vunpack.c.h.b16 %v83
    %v264 = vunpack.c.l.b16 %v84
    %v265 = vunpack.c.h.b16 %v84
    %v266 = vunpack.c.l.b16 %v85
    %v267 = vunpack.c.h.b16 %v85
    %v268 = vunpack.c.l.b16 %v86
    %v269 = vunpack.c.h.b16 %v86
    %v270 = vunpack.c.l.b16 %v87
    %v271 = vunpack.c.h.b16 %v87
    %v272 = vunpack.c.l.b16 %v88
    %v273 = vunpack.c.h.b16 %v88
    %v274 = vunpack.c.l.b16 %v89
    %v275 = vunpack.c.h.b16 %v89
    %v276 = vunpack.c.l.b16 %v90
    %v277 = vunpack.c.h.b16 %v90
    %v278 = vunpack.c.l.b16 %v91
    %v279 = vunpack.c.h.b16 %v91
    %v280 = vunpack.c.l.b16 %v92
    %v281 = vunpack.c.h.b16 %v92
    %v282 = vunpack.c.l.b16 %v93
    %v283 = vunpack.c.h.b16 %v93
    %v284 = vunpack.c.l.b16 %v94
    %v285 = vunpack.c.h.b16 %v94
    %v286 = vunpack.c.l.b16 %v95
    %v287 = vunpack.c.h.b16 %v95
    %v288 = vunpack.c.l.b16 %v96
    %v289 = vunpack.c.h.b16 %v96
    %v290 = vunpack.c.l.b16 %v97
    %v291 = vunpack.c.h.b16 %v97
    %v292 = vunpack.c.l.b16 %v98
    %v293 = vunpack.c.h.b16 %v98
    %v294 = vunpack.c.l.b16 %v99
    %v295 = vunpack.c.h.b16 %v99
    %v296 = vunpack.c.l.b16 %v100
    %v297 = vunpack.c.h.b16 %v100
    %v298 = vunpack.c.l.b16 %v101
    %v299 = vunpack.c.h.b16 %v101
    %v300 = vunpack.c.l.b16 %v102
    %v301 = vunpack.c.h.b16 %v102
    %v302 = vunpack.c.l.b16 %v103
    %v303 = vunpack.c.h.b16 %v103
    %v304 = vunpack.c.l.b16 %v104
    %v305 = vunpack.c.h.b16 %v104
    %v306 = vunpack.c.l.b16 %v105
    %v307 = vunpack.c.h.b16 %v105
    %v308 = vunpack.c.l.b16 %v106
    %v309 = vunpack.c.h.b16 %v106
    %v310 = vunpack.c.l.b16 %v107
    %v311 = vunpack.c.h.b16 %v107
    %v312 = vunpack.c.l.b16 %v108
    %v313 = vunpack.c.h.b16 %v108
    %v314 = vunpack.c.l.b16 %v109
    %v315 = vunpack.c.h.b16 %v109
    %v316 = vunpack.c.l.b16 %v110
    %v317 = vunpack.c.h.b16 %v110
    %v318 = vunpack.c.l.b16 %v111
    %v319 = vunpack.c.h.b16 %v111
    %v320 = vunpack.c.l.b16 %v112
    %v321 = vunpack.c.h.b16 %v112
    %v322 = vunpack.c.l.b16 %v113
    %v323 = vunpack.c.h.b16 %v113
    %v324 = vunpack.c.l.b16 %v114
    %v325 = vunpack.c.h.b16 %v114
    %v326 = vunpack.c.l.b16 %v115
    %v327 = vunpack.c.h.b16 %v115
    %v328 = vpack.c.b16 %v204, %v200
    %v329 = vpack.c.b16 %v205, %v201
    %v330 = vpack.c.b16 %v206, %v202
    %v331 = vpack.c.b16 %v207, %v203
    %v332 = vpack.c.b16 %v212, %v208
    %v333 = vpack.c.b16 %v213, %v209
    %v334 = vpack.c.b16 %v214, %v210
    %v335 = vpack.c.b16 %v215, %v211
    %v336 = vpack.c.b16 %v220, %v216
    %v337 = vpack.c.b16 %v221, %v217
    %v338 = vpack.c.b16 %v222, %v218
    %v339 = vpack.c.b16 %v223, %v219
    %v340 = vpack.c.b16 %v228, %v224
    %v341 = vpack.c.b16 %v229, %v225
    %v342 = vpack.c.b16 %v230, %v226
    %v343 = vpack.c.b16 %v231, %v227
    %v344 = vpack.c.b16 %v236, %v232
    %v345 = vpack.c.b16 %v237, %v233
    %v346 = vpack.c.b16 %v238, %v234
    %v347 = vpack.c.b16 %v239, %v235
    %v348 = vpack.c.b16 %v244, %v240
    %v349 = vpack.c.b16 %v245, %v241
    %v350 = vpack.c.b16 %v246, %v242
    %v351 = vpack.c.b16 %v247, %v243
    %v352 = vpack.c.b16 %v252, %v248
    %v353 = vpack.c.b16 %v253, %v249
    %v354 = vpack.c.b16 %v254, %v250
    %v355 = vpack.c.b16 %v255, %v251
    %v356 = vpack.c.b16 %v260, %v256
    %v357 = vpack.c.b16 %v261, %v257
    %v358 = vpack.c.b16 %v262, %v258
    %v359 = vpack.c.b16 %v263, %v259
    %v360 = vpack.c.b16 %v268, %v264
    %v361 = vpack.c.b16 %v269, %v265
    %v362 = vpack.c.b16 %v270, %v266
    %v363 = vpack.c.b16 %v271, %v267
    %v364 = vpack.c.b16 %v276, %v272
    %v365 = vpack.c.b16 %v277, %v273
    %v366 = vpack.c.b16 %v278, %v274
    %v367 = vpack.c.b16 %v279, %v275
    %v368 = vpack.c.b16 %v284, %v280
    %v369 = vpack.c.b16 %v285, %v281
    %v370 = vpack.c.b16 %v286, %v282
    %v371 = vpack.c.b16 %v287, %v283
    %v372 = vpack.c.b16 %v292, %v288
    %v373 = vpack.c.b16 %v293, %v289
    %v374 = vpack.c.b16 %v294, %v290
    %v375 = vpack.c.b16 %v295, %v291
    %v376 = vpack.c.b16 %v300, %v296
    %v377 = vpack.c.b16 %v301, %v297
    %v378 = vpack.c.b16 %v302, %v298
    %v379 = vpack.c.b16 %v303, %v299
    %v380 = vpack.c.b16 %v308, %v304
    %v381 = vpack.c.b16 %v309, %v305
    %v382 = vpack.c.b16 %v310, %v306
    %v383 = vpack.c.b16 %v311, %v307
    %v384 = vpack.c.b16 %v316, %v312
    %v385 = vpack.c.b16 %v317, %v313
    %v386 = vpack.c.b16 %v318, %v314
    %v387 = vpack.c.b16 %v319, %v315
    %v388 = vpack.c.b16 %v324, %v320
    %v389 = vpack.c.b16 %v325, %v321
    %v390 = vpack.c.b16 %v326, %v322
    %v391 = vpack.c.b16 %v327, %v323
    %456 = vmatprep.subr.bf16.mxu0 %v357
    %457 = vmatpush1.bf16.msra.mxu0 %v356
    %458 = vmatprep.subr.bf16.mxu0 %v353
    %459 = vmatpush1.bf16.msra.mxu0 %v352
    %460 = vmatprep.subr.bf16.mxu0 %v349
    %461 = vmatpush1.bf16.msra.mxu0 %v348
    %462 = vmatprep.subr.bf16.mxu0 %v345
    %463 = vmatpush1.bf16.msra.mxu0 %v344
    %464 = vmatprep.subr.bf16.mxu0 %v341
    %465 = vmatpush1.bf16.msra.mxu0 %v340
    %466 = vmatprep.subr.bf16.mxu0 %v337
    %467 = vmatpush1.bf16.msra.mxu0 %v336
    %468 = vmatprep.subr.bf16.mxu0 %v333
    %469 = vmatpush1.bf16.msra.mxu0 %v332
    %470 = vmatprep.subr.bf16.mxu0 %v329
    %471 = vmatpush1.bf16.msra.mxu0 %v328
    %472 = vmatprep.subr.bf16.mxu0 %v389
    %473 = vmatpush2.bf16.msra.mxu0 %v388
    %474 = vmatprep.subr.bf16.mxu0 %v385
    %475 = vmatpush2.bf16.msra.mxu0 %v384
    %476 = vmatprep.subr.bf16.mxu0 %v381
    %477 = vmatpush2.bf16.msra.mxu0 %v380
    %478 = vmatprep.subr.bf16.mxu0 %v377
    %479 = vmatpush2.bf16.msra.mxu0 %v376
    %480 = vmatprep.subr.bf16.mxu0 %v373
    %481 = vmatpush2.bf16.msra.mxu0 %v372
    %482 = vmatprep.subr.bf16.mxu0 %v369
    %483 = vmatpush2.bf16.msra.mxu0 %v368
    %484 = vmatprep.subr.bf16.mxu0 %v365
    %485 = vmatpush2.bf16.msra.mxu0 %v364
    %486 = vmatprep.subr.bf16.mxu0 %v361
    %487 = vmatpush2.bf16.msra.mxu0 %v360
    %488 = vmatprep.mubr.bf16.mxu0 %v129
    %489 = vmatmul.mubr.bf16.gmra.mxu0 %v128
    %v490 = vpop.f32.mrf.mxu0
    %v491 = vadd.f32 0.0, %v490
    %v492 = vpop.f32.mrf.mxu0
    %v493 = vadd.f32 0.0, %v492
    %v494 = vpop.f32.mrf.mxu0
    %v495 = vadd.f32 0.0, %v494
    %v496 = vpop.f32.mrf.mxu0
    %v497 = vadd.f32 0.0, %v496
    %498 = vmatprep.mubr.bf16.mxu0 %v131
    %499 = vmatmul.mubr.bf16.gmra.mxu0 %v130
    %v500 = vpop.f32.mrf.mxu0
    %v501 = vadd.f32 0.0, %v500
    %v502 = vpop.f32.mrf.mxu0
    %v503 = vadd.f32 0.0, %v502
    %v504 = vpop.f32.mrf.mxu0
    %v505 = vadd.f32 0.0, %v504
    %v506 = vpop.f32.mrf.mxu0
    %v507 = vadd.f32 0.0, %v506
    %508 = vdwg.mxu0
    %509 = vmatprep.subr.bf16.mxu0 %v359
    %510 = vmatpush1.bf16.msra.mxu0 %v358
    %511 = vmatprep.subr.bf16.mxu0 %v355
    %512 = vmatpush1.bf16.msra.mxu0 %v354
    %513 = vmatprep.subr.bf16.mxu0 %v351
    %514 = vmatpush1.bf16.msra.mxu0 %v350
    %515 = vmatprep.subr.bf16.mxu0 %v347
    %516 = vmatpush1.bf16.msra.mxu0 %v346
    %517 = vmatprep.subr.bf16.mxu0 %v343
    %518 = vmatpush1.bf16.msra.mxu0 %v342
    %519 = vmatprep.subr.bf16.mxu0 %v339
    %520 = vmatpush1.bf16.msra.mxu0 %v338
    %521 = vmatprep.subr.bf16.mxu0 %v335
    %522 = vmatpush1.bf16.msra.mxu0 %v334
    %523 = vmatprep.subr.bf16.mxu0 %v331
    %524 = vmatpush1.bf16.msra.mxu0 %v330
    %525 = vmatprep.subr.bf16.mxu0 %v391
    %526 = vmatpush2.bf16.msra.mxu0 %v390
    %527 = vmatprep.subr.bf16.mxu0 %v387
    %528 = vmatpush2.bf16.msra.mxu0 %v386
    %529 = vmatprep.subr.bf16.mxu0 %v383
    %530 = vmatpush2.bf16.msra.mxu0 %v382
    %531 = vmatprep.subr.bf16.mxu0 %v379
    %532 = vmatpush2.bf16.msra.mxu0 %v378
    %533 = vmatprep.subr.bf16.mxu0 %v375
    %534 = vmatpush2.bf16.msra.mxu0 %v374
    %535 = vmatprep.subr.bf16.mxu0 %v371
    %536 = vmatpush2.bf16.msra.mxu0 %v370
    %537 = vmatprep.subr.bf16.mxu0 %v367
    %538 = vmatpush2.bf16.msra.mxu0 %v366
    %539 = vmatprep.subr.bf16.mxu0 %v363
    %540 = vmatpush2.bf16.msra.mxu0 %v362
    %541 = vmatprep.mubr.bf16.mxu0 %v129
    %542 = vmatmul.mubr.bf16.gmra.mxu0 %v128
    %v543 = vpop.f32.mrf.mxu0
    %v544 = vadd.f32 0.0, %v543
    %v545 = vpop.f32.mrf.mxu0
    %v546 = vadd.f32 0.0, %v545
    %v547 = vpop.f32.mrf.mxu0
    %v548 = vadd.f32 0.0, %v547
    %v549 = vpop.f32.mrf.mxu0
    %v550 = vadd.f32 0.0, %v549
    %551 = vmatprep.mubr.bf16.mxu0 %v131
    %552 = vmatmul.mubr.bf16.gmra.mxu0 %v130
    %v553 = vpop.f32.mrf.mxu0
    %v554 = vadd.f32 0.0, %v553
    %v555 = vpop.f32.mrf.mxu0
    %v556 = vadd.f32 0.0, %v555
    %v557 = vpop.f32.mrf.mxu0
    %v558 = vadd.f32 0.0, %v557
    %v559 = vpop.f32.mrf.mxu0
    %v560 = vadd.f32 0.0, %v559
    %561 = vdwg.mxu0
    %v562 = vadd.f32 %v32, %v491
    %v563 = vadd.f32 %v33, %v493
    %v564 = vadd.f32 %v34, %v544
    %v565 = vadd.f32 %v35, %v546
    %v566 = vadd.f32 %v36, %v495
    %v567 = vadd.f32 %v37, %v497
    %v568 = vadd.f32 %v38, %v548
    %v569 = vadd.f32 %v39, %v550
    %v570 = vadd.f32 %v40, %v501
    %v571 = vadd.f32 %v41, %v503
    %v572 = vadd.f32 %v42, %v554
    %v573 = vadd.f32 %v43, %v556
    %v574 = vadd.f32 %v44, %v505
    %v575 = vadd.f32 %v45, %v507
    %v576 = vadd.f32 %v46, %v558
    %v577 = vadd.f32 %v47, %v560
    %578 = vst [vmem:[#allocation2] sm:$0xff] %v562
    %579 = vst [vmem:[#allocation2 + $0x8] sm:$0xff] %v563
    %580 = vst [vmem:[#allocation2 + $0x10] sm:$0xff] %v564
    %581 = vst [vmem:[#allocation2 + $0x18] sm:$0xff] %v565
    %582 = vst [vmem:[#allocation2 + $0x20] sm:$0xff] %v566
    %583 = vst [vmem:[#allocation2 + $0x28] sm:$0xff] %v567
    %584 = vst [vmem:[#allocation2 + $0x30] sm:$0xff] %v568
    %585 = vst [vmem:[#allocation2 + $0x38] sm:$0xff] %v569
    %586 = vst [vmem:[#allocation2 + $0x40] sm:$0xff] %v570
    %587 = vst [vmem:[#allocation2 + $0x48] sm:$0xff] %v571
    %588 = vst [vmem:[#allocation2 + $0x50] sm:$0xff] %v572
    %589 = vst [vmem:[#allocation2 + $0x58] sm:$0xff] %v573
    %590 = vst [vmem:[#allocation2 + $0x60] sm:$0xff] %v574
    %591 = vst [vmem:[#allocation2 + $0x68] sm:$0xff] %v575
    %592 = vst [vmem:[#allocation2 + $0x70] sm:$0xff] %v576
    %593 = vst [vmem:[#allocation2 + $0x78] sm:$0xff] %v577
    // Predicated region
    $region14: #{bloom_forward.33} parent=1 // pred_check
      %p594 = pneg %p12
    $region15: #{bloom_forward.33} parent=1 // pred_check_branch
      %596 = sbr.rel (%p594) target = $region17
    $region16: #{bloom_forward.33} parent=1 // pred_region
      %v597 = vld [vmem:[#allocation2] sm:$0xff]
      %v598 = vld [vmem:[#allocation2 + $0x8] sm:$0xff]
      %v599 = vld [vmem:[#allocation2 + $0x10] sm:$0xff]
      %v600 = vld [vmem:[#allocation2 + $0x18] sm:$0xff]
      %v601 = vld [vmem:[#allocation2 + $0x20] sm:$0xff]
      %v602 = vld [vmem:[#allocation2 + $0x28] sm:$0xff]
      %v603 = vld [vmem:[#allocation2 + $0x30] sm:$0xff]
      %v604 = vld [vmem:[#allocation2 + $0x38] sm:$0xff]
      %v605 = vld [vmem:[#allocation2 + $0x40] sm:$0xff]
      %v606 = vld [vmem:[#allocation2 + $0x48] sm:$0xff]
      %v607 = vld [vmem:[#allocation2 + $0x50] sm:$0xff]
      %v608 = vld [vmem:[#allocation2 + $0x58] sm:$0xff]
      %v609 = vld [vmem:[#allocation2 + $0x60] sm:$0xff]
      %v610 = vld [vmem:[#allocation2 + $0x68] sm:$0xff]
      %v611 = vld [vmem:[#allocation2 + $0x70] sm:$0xff]
      %v612 = vld [vmem:[#allocation2 + $0x78] sm:$0xff]
      %613 = vst [vmem:[#allocation3] sm:$0xff] %v597
      %614 = vst [vmem:[#allocation3 + $0x8] sm:$0xff] %v598
      %615 = vst [vmem:[#allocation3 + $0x10] sm:$0xff] %v599
      %616 = vst [vmem:[#allocation3 + $0x18] sm:$0xff] %v600
      %617 = vst [vmem:[#allocation3 + $0x20] sm:$0xff] %v601
      %618 = vst [vmem:[#allocation3 + $0x28] sm:$0xff] %v602
      %619 = vst [vmem:[#allocation3 + $0x30] sm:$0xff] %v603
      %620 = vst [vmem:[#allocation3 + $0x38] sm:$0xff] %v604
      %621 = vst [vmem:[#allocation3 + $0x40] sm:$0xff] %v605
      %622 = vst [vmem:[#allocation3 + $0x48] sm:$0xff] %v606
      %623 = vst [vmem:[#allocation3 + $0x50] sm:$0xff] %v607
      %624 = vst [vmem:[#allocation3 + $0x58] sm:$0xff] %v608
      %625 = vst [vmem:[#allocation3 + $0x60] sm:$0xff] %v609
      %626 = vst [vmem:[#allocation3 + $0x68] sm:$0xff] %v610
      %627 = vst [vmem:[#allocation3 + $0x70] sm:$0xff] %v611
      %628 = vst [vmem:[#allocation3 + $0x78] sm:$0xff] %v612
    $region17: #{bloom_forward.33} parent=1 // pred_fallthru
      _
    // Predicated region
    $region18: #{bloom_forward.33} parent=1 // pred_check
      _
    $region19: #{bloom_forward.33} parent=1 // pred_check_branch
      %630 = sbr.rel (0) target = $region21
    $region20: #{bloom_forward.33} parent=1 // pred_region
      %s632 = ssub.s32 2048, 2048
      %633 = vsyncadd [#allocation4], %s632
      %s634 = sshll.u32 [#allocation3], 4
      %s635 = int_to_ptr.vmem [resolvable:$true] %s634
      %640 = dma.vmem_to_hbm [thread:$0]  %s635, 2048, %s2, [#allocation4], 512, 512, 32
    $region21: #{bloom_forward.33} parent=1 // pred_fallthru
      _
    // Predicated region
    $region22: #{bloom_forward.33} parent=1 // pred_check
      _
    $region23: #{bloom_forward.33} parent=1 // pred_check_branch
      %642 = sbr.rel (0) target = $region25
    $region24: #{bloom_forward.33} parent=1 // pred_region
      %643 = dma.done [#allocation4], 2048
    $region25: #{bloom_forward.33} parent=1 // pred_fallthru
      _
    %644 = vsyncpa [#allocation4], 1

// kernel: bloom_forward.23
$region0: #{bloom_forward.23}
  #allocation0 [shape = 'u32[]', space=smem, size = 0x4, offset = 0x4, fixed_abs, tag = 'smem constant byte address 0x4 - core index']
  #allocation1 [shape = 'u32[144,128]{1,0:T(1,128)}', space=vmem, size = 0x12000, scoped, tag = 'internal scratch']
  #allocation2 [shape = 'f32[32,1024]{1,0:T(8,128)}', space=vmem, size = 0x20000, scoped, tag = 'scratch operand']
  %s0 = inlined_call_operand.vmem [shape: bf16[32,256], index: 0, kind: input, shape index: {}]
  %s1 = inlined_call_operand.vmem [shape: bf16[256,1024], index: 1, kind: input, shape index: {}]
  %s2 = inlined_call_operand.vmem [shape: f32[1,1024], index: 2, kind: input, shape index: {}]
  %s3 = inlined_call_operand.vmem [shape: bf16[32,1024], index: 3, kind: output, shape index: {}]
  %s4 = sld [smem:[#allocation0]]
  $region30: #{bloom_forward.23} parent=0
    _
  %s6 = ssub.s32 1, %s4
  %s7 = scalar_select 0, %s6, %s4
  // Predicated region
  $region2: #{bloom_forward.23} parent=0 // pred_check
    _
  $region3: #{bloom_forward.23} parent=0 // pred_check_branch
    %9 = sbr.rel (0) target = $region5
  $region4: #{bloom_forward.23} parent=0 // pred_region
    _
  $region5: #{bloom_forward.23} parent=0 // pred_fallthru
    _
  // Predicated region
  $region6: #{bloom_forward.23} parent=0 // pred_check
    _
  $region7: #{bloom_forward.23} parent=0 // pred_check_branch
    %11 = sbr.rel (0) target = $region9
  $region8: #{bloom_forward.23} parent=0 // pred_region
    _
  $region9: #{bloom_forward.23} parent=0 // pred_fallthru
    _
  // Predicated region
  $region10: #{bloom_forward.23} parent=0 // pred_check
    _
  $region11: #{bloom_forward.23} parent=0 // pred_check_branch
    %13 = sbr.rel (0) target = $region13
  $region12: #{bloom_forward.23} parent=0 // pred_region
    _
  $region13: #{bloom_forward.23} parent=0 // pred_fallthru
    _
  %p14 = scmp.eq.s32.totalorder 0, 0
  // Predicated region
  $region14: #{bloom_forward.23} parent=0 // pred_check
    %p15 = pneg %p14
  $region15: #{bloom_forward.23} parent=0 // pred_check_branch
    %17 = sbr.rel (%p15) target = $region17
  $region16: #{bloom_forward.23} parent=0 // pred_region
    %18 = vst [vmem:[#allocation2] sm:$0xff] 0.0
    %19 = vst [vmem:[#allocation2 + $0x8] sm:$0xff] 0.0
    %20 = vst [vmem:[#allocation2 + $0x10] sm:$0xff] 0.0
    %21 = vst [vmem:[#allocation2 + $0x18] sm:$0xff] 0.0
    %22 = vst [vmem:[#allocation2 + $0x20] sm:$0xff] 0.0
    %23 = vst [vmem:[#allocation2 + $0x28] sm:$0xff] 0.0
    %24 = vst [vmem:[#allocation2 + $0x30] sm:$0xff] 0.0
    %25 = vst [vmem:[#allocation2 + $0x38] sm:$0xff] 0.0
    %26 = vst [vmem:[#allocation2 + $0x40] sm:$0xff] 0.0
    %27 = vst [vmem:[#allocation2 + $0x48] sm:$0xff] 0.0
    %28 = vst [vmem:[#allocation2 + $0x50] sm:$0xff] 0.0
    %29 = vst [vmem:[#allocation2 + $0x58] sm:$0xff] 0.0
    %30 = vst [vmem:[#allocation2 + $0x60] sm:$0xff] 0.0
    %31 = vst [vmem:[#allocation2 + $0x68] sm:$0xff] 0.0
    %32 = vst [vmem:[#allocation2 + $0x70] sm:$0xff] 0.0
    %33 = vst [vmem:[#allocation2 + $0x78] sm:$0xff] 0.0
    %34 = vst [vmem:[#allocation2 + $0x80] sm:$0xff] 0.0
    %35 = vst [vmem:[#allocation2 + $0x88] sm:$0xff] 0.0
    %36 = vst [vmem:[#allocation2 + $0x90] sm:$0xff] 0.0
    %37 = vst [vmem:[#allocation2 + $0x98] sm:$0xff] 0.0
    %38 = vst [vmem:[#allocation2 + $0xa0] sm:$0xff] 0.0
    %39 = vst [vmem:[#allocation2 + $0xa8] sm:$0xff] 0.0
    %40 = vst [vmem:[#allocation2 + $0xb0] sm:$0xff] 0.0
    %41 = vst [vmem:[#allocation2 + $0xb8] sm:$0xff] 0.0
    %42 = vst [vmem:[#allocation2 + $0xc0] sm:$0xff] 0.0
    %43 = vst [vmem:[#allocation2 + $0xc8] sm:$0xff] 0.0
    %44 = vst [vmem:[#allocation2 + $0xd0] sm:$0xff] 0.0
    %45 = vst [vmem:[#allocation2 + $0xd8] sm:$0xff] 0.0
    %46 = vst [vmem:[#allocation2 + $0xe0] sm:$0xff] 0.0
    %47 = vst [vmem:[#allocation2 + $0xe8] sm:$0xff] 0.0
    %48 = vst [vmem:[#allocation2 + $0xf0] sm:$0xff] 0.0
    %49 = vst [vmem:[#allocation2 + $0xf8] sm:$0xff] 0.0
  $region17: #{bloom_forward.23} parent=0 // pred_fallthru
    _
  %v50 = vld [vmem:[#allocation2] sm:$0xff]
  %v51 = vld [vmem:[#allocation2 + $0x8] sm:$0xff]
  %v52 = vld [vmem:[#allocation2 + $0x10] sm:$0xff]
  %v53 = vld [vmem:[#allocation2 + $0x18] sm:$0xff]
  %v54 = vld [vmem:[#allocation2 + $0x20] sm:$0xff]
  %v55 = vld [vmem:[#allocation2 + $0x28] sm:$0xff]
  %v56 = vld [vmem:[#allocation2 + $0x30] sm:$0xff]
  %v57 = vld [vmem:[#allocation2 + $0x38] sm:$0xff]
  %v58 = vld [vmem:[#allocation2 + $0x40] sm:$0xff]
  %v59 = vld [vmem:[#allocation2 + $0x48] sm:$0xff]
  %v60 = vld [vmem:[#allocation2 + $0x50] sm:$0xff]
  %v61 = vld [vmem:[#allocation2 + $0x58] sm:$0xff]
  %v62 = vld [vmem:[#allocation2 + $0x60] sm:$0xff]
  %v63 = vld [vmem:[#allocation2 + $0x68] sm:$0xff]
  %v64 = vld [vmem:[#allocation2 + $0x70] sm:$0xff]
  %v65 = vld [vmem:[#allocation2 + $0x78] sm:$0xff]
  %v66 = vld [vmem:[#allocation2 + $0x80] sm:$0xff]
  %v67 = vld [vmem:[#allocation2 + $0x88] sm:$0xff]
  %v68 = vld [vmem:[#allocation2 + $0x90] sm:$0xff]
  %v69 = vld [vmem:[#allocation2 + $0x98] sm:$0xff]
  %v70 = vld [vmem:[#allocation2 + $0xa0] sm:$0xff]
  %v71 = vld [vmem:[#allocation2 + $0xa8] sm:$0xff]
  %v72 = vld [vmem:[#allocation2 + $0xb0] sm:$0xff]
  %v73 = vld [vmem:[#allocation2 + $0xb8] sm:$0xff]
  %v74 = vld [vmem:[#allocation2 + $0xc0] sm:$0xff]
  %v75 = vld [vmem:[#allocation2 + $0xc8] sm:$0xff]
  %v76 = vld [vmem:[#allocation2 + $0xd0] sm:$0xff]
  %v77 = vld [vmem:[#allocation2 + $0xd8] sm:$0xff]
  %v78 = vld [vmem:[#allocation2 + $0xe0] sm:$0xff]
  %v79 = vld [vmem:[#allocation2 + $0xe8] sm:$0xff]
  %v80 = vld [vmem:[#allocation2 + $0xf0] sm:$0xff]
  %v81 = vld [vmem:[#allocation2 + $0xf8] sm:$0xff]
  %v82 = vld [vmem:[%s0] sm:$0xff]
  %v83 = vld [vmem:[%s0 + $0x8] sm:$0xff]
  %v84 = vld [vmem:[%s0 + $0x10] sm:$0xff]
  %v85 = vld [vmem:[%s0 + $0x18] sm:$0xff]
  %v86 = vld [vmem:[%s1] sm:$0xff]
  %v87 = vld [vmem:[%s1 + $0x8] sm:$0xff]
  %v88 = vld [vmem:[%s1 + $0x10] sm:$0xff]
  %v89 = vld [vmem:[%s1 + $0x18] sm:$0xff]
  %v90 = vld [vmem:[%s1 + $0x20] sm:$0xff]
  %v91 = vld [vmem:[%s1 + $0x28] sm:$0xff]
  %v92 = vld [vmem:[%s1 + $0x30] sm:$0xff]
  %v93 = vld [vmem:[%s1 + $0x38] sm:$0xff]
  %v94 = vld [vmem:[%s1 + $0x40] sm:$0xff]
  %v95 = vld [vmem:[%s1 + $0x48] sm:$0xff]
  %v96 = vld [vmem:[%s1 + $0x50] sm:$0xff]
  %v97 = vld [vmem:[%s1 + $0x58] sm:$0xff]
  %v98 = vld [vmem:[%s1 + $0x60] sm:$0xff]
  %v99 = vld [vmem:[%s1 + $0x68] sm:$0xff]
  %v100 = vld [vmem:[%s1 + $0x70] sm:$0xff]
  %v101 = vld [vmem:[%s1 + $0x78] sm:$0xff]
  %v102 = vld [vmem:[%s1 + $0x80] sm:$0xff]
  %v103 = vld [vmem:[%s1 + $0x88] sm:$0xff]
  %v104 = vld [vmem:[%s1 + $0x90] sm:$0xff]
  %v105 = vld [vmem:[%s1 + $0x98] sm:$0xff]
  %v106 = vld [vmem:[%s1 + $0xa0] sm:$0xff]
  %v107 = vld [vmem:[%s1 + $0xa8] sm:$0xff]
  %v108 = vld [vmem:[%s1 + $0xb0] sm:$0xff]
  %v109 = vld [vmem:[%s1 + $0xb8] sm:$0xff]
  %v110 = vld [vmem:[%s1 + $0xc0] sm:$0xff]
  %v111 = vld [vmem:[%s1 + $0xc8] sm:$0xff]
  %v112 = vld [vmem:[%s1 + $0xd0] sm:$0xff]
  %v113 = vld [vmem:[%s1 + $0xd8] sm:$0xff]
  %v114 = vld [vmem:[%s1 + $0xe0] sm:$0xff]
  %v115 = vld [vmem:[%s1 + $0xe8] sm:$0xff]
  %v116 = vld [vmem:[%s1 + $0xf0] sm:$0xff]
  %v117 = vld [vmem:[%s1 + $0xf8] sm:$0xff]
  %v118 = vld [vmem:[%s1 + $0x100] sm:$0xff]
  %v119 = vld [vmem:[%s1 + $0x108] sm:$0xff]
  %v120 = vld [vmem:[%s1 + $0x110] sm:$0xff]
  %v121 = vld [vmem:[%s1 + $0x118] sm:$0xff]
  %v122 = vld [vmem:[%s1 + $0x120] sm:$0xff]
  %v123 = vld [vmem:[%s1 + $0x128] sm:$0xff]
  %v124 = vld [vmem:[%s1 + $0x130] sm:$0xff]
  %v125 = vld [vmem:[%s1 + $0x138] sm:$0xff]
  %v126 = vld [vmem:[%s1 + $0x140] sm:$0xff]
  %v127 = vld [vmem:[%s1 + $0x148] sm:$0xff]
  %v128 = vld [vmem:[%s1 + $0x150] sm:$0xff]
  %v129 = vld [vmem:[%s1 + $0x158] sm:$0xff]
  %v130 = vld [vmem:[%s1 + $0x160] sm:$0xff]
  %v131 = vld [vmem:[%s1 + $0x168] sm:$0xff]
  %v132 = vld [vmem:[%s1 + $0x170] sm:$0xff]
  %v133 = vld [vmem:[%s1 + $0x178] sm:$0xff]
  %v134 = vld [vmem:[%s1 + $0x180] sm:$0xff]
  %v135 = vld [vmem:[%s1 + $0x188] sm:$0xff]
  %v136 = vld [vmem:[%s1 + $0x190] sm:$0xff]
  %v137 = vld [vmem:[%s1 + $0x198] sm:$0xff]
  %v138 = vld [vmem:[%s1 + $0x1a0] sm:$0xff]
  %v139 = vld [vmem:[%s1 + $0x1a8] sm:$0xff]
  %v140 = vld [vmem:[%s1 + $0x1b0] sm:$0xff]
  %v141 = vld [vmem:[%s1 + $0x1b8] sm:$0xff]
  %v142 = vld [vmem:[%s1 + $0x1c0] sm:$0xff]
  %v143 = vld [vmem:[%s1 + $0x1c8] sm:$0xff]
  %v144 = vld [vmem:[%s1 + $0x1d0] sm:$0xff]
  %v145 = vld [vmem:[%s1 + $0x1d8] sm:$0xff]
  %v146 = vld [vmem:[%s1 + $0x1e0] sm:$0xff]
  %v147 = vld [vmem:[%s1 + $0x1e8] sm:$0xff]
  %v148 = vld [vmem:[%s1 + $0x1f0] sm:$0xff]
  %v149 = vld [vmem:[%s1 + $0x1f8] sm:$0xff]
  %v150 = vld [vmem:[%s1 + $0x200] sm:$0xff]
  %v151 = vld [vmem:[%s1 + $0x208] sm:$0xff]
  %v152 = vld [vmem:[%s1 + $0x210] sm:$0xff]
  %v153 = vld [vmem:[%s1 + $0x218] sm:$0xff]
  %v154 = vld [vmem:[%s1 + $0x220] sm:$0xff]
  %v155 = vld [vmem:[%s1 + $0x228] sm:$0xff]
  %v156 = vld [vmem:[%s1 + $0x230] sm:$0xff]
  %v157 = vld [vmem:[%s1 + $0x238] sm:$0xff]
  %v158 = vld [vmem:[%s1 + $0x240] sm:$0xff]
  %v159 = vld [vmem:[%s1 + $0x248] sm:$0xff]
  %v160 = vld [vmem:[%s1 + $0x250] sm:$0xff]
  %v161 = vld [vmem:[%s1 + $0x258] sm:$0xff]
  %v162 = vld [vmem:[%s1 + $0x260] sm:$0xff]
  %v163 = vld [vmem:[%s1 + $0x268] sm:$0xff]
  %v164 = vld [vmem:[%s1 + $0x270] sm:$0xff]
  %v165 = vld [vmem:[%s1 + $0x278] sm:$0xff]
  %v166 = vld [vmem:[%s1 + $0x280] sm:$0xff]
  %v167 = vld [vmem:[%s1 + $0x288] sm:$0xff]
  %v168 = vld [vmem:[%s1 + $0x290] sm:$0xff]
  %v169 = vld [vmem:[%s1 + $0x298] sm:$0xff]
  %v170 = vld [vmem:[%s1 + $0x2a0] sm:$0xff]
  %v171 = vld [vmem:[%s1 + $0x2a8] sm:$0xff]
  %v172 = vld [vmem:[%s1 + $0x2b0] sm:$0xff]
  %v173 = vld [vmem:[%s1 + $0x2b8] sm:$0xff]
  %v174 = vld [vmem:[%s1 + $0x2c0] sm:$0xff]
  %v175 = vld [vmem:[%s1 + $0x2c8] sm:$0xff]
  %v176 = vld [vmem:[%s1 + $0x2d0] sm:$0xff]
  %v177 = vld [vmem:[%s1 + $0x2d8] sm:$0xff]
  %v178 = vld [vmem:[%s1 + $0x2e0] sm:$0xff]
  %v179 = vld [vmem:[%s1 + $0x2e8] sm:$0xff]
  %v180 = vld [vmem:[%s1 + $0x2f0] sm:$0xff]
  %v181 = vld [vmem:[%s1 + $0x2f8] sm:$0xff]
  %v182 = vld [vmem:[%s1 + $0x300] sm:$0xff]
  %v183 = vld [vmem:[%s1 + $0x308] sm:$0xff]
  %v184 = vld [vmem:[%s1 + $0x310] sm:$0xff]
  %v185 = vld [vmem:[%s1 + $0x318] sm:$0xff]
  %v186 = vld [vmem:[%s1 + $0x320] sm:$0xff]
  %v187 = vld [vmem:[%s1 + $0x328] sm:$0xff]
  %v188 = vld [vmem:[%s1 + $0x330] sm:$0xff]
  %v189 = vld [vmem:[%s1 + $0x338] sm:$0xff]
  %v190 = vld [vmem:[%s1 + $0x340] sm:$0xff]
  %v191 = vld [vmem:[%s1 + $0x348] sm:$0xff]
  %v192 = vld [vmem:[%s1 + $0x350] sm:$0xff]
  %v193 = vld [vmem:[%s1 + $0x358] sm:$0xff]
  %v194 = vld [vmem:[%s1 + $0x360] sm:$0xff]
  %v195 = vld [vmem:[%s1 + $0x368] sm:$0xff]
  %v196 = vld [vmem:[%s1 + $0x370] sm:$0xff]
  %v197 = vld [vmem:[%s1 + $0x378] sm:$0xff]
  %v198 = vld [vmem:[%s1 + $0x380] sm:$0xff]
  %v199 = vld [vmem:[%s1 + $0x388] sm:$0xff]
  %v200 = vld [vmem:[%s1 + $0x390] sm:$0xff]
  %v201 = vld [vmem:[%s1 + $0x398] sm:$0xff]
  %v202 = vld [vmem:[%s1 + $0x3a0] sm:$0xff]
  %v203 = vld [vmem:[%s1 + $0x3a8] sm:$0xff]
  %v204 = vld [vmem:[%s1 + $0x3b0] sm:$0xff]
  %v205 = vld [vmem:[%s1 + $0x3b8] sm:$0xff]
  %v206 = vld [vmem:[%s1 + $0x3c0] sm:$0xff]
  %v207 = vld [vmem:[%s1 + $0x3c8] sm:$0xff]
  %v208 = vld [vmem:[%s1 + $0x3d0] sm:$0xff]
  %v209 = vld [vmem:[%s1 + $0x3d8] sm:$0xff]
  %v210 = vld [vmem:[%s1 + $0x3e0] sm:$0xff]
  %v211 = vld [vmem:[%s1 + $0x3e8] sm:$0xff]
  %v212 = vld [vmem:[%s1 + $0x3f0] sm:$0xff]
  %v213 = vld [vmem:[%s1 + $0x3f8] sm:$0xff]
  %v218 = vunpack.c.l.b16 %v82
  %v219 = vunpack.c.h.b16 %v82
  %v220 = vunpack.c.l.b16 %v83
  %v221 = vunpack.c.h.b16 %v83
  %v222 = vunpack.c.l.b16 %v84
  %v223 = vunpack.c.h.b16 %v84
  %v224 = vunpack.c.l.b16 %v85
  %v225 = vunpack.c.h.b16 %v85
  %v226 = vpack.c.b16 %v220, %v218
  %v227 = vpack.c.b16 %v221, %v219
  %v228 = vpack.c.b16 %v224, %v222
  %v229 = vpack.c.b16 %v225, %v223
  %v362 = vunpack.c.l.b16 %v86
  %v363 = vunpack.c.h.b16 %v86
  %v364 = vunpack.c.l.b16 %v87
  %v365 = vunpack.c.h.b16 %v87
  %v366 = vunpack.c.l.b16 %v88
  %v367 = vunpack.c.h.b16 %v88
  %v368 = vunpack.c.l.b16 %v89
  %v369 = vunpack.c.h.b16 %v89
  %v370 = vunpack.c.l.b16 %v90
  %v371 = vunpack.c.h.b16 %v90
  %v372 = vunpack.c.l.b16 %v91
  %v373 = vunpack.c.h.b16 %v91
  %v374 = vunpack.c.l.b16 %v92
  %v375 = vunpack.c.h.b16 %v92
  %v376 = vunpack.c.l.b16 %v93
  %v377 = vunpack.c.h.b16 %v93
  %v378 = vunpack.c.l.b16 %v94
  %v379 = vunpack.c.h.b16 %v94
  %v380 = vunpack.c.l.b16 %v95
  %v381 = vunpack.c.h.b16 %v95
  %v382 = vunpack.c.l.b16 %v96
  %v383 = vunpack.c.h.b16 %v96
  %v384 = vunpack.c.l.b16 %v97
  %v385 = vunpack.c.h.b16 %v97
  %v386 = vunpack.c.l.b16 %v98
  %v387 = vunpack.c.h.b16 %v98
  %v388 = vunpack.c.l.b16 %v99
  %v389 = vunpack.c.h.b16 %v99
  %v390 = vunpack.c.l.b16 %v100
  %v391 = vunpack.c.h.b16 %v100
  %v392 = vunpack.c.l.b16 %v101
  %v393 = vunpack.c.h.b16 %v101
  %v394 = vunpack.c.l.b16 %v102
  %v395 = vunpack.c.h.b16 %v102
  %v396 = vunpack.c.l.b16 %v103
  %v397 = vunpack.c.h.b16 %v103
  %v398 = vunpack.c.l.b16 %v104
  %v399 = vunpack.c.h.b16 %v104
  %v400 = vunpack.c.l.b16 %v105
  %v401 = vunpack.c.h.b16 %v105
  %v402 = vunpack.c.l.b16 %v106
  %v403 = vunpack.c.h.b16 %v106
  %v404 = vunpack.c.l.b16 %v107
  %v405 = vunpack.c.h.b16 %v107
  %v406 = vunpack.c.l.b16 %v108
  %v407 = vunpack.c.h.b16 %v108
  %v408 = vunpack.c.l.b16 %v109
  %v409 = vunpack.c.h.b16 %v109
  %v410 = vunpack.c.l.b16 %v110
  %v411 = vunpack.c.h.b16 %v110
  %v412 = vunpack.c.l.b16 %v111
  %v413 = vunpack.c.h.b16 %v111
  %v414 = vunpack.c.l.b16 %v112
  %v415 = vunpack.c.h.b16 %v112
  %v416 = vunpack.c.l.b16 %v113
  %v417 = vunpack.c.h.b16 %v113
  %v418 = vunpack.c.l.b16 %v114
  %v419 = vunpack.c.h.b16 %v114
  %v420 = vunpack.c.l.b16 %v115
  %v421 = vunpack.c.h.b16 %v115
  %v422 = vunpack.c.l.b16 %v116
  %v423 = vunpack.c.h.b16 %v116
  %v424 = vunpack.c.l.b16 %v117
  %v425 = vunpack.c.h.b16 %v117
  %v426 = vunpack.c.l.b16 %v118
  %v427 = vunpack.c.h.b16 %v118
  %v428 = vunpack.c.l.b16 %v119
  %v429 = vunpack.c.h.b16 %v119
  %v430 = vunpack.c.l.b16 %v120
  %v431 = vunpack.c.h.b16 %v120
  %v432 = vunpack.c.l.b16 %v121
  %v433 = vunpack.c.h.b16 %v121
  %v434 = vunpack.c.l.b16 %v122
  %v435 = vunpack.c.h.b16 %v122
  %v436 = vunpack.c.l.b16 %v123
  %v437 = vunpack.c.h.b16 %v123
  %v438 = vunpack.c.l.b16 %v124
  %v439 = vunpack.c.h.b16 %v124
  %v440 = vunpack.c.l.b16 %v125
  %v441 = vunpack.c.h.b16 %v125
  %v442 = vunpack.c.l.b16 %v126
  %v443 = vunpack.c.h.b16 %v126
  %v444 = vunpack.c.l.b16 %v127
  %v445 = vunpack.c.h.b16 %v127
  %v446 = vunpack.c.l.b16 %v128
  %v447 = vunpack.c.h.b16 %v128
  %v448 = vunpack.c.l.b16 %v129
  %v449 = vunpack.c.h.b16 %v129
  %v450 = vunpack.c.l.b16 %v130
  %v451 = vunpack.c.h.b16 %v130
  %v452 = vunpack.c.l.b16 %v131
  %v453 = vunpack.c.h.b16 %v131
  %v454 = vunpack.c.l.b16 %v132
  %v455 = vunpack.c.h.b16 %v132
  %v456 = vunpack.c.l.b16 %v133
  %v457 = vunpack.c.h.b16 %v133
  %v458 = vunpack.c.l.b16 %v134
  %v459 = vunpack.c.h.b16 %v134
  %v460 = vunpack.c.l.b16 %v135
  %v461 = vunpack.c.h.b16 %v135
  %v462 = vunpack.c.l.b16 %v136
  %v463 = vunpack.c.h.b16 %v136
  %v464 = vunpack.c.l.b16 %v137
  %v465 = vunpack.c.h.b16 %v137
  %v466 = vunpack.c.l.b16 %v138
  %v467 = vunpack.c.h.b16 %v138
  %v468 = vunpack.c.l.b16 %v139
  %v469 = vunpack.c.h.b16 %v139
  %v470 = vunpack.c.l.b16 %v140
  %v471 = vunpack.c.h.b16 %v140
  %v472 = vunpack.c.l.b16 %v141
  %v473 = vunpack.c.h.b16 %v141
  %v474 = vunpack.c.l.b16 %v142
  %v475 = vunpack.c.h.b16 %v142
  %v476 = vunpack.c.l.b16 %v143
  %v477 = vunpack.c.h.b16 %v143
  %v478 = vunpack.c.l.b16 %v144
  %v479 = vunpack.c.h.b16 %v144
  %v480 = vunpack.c.l.b16 %v145
  %v481 = vunpack.c.h.b16 %v145
  %v482 = vunpack.c.l.b16 %v146
  %v483 = vunpack.c.h.b16 %v146
  %v484 = vunpack.c.l.b16 %v147
  %v485 = vunpack.c.h.b16 %v147
  %v486 = vunpack.c.l.b16 %v148
  %v487 = vunpack.c.h.b16 %v148
  %v488 = vunpack.c.l.b16 %v149
  %v489 = vunpack.c.h.b16 %v149
  %v490 = vunpack.c.l.b16 %v150
  %v491 = vunpack.c.h.b16 %v150
  %v492 = vunpack.c.l.b16 %v151
  %v493 = vunpack.c.h.b16 %v151
  %v494 = vunpack.c.l.b16 %v152
  %v495 = vunpack.c.h.b16 %v152
  %v496 = vunpack.c.l.b16 %v153
  %v497 = vunpack.c.h.b16 %v153
  %v498 = vunpack.c.l.b16 %v154
  %v499 = vunpack.c.h.b16 %v154
  %v500 = vunpack.c.l.b16 %v155
  %v501 = vunpack.c.h.b16 %v155
  %v502 = vunpack.c.l.b16 %v156
  %v503 = vunpack.c.h.b16 %v156
  %v504 = vunpack.c.l.b16 %v157
  %v505 = vunpack.c.h.b16 %v157
  %v506 = vunpack.c.l.b16 %v158
  %v507 = vunpack.c.h.b16 %v158
  %v508 = vunpack.c.l.b16 %v159
  %v509 = vunpack.c.h.b16 %v159
  %v510 = vunpack.c.l.b16 %v160
  %v511 = vunpack.c.h.b16 %v160
  %v512 = vunpack.c.l.b16 %v161
  %v513 = vunpack.c.h.b16 %v161
  %v514 = vunpack.c.l.b16 %v162
  %v515 = vunpack.c.h.b16 %v162
  %v516 = vunpack.c.l.b16 %v163
  %v517 = vunpack.c.h.b16 %v163
  %v518 = vunpack.c.l.b16 %v164
  %v519 = vunpack.c.h.b16 %v164
  %v520 = vunpack.c.l.b16 %v165
  %v521 = vunpack.c.h.b16 %v165
  %v522 = vunpack.c.l.b16 %v166
  %v523 = vunpack.c.h.b16 %v166
  %v524 = vunpack.c.l.b16 %v167
  %v525 = vunpack.c.h.b16 %v167
  %v526 = vunpack.c.l.b16 %v168
  %v527 = vunpack.c.h.b16 %v168
  %v528 = vunpack.c.l.b16 %v169
  %v529 = vunpack.c.h.b16 %v169
  %v530 = vunpack.c.l.b16 %v170
  %v531 = vunpack.c.h.b16 %v170
  %v532 = vunpack.c.l.b16 %v171
  %v533 = vunpack.c.h.b16 %v171
  %v534 = vunpack.c.l.b16 %v172
  %v535 = vunpack.c.h.b16 %v172
  %v536 = vunpack.c.l.b16 %v173
  %v537 = vunpack.c.h.b16 %v173
  %v538 = vunpack.c.l.b16 %v174
  %v539 = vunpack.c.h.b16 %v174
  %v540 = vunpack.c.l.b16 %v175
  %v541 = vunpack.c.h.b16 %v175
  %v542 = vunpack.c.l.b16 %v176
  %v543 = vunpack.c.h.b16 %v176
  %v544 = vunpack.c.l.b16 %v177
  %v545 = vunpack.c.h.b16 %v177
  %v546 = vunpack.c.l.b16 %v178
  %v547 = vunpack.c.h.b16 %v178
  %v548 = vunpack.c.l.b16 %v179
  %v549 = vunpack.c.h.b16 %v179
  %v550 = vunpack.c.l.b16 %v180
  %v551 = vunpack.c.h.b16 %v180
  %v552 = vunpack.c.l.b16 %v181
  %v553 = vunpack.c.h.b16 %v181
  %v554 = vunpack.c.l.b16 %v182
  %v555 = vunpack.c.h.b16 %v182
  %v556 = vunpack.c.l.b16 %v183
  %v557 = vunpack.c.h.b16 %v183
  %v558 = vunpack.c.l.b16 %v184
  %v559 = vunpack.c.h.b16 %v184
  %v560 = vunpack.c.l.b16 %v185
  %v561 = vunpack.c.h.b16 %v185
  %v562 = vunpack.c.l.b16 %v186
  %v563 = vunpack.c.h.b16 %v186
  %v564 = vunpack.c.l.b16 %v187
  %v565 = vunpack.c.h.b16 %v187
  %v566 = vunpack.c.l.b16 %v188
  %v567 = vunpack.c.h.b16 %v188
  %v568 = vunpack.c.l.b16 %v189
  %v569 = vunpack.c.h.b16 %v189
  %v570 = vunpack.c.l.b16 %v190
  %v571 = vunpack.c.h.b16 %v190
  %v572 = vunpack.c.l.b16 %v191
  %v573 = vunpack.c.h.b16 %v191
  %v574 = vunpack.c.l.b16 %v192
  %v575 = vunpack.c.h.b16 %v192
  %v576 = vunpack.c.l.b16 %v193
  %v577 = vunpack.c.h.b16 %v193
  %v578 = vunpack.c.l.b16 %v194
  %v579 = vunpack.c.h.b16 %v194
  %v580 = vunpack.c.l.b16 %v195
  %v581 = vunpack.c.h.b16 %v195
  %v582 = vunpack.c.l.b16 %v196
  %v583 = vunpack.c.h.b16 %v196
  %v584 = vunpack.c.l.b16 %v197
  %v585 = vunpack.c.h.b16 %v197
  %v586 = vunpack.c.l.b16 %v198
  %v587 = vunpack.c.h.b16 %v198
  %v588 = vunpack.c.l.b16 %v199
  %v589 = vunpack.c.h.b16 %v199
  %v590 = vunpack.c.l.b16 %v200
  %v591 = vunpack.c.h.b16 %v200
  %v592 = vunpack.c.l.b16 %v201
  %v593 = vunpack.c.h.b16 %v201
  %v594 = vunpack.c.l.b16 %v202
  %v595 = vunpack.c.h.b16 %v202
  %v596 = vunpack.c.l.b16 %v203
  %v597 = vunpack.c.h.b16 %v203
  %v598 = vunpack.c.l.b16 %v204
  %v599 = vunpack.c.h.b16 %v204
  %v600 = vunpack.c.l.b16 %v205
  %v601 = vunpack.c.h.b16 %v205
  %v602 = vunpack.c.l.b16 %v206
  %v603 = vunpack.c.h.b16 %v206
  %v604 = vunpack.c.l.b16 %v207
  %v605 = vunpack.c.h.b16 %v207
  %v606 = vunpack.c.l.b16 %v208
  %v607 = vunpack.c.h.b16 %v208
  %v608 = vunpack.c.l.b16 %v209
  %v609 = vunpack.c.h.b16 %v209
  %v610 = vunpack.c.l.b16 %v210
  %v611 = vunpack.c.h.b16 %v210
  %v612 = vunpack.c.l.b16 %v211
  %v613 = vunpack.c.h.b16 %v211
  %v614 = vunpack.c.l.b16 %v212
  %v615 = vunpack.c.h.b16 %v212
  %v616 = vunpack.c.l.b16 %v213
  %v617 = vunpack.c.h.b16 %v213
  %v618 = vpack.c.b16 %v370, %v362
  %v619 = vpack.c.b16 %v371, %v363
  %v620 = vpack.c.b16 %v372, %v364
  %v621 = vpack.c.b16 %v373, %v365
  %v622 = vpack.c.b16 %v374, %v366
  %v623 = vpack.c.b16 %v375, %v367
  %v624 = vpack.c.b16 %v376, %v368
  %v625 = vpack.c.b16 %v377, %v369
  %v626 = vpack.c.b16 %v386, %v378
  %v627 = vpack.c.b16 %v387, %v379
  %v628 = vpack.c.b16 %v388, %v380
  %v629 = vpack.c.b16 %v389, %v381
  %v630 = vpack.c.b16 %v390, %v382
  %v631 = vpack.c.b16 %v391, %v383
  %v632 = vpack.c.b16 %v392, %v384
  %v633 = vpack.c.b16 %v393, %v385
  %v634 = vpack.c.b16 %v402, %v394
  %v635 = vpack.c.b16 %v403, %v395
  %v636 = vpack.c.b16 %v404, %v396
  %v637 = vpack.c.b16 %v405, %v397
  %v638 = vpack.c.b16 %v406, %v398
  %v639 = vpack.c.b16 %v407, %v399
  %v640 = vpack.c.b16 %v408, %v400
  %v641 = vpack.c.b16 %v409, %v401
  %v642 = vpack.c.b16 %v418, %v410
  %v643 = vpack.c.b16 %v419, %v411
  %v644 = vpack.c.b16 %v420, %v412
  %v645 = vpack.c.b16 %v421, %v413
  %v646 = vpack.c.b16 %v422, %v414
  %v647 = vpack.c.b16 %v423, %v415
  %v648 = vpack.c.b16 %v424, %v416
  %v649 = vpack.c.b16 %v425, %v417
  %v650 = vpack.c.b16 %v434, %v426
  %v651 = vpack.c.b16 %v435, %v427
  %v652 = vpack.c.b16 %v436, %v428
  %v653 = vpack.c.b16 %v437, %v429
  %v654 = vpack.c.b16 %v438, %v430
  %v655 = vpack.c.b16 %v439, %v431
  %v656 = vpack.c.b16 %v440, %v432
  %v657 = vpack.c.b16 %v441, %v433
  %v658 = vpack.c.b16 %v450, %v442
  %v659 = vpack.c.b16 %v451, %v443
  %v660 = vpack.c.b16 %v452, %v444
  %v661 = vpack.c.b16 %v453, %v445
  %v662 = vpack.c.b16 %v454, %v446
  %v663 = vpack.c.b16 %v455, %v447
  %v664 = vpack.c.b16 %v456, %v448
  %v665 = vpack.c.b16 %v457, %v449
  %v666 = vpack.c.b16 %v466, %v458
  %v667 = vpack.c.b16 %v467, %v459
  %v668 = vpack.c.b16 %v468, %v460
  %v669 = vpack.c.b16 %v469, %v461
  %v670 = vpack.c.b16 %v470, %v462
  %v671 = vpack.c.b16 %v471, %v463
  %v672 = vpack.c.b16 %v472, %v464
  %v673 = vpack.c.b16 %v473, %v465
  %v674 = vpack.c.b16 %v482, %v474
  %v675 = vpack.c.b16 %v483, %v475
  %v676 = vpack.c.b16 %v484, %v476
  %v677 = vpack.c.b16 %v485, %v477
  %v678 = vpack.c.b16 %v486, %v478
  %v679 = vpack.c.b16 %v487, %v479
  %v680 = vpack.c.b16 %v488, %v480
  %v681 = vpack.c.b16 %v489, %v481
  %v682 = vpack.c.b16 %v498, %v490
  %v683 = vpack.c.b16 %v499, %v491
  %v684 = vpack.c.b16 %v500, %v492
  %v685 = vpack.c.b16 %v501, %v493
  %v686 = vpack.c.b16 %v502, %v494
  %v687 = vpack.c.b16 %v503, %v495
  %v688 = vpack.c.b16 %v504, %v496
  %v689 = vpack.c.b16 %v505, %v497
  %v690 = vpack.c.b16 %v514, %v506
  %v691 = vpack.c.b16 %v515, %v507
  %v692 = vpack.c.b16 %v516, %v508
  %v693 = vpack.c.b16 %v517, %v509
  %v694 = vpack.c.b16 %v518, %v510
  %v695 = vpack.c.b16 %v519, %v511
  %v696 = vpack.c.b16 %v520, %v512
  %v697 = vpack.c.b16 %v521, %v513
  %v698 = vpack.c.b16 %v530, %v522
  %v699 = vpack.c.b16 %v531, %v523
  %v700 = vpack.c.b16 %v532, %v524
  %v701 = vpack.c.b16 %v533, %v525
  %v702 = vpack.c.b16 %v534, %v526
  %v703 = vpack.c.b16 %v535, %v527
  %v704 = vpack.c.b16 %v536, %v528
  %v705 = vpack.c.b16 %v537, %v529
  %v706 = vpack.c.b16 %v546, %v538
  %v707 = vpack.c.b16 %v547, %v539
  %v708 = vpack.c.b16 %v548, %v540
  %v709 = vpack.c.b16 %v549, %v541
  %v710 = vpack.c.b16 %v550, %v542
  %v711 = vpack.c.b16 %v551, %v543
  %v712 = vpack.c.b16 %v552, %v544
  %v713 = vpack.c.b16 %v553, %v545
  %v714 = vpack.c.b16 %v562, %v554
  %v715 = vpack.c.b16 %v563, %v555
  %v716 = vpack.c.b16 %v564, %v556
  %v717 = vpack.c.b16 %v565, %v557
  %v718 = vpack.c.b16 %v566, %v558
  %v719 = vpack.c.b16 %v567, %v559
  %v720 = vpack.c.b16 %v568, %v560
  %v721 = vpack.c.b16 %v569, %v561
  %v722 = vpack.c.b16 %v578, %v570
  %v723 = vpack.c.b16 %v579, %v571
  %v724 = vpack.c.b16 %v580, %v572
  %v725 = vpack.c.b16 %v581, %v573
  %v726 = vpack.c.b16 %v582, %v574
  %v727 = vpack.c.b16 %v583, %v575
  %v728 = vpack.c.b16 %v584, %v576
  %v729 = vpack.c.b16 %v585, %v577
  %v730 = vpack.c.b16 %v594, %v586
  %v731 = vpack.c.b16 %v595, %v587
  %v732 = vpack.c.b16 %v596, %v588
  %v733 = vpack.c.b16 %v597, %v589
  %v734 = vpack.c.b16 %v598, %v590
  %v735 = vpack.c.b16 %v599, %v591
  %v736 = vpack.c.b16 %v600, %v592
  %v737 = vpack.c.b16 %v601, %v593
  %v738 = vpack.c.b16 %v610, %v602
  %v739 = vpack.c.b16 %v611, %v603
  %v740 = vpack.c.b16 %v612, %v604
  %v741 = vpack.c.b16 %v613, %v605
  %v742 = vpack.c.b16 %v614, %v606
  %v743 = vpack.c.b16 %v615, %v607
  %v744 = vpack.c.b16 %v616, %v608
  %v745 = vpack.c.b16 %v617, %v609
  %874 = vmatprep.subr.bf16.mxu0 %v675
  %875 = vmatpush1.bf16.msra.mxu0 %v674
  %876 = vmatprep.subr.bf16.mxu0 %v667
  %877 = vmatpush1.bf16.msra.mxu0 %v666
  %878 = vmatprep.subr.bf16.mxu0 %v659
  %879 = vmatpush1.bf16.msra.mxu0 %v658
  %880 = vmatprep.subr.bf16.mxu0 %v651
  %881 = vmatpush1.bf16.msra.mxu0 %v650
  %882 = vmatprep.subr.bf16.mxu0 %v643
  %883 = vmatpush1.bf16.msra.mxu0 %v642
  %884 = vmatprep.subr.bf16.mxu0 %v635
  %885 = vmatpush1.bf16.msra.mxu0 %v634
  %886 = vmatprep.subr.bf16.mxu0 %v627
  %887 = vmatpush1.bf16.msra.mxu0 %v626
  %888 = vmatprep.subr.bf16.mxu0 %v619
  %889 = vmatpush1.bf16.msra.mxu0 %v618
  %890 = vmatprep.subr.bf16.mxu0 %v739
  %891 = vmatpush2.bf16.msra.mxu0 %v738
  %892 = vmatprep.subr.bf16.mxu0 %v731
  %893 = vmatpush2.bf16.msra.mxu0 %v730
  %894 = vmatprep.subr.bf16.mxu0 %v723
  %895 = vmatpush2.bf16.msra.mxu0 %v722
  %896 = vmatprep.subr.bf16.mxu0 %v715
  %897 = vmatpush2.bf16.msra.mxu0 %v714
  %898 = vmatprep.subr.bf16.mxu0 %v707
  %899 = vmatpush2.bf16.msra.mxu0 %v706
  %900 = vmatprep.subr.bf16.mxu0 %v699
  %901 = vmatpush2.bf16.msra.mxu0 %v698
  %902 = vmatprep.subr.bf16.mxu0 %v691
  %903 = vmatpush2.bf16.msra.mxu0 %v690
  %904 = vmatprep.subr.bf16.mxu0 %v683
  %905 = vmatpush2.bf16.msra.mxu0 %v682
  %906 = vmatprep.mubr.bf16.mxu0 %v227
  %907 = vmatmul.mubr.bf16.gmra.mxu0 %v226
  %v908 = vpop.f32.mrf.mxu0
  %v909 = vadd.f32 0.0, %v908
  %v910 = vpop.f32.mrf.mxu0
  %v911 = vadd.f32 0.0, %v910
  %v912 = vpop.f32.mrf.mxu0
  %v913 = vadd.f32 0.0, %v912
  %v914 = vpop.f32.mrf.mxu0
  %v915 = vadd.f32 0.0, %v914
  %916 = vmatprep.mubr.bf16.mxu0 %v229
  %917 = vmatmul.mubr.bf16.gmra.mxu0 %v228
  %v918 = vpop.f32.mrf.mxu0
  %v919 = vadd.f32 0.0, %v918
  %v920 = vpop.f32.mrf.mxu0
  %v921 = vadd.f32 0.0, %v920
  %v922 = vpop.f32.mrf.mxu0
  %v923 = vadd.f32 0.0, %v922
  %v924 = vpop.f32.mrf.mxu0
  %v925 = vadd.f32 0.0, %v924
  %926 = vdwg.mxu0
  %927 = vmatprep.subr.bf16.mxu0 %v677
  %928 = vmatpush1.bf16.msra.mxu0 %v676
  %929 = vmatprep.subr.bf16.mxu0 %v669
  %930 = vmatpush1.bf16.msra.mxu0 %v668
  %931 = vmatprep.subr.bf16.mxu0 %v661
  %932 = vmatpush1.bf16.msra.mxu0 %v660
  %933 = vmatprep.subr.bf16.mxu0 %v653
  %934 = vmatpush1.bf16.msra.mxu0 %v652
  %935 = vmatprep.subr.bf16.mxu0 %v645
  %936 = vmatpush1.bf16.msra.mxu0 %v644
  %937 = vmatprep.subr.bf16.mxu0 %v637
  %938 = vmatpush1.bf16.msra.mxu0 %v636
  %939 = vmatprep.subr.bf16.mxu0 %v629
  %940 = vmatpush1.bf16.msra.mxu0 %v628
  %941 = vmatprep.subr.bf16.mxu0 %v621
  %942 = vmatpush1.bf16.msra.mxu0 %v620
  %943 = vmatprep.subr.bf16.mxu0 %v741
  %944 = vmatpush2.bf16.msra.mxu0 %v740
  %945 = vmatprep.subr.bf16.mxu0 %v733
  %946 = vmatpush2.bf16.msra.mxu0 %v732
  %947 = vmatprep.subr.bf16.mxu0 %v725
  %948 = vmatpush2.bf16.msra.mxu0 %v724
  %949 = vmatprep.subr.bf16.mxu0 %v717
  %950 = vmatpush2.bf16.msra.mxu0 %v716
  %951 = vmatprep.subr.bf16.mxu0 %v709
  %952 = vmatpush2.bf16.msra.mxu0 %v708
  %953 = vmatprep.subr.bf16.mxu0 %v701
  %954 = vmatpush2.bf16.msra.mxu0 %v700
  %955 = vmatprep.subr.bf16.mxu0 %v693
  %956 = vmatpush2.bf16.msra.mxu0 %v692
  %957 = vmatprep.subr.bf16.mxu0 %v685
  %958 = vmatpush2.bf16.msra.mxu0 %v684
  %959 = vmatprep.mubr.bf16.mxu0 %v227
  %960 = vmatmul.mubr.bf16.gmra.mxu0 %v226
  %v961 = vpop.f32.mrf.mxu0
  %v962 = vadd.f32 0.0, %v961
  %v963 = vpop.f32.mrf.mxu0
  %v964 = vadd.f32 0.0, %v963
  %v965 = vpop.f32.mrf.mxu0
  %v966 = vadd.f32 0.0, %v965
  %v967 = vpop.f32.mrf.mxu0
  %v968 = vadd.f32 0.0, %v967
  %969 = vmatprep.mubr.bf16.mxu0 %v229
  %970 = vmatmul.mubr.bf16.gmra.mxu0 %v228
  %v971 = vpop.f32.mrf.mxu0
  %v972 = vadd.f32 0.0, %v971
  %v973 = vpop.f32.mrf.mxu0
  %v974 = vadd.f32 0.0, %v973
  %v975 = vpop.f32.mrf.mxu0
  %v976 = vadd.f32 0.0, %v975
  %v977 = vpop.f32.mrf.mxu0
  %v978 = vadd.f32 0.0, %v977
  %979 = vdwg.mxu0
  %980 = vmatprep.subr.bf16.mxu0 %v679
  %981 = vmatpush1.bf16.msra.mxu0 %v678
  %982 = vmatprep.subr.bf16.mxu0 %v671
  %983 = vmatpush1.bf16.msra.mxu0 %v670
  %984 = vmatprep.subr.bf16.mxu0 %v663
  %985 = vmatpush1.bf16.msra.mxu0 %v662
  %986 = vmatprep.subr.bf16.mxu0 %v655
  %987 = vmatpush1.bf16.msra.mxu0 %v654
  %988 = vmatprep.subr.bf16.mxu0 %v647
  %989 = vmatpush1.bf16.msra.mxu0 %v646
  %990 = vmatprep.subr.bf16.mxu0 %v639
  %991 = vmatpush1.bf16.msra.mxu0 %v638
  %992 = vmatprep.subr.bf16.mxu0 %v631
  %993 = vmatpush1.bf16.msra.mxu0 %v630
  %994 = vmatprep.subr.bf16.mxu0 %v623
  %995 = vmatpush1.bf16.msra.mxu0 %v622
  %996 = vmatprep.subr.bf16.mxu0 %v743
  %997 = vmatpush2.bf16.msra.mxu0 %v742
  %998 = vmatprep.subr.bf16.mxu0 %v735
  %999 = vmatpush2.bf16.msra.mxu0 %v734
  %1000 = vmatprep.subr.bf16.mxu0 %v727
  %1001 = vmatpush2.bf16.msra.mxu0 %v726
  %1002 = vmatprep.subr.bf16.mxu0 %v719
  %1003 = vmatpush2.bf16.msra.mxu0 %v718
  %1004 = vmatprep.subr.bf16.mxu0 %v711
  %1005 = vmatpush2.bf16.msra.mxu0 %v710
  %1006 = vmatprep.subr.bf16.mxu0 %v703
  %1007 = vmatpush2.bf16.msra.mxu0 %v702
  %1008 = vmatprep.subr.bf16.mxu0 %v695
  %1009 = vmatpush2.bf16.msra.mxu0 %v694
  %1010 = vmatprep.subr.bf16.mxu0 %v687
  %1011 = vmatpush2.bf16.msra.mxu0 %v686
  %1012 = vmatprep.mubr.bf16.mxu0 %v227
  %1013 = vmatmul.mubr.bf16.gmra.mxu0 %v226
  %v1014 = vpop.f32.mrf.mxu0
  %v1015 = vadd.f32 0.0, %v1014
  %v1016 = vpop.f32.mrf.mxu0
  %v1017 = vadd.f32 0.0, %v1016
  %v1018 = vpop.f32.mrf.mxu0
  %v1019 = vadd.f32 0.0, %v1018
  %v1020 = vpop.f32.mrf.mxu0
  %v1021 = vadd.f32 0.0, %v1020
  %1022 = vmatprep.mubr.bf16.mxu0 %v229
  %1023 = vmatmul.mubr.bf16.gmra.mxu0 %v228
  %v1024 = vpop.f32.mrf.mxu0
  %v1025 = vadd.f32 0.0, %v1024
  %v1026 = vpop.f32.mrf.mxu0
  %v1027 = vadd.f32 0.0, %v1026
  %v1028 = vpop.f32.mrf.mxu0
  %v1029 = vadd.f32 0.0, %v1028
  %v1030 = vpop.f32.mrf.mxu0
  %v1031 = vadd.f32 0.0, %v1030
  %1032 = vdwg.mxu0
  %1033 = vmatprep.subr.bf16.mxu0 %v681
  %1034 = vmatpush1.bf16.msra.mxu0 %v680
  %1035 = vmatprep.subr.bf16.mxu0 %v673
  %1036 = vmatpush1.bf16.msra.mxu0 %v672
  %1037 = vmatprep.subr.bf16.mxu0 %v665
  %1038 = vmatpush1.bf16.msra.mxu0 %v664
  %1039 = vmatprep.subr.bf16.mxu0 %v657
  %1040 = vmatpush1.bf16.msra.mxu0 %v656
  %1041 = vmatprep.subr.bf16.mxu0 %v649
  %1042 = vmatpush1.bf16.msra.mxu0 %v648
  %1043 = vmatprep.subr.bf16.mxu0 %v641
  %1044 = vmatpush1.bf16.msra.mxu0 %v640
  %1045 = vmatprep.subr.bf16.mxu0 %v633
  %1046 = vmatpush1.bf16.msra.mxu0 %v632
  %1047 = vmatprep.subr.bf16.mxu0 %v625
  %1048 = vmatpush1.bf16.msra.mxu0 %v624
  %1049 = vmatprep.subr.bf16.mxu0 %v745
  %1050 = vmatpush2.bf16.msra.mxu0 %v744
  %1051 = vmatprep.subr.bf16.mxu0 %v737
  %1052 = vmatpush2.bf16.msra.mxu0 %v736
  %1053 = vmatprep.subr.bf16.mxu0 %v729
  %1054 = vmatpush2.bf16.msra.mxu0 %v728
  %1055 = vmatprep.subr.bf16.mxu0 %v721
  %1056 = vmatpush2.bf16.msra.mxu0 %v720
  %1057 = vmatprep.subr.bf16.mxu0 %v713
  %1058 = vmatpush2.bf16.msra.mxu0 %v712
  %1059 = vmatprep.subr.bf16.mxu0 %v705
  %1060 = vmatpush2.bf16.msra.mxu0 %v704
  %1061 = vmatprep.subr.bf16.mxu0 %v697
  %1062 = vmatpush2.bf16.msra.mxu0 %v696
  %1063 = vmatprep.subr.bf16.mxu0 %v689
  %1064 = vmatpush2.bf16.msra.mxu0 %v688
  %1065 = vmatprep.mubr.bf16.mxu0 %v227
  %1066 = vmatmul.mubr.bf16.gmra.mxu0 %v226
  %v1067 = vpop.f32.mrf.mxu0
  %v1068 = vadd.f32 0.0, %v1067
  %v1069 = vpop.f32.mrf.mxu0
  %v1070 = vadd.f32 0.0, %v1069
  %v1071 = vpop.f32.mrf.mxu0
  %v1072 = vadd.f32 0.0, %v1071
  %v1073 = vpop.f32.mrf.mxu0
  %v1074 = vadd.f32 0.0, %v1073
  %1075 = vmatprep.mubr.bf16.mxu0 %v229
  %1076 = vmatmul.mubr.bf16.gmra.mxu0 %v228
  %v1077 = vpop.f32.mrf.mxu0
  %v1078 = vadd.f32 0.0, %v1077
  %v1079 = vpop.f32.mrf.mxu0
  %v1080 = vadd.f32 0.0, %v1079
  %v1081 = vpop.f32.mrf.mxu0
  %v1082 = vadd.f32 0.0, %v1081
  %v1083 = vpop.f32.mrf.mxu0
  %v1084 = vadd.f32 0.0, %v1083
  %1085 = vdwg.mxu0
  %v1086 = vadd.f32 %v50, %v909
  %v1087 = vadd.f32 %v51, %v911
  %v1088 = vadd.f32 %v52, %v962
  %v1089 = vadd.f32 %v53, %v964
  %v1090 = vadd.f32 %v54, %v1015
  %v1091 = vadd.f32 %v55, %v1017
  %v1092 = vadd.f32 %v56, %v1068
  %v1093 = vadd.f32 %v57, %v1070
  %v1094 = vadd.f32 %v58, %v913
  %v1095 = vadd.f32 %v59, %v915
  %v1096 = vadd.f32 %v60, %v966
  %v1097 = vadd.f32 %v61, %v968
  %v1098 = vadd.f32 %v62, %v1019
  %v1099 = vadd.f32 %v63, %v1021
  %v1100 = vadd.f32 %v64, %v1072
  %v1101 = vadd.f32 %v65, %v1074
  %v1102 = vadd.f32 %v66, %v919
  %v1103 = vadd.f32 %v67, %v921
  %v1104 = vadd.f32 %v68, %v972
  %v1105 = vadd.f32 %v69, %v974
  %v1106 = vadd.f32 %v70, %v1025
  %v1107 = vadd.f32 %v71, %v1027
  %v1108 = vadd.f32 %v72, %v1078
  %v1109 = vadd.f32 %v73, %v1080
  %v1110 = vadd.f32 %v74, %v923
  %v1111 = vadd.f32 %v75, %v925
  %v1112 = vadd.f32 %v76, %v976
  %v1113 = vadd.f32 %v77, %v978
  %v1114 = vadd.f32 %v78, %v1029
  %v1115 = vadd.f32 %v79, %v1031
  %v1116 = vadd.f32 %v80, %v1082
  %v1117 = vadd.f32 %v81, %v1084
  %1118 = vst [vmem:[#allocation2] sm:$0xff] %v1086
  %1119 = vst [vmem:[#allocation2 + $0x8] sm:$0xff] %v1087
  %1120 = vst [vmem:[#allocation2 + $0x10] sm:$0xff] %v1088
  %1121 = vst [vmem:[#allocation2 + $0x18] sm:$0xff] %v1089
  %1122 = vst [vmem:[#allocation2 + $0x20] sm:$0xff] %v1090
  %1123 = vst [vmem:[#allocation2 + $0x28] sm:$0xff] %v1091
  %1124 = vst [vmem:[#allocation2 + $0x30] sm:$0xff] %v1092
  %1125 = vst [vmem:[#allocation2 + $0x38] sm:$0xff] %v1093
  %1126 = vst [vmem:[#allocation2 + $0x40] sm:$0xff] %v1094
  %1127 = vst [vmem:[#allocation2 + $0x48] sm:$0xff] %v1095
  %1128 = vst [vmem:[#allocation2 + $0x50] sm:$0xff] %v1096
  %1129 = vst [vmem:[#allocation2 + $0x58] sm:$0xff] %v1097
  %1130 = vst [vmem:[#allocation2 + $0x60] sm:$0xff] %v1098
  %1131 = vst [vmem:[#allocation2 + $0x68] sm:$0xff] %v1099
  %1132 = vst [vmem:[#allocation2 + $0x70] sm:$0xff] %v1100
  %1133 = vst [vmem:[#allocation2 + $0x78] sm:$0xff] %v1101
  %1134 = vst [vmem:[#allocation2 + $0x80] sm:$0xff] %v1102
  %1135 = vst [vmem:[#allocation2 + $0x88] sm:$0xff] %v1103
  %1136 = vst [vmem:[#allocation2 + $0x90] sm:$0xff] %v1104
  %1137 = vst [vmem:[#allocation2 + $0x98] sm:$0xff] %v1105
  %1138 = vst [vmem:[#allocation2 + $0xa0] sm:$0xff] %v1106
  %1139 = vst [vmem:[#allocation2 + $0xa8] sm:$0xff] %v1107
  %1140 = vst [vmem:[#allocation2 + $0xb0] sm:$0xff] %v1108
  %1141 = vst [vmem:[#allocation2 + $0xb8] sm:$0xff] %v1109
  %1142 = vst [vmem:[#allocation2 + $0xc0] sm:$0xff] %v1110
  %1143 = vst [vmem:[#allocation2 + $0xc8] sm:$0xff] %v1111
  %1144 = vst [vmem:[#allocation2 + $0xd0] sm:$0xff] %v1112
  %1145 = vst [vmem:[#allocation2 + $0xd8] sm:$0xff] %v1113
  %1146 = vst [vmem:[#allocation2 + $0xe0] sm:$0xff] %v1114
  %1147 = vst [vmem:[#allocation2 + $0xe8] sm:$0xff] %v1115
  %1148 = vst [vmem:[#allocation2 + $0xf0] sm:$0xff] %v1116
  %1149 = vst [vmem:[#allocation2 + $0xf8] sm:$0xff] %v1117
  // Predicated region
  $region18: #{bloom_forward.23} parent=0 // pred_check
    %p1150 = pneg %p14
  $region19: #{bloom_forward.23} parent=0 // pred_check_branch
    %1152 = sbr.rel (%p1150) target = $region21
  $region20: #{bloom_forward.23} parent=0 // pred_region
    %v1153 = vld [vmem:[#allocation2] sm:$0xff]
    %v1154 = vld [vmem:[#allocation2 + $0x8] sm:$0xff]
    %v1155 = vld [vmem:[#allocation2 + $0x10] sm:$0xff]
    %v1156 = vld [vmem:[#allocation2 + $0x18] sm:$0xff]
    %v1157 = vld [vmem:[#allocation2 + $0x20] sm:$0xff]
    %v1158 = vld [vmem:[#allocation2 + $0x28] sm:$0xff]
    %v1159 = vld [vmem:[#allocation2 + $0x30] sm:$0xff]
    %v1160 = vld [vmem:[#allocation2 + $0x38] sm:$0xff]
    %v1161 = vld [vmem:[#allocation2 + $0x40] sm:$0xff]
    %v1162 = vld [vmem:[#allocation2 + $0x48] sm:$0xff]
    %v1163 = vld [vmem:[#allocation2 + $0x50] sm:$0xff]
    %v1164 = vld [vmem:[#allocation2 + $0x58] sm:$0xff]
    %v1165 = vld [vmem:[#allocation2 + $0x60] sm:$0xff]
    %v1166 = vld [vmem:[#allocation2 + $0x68] sm:$0xff]
    %v1167 = vld [vmem:[#allocation2 + $0x70] sm:$0xff]
    %v1168 = vld [vmem:[#allocation2 + $0x78] sm:$0xff]
    %v1169 = vld [vmem:[#allocation2 + $0x80] sm:$0xff]
    %v1170 = vld [vmem:[#allocation2 + $0x88] sm:$0xff]
    %v1171 = vld [vmem:[#allocation2 + $0x90] sm:$0xff]
    %v1172 = vld [vmem:[#allocation2 + $0x98] sm:$0xff]
    %v1173 = vld [vmem:[#allocation2 + $0xa0] sm:$0xff]
    %v1174 = vld [vmem:[#allocation2 + $0xa8] sm:$0xff]
    %v1175 = vld [vmem:[#allocation2 + $0xb0] sm:$0xff]
    %v1176 = vld [vmem:[#allocation2 + $0xb8] sm:$0xff]
    %v1177 = vld [vmem:[#allocation2 + $0xc0] sm:$0xff]
    %v1178 = vld [vmem:[#allocation2 + $0xc8] sm:$0xff]
    %v1179 = vld [vmem:[#allocation2 + $0xd0] sm:$0xff]
    %v1180 = vld [vmem:[#allocation2 + $0xd8] sm:$0xff]
    %v1181 = vld [vmem:[#allocation2 + $0xe0] sm:$0xff]
    %v1182 = vld [vmem:[#allocation2 + $0xe8] sm:$0xff]
    %v1183 = vld [vmem:[#allocation2 + $0xf0] sm:$0xff]
    %v1184 = vld [vmem:[#allocation2 + $0xf8] sm:$0xff]
    %v1185 = vld [vmem:[%s2] sm:$0xff]
    %v1187 = vlaneseq
    %v1188 = vshrl.u32 %v1187, 7
    %v1189 = vsub.s32 0, %v1188
    %v1190 = vrot.slane %v1185, %v1189
    %v1191 = vlaneseq
    %v1192 = vshrl.u32 %v1191, 7
    %v1193 = vsub.s32 1, %v1192
    %v1194 = vrot.slane %v1185, %v1193
    %v1195 = vlaneseq
    %v1196 = vshrl.u32 %v1195, 7
    %v1197 = vsub.s32 2, %v1196
    %v1198 = vrot.slane %v1185, %v1197
    %v1199 = vlaneseq
    %v1200 = vshrl.u32 %v1199, 7
    %v1201 = vsub.s32 3, %v1200
    %v1202 = vrot.slane %v1185, %v1201
    %v1203 = vlaneseq
    %v1204 = vshrl.u32 %v1203, 7
    %v1205 = vsub.s32 4, %v1204
    %v1206 = vrot.slane %v1185, %v1205
    %v1207 = vlaneseq
    %v1208 = vshrl.u32 %v1207, 7
    %v1209 = vsub.s32 5, %v1208
    %v1210 = vrot.slane %v1185, %v1209
    %v1211 = vlaneseq
    %v1212 = vshrl.u32 %v1211, 7
    %v1213 = vsub.s32 6, %v1212
    %v1214 = vrot.slane %v1185, %v1213
    %v1215 = vlaneseq
    %v1216 = vshrl.u32 %v1215, 7
    %v1217 = vsub.s32 7, %v1216
    %v1218 = vrot.slane %v1185, %v1217
    %v1227 = vadd.f32 %v1153, %v1190
    %v1228 = vadd.f32 %v1154, %v1194
    %v1229 = vadd.f32 %v1155, %v1198
    %v1230 = vadd.f32 %v1156, %v1202
    %v1231 = vadd.f32 %v1157, %v1206
    %v1232 = vadd.f32 %v1158, %v1210
    %v1233 = vadd.f32 %v1159, %v1214
    %v1234 = vadd.f32 %v1160, %v1218
    %v1235 = vadd.f32 %v1161, %v1190
    %v1236 = vadd.f32 %v1162, %v1194
    %v1237 = vadd.f32 %v1163, %v1198
    %v1238 = vadd.f32 %v1164, %v1202
    %v1239 = vadd.f32 %v1165, %v1206
    %v1240 = vadd.f32 %v1166, %v1210
    %v1241 = vadd.f32 %v1167, %v1214
    %v1242 = vadd.f32 %v1168, %v1218
    %v1243 = vadd.f32 %v1169, %v1190
    %v1244 = vadd.f32 %v1170, %v1194
    %v1245 = vadd.f32 %v1171, %v1198
    %v1246 = vadd.f32 %v1172, %v1202
    %v1247 = vadd.f32 %v1173, %v1206
    %v1248 = vadd.f32 %v1174, %v1210
    %v1249 = vadd.f32 %v1175, %v1214
    %v1250 = vadd.f32 %v1176, %v1218
    %v1251 = vadd.f32 %v1177, %v1190
    %v1252 = vadd.f32 %v1178, %v1194
    %v1253 = vadd.f32 %v1179, %v1198
    %v1254 = vadd.f32 %v1180, %v1202
    %v1255 = vadd.f32 %v1181, %v1206
    %v1256 = vadd.f32 %v1182, %v1210
    %v1257 = vadd.f32 %v1183, %v1214
    %v1258 = vadd.f32 %v1184, %v1218
    %v1259 = vmul.f32 %v1227, 0.5
    %v1260 = vmul.f32 %v1228, 0.5
    %v1261 = vmul.f32 %v1229, 0.5
    %v1262 = vmul.f32 %v1230, 0.5
    %v1263 = vmul.f32 %v1231, 0.5
    %v1264 = vmul.f32 %v1232, 0.5
    %v1265 = vmul.f32 %v1233, 0.5
    %v1266 = vmul.f32 %v1234, 0.5
    %v1267 = vmul.f32 %v1235, 0.5
    %v1268 = vmul.f32 %v1236, 0.5
    %v1269 = vmul.f32 %v1237, 0.5
    %v1270 = vmul.f32 %v1238, 0.5
    %v1271 = vmul.f32 %v1239, 0.5
    %v1272 = vmul.f32 %v1240, 0.5
    %v1273 = vmul.f32 %v1241, 0.5
    %v1274 = vmul.f32 %v1242, 0.5
    %v1275 = vmul.f32 %v1243, 0.5
    %v1276 = vmul.f32 %v1244, 0.5
    %v1277 = vmul.f32 %v1245, 0.5
    %v1278 = vmul.f32 %v1246, 0.5
    %v1279 = vmul.f32 %v1247, 0.5
    %v1280 = vmul.f32 %v1248, 0.5
    %v1281 = vmul.f32 %v1249, 0.5
    %v1282 = vmul.f32 %v1250, 0.5
    %v1283 = vmul.f32 %v1251, 0.5
    %v1284 = vmul.f32 %v1252, 0.5
    %v1285 = vmul.f32 %v1253, 0.5
    %v1286 = vmul.f32 %v1254, 0.5
    %v1287 = vmul.f32 %v1255, 0.5
    %v1288 = vmul.f32 %v1256, 0.5
    %v1289 = vmul.f32 %v1257, 0.5
    %v1290 = vmul.f32 %v1258, 0.5
    %v1291 = vmul.f32 %v1227, 0.7978846
    %v1292 = vmul.f32 %v1228, 0.7978846
    %v1293 = vmul.f32 %v1229, 0.7978846
    %v1294 = vmul.f32 %v1230, 0.7978846
    %v1295 = vmul.f32 %v1231, 0.7978846
    %v1296 = vmul.f32 %v1232, 0.7978846
    %v1297 = vmul.f32 %v1233, 0.7978846
    %v1298 = vmul.f32 %v1234, 0.7978846
    %v1299 = vmul.f32 %v1235, 0.7978846
    %v1300 = vmul.f32 %v1236, 0.7978846
    %v1301 = vmul.f32 %v1237, 0.7978846
    %v1302 = vmul.f32 %v1238, 0.7978846
    %v1303 = vmul.f32 %v1239, 0.7978846
    %v1304 = vmul.f32 %v1240, 0.7978846
    %v1305 = vmul.f32 %v1241, 0.7978846
    %v1306 = vmul.f32 %v1242, 0.7978846
    %v1307 = vmul.f32 %v1243, 0.7978846
    %v1308 = vmul.f32 %v1244, 0.7978846
    %v1309 = vmul.f32 %v1245, 0.7978846
    %v1310 = vmul.f32 %v1246, 0.7978846
    %v1311 = vmul.f32 %v1247, 0.7978846
    %v1312 = vmul.f32 %v1248, 0.7978846
    %v1313 = vmul.f32 %v1249, 0.7978846
    %v1314 = vmul.f32 %v1250, 0.7978846
    %v1315 = vmul.f32 %v1251, 0.7978846
    %v1316 = vmul.f32 %v1252, 0.7978846
    %v1317 = vmul.f32 %v1253, 0.7978846
    %v1318 = vmul.f32 %v1254, 0.7978846
    %v1319 = vmul.f32 %v1255, 0.7978846
    %v1320 = vmul.f32 %v1256, 0.7978846
    %v1321 = vmul.f32 %v1257, 0.7978846
    %v1322 = vmul.f32 %v1258, 0.7978846
    %v1323 = vmul.f32 %v1227, 0.044715
    %v1324 = vmul.f32 %v1228, 0.044715
    %v1325 = vmul.f32 %v1229, 0.044715
    %v1326 = vmul.f32 %v1230, 0.044715
    %v1327 = vmul.f32 %v1231, 0.044715
    %v1328 = vmul.f32 %v1232, 0.044715
    %v1329 = vmul.f32 %v1233, 0.044715
    %v1330 = vmul.f32 %v1234, 0.044715
    %v1331 = vmul.f32 %v1235, 0.044715
    %v1332 = vmul.f32 %v1236, 0.044715
    %v1333 = vmul.f32 %v1237, 0.044715
    %v1334 = vmul.f32 %v1238, 0.044715
    %v1335 = vmul.f32 %v1239, 0.044715
    %v1336 = vmul.f32 %v1240, 0.044715
    %v1337 = vmul.f32 %v1241, 0.044715
    %v1338 = vmul.f32 %v1242, 0.044715
    %v1339 = vmul.f32 %v1243, 0.044715
    %v1340 = vmul.f32 %v1244, 0.044715
    %v1341 = vmul.f32 %v1245, 0.044715
    %v1342 = vmul.f32 %v1246, 0.044715
    %v1343 = vmul.f32 %v1247, 0.044715
    %v1344 = vmul.f32 %v1248, 0.044715
    %v1345 = vmul.f32 %v1249, 0.044715
    %v1346 = vmul.f32 %v1250, 0.044715
    %v1347 = vmul.f32 %v1251, 0.044715
    %v1348 = vmul.f32 %v1252, 0.044715
    %v1349 = vmul.f32 %v1253, 0.044715
    %v1350 = vmul.f32 %v1254, 0.044715
    %v1351 = vmul.f32 %v1255, 0.044715
    %v1352 = vmul.f32 %v1256, 0.044715
    %v1353 = vmul.f32 %v1257, 0.044715
    %v1354 = vmul.f32 %v1258, 0.044715
    %v1355 = vmul.f32 %v1323, %v1227
    %v1356 = vmul.f32 %v1324, %v1228
    %v1357 = vmul.f32 %v1325, %v1229
    %v1358 = vmul.f32 %v1326, %v1230
    %v1359 = vmul.f32 %v1327, %v1231
    %v1360 = vmul.f32 %v1328, %v1232
    %v1361 = vmul.f32 %v1329, %v1233
    %v1362 = vmul.f32 %v1330, %v1234
    %v1363 = vmul.f32 %v1331, %v1235
    %v1364 = vmul.f32 %v1332, %v1236
    %v1365 = vmul.f32 %v1333, %v1237
    %v1366 = vmul.f32 %v1334, %v1238
    %v1367 = vmul.f32 %v1335, %v1239
    %v1368 = vmul.f32 %v1336, %v1240
    %v1369 = vmul.f32 %v1337, %v1241
    %v1370 = vmul.f32 %v1338, %v1242
    %v1371 = vmul.f32 %v1339, %v1243
    %v1372 = vmul.f32 %v1340, %v1244
    %v1373 = vmul.f32 %v1341, %v1245
    %v1374 = vmul.f32 %v1342, %v1246
    %v1375 = vmul.f32 %v1343, %v1247
    %v1376 = vmul.f32 %v1344, %v1248
    %v1377 = vmul.f32 %v1345, %v1249
    %v1378 = vmul.f32 %v1346, %v1250
    %v1379 = vmul.f32 %v1347, %v1251
    %v1380 = vmul.f32 %v1348, %v1252
    %v1381 = vmul.f32 %v1349, %v1253
    %v1382 = vmul.f32 %v1350, %v1254
    %v1383 = vmul.f32 %v1351, %v1255
    %v1384 = vmul.f32 %v1352, %v1256
    %v1385 = vmul.f32 %v1353, %v1257
    %v1386 = vmul.f32 %v1354, %v1258
    %v1387 = vadd.f32 %v1355, 1.0
    %v1388 = vadd.f32 %v1356, 1.0
    %v1389 = vadd.f32 %v1357, 1.0
    %v1390 = vadd.f32 %v1358, 1.0
    %v1391 = vadd.f32 %v1359, 1.0
    %v1392 = vadd.f32 %v1360, 1.0
    %v1393 = vadd.f32 %v1361, 1.0
    %v1394 = vadd.f32 %v1362, 1.0
    %v1395 = vadd.f32 %v1363, 1.0
    %v1396 = vadd.f32 %v1364, 1.0
    %v1397 = vadd.f32 %v1365, 1.0
    %v1398 = vadd.f32 %v1366, 1.0
    %v1399 = vadd.f32 %v1367, 1.0
    %v1400 = vadd.f32 %v1368, 1.0
    %v1401 = vadd.f32 %v1369, 1.0
    %v1402 = vadd.f32 %v1370, 1.0
    %v1403 = vadd.f32 %v1371, 1.0
    %v1404 = vadd.f32 %v1372, 1.0
    %v1405 = vadd.f32 %v1373, 1.0
    %v1406 = vadd.f32 %v1374, 1.0
    %v1407 = vadd.f32 %v1375, 1.0
    %v1408 = vadd.f32 %v1376, 1.0
    %v1409 = vadd.f32 %v1377, 1.0
    %v1410 = vadd.f32 %v1378, 1.0
    %v1411 = vadd.f32 %v1379, 1.0
    %v1412 = vadd.f32 %v1380, 1.0
    %v1413 = vadd.f32 %v1381, 1.0
    %v1414 = vadd.f32 %v1382, 1.0
    %v1415 = vadd.f32 %v1383, 1.0
    %v1416 = vadd.f32 %v1384, 1.0
    %v1417 = vadd.f32 %v1385, 1.0
    %v1418 = vadd.f32 %v1386, 1.0
    %v1419 = vmul.f32 %v1291, %v1387
    %v1420 = vmul.f32 %v1292, %v1388
    %v1421 = vmul.f32 %v1293, %v1389
    %v1422 = vmul.f32 %v1294, %v1390
    %v1423 = vmul.f32 %v1295, %v1391
    %v1424 = vmul.f32 %v1296, %v1392
    %v1425 = vmul.f32 %v1297, %v1393
    %v1426 = vmul.f32 %v1298, %v1394
    %v1427 = vmul.f32 %v1299, %v1395
    %v1428 = vmul.f32 %v1300, %v1396
    %v1429 = vmul.f32 %v1301, %v1397
    %v1430 = vmul.f32 %v1302, %v1398
    %v1431 = vmul.f32 %v1303, %v1399
    %v1432 = vmul.f32 %v1304, %v1400
    %v1433 = vmul.f32 %v1305, %v1401
    %v1434 = vmul.f32 %v1306, %v1402
    %v1435 = vmul.f32 %v1307, %v1403
    %v1436 = vmul.f32 %v1308, %v1404
    %v1437 = vmul.f32 %v1309, %v1405
    %v1438 = vmul.f32 %v1310, %v1406
    %v1439 = vmul.f32 %v1311, %v1407
    %v1440 = vmul.f32 %v1312, %v1408
    %v1441 = vmul.f32 %v1313, %v1409
    %v1442 = vmul.f32 %v1314, %v1410
    %v1443 = vmul.f32 %v1315, %v1411
    %v1444 = vmul.f32 %v1316, %v1412
    %v1445 = vmul.f32 %v1317, %v1413
    %v1446 = vmul.f32 %v1318, %v1414
    %v1447 = vmul.f32 %v1319, %v1415
    %v1448 = vmul.f32 %v1320, %v1416
    %v1449 = vmul.f32 %v1321, %v1417
    %v1450 = vmul.f32 %v1322, %v1418
    %v1451 = vtanh.pop %v1419
    %v1452 = vtanh.pop %v1420
    %v1453 = vtanh.pop %v1421
    %v1454 = vtanh.pop %v1422
    %v1455 = vtanh.pop %v1423
    %v1456 = vtanh.pop %v1424
    %v1457 = vtanh.pop %v1425
    %v1458 = vtanh.pop %v1426
    %v1459 = vtanh.pop %v1427
    %v1460 = vtanh.pop %v1428
    %v1461 = vtanh.pop %v1429
    %v1462 = vtanh.pop %v1430
    %v1463 = vtanh.pop %v1431
    %v1464 = vtanh.pop %v1432
    %v1465 = vtanh.pop %v1433
    %v1466 = vtanh.pop %v1434
    %v1467 = vtanh.pop %v1435
    %v1468 = vtanh.pop %v1436
    %v1469 = vtanh.pop %v1437
    %v1470 = vtanh.pop %v1438
    %v1471 = vtanh.pop %v1439
    %v1472 = vtanh.pop %v1440
    %v1473 = vtanh.pop %v1441
    %v1474 = vtanh.pop %v1442
    %v1475 = vtanh.pop %v1443
    %v1476 = vtanh.pop %v1444
    %v1477 = vtanh.pop %v1445
    %v1478 = vtanh.pop %v1446
    %v1479 = vtanh.pop %v1447
    %v1480 = vtanh.pop %v1448
    %v1481 = vtanh.pop %v1449
    %v1482 = vtanh.pop %v1450
    %v1483 = vadd.f32 %v1451, 1.0
    %v1484 = vadd.f32 %v1452, 1.0
    %v1485 = vadd.f32 %v1453, 1.0
    %v1486 = vadd.f32 %v1454, 1.0
    %v1487 = vadd.f32 %v1455, 1.0
    %v1488 = vadd.f32 %v1456, 1.0
    %v1489 = vadd.f32 %v1457, 1.0
    %v1490 = vadd.f32 %v1458, 1.0
    %v1491 = vadd.f32 %v1459, 1.0
    %v1492 = vadd.f32 %v1460, 1.0
    %v1493 = vadd.f32 %v1461, 1.0
    %v1494 = vadd.f32 %v1462, 1.0
    %v1495 = vadd.f32 %v1463, 1.0
    %v1496 = vadd.f32 %v1464, 1.0
    %v1497 = vadd.f32 %v1465, 1.0
    %v1498 = vadd.f32 %v1466, 1.0
    %v1499 = vadd.f32 %v1467, 1.0
    %v1500 = vadd.f32 %v1468, 1.0
    %v1501 = vadd.f32 %v1469, 1.0
    %v1502 = vadd.f32 %v1470, 1.0
    %v1503 = vadd.f32 %v1471, 1.0
    %v1504 = vadd.f32 %v1472, 1.0
    %v1505 = vadd.f32 %v1473, 1.0
    %v1506 = vadd.f32 %v1474, 1.0
    %v1507 = vadd.f32 %v1475, 1.0
    %v1508 = vadd.f32 %v1476, 1.0
    %v1509 = vadd.f32 %v1477, 1.0
    %v1510 = vadd.f32 %v1478, 1.0
    %v1511 = vadd.f32 %v1479, 1.0
    %v1512 = vadd.f32 %v1480, 1.0
    %v1513 = vadd.f32 %v1481, 1.0
    %v1514 = vadd.f32 %v1482, 1.0
    %v1515 = vmul.f32 %v1259, %v1483
    %v1516 = vmul.f32 %v1260, %v1484
    %v1517 = vmul.f32 %v1261, %v1485
    %v1518 = vmul.f32 %v1262, %v1486
    %v1519 = vmul.f32 %v1263, %v1487
    %v1520 = vmul.f32 %v1264, %v1488
    %v1521 = vmul.f32 %v1265, %v1489
    %v1522 = vmul.f32 %v1266, %v1490
    %v1523 = vmul.f32 %v1267, %v1491
    %v1524 = vmul.f32 %v1268, %v1492
    %v1525 = vmul.f32 %v1269, %v1493
    %v1526 = vmul.f32 %v1270, %v1494
    %v1527 = vmul.f32 %v1271, %v1495
    %v1528 = vmul.f32 %v1272, %v1496
    %v1529 = vmul.f32 %v1273, %v1497
    %v1530 = vmul.f32 %v1274, %v1498
    %v1531 = vmul.f32 %v1275, %v1499
    %v1532 = vmul.f32 %v1276, %v1500
    %v1533 = vmul.f32 %v1277, %v1501
    %v1534 = vmul.f32 %v1278, %v1502
    %v1535 = vmul.f32 %v1279, %v1503
    %v1536 = vmul.f32 %v1280, %v1504
    %v1537 = vmul.f32 %v1281, %v1505
    %v1538 = vmul.f32 %v1282, %v1506
    %v1539 = vmul.f32 %v1283, %v1507
    %v1540 = vmul.f32 %v1284, %v1508
    %v1541 = vmul.f32 %v1285, %v1509
    %v1542 = vmul.f32 %v1286, %v1510
    %v1543 = vmul.f32 %v1287, %v1511
    %v1544 = vmul.f32 %v1288, %v1512
    %v1545 = vmul.f32 %v1289, %v1513
    %v1546 = vmul.f32 %v1290, %v1514
    %v1547 = vpack.c.bf16 %v1523, %v1515
    %v1548 = vpack.c.bf16 %v1524, %v1516
    %v1549 = vpack.c.bf16 %v1525, %v1517
    %v1550 = vpack.c.bf16 %v1526, %v1518
    %v1551 = vpack.c.bf16 %v1527, %v1519
    %v1552 = vpack.c.bf16 %v1528, %v1520
    %v1553 = vpack.c.bf16 %v1529, %v1521
    %v1554 = vpack.c.bf16 %v1530, %v1522
    %v1555 = vpack.c.bf16 %v1539, %v1531
    %v1556 = vpack.c.bf16 %v1540, %v1532
    %v1557 = vpack.c.bf16 %v1541, %v1533
    %v1558 = vpack.c.bf16 %v1542, %v1534
    %v1559 = vpack.c.bf16 %v1543, %v1535
    %v1560 = vpack.c.bf16 %v1544, %v1536
    %v1561 = vpack.c.bf16 %v1545, %v1537
    %v1562 = vpack.c.bf16 %v1546, %v1538
    %v1579 = vunpack.c.l.b16 %v1547
    %v1580 = vunpack.c.l.b16 %v1548
    %v1581 = vunpack.c.l.b16 %v1549
    %v1582 = vunpack.c.l.b16 %v1550
    %v1583 = vunpack.c.l.b16 %v1551
    %v1584 = vunpack.c.l.b16 %v1552
    %v1585 = vunpack.c.l.b16 %v1553
    %v1586 = vunpack.c.l.b16 %v1554
    %v1587 = vunpack.c.h.b16 %v1547
    %v1588 = vunpack.c.h.b16 %v1548
    %v1589 = vunpack.c.h.b16 %v1549
    %v1590 = vunpack.c.h.b16 %v1550
    %v1591 = vunpack.c.h.b16 %v1551
    %v1592 = vunpack.c.h.b16 %v1552
    %v1593 = vunpack.c.h.b16 %v1553
    %v1594 = vunpack.c.h.b16 %v1554
    %v1595 = vunpack.c.l.b16 %v1555
    %v1596 = vunpack.c.l.b16 %v1556
    %v1597 = vunpack.c.l.b16 %v1557
    %v1598 = vunpack.c.l.b16 %v1558
    %v1599 = vunpack.c.l.b16 %v1559
    %v1600 = vunpack.c.l.b16 %v1560
    %v1601 = vunpack.c.l.b16 %v1561
    %v1602 = vunpack.c.l.b16 %v1562
    %v1603 = vunpack.c.h.b16 %v1555
    %v1604 = vunpack.c.h.b16 %v1556
    %v1605 = vunpack.c.h.b16 %v1557
    %v1606 = vunpack.c.h.b16 %v1558
    %v1607 = vunpack.c.h.b16 %v1559
    %v1608 = vunpack.c.h.b16 %v1560
    %v1609 = vunpack.c.h.b16 %v1561
    %v1610 = vunpack.c.h.b16 %v1562
    %v1611 = vpack.c.b16 %v1580, %v1579
    %v1612 = vpack.c.b16 %v1582, %v1581
    %v1613 = vpack.c.b16 %v1584, %v1583
    %v1614 = vpack.c.b16 %v1586, %v1585
    %v1615 = vpack.c.b16 %v1588, %v1587
    %v1616 = vpack.c.b16 %v1590, %v1589
    %v1617 = vpack.c.b16 %v1592, %v1591
    %v1618 = vpack.c.b16 %v1594, %v1593
    %v1619 = vpack.c.b16 %v1596, %v1595
    %v1620 = vpack.c.b16 %v1598, %v1597
    %v1621 = vpack.c.b16 %v1600, %v1599
    %v1622 = vpack.c.b16 %v1602, %v1601
    %v1623 = vpack.c.b16 %v1604, %v1603
    %v1624 = vpack.c.b16 %v1606, %v1605
    %v1625 = vpack.c.b16 %v1608, %v1607
    %v1626 = vpack.c.b16 %v1610, %v1609
    %1643 = vst [vmem:[%s3] sm:$0xff] %v1611
    %1644 = vst [vmem:[%s3 + $0x8] sm:$0xff] %v1612
    %1645 = vst [vmem:[%s3 + $0x10] sm:$0xff] %v1613
    %1646 = vst [vmem:[%s3 + $0x18] sm:$0xff] %v1614
    %1647 = vst [vmem:[%s3 + $0x20] sm:$0xff] %v1615
    %1648 = vst [vmem:[%s3 + $0x28] sm:$0xff] %v1616
    %1649 = vst [vmem:[%s3 + $0x30] sm:$0xff] %v1617
    %1650 = vst [vmem:[%s3 + $0x38] sm:$0xff] %v1618
    %1651 = vst [vmem:[%s3 + $0x40] sm:$0xff] %v1619
    %1652 = vst [vmem:[%s3 + $0x48] sm:$0xff] %v1620
    %1653 = vst [vmem:[%s3 + $0x50] sm:$0xff] %v1621
    %1654 = vst [vmem:[%s3 + $0x58] sm:$0xff] %v1622
    %1655 = vst [vmem:[%s3 + $0x60] sm:$0xff] %v1623
    %1656 = vst [vmem:[%s3 + $0x68] sm:$0xff] %v1624
    %1657 = vst [vmem:[%s3 + $0x70] sm:$0xff] %v1625
    %1658 = vst [vmem:[%s3 + $0x78] sm:$0xff] %v1626
  $region21: #{bloom_forward.23} parent=0 // pred_fallthru
    _
  // Predicated region
  $region22: #{bloom_forward.23} parent=0 // pred_check
    _
  $region23: #{bloom_forward.23} parent=0 // pred_check_branch
    %1660 = sbr.rel (0) target = $region25
  $region24: #{bloom_forward.23} parent=0 // pred_region
    _
  $region25: #{bloom_forward.23} parent=0 // pred_fallthru
    _
  // Predicated region
  $region26: #{bloom_forward.23} parent=0 // pred_check
    _
  $region27: #{bloom_forward.23} parent=0 // pred_check_branch
    %1662 = sbr.rel (0) target = $region29
  $region28: #{bloom_forward.23} parent=0 // pred_region
    _
  $region29: #{bloom_forward.23} parent=0 // pred_fallthru
    _

</llo_original>
